<compile_context>
chip_gen: v7x
topology: tpu7x:2x2x1
jax: 0.10.0
libtpu: 0.0.40
codegen_flags: <defaults>
</compile_context>

<pallas_src>
import math

import jax
import jax.numpy as jnp
from jax.experimental import pallas as pl
from jax.experimental.pallas import tpu as pltpu


# ----------------------------------------------------------------------------
# Fully fused MLP kernel: all three branches + all layers in one invocation
# ----------------------------------------------------------------------------
def _make_fused_mlp_kernel(n_layers: int, n_branch: int, batch: int, eps: float):
    def kernel(x_ref, *refs):
        # refs = [w0, gb0, w1, gb1, ..., o_ref]; gb_l is (2, D_l) = [gamma; beta]
        o_ref = refs[-1]
        param_refs = refs[:-1]

        h = x_ref[...]                                  # (3*B, Din) bf16
        yg = None
        for l in range(n_layers):
            w_ref = param_refs[2 * l]
            gb_ref = param_refs[2 * l + 1]

            # Linear (no bias: exactly cancelled by the BN mean subtraction in
            # training mode).  One matmul for all three branches.
            y = jnp.dot(h, w_ref[...], preferred_element_type=jnp.float32)
            d = y.shape[-1]

            # Per-branch BatchNorm1d (training mode, biased variance, eps=1e-5),
            # folded into one per-column scale/shift.  Stats are computed per
            # branch by grouping rows (split lands on sublane-8 boundaries).
            yg = y.reshape(n_branch, batch, d)          # (3, B, D)
            mean = jnp.mean(yg, axis=1, keepdims=True)  # (3, 1, D)
            var = jnp.mean(jnp.square(yg - mean), axis=1, keepdims=True)

            gb = gb_ref[...].astype(jnp.float32)        # (2, D)
            gamma = gb[0:1, :]                          # (1, D) -> broadcasts
            beta = gb[1:2, :]
            scale = gamma * jax.lax.rsqrt(var + eps)    # (3, 1, D)
            shift = beta - mean * scale
            yg = yg * scale + shift

            # Activation ('RELU' in this instantiation, applied after every BN).
            yg = jnp.maximum(yg, 0.0)

            # nn.Dropout(p=0.0) between hidden layers is an exact identity.
            # TODO(synk): non-zero dropout_weight would need pltpu PRNG masking.
            if l != n_layers - 1:
                h = yg.reshape(n_branch * batch, d).astype(jnp.bfloat16)

        o_ref[...] = yg.reshape(n_branch * batch, -1).astype(o_ref.dtype)

    return kernel


def triplet_net_forward(triplet_data, params, *, eps=1e-5):
    """triplet_data: (3, B, 1024).  params: list of (w_bf16 (K,N), gb (2,N)).

    Returns (anchor_emb, pos_emb, neg_emb), each (B, embedding_dim) f32.
    """
    n_branch, B, Din = triplet_data.shape
    n_layers = len(params)
    Dout = params[-1][0].shape[1]

    # Fuse branches into the M dimension; feed bf16 to halve input DMA.
    x = triplet_data.reshape(n_branch * B, Din).astype(jnp.bfloat16)

    flat_params = []
    for (w, gb) in params:
        flat_params.append(w)
        flat_params.append(gb)

    kernel = _make_fused_mlp_kernel(n_layers, n_branch, B, eps)

    # No grid: single invocation, every operand fully resident in VMEM
    # (~3 MiB of bf16 weights + 48 KiB activations -> fits every generation,
    # including v7x's 64 MiB VMEM, with no retiling).
    out = pl.pallas_call(
        kernel,
        out_shape=jax.ShapeDtypeStruct((n_branch * B, Dout), jnp.float32),
    )(x, *flat_params)

    out = out.reshape(n_branch, B, Dout)
    return tuple(out[i] for i in range(n_branch))


# ----------------------------------------------------------------------------
# Pure-JAX reference (same bf16/f32 numerics as the kernel) for validation
# ----------------------------------------------------------------------------
def triplet_net_reference(triplet_data, params, *, eps=1e-5):
    outs = []
    for b in range(triplet_data.shape[0]):
        h = triplet_data[b].astype(jnp.bfloat16)
        y = None
        for (w, gb) in params:
            y = jnp.dot(h, w, preferred_element_type=jnp.float32)
            mean = jnp.mean(y, axis=0, keepdims=True)
            var = jnp.mean(jnp.square(y - mean), axis=0, keepdims=True)
            gamma = gb[0:1, :].astype(jnp.float32)
            beta = gb[1:2, :].astype(jnp.float32)
            scale = gamma * jax.lax.rsqrt(var + eps)
            shift = beta - mean * scale
            y = jnp.maximum(y * scale + shift, 0.0)
            h = y.astype(jnp.bfloat16)
        outs.append(y)
    return tuple(outs)


# ----------------------------------------------------------------------------
# TripletNet parameter construction (deterministic, mirrors __init__)
# ----------------------------------------------------------------------------
def build_triplet_net_params(key, *, input_dim, n_linear_layers, decay_rate,
                             embedding_dim):
    # Reproduce the in_features_list logic of TripletNet.__init__
    in_features_list = []
    for layer_num in range(n_linear_layers):
        if layer_num == 0:
            in_features_list.append(input_dim)
        elif layer_num == n_linear_layers - 1:
            in_features_list.append(embedding_dim)
        else:
            n_layer_features = int(math.floor(in_features_list[-1] * decay_rate))
            if n_layer_features < embedding_dim:
                n_layer_features = embedding_dim
            in_features_list.append(n_layer_features)

    params = []
    for layer_num in range(n_linear_layers):
        fan_in = input_dim if layer_num == 0 else in_features_list[layer_num - 1]
        fan_out = in_features_list[layer_num]
        key, wkey = jax.random.split(key)
        # xavier_uniform_: U(-a, a), a = sqrt(6 / (fan_in + fan_out)).
        a = math.sqrt(6.0 / (fan_in + fan_out))
        # Stored as (in, out) so the kernel computes x @ W; bf16 halves the
        # dominant HBM weight traffic and feeds the MXU natively.
        w = jax.random.uniform(wkey, (fan_in, fan_out), jnp.float32,
                               minval=-a, maxval=a).astype(jnp.bfloat16)
        # NOTE: the Linear bias (fill 0.01) is intentionally omitted — it is
        # exactly cancelled by the training-mode BatchNorm mean subtraction.
        # gamma/beta packed into one (2, fan_out) array -> one DMA descriptor.
        gamma = jnp.ones((fan_out,), jnp.float32)     # BN weight init
        beta = jnp.zeros((fan_out,), jnp.float32)     # BN bias init
        gb = jnp.stack([gamma, beta], axis=0)          # (2, fan_out)
        params.append((w, gb))
    return params


# ----------------------------------------------------------------------------
if __name__ == "__main__":
    hyperparameter_dict = {
        "n_linear_layers": 3,
        "decay_rate": 0.5,
        "embedding_dim": 32,
        "activation_function": "RELU",
        "dropout_weight": 0.0,
    }
    input_dim = 1024  # fixed by the module
    batch = 8

    key = jax.random.PRNGKey(0)
    pkey, dkey = jax.random.split(key)

    params = build_triplet_net_params(
        pkey,
        input_dim=input_dim,
        n_linear_layers=hyperparameter_dict["n_linear_layers"],
        decay_rate=hyperparameter_dict["decay_rate"],
        embedding_dim=hyperparameter_dict["embedding_dim"],
    )

    triplet_data = jax.random.normal(dkey, (3, batch, input_dim), jnp.float32)

    fwd = jax.jit(lambda t: triplet_net_forward(t, params))
    anchor_e, pos_e, neg_e = fwd(triplet_data)
    jax.block_until_ready((anchor_e, pos_e, neg_e))

    expected = (batch, hyperparameter_dict["embedding_dim"])
    assert anchor_e.shape == expected, anchor_e.shape
    assert pos_e.shape == expected and neg_e.shape == expected
    assert bool(jnp.all(jnp.isfinite(anchor_e)))
    assert bool(jnp.all(jnp.isfinite(pos_e)))
    assert bool(jnp.all(jnp.isfinite(neg_e)))

    # Compare against a pure-JAX reference with identical numerics (bf16
    # inputs/weights, f32 accumulation); loosened tolerance per review.
    ref_a, ref_p, ref_n = triplet_net_reference(triplet_data, params)
    assert bool(jnp.allclose(anchor_e, ref_a, atol=2e-2, rtol=2e-2))
    assert bool(jnp.allclose(pos_e, ref_p, atol=2e-2, rtol=2e-2))
    assert bool(jnp.allclose(neg_e, ref_n, atol=2e-2, rtol=2e-2))

    print("KERNEL_OK")
</pallas_src>

<mosaic_0001>
module attributes {stable_mosaic.version = 11 : i64} {
  func.func @kernel(%arg0: memref<24x1024xbf16, #tpu.memory_space<vmem>>, %arg1: memref<1024x1024xbf16, #tpu.memory_space<vmem>>, %arg2: memref<2x1024xf32, #tpu.memory_space<vmem>>, %arg3: memref<1024x512xbf16, #tpu.memory_space<vmem>>, %arg4: memref<2x512xf32, #tpu.memory_space<vmem>>, %arg5: memref<512x32xbf16, #tpu.memory_space<vmem>>, %arg6: memref<2x32xf32, #tpu.memory_space<vmem>>, %arg7: memref<24x32xf32, #tpu.memory_space<vmem>>) attributes {dimension_semantics = [], scalar_prefetch = 0 : i64, scratch_operands = 0 : i64, tpu.core_type = #tpu.core_type<tc>} {
    %c0 = arith.constant 0 : index
    %c0_0 = arith.constant 0 : index
    %0 = vector.load %arg0[%c0, %c0_0] : memref<24x1024xbf16, #tpu.memory_space<vmem>>, vector<24x1024xbf16>
    %c0_1 = arith.constant 0 : index
    %c0_2 = arith.constant 0 : index
    %1 = vector.load %arg1[%c0_1, %c0_2] : memref<1024x1024xbf16, #tpu.memory_space<vmem>>, vector<1024x1024xbf16>
    %cst = arith.constant dense<0.000000e+00> : vector<24x1024xf32>
    %2 = tpu.matmul %0, %1, %cst {dimension_numbers = #tpu.dot_dimension_numbers<[1], [0], [0], [1], [0, 0, 1, 1], [], []>} : vector<24x1024xbf16>, vector<1024x1024xbf16>, vector<24x1024xf32> -> vector<24x1024xf32>
    %3 = vector.shape_cast %2 : vector<24x1024xf32> to vector<3x8x1024xf32>
    %cst_3 = arith.constant dense<0.000000e+00> : vector<3x1024xf32>
    %4 = vector.multi_reduction <add>, %3, %cst_3 [1] : vector<3x8x1024xf32> to vector<3x1024xf32>
    %5 = vector.shape_cast %4 : vector<3x1024xf32> to vector<3x1x1024xf32>
    %cst_4 = arith.constant 8.000000e+00 : f32
    %6 = vector.broadcast %cst_4 : f32 to vector<3x1x1024xf32>
    %7 = arith.divf %5, %6 : vector<3x1x1024xf32>
    %8 = vector.broadcast %7 : vector<3x1x1024xf32> to vector<3x8x1024xf32>
    %9 = arith.subf %3, %8 : vector<3x8x1024xf32>
    %10 = arith.mulf %9, %9 : vector<3x8x1024xf32>
    %cst_5 = arith.constant dense<0.000000e+00> : vector<3x1024xf32>
    %11 = vector.multi_reduction <add>, %10, %cst_5 [1] : vector<3x8x1024xf32> to vector<3x1024xf32>
    %12 = vector.shape_cast %11 : vector<3x1024xf32> to vector<3x1x1024xf32>
    %cst_6 = arith.constant 8.000000e+00 : f32
    %13 = vector.broadcast %cst_6 : f32 to vector<3x1x1024xf32>
    %14 = arith.divf %12, %13 : vector<3x1x1024xf32>
    %c0_7 = arith.constant 0 : index
    %c0_8 = arith.constant 0 : index
    %15 = vector.load %arg2[%c0_7, %c0_8] : memref<2x1024xf32, #tpu.memory_space<vmem>>, vector<2x1024xf32>
    %16 = vector.extract_strided_slice %15 {offsets = [0, 0], sizes = [1, 1024], strides = [1, 1]} : vector<2x1024xf32> to vector<1x1024xf32>
    %17 = vector.extract_strided_slice %15 {offsets = [1, 0], sizes = [1, 1024], strides = [1, 1]} : vector<2x1024xf32> to vector<1x1024xf32>
    %cst_9 = arith.constant 9.99999974E-6 : f32
    %18 = vector.broadcast %cst_9 : f32 to vector<3x1x1024xf32>
    %19 = arith.addf %14, %18 : vector<3x1x1024xf32>
    %20 = math.rsqrt %19 : vector<3x1x1024xf32>
    %21 = vector.shape_cast %16 : vector<1x1024xf32> to vector<1x1x1024xf32>
    %22 = vector.broadcast %21 : vector<1x1x1024xf32> to vector<3x1x1024xf32>
    %23 = arith.mulf %22, %20 : vector<3x1x1024xf32>
    %24 = arith.mulf %7, %23 : vector<3x1x1024xf32>
    %25 = vector.shape_cast %17 : vector<1x1024xf32> to vector<1x1x1024xf32>
    %26 = vector.broadcast %25 : vector<1x1x1024xf32> to vector<3x1x1024xf32>
    %27 = arith.subf %26, %24 : vector<3x1x1024xf32>
    %28 = vector.broadcast %23 : vector<3x1x1024xf32> to vector<3x8x1024xf32>
    %29 = arith.mulf %3, %28 : vector<3x8x1024xf32>
    %30 = vector.broadcast %27 : vector<3x1x1024xf32> to vector<3x8x1024xf32>
    %31 = arith.addf %29, %30 : vector<3x8x1024xf32>
    %cst_10 = arith.constant 0.000000e+00 : f32
    %32 = vector.broadcast %cst_10 : f32 to vector<3x8x1024xf32>
    %33 = arith.maximumf %31, %32 : vector<3x8x1024xf32>
    %34 = vector.shape_cast %33 : vector<3x8x1024xf32> to vector<24x1024xf32>
    %35 = arith.truncf %34 : vector<24x1024xf32> to vector<24x1024xbf16>
    %c0_11 = arith.constant 0 : index
    %c0_12 = arith.constant 0 : index
    %36 = vector.load %arg3[%c0_11, %c0_12] : memref<1024x512xbf16, #tpu.memory_space<vmem>>, vector<1024x512xbf16>
    %cst_13 = arith.constant dense<0.000000e+00> : vector<24x512xf32>
    %37 = tpu.matmul %35, %36, %cst_13 {dimension_numbers = #tpu.dot_dimension_numbers<[1], [0], [0], [1], [0, 0, 1, 1], [], []>} : vector<24x1024xbf16>, vector<1024x512xbf16>, vector<24x512xf32> -> vector<24x512xf32>
    %38 = vector.shape_cast %37 : vector<24x512xf32> to vector<3x8x512xf32>
    %cst_14 = arith.constant dense<0.000000e+00> : vector<3x512xf32>
    %39 = vector.multi_reduction <add>, %38, %cst_14 [1] : vector<3x8x512xf32> to vector<3x512xf32>
    %40 = vector.shape_cast %39 : vector<3x512xf32> to vector<3x1x512xf32>
    %cst_15 = arith.constant 8.000000e+00 : f32
    %41 = vector.broadcast %cst_15 : f32 to vector<3x1x512xf32>
    %42 = arith.divf %40, %41 : vector<3x1x512xf32>
    %43 = vector.broadcast %42 : vector<3x1x512xf32> to vector<3x8x512xf32>
    %44 = arith.subf %38, %43 : vector<3x8x512xf32>
    %45 = arith.mulf %44, %44 : vector<3x8x512xf32>
    %cst_16 = arith.constant dense<0.000000e+00> : vector<3x512xf32>
    %46 = vector.multi_reduction <add>, %45, %cst_16 [1] : vector<3x8x512xf32> to vector<3x512xf32>
    %47 = vector.shape_cast %46 : vector<3x512xf32> to vector<3x1x512xf32>
    %cst_17 = arith.constant 8.000000e+00 : f32
    %48 = vector.broadcast %cst_17 : f32 to vector<3x1x512xf32>
    %49 = arith.divf %47, %48 : vector<3x1x512xf32>
    %c0_18 = arith.constant 0 : index
    %c0_19 = arith.constant 0 : index
    %50 = vector.load %arg4[%c0_18, %c0_19] : memref<2x512xf32, #tpu.memory_space<vmem>>, vector<2x512xf32>
    %51 = vector.extract_strided_slice %50 {offsets = [0, 0], sizes = [1, 512], strides = [1, 1]} : vector<2x512xf32> to vector<1x512xf32>
    %52 = vector.extract_strided_slice %50 {offsets = [1, 0], sizes = [1, 512], strides = [1, 1]} : vector<2x512xf32> to vector<1x512xf32>
    %cst_20 = arith.constant 9.99999974E-6 : f32
    %53 = vector.broadcast %cst_20 : f32 to vector<3x1x512xf32>
    %54 = arith.addf %49, %53 : vector<3x1x512xf32>
    %55 = math.rsqrt %54 : vector<3x1x512xf32>
    %56 = vector.shape_cast %51 : vector<1x512xf32> to vector<1x1x512xf32>
    %57 = vector.broadcast %56 : vector<1x1x512xf32> to vector<3x1x512xf32>
    %58 = arith.mulf %57, %55 : vector<3x1x512xf32>
    %59 = arith.mulf %42, %58 : vector<3x1x512xf32>
    %60 = vector.shape_cast %52 : vector<1x512xf32> to vector<1x1x512xf32>
    %61 = vector.broadcast %60 : vector<1x1x512xf32> to vector<3x1x512xf32>
    %62 = arith.subf %61, %59 : vector<3x1x512xf32>
    %63 = vector.broadcast %58 : vector<3x1x512xf32> to vector<3x8x512xf32>
    %64 = arith.mulf %38, %63 : vector<3x8x512xf32>
    %65 = vector.broadcast %62 : vector<3x1x512xf32> to vector<3x8x512xf32>
    %66 = arith.addf %64, %65 : vector<3x8x512xf32>
    %cst_21 = arith.constant 0.000000e+00 : f32
    %67 = vector.broadcast %cst_21 : f32 to vector<3x8x512xf32>
    %68 = arith.maximumf %66, %67 : vector<3x8x512xf32>
    %69 = vector.shape_cast %68 : vector<3x8x512xf32> to vector<24x512xf32>
    %70 = arith.truncf %69 : vector<24x512xf32> to vector<24x512xbf16>
    %c0_22 = arith.constant 0 : index
    %c0_23 = arith.constant 0 : index
    %71 = vector.load %arg5[%c0_22, %c0_23] : memref<512x32xbf16, #tpu.memory_space<vmem>>, vector<512x32xbf16>
    %cst_24 = arith.constant dense<0.000000e+00> : vector<24x32xf32>
    %72 = tpu.matmul %70, %71, %cst_24 {dimension_numbers = #tpu.dot_dimension_numbers<[1], [0], [0], [1], [0, 0, 1, 1], [], []>} : vector<24x512xbf16>, vector<512x32xbf16>, vector<24x32xf32> -> vector<24x32xf32>
    %73 = vector.shape_cast %72 : vector<24x32xf32> to vector<3x8x32xf32>
    %cst_25 = arith.constant dense<0.000000e+00> : vector<3x32xf32>
    %74 = vector.multi_reduction <add>, %73, %cst_25 [1] : vector<3x8x32xf32> to vector<3x32xf32>
    %75 = vector.shape_cast %74 : vector<3x32xf32> to vector<3x1x32xf32>
    %cst_26 = arith.constant 8.000000e+00 : f32
    %76 = vector.broadcast %cst_26 : f32 to vector<3x1x32xf32>
    %77 = arith.divf %75, %76 : vector<3x1x32xf32>
    %78 = vector.broadcast %77 : vector<3x1x32xf32> to vector<3x8x32xf32>
    %79 = arith.subf %73, %78 : vector<3x8x32xf32>
    %80 = arith.mulf %79, %79 : vector<3x8x32xf32>
    %cst_27 = arith.constant dense<0.000000e+00> : vector<3x32xf32>
    %81 = vector.multi_reduction <add>, %80, %cst_27 [1] : vector<3x8x32xf32> to vector<3x32xf32>
    %82 = vector.shape_cast %81 : vector<3x32xf32> to vector<3x1x32xf32>
    %cst_28 = arith.constant 8.000000e+00 : f32
    %83 = vector.broadcast %cst_28 : f32 to vector<3x1x32xf32>
    %84 = arith.divf %82, %83 : vector<3x1x32xf32>
    %c0_29 = arith.constant 0 : index
    %c0_30 = arith.constant 0 : index
    %85 = vector.load %arg6[%c0_29, %c0_30] : memref<2x32xf32, #tpu.memory_space<vmem>>, vector<2x32xf32>
    %86 = vector.extract_strided_slice %85 {offsets = [0, 0], sizes = [1, 32], strides = [1, 1]} : vector<2x32xf32> to vector<1x32xf32>
    %87 = vector.extract_strided_slice %85 {offsets = [1, 0], sizes = [1, 32], strides = [1, 1]} : vector<2x32xf32> to vector<1x32xf32>
    %cst_31 = arith.constant 9.99999974E-6 : f32
    %88 = vector.broadcast %cst_31 : f32 to vector<3x1x32xf32>
    %89 = arith.addf %84, %88 : vector<3x1x32xf32>
    %90 = math.rsqrt %89 : vector<3x1x32xf32>
    %91 = vector.shape_cast %86 : vector<1x32xf32> to vector<1x1x32xf32>
    %92 = vector.broadcast %91 : vector<1x1x32xf32> to vector<3x1x32xf32>
    %93 = arith.mulf %92, %90 : vector<3x1x32xf32>
    %94 = arith.mulf %77, %93 : vector<3x1x32xf32>
    %95 = vector.shape_cast %87 : vector<1x32xf32> to vector<1x1x32xf32>
    %96 = vector.broadcast %95 : vector<1x1x32xf32> to vector<3x1x32xf32>
    %97 = arith.subf %96, %94 : vector<3x1x32xf32>
    %98 = vector.broadcast %93 : vector<3x1x32xf32> to vector<3x8x32xf32>
    %99 = arith.mulf %73, %98 : vector<3x8x32xf32>
    %100 = vector.broadcast %97 : vector<3x1x32xf32> to vector<3x8x32xf32>
    %101 = arith.addf %99, %100 : vector<3x8x32xf32>
    %cst_32 = arith.constant 0.000000e+00 : f32
    %102 = vector.broadcast %cst_32 : f32 to vector<3x8x32xf32>
    %103 = arith.maximumf %101, %102 : vector<3x8x32xf32>
    %104 = vector.shape_cast %103 : vector<3x8x32xf32> to vector<24x32xf32>
    %c0_33 = arith.constant 0 : index
    %c0_34 = arith.constant 0 : index
    %105 = vector.load %arg7[%c0_33, %c0_34] : memref<24x32xf32, #tpu.memory_space<vmem>>, vector<24x32xf32>
    tpu.vector_store %arg7[%c0_33, %c0_34], %104 {strides = array<i32>} : memref<24x32xf32, #tpu.memory_space<vmem>>, vector<24x32xf32>,
    return
  }
}

</mosaic_0001>

<llo_original>
// kernel: _lambda_.1
$region0: #{_lambda_.1}
  #allocation0 [shape = 'u32[]', space=smem, size = 0x4, offset = 0x4, fixed_abs, tag = 'smem constant byte address 0x4 - core index']
  #allocation1 [shape = 'u32[144,128]{1,0:T(1,128)}', space=vmem, size = 0x12000, scoped, tag = 'internal scratch']
  %s0 = inlined_call_operand.vmem [shape: bf16[24,1024], index: 0, kind: input, shape index: {}]
  %s1 = inlined_call_operand.vmem [shape: bf16[1024,1024], index: 1, kind: input, shape index: {}]
  %s2 = inlined_call_operand.vmem [shape: f32[2,1024], index: 2, kind: input, shape index: {}]
  %s3 = inlined_call_operand.vmem [shape: bf16[1024,512], index: 3, kind: input, shape index: {}]
  %s4 = inlined_call_operand.vmem [shape: f32[2,512], index: 4, kind: input, shape index: {}]
  %s5 = inlined_call_operand.vmem [shape: bf16[512,32], index: 5, kind: input, shape index: {}]
  %s6 = inlined_call_operand.vmem [shape: f32[2,32], index: 6, kind: input, shape index: {}]
  %s7 = inlined_call_operand.vmem [shape: f32[24,32], index: 7, kind: output, shape index: {}]
  %s8 = sld [smem:[#allocation0]]
  $region38: #{_lambda_.1} parent=0
    _
  %s10 = ssub.s32 1, %s8
  %s11 = scalar_select 0, %s10, %s8
  // Predicated region
  $region2: #{_lambda_.1} parent=0 // pred_check
    _
  $region3: #{_lambda_.1} parent=0 // pred_check_branch
    %13 = sbr.rel (0) target = $region5
  $region4: #{_lambda_.1} parent=0 // pred_region
    _
  $region5: #{_lambda_.1} parent=0 // pred_fallthru
    _
  // Predicated region
  $region6: #{_lambda_.1} parent=0 // pred_check
    _
  $region7: #{_lambda_.1} parent=0 // pred_check_branch
    %15 = sbr.rel (0) target = $region9
  $region8: #{_lambda_.1} parent=0 // pred_region
    _
  $region9: #{_lambda_.1} parent=0 // pred_fallthru
    _
  // Predicated region
  $region10: #{_lambda_.1} parent=0 // pred_check
    _
  $region11: #{_lambda_.1} parent=0 // pred_check_branch
    %17 = sbr.rel (0) target = $region13
  $region12: #{_lambda_.1} parent=0 // pred_region
    _
  $region13: #{_lambda_.1} parent=0 // pred_fallthru
    _
  // Predicated region
  $region14: #{_lambda_.1} parent=0 // pred_check
    _
  $region15: #{_lambda_.1} parent=0 // pred_check_branch
    %19 = sbr.rel (0) target = $region17
  $region16: #{_lambda_.1} parent=0 // pred_region
    _
  $region17: #{_lambda_.1} parent=0 // pred_fallthru
    _
  // Predicated region
  $region18: #{_lambda_.1} parent=0 // pred_check
    _
  $region19: #{_lambda_.1} parent=0 // pred_check_branch
    %21 = sbr.rel (0) target = $region21
  $region20: #{_lambda_.1} parent=0 // pred_region
    _
  $region21: #{_lambda_.1} parent=0 // pred_fallthru
    _
  // Predicated region
  $region22: #{_lambda_.1} parent=0 // pred_check
    _
  $region23: #{_lambda_.1} parent=0 // pred_check_branch
    %23 = sbr.rel (0) target = $region25
  $region24: #{_lambda_.1} parent=0 // pred_region
    _
  $region25: #{_lambda_.1} parent=0 // pred_fallthru
    _
  // Predicated region
  $region26: #{_lambda_.1} parent=0 // pred_check
    _
  $region27: #{_lambda_.1} parent=0 // pred_check_branch
    %25 = sbr.rel (0) target = $region29
  $region28: #{_lambda_.1} parent=0 // pred_region
    _
  $region29: #{_lambda_.1} parent=0 // pred_fallthru
    _
  %v27 = vld [vmem:[%s0] sm:$0xff]
  %v28 = vld [vmem:[%s0 + $0x8] sm:$0xff]
  %v29 = vld [vmem:[%s0 + $0x10] sm:$0xff]
  %v30 = vld [vmem:[%s0 + $0x18] sm:$0xff]
  %v31 = vld [vmem:[%s0 + $0x20] sm:$0xff]
  %v32 = vld [vmem:[%s0 + $0x28] sm:$0xff]
  %v33 = vld [vmem:[%s0 + $0x30] sm:$0xff]
  %v34 = vld [vmem:[%s0 + $0x38] sm:$0xff]
  %v35 = vld [vmem:[%s0 + $0x40] sm:$0xff]
  %v36 = vld [vmem:[%s0 + $0x48] sm:$0xff]
  %v37 = vld [vmem:[%s0 + $0x50] sm:$0xff]
  %v38 = vld [vmem:[%s0 + $0x58] sm:$0xff]
  %v39 = vld [vmem:[%s1] sm:$0xff]
  %v40 = vld [vmem:[%s1 + $0x8] sm:$0xff]
  %v41 = vld [vmem:[%s1 + $0x10] sm:$0xff]
  %v42 = vld [vmem:[%s1 + $0x18] sm:$0xff]
  %v43 = vld [vmem:[%s1 + $0x20] sm:$0xff]
  %v44 = vld [vmem:[%s1 + $0x28] sm:$0xff]
  %v45 = vld [vmem:[%s1 + $0x30] sm:$0xff]
  %v46 = vld [vmem:[%s1 + $0x38] sm:$0xff]
  %v47 = vld [vmem:[%s1 + $0x40] sm:$0xff]
  %v48 = vld [vmem:[%s1 + $0x48] sm:$0xff]
  %v49 = vld [vmem:[%s1 + $0x50] sm:$0xff]
  %v50 = vld [vmem:[%s1 + $0x58] sm:$0xff]
  %v51 = vld [vmem:[%s1 + $0x60] sm:$0xff]
  %v52 = vld [vmem:[%s1 + $0x68] sm:$0xff]
  %v53 = vld [vmem:[%s1 + $0x70] sm:$0xff]
  %v54 = vld [vmem:[%s1 + $0x78] sm:$0xff]
  %v55 = vld [vmem:[%s1 + $0x80] sm:$0xff]
  %v56 = vld [vmem:[%s1 + $0x88] sm:$0xff]
  %v57 = vld [vmem:[%s1 + $0x90] sm:$0xff]
  %v58 = vld [vmem:[%s1 + $0x98] sm:$0xff]
  %v59 = vld [vmem:[%s1 + $0xa0] sm:$0xff]
  %v60 = vld [vmem:[%s1 + $0xa8] sm:$0xff]
  %v61 = vld [vmem:[%s1 + $0xb0] sm:$0xff]
  %v62 = vld [vmem:[%s1 + $0xb8] sm:$0xff]
  %v63 = vld [vmem:[%s1 + $0xc0] sm:$0xff]
  %v64 = vld [vmem:[%s1 + $0xc8] sm:$0xff]
  %v65 = vld [vmem:[%s1 + $0xd0] sm:$0xff]
  %v66 = vld [vmem:[%s1 + $0xd8] sm:$0xff]
  %v67 = vld [vmem:[%s1 + $0xe0] sm:$0xff]
  %v68 = vld [vmem:[%s1 + $0xe8] sm:$0xff]
  %v69 = vld [vmem:[%s1 + $0xf0] sm:$0xff]
  %v70 = vld [vmem:[%s1 + $0xf8] sm:$0xff]
  %v71 = vld [vmem:[%s1 + $0x100] sm:$0xff]
  %v72 = vld [vmem:[%s1 + $0x108] sm:$0xff]
  %v73 = vld [vmem:[%s1 + $0x110] sm:$0xff]
  %v74 = vld [vmem:[%s1 + $0x118] sm:$0xff]
  %v75 = vld [vmem:[%s1 + $0x120] sm:$0xff]
  %v76 = vld [vmem:[%s1 + $0x128] sm:$0xff]
  %v77 = vld [vmem:[%s1 + $0x130] sm:$0xff]
  %v78 = vld [vmem:[%s1 + $0x138] sm:$0xff]
  %v79 = vld [vmem:[%s1 + $0x140] sm:$0xff]
  %v80 = vld [vmem:[%s1 + $0x148] sm:$0xff]
  %v81 = vld [vmem:[%s1 + $0x150] sm:$0xff]
  %v82 = vld [vmem:[%s1 + $0x158] sm:$0xff]
  %v83 = vld [vmem:[%s1 + $0x160] sm:$0xff]
  %v84 = vld [vmem:[%s1 + $0x168] sm:$0xff]
  %v85 = vld [vmem:[%s1 + $0x170] sm:$0xff]
  %v86 = vld [vmem:[%s1 + $0x178] sm:$0xff]
  %v87 = vld [vmem:[%s1 + $0x180] sm:$0xff]
  %v88 = vld [vmem:[%s1 + $0x188] sm:$0xff]
  %v89 = vld [vmem:[%s1 + $0x190] sm:$0xff]
  %v90 = vld [vmem:[%s1 + $0x198] sm:$0xff]
  %v91 = vld [vmem:[%s1 + $0x1a0] sm:$0xff]
  %v92 = vld [vmem:[%s1 + $0x1a8] sm:$0xff]
  %v93 = vld [vmem:[%s1 + $0x1b0] sm:$0xff]
  %v94 = vld [vmem:[%s1 + $0x1b8] sm:$0xff]
  %v95 = vld [vmem:[%s1 + $0x1c0] sm:$0xff]
  %v96 = vld [vmem:[%s1 + $0x1c8] sm:$0xff]
  %v97 = vld [vmem:[%s1 + $0x1d0] sm:$0xff]
  %v98 = vld [vmem:[%s1 + $0x1d8] sm:$0xff]
  %v99 = vld [vmem:[%s1 + $0x1e0] sm:$0xff]
  %v100 = vld [vmem:[%s1 + $0x1e8] sm:$0xff]
  %v101 = vld [vmem:[%s1 + $0x1f0] sm:$0xff]
  %v102 = vld [vmem:[%s1 + $0x1f8] sm:$0xff]
  %v103 = vld [vmem:[%s1 + $0x200] sm:$0xff]
  %v104 = vld [vmem:[%s1 + $0x208] sm:$0xff]
  %v105 = vld [vmem:[%s1 + $0x210] sm:$0xff]
  %v106 = vld [vmem:[%s1 + $0x218] sm:$0xff]
  %v107 = vld [vmem:[%s1 + $0x220] sm:$0xff]
  %v108 = vld [vmem:[%s1 + $0x228] sm:$0xff]
  %v109 = vld [vmem:[%s1 + $0x230] sm:$0xff]
  %v110 = vld [vmem:[%s1 + $0x238] sm:$0xff]
  %v111 = vld [vmem:[%s1 + $0x240] sm:$0xff]
  %v112 = vld [vmem:[%s1 + $0x248] sm:$0xff]
  %v113 = vld [vmem:[%s1 + $0x250] sm:$0xff]
  %v114 = vld [vmem:[%s1 + $0x258] sm:$0xff]
  %v115 = vld [vmem:[%s1 + $0x260] sm:$0xff]
  %v116 = vld [vmem:[%s1 + $0x268] sm:$0xff]
  %v117 = vld [vmem:[%s1 + $0x270] sm:$0xff]
  %v118 = vld [vmem:[%s1 + $0x278] sm:$0xff]
  %v119 = vld [vmem:[%s1 + $0x280] sm:$0xff]
  %v120 = vld [vmem:[%s1 + $0x288] sm:$0xff]
  %v121 = vld [vmem:[%s1 + $0x290] sm:$0xff]
  %v122 = vld [vmem:[%s1 + $0x298] sm:$0xff]
  %v123 = vld [vmem:[%s1 + $0x2a0] sm:$0xff]
  %v124 = vld [vmem:[%s1 + $0x2a8] sm:$0xff]
  %v125 = vld [vmem:[%s1 + $0x2b0] sm:$0xff]
  %v126 = vld [vmem:[%s1 + $0x2b8] sm:$0xff]
  %v127 = vld [vmem:[%s1 + $0x2c0] sm:$0xff]
  %v128 = vld [vmem:[%s1 + $0x2c8] sm:$0xff]
  %v129 = vld [vmem:[%s1 + $0x2d0] sm:$0xff]
  %v130 = vld [vmem:[%s1 + $0x2d8] sm:$0xff]
  %v131 = vld [vmem:[%s1 + $0x2e0] sm:$0xff]
  %v132 = vld [vmem:[%s1 + $0x2e8] sm:$0xff]
  %v133 = vld [vmem:[%s1 + $0x2f0] sm:$0xff]
  %v134 = vld [vmem:[%s1 + $0x2f8] sm:$0xff]
  %v135 = vld [vmem:[%s1 + $0x300] sm:$0xff]
  %v136 = vld [vmem:[%s1 + $0x308] sm:$0xff]
  %v137 = vld [vmem:[%s1 + $0x310] sm:$0xff]
  %v138 = vld [vmem:[%s1 + $0x318] sm:$0xff]
  %v139 = vld [vmem:[%s1 + $0x320] sm:$0xff]
  %v140 = vld [vmem:[%s1 + $0x328] sm:$0xff]
  %v141 = vld [vmem:[%s1 + $0x330] sm:$0xff]
  %v142 = vld [vmem:[%s1 + $0x338] sm:$0xff]
  %v143 = vld [vmem:[%s1 + $0x340] sm:$0xff]
  %v144 = vld [vmem:[%s1 + $0x348] sm:$0xff]
  %v145 = vld [vmem:[%s1 + $0x350] sm:$0xff]
  %v146 = vld [vmem:[%s1 + $0x358] sm:$0xff]
  %v147 = vld [vmem:[%s1 + $0x360] sm:$0xff]
  %v148 = vld [vmem:[%s1 + $0x368] sm:$0xff]
  %v149 = vld [vmem:[%s1 + $0x370] sm:$0xff]
  %v150 = vld [vmem:[%s1 + $0x378] sm:$0xff]
  %v151 = vld [vmem:[%s1 + $0x380] sm:$0xff]
  %v152 = vld [vmem:[%s1 + $0x388] sm:$0xff]
  %v153 = vld [vmem:[%s1 + $0x390] sm:$0xff]
  %v154 = vld [vmem:[%s1 + $0x398] sm:$0xff]
  %v155 = vld [vmem:[%s1 + $0x3a0] sm:$0xff]
  %v156 = vld [vmem:[%s1 + $0x3a8] sm:$0xff]
  %v157 = vld [vmem:[%s1 + $0x3b0] sm:$0xff]
  %v158 = vld [vmem:[%s1 + $0x3b8] sm:$0xff]
  %v159 = vld [vmem:[%s1 + $0x3c0] sm:$0xff]
  %v160 = vld [vmem:[%s1 + $0x3c8] sm:$0xff]
  %v161 = vld [vmem:[%s1 + $0x3d0] sm:$0xff]
  %v162 = vld [vmem:[%s1 + $0x3d8] sm:$0xff]
  %v163 = vld [vmem:[%s1 + $0x3e0] sm:$0xff]
  %v164 = vld [vmem:[%s1 + $0x3e8] sm:$0xff]
  %v165 = vld [vmem:[%s1 + $0x3f0] sm:$0xff]
  %v166 = vld [vmem:[%s1 + $0x3f8] sm:$0xff]
  %v167 = vld [vmem:[%s1 + $0x400] sm:$0xff]
  %v168 = vld [vmem:[%s1 + $0x408] sm:$0xff]
  %v169 = vld [vmem:[%s1 + $0x410] sm:$0xff]
  %v170 = vld [vmem:[%s1 + $0x418] sm:$0xff]
  %v171 = vld [vmem:[%s1 + $0x420] sm:$0xff]
  %v172 = vld [vmem:[%s1 + $0x428] sm:$0xff]
  %v173 = vld [vmem:[%s1 + $0x430] sm:$0xff]
  %v174 = vld [vmem:[%s1 + $0x438] sm:$0xff]
  %v175 = vld [vmem:[%s1 + $0x440] sm:$0xff]
  %v176 = vld [vmem:[%s1 + $0x448] sm:$0xff]
  %v177 = vld [vmem:[%s1 + $0x450] sm:$0xff]
  %v178 = vld [vmem:[%s1 + $0x458] sm:$0xff]
  %v179 = vld [vmem:[%s1 + $0x460] sm:$0xff]
  %v180 = vld [vmem:[%s1 + $0x468] sm:$0xff]
  %v181 = vld [vmem:[%s1 + $0x470] sm:$0xff]
  %v182 = vld [vmem:[%s1 + $0x478] sm:$0xff]
  %v183 = vld [vmem:[%s1 + $0x480] sm:$0xff]
  %v184 = vld [vmem:[%s1 + $0x488] sm:$0xff]
  %v185 = vld [vmem:[%s1 + $0x490] sm:$0xff]
  %v186 = vld [vmem:[%s1 + $0x498] sm:$0xff]
  %v187 = vld [vmem:[%s1 + $0x4a0] sm:$0xff]
  %v188 = vld [vmem:[%s1 + $0x4a8] sm:$0xff]
  %v189 = vld [vmem:[%s1 + $0x4b0] sm:$0xff]
  %v190 = vld [vmem:[%s1 + $0x4b8] sm:$0xff]
  %v191 = vld [vmem:[%s1 + $0x4c0] sm:$0xff]
  %v192 = vld [vmem:[%s1 + $0x4c8] sm:$0xff]
  %v193 = vld [vmem:[%s1 + $0x4d0] sm:$0xff]
  %v194 = vld [vmem:[%s1 + $0x4d8] sm:$0xff]
  %v195 = vld [vmem:[%s1 + $0x4e0] sm:$0xff]
  %v196 = vld [vmem:[%s1 + $0x4e8] sm:$0xff]
  %v197 = vld [vmem:[%s1 + $0x4f0] sm:$0xff]
  %v198 = vld [vmem:[%s1 + $0x4f8] sm:$0xff]
  %v199 = vld [vmem:[%s1 + $0x500] sm:$0xff]
  %v200 = vld [vmem:[%s1 + $0x508] sm:$0xff]
  %v201 = vld [vmem:[%s1 + $0x510] sm:$0xff]
  %v202 = vld [vmem:[%s1 + $0x518] sm:$0xff]
  %v203 = vld [vmem:[%s1 + $0x520] sm:$0xff]
  %v204 = vld [vmem:[%s1 + $0x528] sm:$0xff]
  %v205 = vld [vmem:[%s1 + $0x530] sm:$0xff]
  %v206 = vld [vmem:[%s1 + $0x538] sm:$0xff]
  %v207 = vld [vmem:[%s1 + $0x540] sm:$0xff]
  %v208 = vld [vmem:[%s1 + $0x548] sm:$0xff]
  %v209 = vld [vmem:[%s1 + $0x550] sm:$0xff]
  %v210 = vld [vmem:[%s1 + $0x558] sm:$0xff]
  %v211 = vld [vmem:[%s1 + $0x560] sm:$0xff]
  %v212 = vld [vmem:[%s1 + $0x568] sm:$0xff]
  %v213 = vld [vmem:[%s1 + $0x570] sm:$0xff]
  %v214 = vld [vmem:[%s1 + $0x578] sm:$0xff]
  %v215 = vld [vmem:[%s1 + $0x580] sm:$0xff]
  %v216 = vld [vmem:[%s1 + $0x588] sm:$0xff]
  %v217 = vld [vmem:[%s1 + $0x590] sm:$0xff]
  %v218 = vld [vmem:[%s1 + $0x598] sm:$0xff]
  %v219 = vld [vmem:[%s1 + $0x5a0] sm:$0xff]
  %v220 = vld [vmem:[%s1 + $0x5a8] sm:$0xff]
  %v221 = vld [vmem:[%s1 + $0x5b0] sm:$0xff]
  %v222 = vld [vmem:[%s1 + $0x5b8] sm:$0xff]
  %v223 = vld [vmem:[%s1 + $0x5c0] sm:$0xff]
  %v224 = vld [vmem:[%s1 + $0x5c8] sm:$0xff]
  %v225 = vld [vmem:[%s1 + $0x5d0] sm:$0xff]
  %v226 = vld [vmem:[%s1 + $0x5d8] sm:$0xff]
  %v227 = vld [vmem:[%s1 + $0x5e0] sm:$0xff]
  %v228 = vld [vmem:[%s1 + $0x5e8] sm:$0xff]
  %v229 = vld [vmem:[%s1 + $0x5f0] sm:$0xff]
  %v230 = vld [vmem:[%s1 + $0x5f8] sm:$0xff]
  %v231 = vld [vmem:[%s1 + $0x600] sm:$0xff]
  %v232 = vld [vmem:[%s1 + $0x608] sm:$0xff]
  %v233 = vld [vmem:[%s1 + $0x610] sm:$0xff]
  %v234 = vld [vmem:[%s1 + $0x618] sm:$0xff]
  %v235 = vld [vmem:[%s1 + $0x620] sm:$0xff]
  %v236 = vld [vmem:[%s1 + $0x628] sm:$0xff]
  %v237 = vld [vmem:[%s1 + $0x630] sm:$0xff]
  %v238 = vld [vmem:[%s1 + $0x638] sm:$0xff]
  %v239 = vld [vmem:[%s1 + $0x640] sm:$0xff]
  %v240 = vld [vmem:[%s1 + $0x648] sm:$0xff]
  %v241 = vld [vmem:[%s1 + $0x650] sm:$0xff]
  %v242 = vld [vmem:[%s1 + $0x658] sm:$0xff]
  %v243 = vld [vmem:[%s1 + $0x660] sm:$0xff]
  %v244 = vld [vmem:[%s1 + $0x668] sm:$0xff]
  %v245 = vld [vmem:[%s1 + $0x670] sm:$0xff]
  %v246 = vld [vmem:[%s1 + $0x678] sm:$0xff]
  %v247 = vld [vmem:[%s1 + $0x680] sm:$0xff]
  %v248 = vld [vmem:[%s1 + $0x688] sm:$0xff]
  %v249 = vld [vmem:[%s1 + $0x690] sm:$0xff]
  %v250 = vld [vmem:[%s1 + $0x698] sm:$0xff]
  %v251 = vld [vmem:[%s1 + $0x6a0] sm:$0xff]
  %v252 = vld [vmem:[%s1 + $0x6a8] sm:$0xff]
  %v253 = vld [vmem:[%s1 + $0x6b0] sm:$0xff]
  %v254 = vld [vmem:[%s1 + $0x6b8] sm:$0xff]
  %v255 = vld [vmem:[%s1 + $0x6c0] sm:$0xff]
  %v256 = vld [vmem:[%s1 + $0x6c8] sm:$0xff]
  %v257 = vld [vmem:[%s1 + $0x6d0] sm:$0xff]
  %v258 = vld [vmem:[%s1 + $0x6d8] sm:$0xff]
  %v259 = vld [vmem:[%s1 + $0x6e0] sm:$0xff]
  %v260 = vld [vmem:[%s1 + $0x6e8] sm:$0xff]
  %v261 = vld [vmem:[%s1 + $0x6f0] sm:$0xff]
  %v262 = vld [vmem:[%s1 + $0x6f8] sm:$0xff]
  %v263 = vld [vmem:[%s1 + $0x700] sm:$0xff]
  %v264 = vld [vmem:[%s1 + $0x708] sm:$0xff]
  %v265 = vld [vmem:[%s1 + $0x710] sm:$0xff]
  %v266 = vld [vmem:[%s1 + $0x718] sm:$0xff]
  %v267 = vld [vmem:[%s1 + $0x720] sm:$0xff]
  %v268 = vld [vmem:[%s1 + $0x728] sm:$0xff]
  %v269 = vld [vmem:[%s1 + $0x730] sm:$0xff]
  %v270 = vld [vmem:[%s1 + $0x738] sm:$0xff]
  %v271 = vld [vmem:[%s1 + $0x740] sm:$0xff]
  %v272 = vld [vmem:[%s1 + $0x748] sm:$0xff]
  %v273 = vld [vmem:[%s1 + $0x750] sm:$0xff]
  %v274 = vld [vmem:[%s1 + $0x758] sm:$0xff]
  %v275 = vld [vmem:[%s1 + $0x760] sm:$0xff]
  %v276 = vld [vmem:[%s1 + $0x768] sm:$0xff]
  %v277 = vld [vmem:[%s1 + $0x770] sm:$0xff]
  %v278 = vld [vmem:[%s1 + $0x778] sm:$0xff]
  %v279 = vld [vmem:[%s1 + $0x780] sm:$0xff]
  %v280 = vld [vmem:[%s1 + $0x788] sm:$0xff]
  %v281 = vld [vmem:[%s1 + $0x790] sm:$0xff]
  %v282 = vld [vmem:[%s1 + $0x798] sm:$0xff]
  %v283 = vld [vmem:[%s1 + $0x7a0] sm:$0xff]
  %v284 = vld [vmem:[%s1 + $0x7a8] sm:$0xff]
  %v285 = vld [vmem:[%s1 + $0x7b0] sm:$0xff]
  %v286 = vld [vmem:[%s1 + $0x7b8] sm:$0xff]
  %v287 = vld [vmem:[%s1 + $0x7c0] sm:$0xff]
  %v288 = vld [vmem:[%s1 + $0x7c8] sm:$0xff]
  %v289 = vld [vmem:[%s1 + $0x7d0] sm:$0xff]
  %v290 = vld [vmem:[%s1 + $0x7d8] sm:$0xff]
  %v291 = vld [vmem:[%s1 + $0x7e0] sm:$0xff]
  %v292 = vld [vmem:[%s1 + $0x7e8] sm:$0xff]
  %v293 = vld [vmem:[%s1 + $0x7f0] sm:$0xff]
  %v294 = vld [vmem:[%s1 + $0x7f8] sm:$0xff]
  %v295 = vld [vmem:[%s1 + $0x800] sm:$0xff]
  %v296 = vld [vmem:[%s1 + $0x808] sm:$0xff]
  %v297 = vld [vmem:[%s1 + $0x810] sm:$0xff]
  %v298 = vld [vmem:[%s1 + $0x818] sm:$0xff]
  %v299 = vld [vmem:[%s1 + $0x820] sm:$0xff]
  %v300 = vld [vmem:[%s1 + $0x828] sm:$0xff]
  %v301 = vld [vmem:[%s1 + $0x830] sm:$0xff]
  %v302 = vld [vmem:[%s1 + $0x838] sm:$0xff]
  %v303 = vld [vmem:[%s1 + $0x840] sm:$0xff]
  %v304 = vld [vmem:[%s1 + $0x848] sm:$0xff]
  %v305 = vld [vmem:[%s1 + $0x850] sm:$0xff]
  %v306 = vld [vmem:[%s1 + $0x858] sm:$0xff]
  %v307 = vld [vmem:[%s1 + $0x860] sm:$0xff]
  %v308 = vld [vmem:[%s1 + $0x868] sm:$0xff]
  %v309 = vld [vmem:[%s1 + $0x870] sm:$0xff]
  %v310 = vld [vmem:[%s1 + $0x878] sm:$0xff]
  %v311 = vld [vmem:[%s1 + $0x880] sm:$0xff]
  %v312 = vld [vmem:[%s1 + $0x888] sm:$0xff]
  %v313 = vld [vmem:[%s1 + $0x890] sm:$0xff]
  %v314 = vld [vmem:[%s1 + $0x898] sm:$0xff]
  %v315 = vld [vmem:[%s1 + $0x8a0] sm:$0xff]
  %v316 = vld [vmem:[%s1 + $0x8a8] sm:$0xff]
  %v317 = vld [vmem:[%s1 + $0x8b0] sm:$0xff]
  %v318 = vld [vmem:[%s1 + $0x8b8] sm:$0xff]
  %v319 = vld [vmem:[%s1 + $0x8c0] sm:$0xff]
  %v320 = vld [vmem:[%s1 + $0x8c8] sm:$0xff]
  %v321 = vld [vmem:[%s1 + $0x8d0] sm:$0xff]
  %v322 = vld [vmem:[%s1 + $0x8d8] sm:$0xff]
  %v323 = vld [vmem:[%s1 + $0x8e0] sm:$0xff]
  %v324 = vld [vmem:[%s1 + $0x8e8] sm:$0xff]
  %v325 = vld [vmem:[%s1 + $0x8f0] sm:$0xff]
  %v326 = vld [vmem:[%s1 + $0x8f8] sm:$0xff]
  %v327 = vld [vmem:[%s1 + $0x900] sm:$0xff]
  %v328 = vld [vmem:[%s1 + $0x908] sm:$0xff]
  %v329 = vld [vmem:[%s1 + $0x910] sm:$0xff]
  %v330 = vld [vmem:[%s1 + $0x918] sm:$0xff]
  %v331 = vld [vmem:[%s1 + $0x920] sm:$0xff]
  %v332 = vld [vmem:[%s1 + $0x928] sm:$0xff]
  %v333 = vld [vmem:[%s1 + $0x930] sm:$0xff]
  %v334 = vld [vmem:[%s1 + $0x938] sm:$0xff]
  %v335 = vld [vmem:[%s1 + $0x940] sm:$0xff]
  %v336 = vld [vmem:[%s1 + $0x948] sm:$0xff]
  %v337 = vld [vmem:[%s1 + $0x950] sm:$0xff]
  %v338 = vld [vmem:[%s1 + $0x958] sm:$0xff]
  %v339 = vld [vmem:[%s1 + $0x960] sm:$0xff]
  %v340 = vld [vmem:[%s1 + $0x968] sm:$0xff]
  %v341 = vld [vmem:[%s1 + $0x970] sm:$0xff]
  %v342 = vld [vmem:[%s1 + $0x978] sm:$0xff]
  %v343 = vld [vmem:[%s1 + $0x980] sm:$0xff]
  %v344 = vld [vmem:[%s1 + $0x988] sm:$0xff]
  %v345 = vld [vmem:[%s1 + $0x990] sm:$0xff]
  %v346 = vld [vmem:[%s1 + $0x998] sm:$0xff]
  %v347 = vld [vmem:[%s1 + $0x9a0] sm:$0xff]
  %v348 = vld [vmem:[%s1 + $0x9a8] sm:$0xff]
  %v349 = vld [vmem:[%s1 + $0x9b0] sm:$0xff]
  %v350 = vld [vmem:[%s1 + $0x9b8] sm:$0xff]
  %v351 = vld [vmem:[%s1 + $0x9c0] sm:$0xff]
  %v352 = vld [vmem:[%s1 + $0x9c8] sm:$0xff]
  %v353 = vld [vmem:[%s1 + $0x9d0] sm:$0xff]
  %v354 = vld [vmem:[%s1 + $0x9d8] sm:$0xff]
  %v355 = vld [vmem:[%s1 + $0x9e0] sm:$0xff]
  %v356 = vld [vmem:[%s1 + $0x9e8] sm:$0xff]
  %v357 = vld [vmem:[%s1 + $0x9f0] sm:$0xff]
  %v358 = vld [vmem:[%s1 + $0x9f8] sm:$0xff]
  %v359 = vld [vmem:[%s1 + $0xa00] sm:$0xff]
  %v360 = vld [vmem:[%s1 + $0xa08] sm:$0xff]
  %v361 = vld [vmem:[%s1 + $0xa10] sm:$0xff]
  %v362 = vld [vmem:[%s1 + $0xa18] sm:$0xff]
  %v363 = vld [vmem:[%s1 + $0xa20] sm:$0xff]
  %v364 = vld [vmem:[%s1 + $0xa28] sm:$0xff]
  %v365 = vld [vmem:[%s1 + $0xa30] sm:$0xff]
  %v366 = vld [vmem:[%s1 + $0xa38] sm:$0xff]
  %v367 = vld [vmem:[%s1 + $0xa40] sm:$0xff]
  %v368 = vld [vmem:[%s1 + $0xa48] sm:$0xff]
  %v369 = vld [vmem:[%s1 + $0xa50] sm:$0xff]
  %v370 = vld [vmem:[%s1 + $0xa58] sm:$0xff]
  %v371 = vld [vmem:[%s1 + $0xa60] sm:$0xff]
  %v372 = vld [vmem:[%s1 + $0xa68] sm:$0xff]
  %v373 = vld [vmem:[%s1 + $0xa70] sm:$0xff]
  %v374 = vld [vmem:[%s1 + $0xa78] sm:$0xff]
  %v375 = vld [vmem:[%s1 + $0xa80] sm:$0xff]
  %v376 = vld [vmem:[%s1 + $0xa88] sm:$0xff]
  %v377 = vld [vmem:[%s1 + $0xa90] sm:$0xff]
  %v378 = vld [vmem:[%s1 + $0xa98] sm:$0xff]
  %v379 = vld [vmem:[%s1 + $0xaa0] sm:$0xff]
  %v380 = vld [vmem:[%s1 + $0xaa8] sm:$0xff]
  %v381 = vld [vmem:[%s1 + $0xab0] sm:$0xff]
  %v382 = vld [vmem:[%s1 + $0xab8] sm:$0xff]
  %v383 = vld [vmem:[%s1 + $0xac0] sm:$0xff]
  %v384 = vld [vmem:[%s1 + $0xac8] sm:$0xff]
  %v385 = vld [vmem:[%s1 + $0xad0] sm:$0xff]
  %v386 = vld [vmem:[%s1 + $0xad8] sm:$0xff]
  %v387 = vld [vmem:[%s1 + $0xae0] sm:$0xff]
  %v388 = vld [vmem:[%s1 + $0xae8] sm:$0xff]
  %v389 = vld [vmem:[%s1 + $0xaf0] sm:$0xff]
  %v390 = vld [vmem:[%s1 + $0xaf8] sm:$0xff]
  %v391 = vld [vmem:[%s1 + $0xb00] sm:$0xff]
  %v392 = vld [vmem:[%s1 + $0xb08] sm:$0xff]
  %v393 = vld [vmem:[%s1 + $0xb10] sm:$0xff]
  %v394 = vld [vmem:[%s1 + $0xb18] sm:$0xff]
  %v395 = vld [vmem:[%s1 + $0xb20] sm:$0xff]
  %v396 = vld [vmem:[%s1 + $0xb28] sm:$0xff]
  %v397 = vld [vmem:[%s1 + $0xb30] sm:$0xff]
  %v398 = vld [vmem:[%s1 + $0xb38] sm:$0xff]
  %v399 = vld [vmem:[%s1 + $0xb40] sm:$0xff]
  %v400 = vld [vmem:[%s1 + $0xb48] sm:$0xff]
  %v401 = vld [vmem:[%s1 + $0xb50] sm:$0xff]
  %v402 = vld [vmem:[%s1 + $0xb58] sm:$0xff]
  %v403 = vld [vmem:[%s1 + $0xb60] sm:$0xff]
  %v404 = vld [vmem:[%s1 + $0xb68] sm:$0xff]
  %v405 = vld [vmem:[%s1 + $0xb70] sm:$0xff]
  %v406 = vld [vmem:[%s1 + $0xb78] sm:$0xff]
  %v407 = vld [vmem:[%s1 + $0xb80] sm:$0xff]
  %v408 = vld [vmem:[%s1 + $0xb88] sm:$0xff]
  %v409 = vld [vmem:[%s1 + $0xb90] sm:$0xff]
  %v410 = vld [vmem:[%s1 + $0xb98] sm:$0xff]
  %v411 = vld [vmem:[%s1 + $0xba0] sm:$0xff]
  %v412 = vld [vmem:[%s1 + $0xba8] sm:$0xff]
  %v413 = vld [vmem:[%s1 + $0xbb0] sm:$0xff]
  %v414 = vld [vmem:[%s1 + $0xbb8] sm:$0xff]
  %v415 = vld [vmem:[%s1 + $0xbc0] sm:$0xff]
  %v416 = vld [vmem:[%s1 + $0xbc8] sm:$0xff]
  %v417 = vld [vmem:[%s1 + $0xbd0] sm:$0xff]
  %v418 = vld [vmem:[%s1 + $0xbd8] sm:$0xff]
  %v419 = vld [vmem:[%s1 + $0xbe0] sm:$0xff]
  %v420 = vld [vmem:[%s1 + $0xbe8] sm:$0xff]
  %v421 = vld [vmem:[%s1 + $0xbf0] sm:$0xff]
  %v422 = vld [vmem:[%s1 + $0xbf8] sm:$0xff]
  %v423 = vld [vmem:[%s1 + $0xc00] sm:$0xff]
  %v424 = vld [vmem:[%s1 + $0xc08] sm:$0xff]
  %v425 = vld [vmem:[%s1 + $0xc10] sm:$0xff]
  %v426 = vld [vmem:[%s1 + $0xc18] sm:$0xff]
  %v427 = vld [vmem:[%s1 + $0xc20] sm:$0xff]
  %v428 = vld [vmem:[%s1 + $0xc28] sm:$0xff]
  %v429 = vld [vmem:[%s1 + $0xc30] sm:$0xff]
  %v430 = vld [vmem:[%s1 + $0xc38] sm:$0xff]
  %v431 = vld [vmem:[%s1 + $0xc40] sm:$0xff]
  %v432 = vld [vmem:[%s1 + $0xc48] sm:$0xff]
  %v433 = vld [vmem:[%s1 + $0xc50] sm:$0xff]
  %v434 = vld [vmem:[%s1 + $0xc58] sm:$0xff]
  %v435 = vld [vmem:[%s1 + $0xc60] sm:$0xff]
  %v436 = vld [vmem:[%s1 + $0xc68] sm:$0xff]
  %v437 = vld [vmem:[%s1 + $0xc70] sm:$0xff]
  %v438 = vld [vmem:[%s1 + $0xc78] sm:$0xff]
  %v439 = vld [vmem:[%s1 + $0xc80] sm:$0xff]
  %v440 = vld [vmem:[%s1 + $0xc88] sm:$0xff]
  %v441 = vld [vmem:[%s1 + $0xc90] sm:$0xff]
  %v442 = vld [vmem:[%s1 + $0xc98] sm:$0xff]
  %v443 = vld [vmem:[%s1 + $0xca0] sm:$0xff]
  %v444 = vld [vmem:[%s1 + $0xca8] sm:$0xff]
  %v445 = vld [vmem:[%s1 + $0xcb0] sm:$0xff]
  %v446 = vld [vmem:[%s1 + $0xcb8] sm:$0xff]
  %v447 = vld [vmem:[%s1 + $0xcc0] sm:$0xff]
  %v448 = vld [vmem:[%s1 + $0xcc8] sm:$0xff]
  %v449 = vld [vmem:[%s1 + $0xcd0] sm:$0xff]
  %v450 = vld [vmem:[%s1 + $0xcd8] sm:$0xff]
  %v451 = vld [vmem:[%s1 + $0xce0] sm:$0xff]
  %v452 = vld [vmem:[%s1 + $0xce8] sm:$0xff]
  %v453 = vld [vmem:[%s1 + $0xcf0] sm:$0xff]
  %v454 = vld [vmem:[%s1 + $0xcf8] sm:$0xff]
  %v455 = vld [vmem:[%s1 + $0xd00] sm:$0xff]
  %v456 = vld [vmem:[%s1 + $0xd08] sm:$0xff]
  %v457 = vld [vmem:[%s1 + $0xd10] sm:$0xff]
  %v458 = vld [vmem:[%s1 + $0xd18] sm:$0xff]
  %v459 = vld [vmem:[%s1 + $0xd20] sm:$0xff]
  %v460 = vld [vmem:[%s1 + $0xd28] sm:$0xff]
  %v461 = vld [vmem:[%s1 + $0xd30] sm:$0xff]
  %v462 = vld [vmem:[%s1 + $0xd38] sm:$0xff]
  %v463 = vld [vmem:[%s1 + $0xd40] sm:$0xff]
  %v464 = vld [vmem:[%s1 + $0xd48] sm:$0xff]
  %v465 = vld [vmem:[%s1 + $0xd50] sm:$0xff]
  %v466 = vld [vmem:[%s1 + $0xd58] sm:$0xff]
  %v467 = vld [vmem:[%s1 + $0xd60] sm:$0xff]
  %v468 = vld [vmem:[%s1 + $0xd68] sm:$0xff]
  %v469 = vld [vmem:[%s1 + $0xd70] sm:$0xff]
  %v470 = vld [vmem:[%s1 + $0xd78] sm:$0xff]
  %v471 = vld [vmem:[%s1 + $0xd80] sm:$0xff]
  %v472 = vld [vmem:[%s1 + $0xd88] sm:$0xff]
  %v473 = vld [vmem:[%s1 + $0xd90] sm:$0xff]
  %v474 = vld [vmem:[%s1 + $0xd98] sm:$0xff]
  %v475 = vld [vmem:[%s1 + $0xda0] sm:$0xff]
  %v476 = vld [vmem:[%s1 + $0xda8] sm:$0xff]
  %v477 = vld [vmem:[%s1 + $0xdb0] sm:$0xff]
  %v478 = vld [vmem:[%s1 + $0xdb8] sm:$0xff]
  %v479 = vld [vmem:[%s1 + $0xdc0] sm:$0xff]
  %v480 = vld [vmem:[%s1 + $0xdc8] sm:$0xff]
  %v481 = vld [vmem:[%s1 + $0xdd0] sm:$0xff]
  %v482 = vld [vmem:[%s1 + $0xdd8] sm:$0xff]
  %v483 = vld [vmem:[%s1 + $0xde0] sm:$0xff]
  %v484 = vld [vmem:[%s1 + $0xde8] sm:$0xff]
  %v485 = vld [vmem:[%s1 + $0xdf0] sm:$0xff]
  %v486 = vld [vmem:[%s1 + $0xdf8] sm:$0xff]
  %v487 = vld [vmem:[%s1 + $0xe00] sm:$0xff]
  %v488 = vld [vmem:[%s1 + $0xe08] sm:$0xff]
  %v489 = vld [vmem:[%s1 + $0xe10] sm:$0xff]
  %v490 = vld [vmem:[%s1 + $0xe18] sm:$0xff]
  %v491 = vld [vmem:[%s1 + $0xe20] sm:$0xff]
  %v492 = vld [vmem:[%s1 + $0xe28] sm:$0xff]
  %v493 = vld [vmem:[%s1 + $0xe30] sm:$0xff]
  %v494 = vld [vmem:[%s1 + $0xe38] sm:$0xff]
  %v495 = vld [vmem:[%s1 + $0xe40] sm:$0xff]
  %v496 = vld [vmem:[%s1 + $0xe48] sm:$0xff]
  %v497 = vld [vmem:[%s1 + $0xe50] sm:$0xff]
  %v498 = vld [vmem:[%s1 + $0xe58] sm:$0xff]
  %v499 = vld [vmem:[%s1 + $0xe60] sm:$0xff]
  %v500 = vld [vmem:[%s1 + $0xe68] sm:$0xff]
  %v501 = vld [vmem:[%s1 + $0xe70] sm:$0xff]
  %v502 = vld [vmem:[%s1 + $0xe78] sm:$0xff]
  %v503 = vld [vmem:[%s1 + $0xe80] sm:$0xff]
  %v504 = vld [vmem:[%s1 + $0xe88] sm:$0xff]
  %v505 = vld [vmem:[%s1 + $0xe90] sm:$0xff]
  %v506 = vld [vmem:[%s1 + $0xe98] sm:$0xff]
  %v507 = vld [vmem:[%s1 + $0xea0] sm:$0xff]
  %v508 = vld [vmem:[%s1 + $0xea8] sm:$0xff]
  %v509 = vld [vmem:[%s1 + $0xeb0] sm:$0xff]
  %v510 = vld [vmem:[%s1 + $0xeb8] sm:$0xff]
  %v511 = vld [vmem:[%s1 + $0xec0] sm:$0xff]
  %v512 = vld [vmem:[%s1 + $0xec8] sm:$0xff]
  %v513 = vld [vmem:[%s1 + $0xed0] sm:$0xff]
  %v514 = vld [vmem:[%s1 + $0xed8] sm:$0xff]
  %v515 = vld [vmem:[%s1 + $0xee0] sm:$0xff]
  %v516 = vld [vmem:[%s1 + $0xee8] sm:$0xff]
  %v517 = vld [vmem:[%s1 + $0xef0] sm:$0xff]
  %v518 = vld [vmem:[%s1 + $0xef8] sm:$0xff]
  %v519 = vld [vmem:[%s1 + $0xf00] sm:$0xff]
  %v520 = vld [vmem:[%s1 + $0xf08] sm:$0xff]
  %v521 = vld [vmem:[%s1 + $0xf10] sm:$0xff]
  %v522 = vld [vmem:[%s1 + $0xf18] sm:$0xff]
  %v523 = vld [vmem:[%s1 + $0xf20] sm:$0xff]
  %v524 = vld [vmem:[%s1 + $0xf28] sm:$0xff]
  %v525 = vld [vmem:[%s1 + $0xf30] sm:$0xff]
  %v526 = vld [vmem:[%s1 + $0xf38] sm:$0xff]
  %v527 = vld [vmem:[%s1 + $0xf40] sm:$0xff]
  %v528 = vld [vmem:[%s1 + $0xf48] sm:$0xff]
  %v529 = vld [vmem:[%s1 + $0xf50] sm:$0xff]
  %v530 = vld [vmem:[%s1 + $0xf58] sm:$0xff]
  %v531 = vld [vmem:[%s1 + $0xf60] sm:$0xff]
  %v532 = vld [vmem:[%s1 + $0xf68] sm:$0xff]
  %v533 = vld [vmem:[%s1 + $0xf70] sm:$0xff]
  %v534 = vld [vmem:[%s1 + $0xf78] sm:$0xff]
  %v535 = vld [vmem:[%s1 + $0xf80] sm:$0xff]
  %v536 = vld [vmem:[%s1 + $0xf88] sm:$0xff]
  %v537 = vld [vmem:[%s1 + $0xf90] sm:$0xff]
  %v538 = vld [vmem:[%s1 + $0xf98] sm:$0xff]
  %v539 = vld [vmem:[%s1 + $0xfa0] sm:$0xff]
  %v540 = vld [vmem:[%s1 + $0xfa8] sm:$0xff]
  %v541 = vld [vmem:[%s1 + $0xfb0] sm:$0xff]
  %v542 = vld [vmem:[%s1 + $0xfb8] sm:$0xff]
  %v543 = vld [vmem:[%s1 + $0xfc0] sm:$0xff]
  %v544 = vld [vmem:[%s1 + $0xfc8] sm:$0xff]
  %v545 = vld [vmem:[%s1 + $0xfd0] sm:$0xff]
  %v546 = vld [vmem:[%s1 + $0xfd8] sm:$0xff]
  %v547 = vld [vmem:[%s1 + $0xfe0] sm:$0xff]
  %v548 = vld [vmem:[%s1 + $0xfe8] sm:$0xff]
  %v549 = vld [vmem:[%s1 + $0xff0] sm:$0xff]
  %v550 = vld [vmem:[%s1 + $0xff8] sm:$0xff]
  %v563 = vunpack.c.l.b16 %v27
  %v564 = vunpack.c.h.b16 %v27
  %v565 = vunpack.c.l.b16 %v28
  %v566 = vunpack.c.h.b16 %v28
  %v567 = vunpack.c.l.b16 %v29
  %v568 = vunpack.c.h.b16 %v29
  %v569 = vunpack.c.l.b16 %v30
  %v570 = vunpack.c.h.b16 %v30
  %v571 = vunpack.c.l.b16 %v31
  %v572 = vunpack.c.h.b16 %v31
  %v573 = vunpack.c.l.b16 %v32
  %v574 = vunpack.c.h.b16 %v32
  %v575 = vunpack.c.l.b16 %v33
  %v576 = vunpack.c.h.b16 %v33
  %v577 = vunpack.c.l.b16 %v34
  %v578 = vunpack.c.h.b16 %v34
  %v579 = vunpack.c.l.b16 %v35
  %v580 = vunpack.c.h.b16 %v35
  %v581 = vunpack.c.l.b16 %v36
  %v582 = vunpack.c.h.b16 %v36
  %v583 = vunpack.c.l.b16 %v37
  %v584 = vunpack.c.h.b16 %v37
  %v585 = vunpack.c.l.b16 %v38
  %v586 = vunpack.c.h.b16 %v38
  %v587 = vpack.c.b16 %v571, %v563
  %v588 = vpack.c.b16 %v572, %v564
  %v589 = vpack.c.b16 %v573, %v565
  %v590 = vpack.c.b16 %v574, %v566
  %v591 = vpack.c.b16 %v575, %v567
  %v592 = vpack.c.b16 %v576, %v568
  %v593 = vpack.c.b16 %v577, %v569
  %v594 = vpack.c.b16 %v578, %v570
  %v595 = vpack.c.b16 %v579, %v579
  %v596 = vpack.c.b16 %v580, %v580
  %v597 = vpack.c.b16 %v581, %v581
  %v598 = vpack.c.b16 %v582, %v582
  %v599 = vpack.c.b16 %v583, %v583
  %v600 = vpack.c.b16 %v584, %v584
  %v601 = vpack.c.b16 %v585, %v585
  %v602 = vpack.c.b16 %v586, %v586
  %v1131 = vunpack.c.l.b16 %v39
  %v1132 = vunpack.c.h.b16 %v39
  %v1133 = vunpack.c.l.b16 %v40
  %v1134 = vunpack.c.h.b16 %v40
  %v1135 = vunpack.c.l.b16 %v41
  %v1136 = vunpack.c.h.b16 %v41
  %v1137 = vunpack.c.l.b16 %v42
  %v1138 = vunpack.c.h.b16 %v42
  %v1139 = vunpack.c.l.b16 %v43
  %v1140 = vunpack.c.h.b16 %v43
  %v1141 = vunpack.c.l.b16 %v44
  %v1142 = vunpack.c.h.b16 %v44
  %v1143 = vunpack.c.l.b16 %v45
  %v1144 = vunpack.c.h.b16 %v45
  %v1145 = vunpack.c.l.b16 %v46
  %v1146 = vunpack.c.h.b16 %v46
  %v1147 = vunpack.c.l.b16 %v47
  %v1148 = vunpack.c.h.b16 %v47
  %v1149 = vunpack.c.l.b16 %v48
  %v1150 = vunpack.c.h.b16 %v48
  %v1151 = vunpack.c.l.b16 %v49
  %v1152 = vunpack.c.h.b16 %v49
  %v1153 = vunpack.c.l.b16 %v50
  %v1154 = vunpack.c.h.b16 %v50
  %v1155 = vunpack.c.l.b16 %v51
  %v1156 = vunpack.c.h.b16 %v51
  %v1157 = vunpack.c.l.b16 %v52
  %v1158 = vunpack.c.h.b16 %v52
  %v1159 = vunpack.c.l.b16 %v53
  %v1160 = vunpack.c.h.b16 %v53
  %v1161 = vunpack.c.l.b16 %v54
  %v1162 = vunpack.c.h.b16 %v54
  %v1163 = vunpack.c.l.b16 %v55
  %v1164 = vunpack.c.h.b16 %v55
  %v1165 = vunpack.c.l.b16 %v56
  %v1166 = vunpack.c.h.b16 %v56
  %v1167 = vunpack.c.l.b16 %v57
  %v1168 = vunpack.c.h.b16 %v57
  %v1169 = vunpack.c.l.b16 %v58
  %v1170 = vunpack.c.h.b16 %v58
  %v1171 = vunpack.c.l.b16 %v59
  %v1172 = vunpack.c.h.b16 %v59
  %v1173 = vunpack.c.l.b16 %v60
  %v1174 = vunpack.c.h.b16 %v60
  %v1175 = vunpack.c.l.b16 %v61
  %v1176 = vunpack.c.h.b16 %v61
  %v1177 = vunpack.c.l.b16 %v62
  %v1178 = vunpack.c.h.b16 %v62
  %v1179 = vunpack.c.l.b16 %v63
  %v1180 = vunpack.c.h.b16 %v63
  %v1181 = vunpack.c.l.b16 %v64
  %v1182 = vunpack.c.h.b16 %v64
  %v1183 = vunpack.c.l.b16 %v65
  %v1184 = vunpack.c.h.b16 %v65
  %v1185 = vunpack.c.l.b16 %v66
  %v1186 = vunpack.c.h.b16 %v66
  %v1187 = vunpack.c.l.b16 %v67
  %v1188 = vunpack.c.h.b16 %v67
  %v1189 = vunpack.c.l.b16 %v68
  %v1190 = vunpack.c.h.b16 %v68
  %v1191 = vunpack.c.l.b16 %v69
  %v1192 = vunpack.c.h.b16 %v69
  %v1193 = vunpack.c.l.b16 %v70
  %v1194 = vunpack.c.h.b16 %v70
  %v1195 = vunpack.c.l.b16 %v71
  %v1196 = vunpack.c.h.b16 %v71
  %v1197 = vunpack.c.l.b16 %v72
  %v1198 = vunpack.c.h.b16 %v72
  %v1199 = vunpack.c.l.b16 %v73
  %v1200 = vunpack.c.h.b16 %v73
  %v1201 = vunpack.c.l.b16 %v74
  %v1202 = vunpack.c.h.b16 %v74
  %v1203 = vunpack.c.l.b16 %v75
  %v1204 = vunpack.c.h.b16 %v75
  %v1205 = vunpack.c.l.b16 %v76
  %v1206 = vunpack.c.h.b16 %v76
  %v1207 = vunpack.c.l.b16 %v77
  %v1208 = vunpack.c.h.b16 %v77
  %v1209 = vunpack.c.l.b16 %v78
  %v1210 = vunpack.c.h.b16 %v78
  %v1211 = vunpack.c.l.b16 %v79
  %v1212 = vunpack.c.h.b16 %v79
  %v1213 = vunpack.c.l.b16 %v80
  %v1214 = vunpack.c.h.b16 %v80
  %v1215 = vunpack.c.l.b16 %v81
  %v1216 = vunpack.c.h.b16 %v81
  %v1217 = vunpack.c.l.b16 %v82
  %v1218 = vunpack.c.h.b16 %v82
  %v1219 = vunpack.c.l.b16 %v83
  %v1220 = vunpack.c.h.b16 %v83
  %v1221 = vunpack.c.l.b16 %v84
  %v1222 = vunpack.c.h.b16 %v84
  %v1223 = vunpack.c.l.b16 %v85
  %v1224 = vunpack.c.h.b16 %v85
  %v1225 = vunpack.c.l.b16 %v86
  %v1226 = vunpack.c.h.b16 %v86
  %v1227 = vunpack.c.l.b16 %v87
  %v1228 = vunpack.c.h.b16 %v87
  %v1229 = vunpack.c.l.b16 %v88
  %v1230 = vunpack.c.h.b16 %v88
  %v1231 = vunpack.c.l.b16 %v89
  %v1232 = vunpack.c.h.b16 %v89
  %v1233 = vunpack.c.l.b16 %v90
  %v1234 = vunpack.c.h.b16 %v90
  %v1235 = vunpack.c.l.b16 %v91
  %v1236 = vunpack.c.h.b16 %v91
  %v1237 = vunpack.c.l.b16 %v92
  %v1238 = vunpack.c.h.b16 %v92
  %v1239 = vunpack.c.l.b16 %v93
  %v1240 = vunpack.c.h.b16 %v93
  %v1241 = vunpack.c.l.b16 %v94
  %v1242 = vunpack.c.h.b16 %v94
  %v1243 = vunpack.c.l.b16 %v95
  %v1244 = vunpack.c.h.b16 %v95
  %v1245 = vunpack.c.l.b16 %v96
  %v1246 = vunpack.c.h.b16 %v96
  %v1247 = vunpack.c.l.b16 %v97
  %v1248 = vunpack.c.h.b16 %v97
  %v1249 = vunpack.c.l.b16 %v98
  %v1250 = vunpack.c.h.b16 %v98
  %v1251 = vunpack.c.l.b16 %v99
  %v1252 = vunpack.c.h.b16 %v99
  %v1253 = vunpack.c.l.b16 %v100
  %v1254 = vunpack.c.h.b16 %v100
  %v1255 = vunpack.c.l.b16 %v101
  %v1256 = vunpack.c.h.b16 %v101
  %v1257 = vunpack.c.l.b16 %v102
  %v1258 = vunpack.c.h.b16 %v102
  %v1259 = vunpack.c.l.b16 %v103
  %v1260 = vunpack.c.h.b16 %v103
  %v1261 = vunpack.c.l.b16 %v104
  %v1262 = vunpack.c.h.b16 %v104
  %v1263 = vunpack.c.l.b16 %v105
  %v1264 = vunpack.c.h.b16 %v105
  %v1265 = vunpack.c.l.b16 %v106
  %v1266 = vunpack.c.h.b16 %v106
  %v1267 = vunpack.c.l.b16 %v107
  %v1268 = vunpack.c.h.b16 %v107
  %v1269 = vunpack.c.l.b16 %v108
  %v1270 = vunpack.c.h.b16 %v108
  %v1271 = vunpack.c.l.b16 %v109
  %v1272 = vunpack.c.h.b16 %v109
  %v1273 = vunpack.c.l.b16 %v110
  %v1274 = vunpack.c.h.b16 %v110
  %v1275 = vunpack.c.l.b16 %v111
  %v1276 = vunpack.c.h.b16 %v111
  %v1277 = vunpack.c.l.b16 %v112
  %v1278 = vunpack.c.h.b16 %v112
  %v1279 = vunpack.c.l.b16 %v113
  %v1280 = vunpack.c.h.b16 %v113
  %v1281 = vunpack.c.l.b16 %v114
  %v1282 = vunpack.c.h.b16 %v114
  %v1283 = vunpack.c.l.b16 %v115
  %v1284 = vunpack.c.h.b16 %v115
  %v1285 = vunpack.c.l.b16 %v116
  %v1286 = vunpack.c.h.b16 %v116
  %v1287 = vunpack.c.l.b16 %v117
  %v1288 = vunpack.c.h.b16 %v117
  %v1289 = vunpack.c.l.b16 %v118
  %v1290 = vunpack.c.h.b16 %v118
  %v1291 = vunpack.c.l.b16 %v119
  %v1292 = vunpack.c.h.b16 %v119
  %v1293 = vunpack.c.l.b16 %v120
  %v1294 = vunpack.c.h.b16 %v120
  %v1295 = vunpack.c.l.b16 %v121
  %v1296 = vunpack.c.h.b16 %v121
  %v1297 = vunpack.c.l.b16 %v122
  %v1298 = vunpack.c.h.b16 %v122
  %v1299 = vunpack.c.l.b16 %v123
  %v1300 = vunpack.c.h.b16 %v123
  %v1301 = vunpack.c.l.b16 %v124
  %v1302 = vunpack.c.h.b16 %v124
  %v1303 = vunpack.c.l.b16 %v125
  %v1304 = vunpack.c.h.b16 %v125
  %v1305 = vunpack.c.l.b16 %v126
  %v1306 = vunpack.c.h.b16 %v126
  %v1307 = vunpack.c.l.b16 %v127
  %v1308 = vunpack.c.h.b16 %v127
  %v1309 = vunpack.c.l.b16 %v128
  %v1310 = vunpack.c.h.b16 %v128
  %v1311 = vunpack.c.l.b16 %v129
  %v1312 = vunpack.c.h.b16 %v129
  %v1313 = vunpack.c.l.b16 %v130
  %v1314 = vunpack.c.h.b16 %v130
  %v1315 = vunpack.c.l.b16 %v131
  %v1316 = vunpack.c.h.b16 %v131
  %v1317 = vunpack.c.l.b16 %v132
  %v1318 = vunpack.c.h.b16 %v132
  %v1319 = vunpack.c.l.b16 %v133
  %v1320 = vunpack.c.h.b16 %v133
  %v1321 = vunpack.c.l.b16 %v134
  %v1322 = vunpack.c.h.b16 %v134
  %v1323 = vunpack.c.l.b16 %v135
  %v1324 = vunpack.c.h.b16 %v135
  %v1325 = vunpack.c.l.b16 %v136
  %v1326 = vunpack.c.h.b16 %v136
  %v1327 = vunpack.c.l.b16 %v137
  %v1328 = vunpack.c.h.b16 %v137
  %v1329 = vunpack.c.l.b16 %v138
  %v1330 = vunpack.c.h.b16 %v138
  %v1331 = vunpack.c.l.b16 %v139
  %v1332 = vunpack.c.h.b16 %v139
  %v1333 = vunpack.c.l.b16 %v140
  %v1334 = vunpack.c.h.b16 %v140
  %v1335 = vunpack.c.l.b16 %v141
  %v1336 = vunpack.c.h.b16 %v141
  %v1337 = vunpack.c.l.b16 %v142
  %v1338 = vunpack.c.h.b16 %v142
  %v1339 = vunpack.c.l.b16 %v143
  %v1340 = vunpack.c.h.b16 %v143
  %v1341 = vunpack.c.l.b16 %v144
  %v1342 = vunpack.c.h.b16 %v144
  %v1343 = vunpack.c.l.b16 %v145
  %v1344 = vunpack.c.h.b16 %v145
  %v1345 = vunpack.c.l.b16 %v146
  %v1346 = vunpack.c.h.b16 %v146
  %v1347 = vunpack.c.l.b16 %v147
  %v1348 = vunpack.c.h.b16 %v147
  %v1349 = vunpack.c.l.b16 %v148
  %v1350 = vunpack.c.h.b16 %v148
  %v1351 = vunpack.c.l.b16 %v149
  %v1352 = vunpack.c.h.b16 %v149
  %v1353 = vunpack.c.l.b16 %v150
  %v1354 = vunpack.c.h.b16 %v150
  %v1355 = vunpack.c.l.b16 %v151
  %v1356 = vunpack.c.h.b16 %v151
  %v1357 = vunpack.c.l.b16 %v152
  %v1358 = vunpack.c.h.b16 %v152
  %v1359 = vunpack.c.l.b16 %v153
  %v1360 = vunpack.c.h.b16 %v153
  %v1361 = vunpack.c.l.b16 %v154
  %v1362 = vunpack.c.h.b16 %v154
  %v1363 = vunpack.c.l.b16 %v155
  %v1364 = vunpack.c.h.b16 %v155
  %v1365 = vunpack.c.l.b16 %v156
  %v1366 = vunpack.c.h.b16 %v156
  %v1367 = vunpack.c.l.b16 %v157
  %v1368 = vunpack.c.h.b16 %v157
  %v1369 = vunpack.c.l.b16 %v158
  %v1370 = vunpack.c.h.b16 %v158
  %v1371 = vunpack.c.l.b16 %v159
  %v1372 = vunpack.c.h.b16 %v159
  %v1373 = vunpack.c.l.b16 %v160
  %v1374 = vunpack.c.h.b16 %v160
  %v1375 = vunpack.c.l.b16 %v161
  %v1376 = vunpack.c.h.b16 %v161
  %v1377 = vunpack.c.l.b16 %v162
  %v1378 = vunpack.c.h.b16 %v162
  %v1379 = vunpack.c.l.b16 %v163
  %v1380 = vunpack.c.h.b16 %v163
  %v1381 = vunpack.c.l.b16 %v164
  %v1382 = vunpack.c.h.b16 %v164
  %v1383 = vunpack.c.l.b16 %v165
  %v1384 = vunpack.c.h.b16 %v165
  %v1385 = vunpack.c.l.b16 %v166
  %v1386 = vunpack.c.h.b16 %v166
  %v1387 = vunpack.c.l.b16 %v167
  %v1388 = vunpack.c.h.b16 %v167
  %v1389 = vunpack.c.l.b16 %v168
  %v1390 = vunpack.c.h.b16 %v168
  %v1391 = vunpack.c.l.b16 %v169
  %v1392 = vunpack.c.h.b16 %v169
  %v1393 = vunpack.c.l.b16 %v170
  %v1394 = vunpack.c.h.b16 %v170
  %v1395 = vunpack.c.l.b16 %v171
  %v1396 = vunpack.c.h.b16 %v171
  %v1397 = vunpack.c.l.b16 %v172
  %v1398 = vunpack.c.h.b16 %v172
  %v1399 = vunpack.c.l.b16 %v173
  %v1400 = vunpack.c.h.b16 %v173
  %v1401 = vunpack.c.l.b16 %v174
  %v1402 = vunpack.c.h.b16 %v174
  %v1403 = vunpack.c.l.b16 %v175
  %v1404 = vunpack.c.h.b16 %v175
  %v1405 = vunpack.c.l.b16 %v176
  %v1406 = vunpack.c.h.b16 %v176
  %v1407 = vunpack.c.l.b16 %v177
  %v1408 = vunpack.c.h.b16 %v177
  %v1409 = vunpack.c.l.b16 %v178
  %v1410 = vunpack.c.h.b16 %v178
  %v1411 = vunpack.c.l.b16 %v179
  %v1412 = vunpack.c.h.b16 %v179
  %v1413 = vunpack.c.l.b16 %v180
  %v1414 = vunpack.c.h.b16 %v180
  %v1415 = vunpack.c.l.b16 %v181
  %v1416 = vunpack.c.h.b16 %v181
  %v1417 = vunpack.c.l.b16 %v182
  %v1418 = vunpack.c.h.b16 %v182
  %v1419 = vunpack.c.l.b16 %v183
  %v1420 = vunpack.c.h.b16 %v183
  %v1421 = vunpack.c.l.b16 %v184
  %v1422 = vunpack.c.h.b16 %v184
  %v1423 = vunpack.c.l.b16 %v185
  %v1424 = vunpack.c.h.b16 %v185
  %v1425 = vunpack.c.l.b16 %v186
  %v1426 = vunpack.c.h.b16 %v186
  %v1427 = vunpack.c.l.b16 %v187
  %v1428 = vunpack.c.h.b16 %v187
  %v1429 = vunpack.c.l.b16 %v188
  %v1430 = vunpack.c.h.b16 %v188
  %v1431 = vunpack.c.l.b16 %v189
  %v1432 = vunpack.c.h.b16 %v189
  %v1433 = vunpack.c.l.b16 %v190
  %v1434 = vunpack.c.h.b16 %v190
  %v1435 = vunpack.c.l.b16 %v191
  %v1436 = vunpack.c.h.b16 %v191
  %v1437 = vunpack.c.l.b16 %v192
  %v1438 = vunpack.c.h.b16 %v192
  %v1439 = vunpack.c.l.b16 %v193
  %v1440 = vunpack.c.h.b16 %v193
  %v1441 = vunpack.c.l.b16 %v194
  %v1442 = vunpack.c.h.b16 %v194
  %v1443 = vunpack.c.l.b16 %v195
  %v1444 = vunpack.c.h.b16 %v195
  %v1445 = vunpack.c.l.b16 %v196
  %v1446 = vunpack.c.h.b16 %v196
  %v1447 = vunpack.c.l.b16 %v197
  %v1448 = vunpack.c.h.b16 %v197
  %v1449 = vunpack.c.l.b16 %v198
  %v1450 = vunpack.c.h.b16 %v198
  %v1451 = vunpack.c.l.b16 %v199
  %v1452 = vunpack.c.h.b16 %v199
  %v1453 = vunpack.c.l.b16 %v200
  %v1454 = vunpack.c.h.b16 %v200
  %v1455 = vunpack.c.l.b16 %v201
  %v1456 = vunpack.c.h.b16 %v201
  %v1457 = vunpack.c.l.b16 %v202
  %v1458 = vunpack.c.h.b16 %v202
  %v1459 = vunpack.c.l.b16 %v203
  %v1460 = vunpack.c.h.b16 %v203
  %v1461 = vunpack.c.l.b16 %v204
  %v1462 = vunpack.c.h.b16 %v204
  %v1463 = vunpack.c.l.b16 %v205
  %v1464 = vunpack.c.h.b16 %v205
  %v1465 = vunpack.c.l.b16 %v206
  %v1466 = vunpack.c.h.b16 %v206
  %v1467 = vunpack.c.l.b16 %v207
  %v1468 = vunpack.c.h.b16 %v207
  %v1469 = vunpack.c.l.b16 %v208
  %v1470 = vunpack.c.h.b16 %v208
  %v1471 = vunpack.c.l.b16 %v209
  %v1472 = vunpack.c.h.b16 %v209
  %v1473 = vunpack.c.l.b16 %v210
  %v1474 = vunpack.c.h.b16 %v210
  %v1475 = vunpack.c.l.b16 %v211
  %v1476 = vunpack.c.h.b16 %v211
  %v1477 = vunpack.c.l.b16 %v212
  %v1478 = vunpack.c.h.b16 %v212
  %v1479 = vunpack.c.l.b16 %v213
  %v1480 = vunpack.c.h.b16 %v213
  %v1481 = vunpack.c.l.b16 %v214
  %v1482 = vunpack.c.h.b16 %v214
  %v1483 = vunpack.c.l.b16 %v215
  %v1484 = vunpack.c.h.b16 %v215
  %v1485 = vunpack.c.l.b16 %v216
  %v1486 = vunpack.c.h.b16 %v216
  %v1487 = vunpack.c.l.b16 %v217
  %v1488 = vunpack.c.h.b16 %v217
  %v1489 = vunpack.c.l.b16 %v218
  %v1490 = vunpack.c.h.b16 %v218
  %v1491 = vunpack.c.l.b16 %v219
  %v1492 = vunpack.c.h.b16 %v219
  %v1493 = vunpack.c.l.b16 %v220
  %v1494 = vunpack.c.h.b16 %v220
  %v1495 = vunpack.c.l.b16 %v221
  %v1496 = vunpack.c.h.b16 %v221
  %v1497 = vunpack.c.l.b16 %v222
  %v1498 = vunpack.c.h.b16 %v222
  %v1499 = vunpack.c.l.b16 %v223
  %v1500 = vunpack.c.h.b16 %v223
  %v1501 = vunpack.c.l.b16 %v224
  %v1502 = vunpack.c.h.b16 %v224
  %v1503 = vunpack.c.l.b16 %v225
  %v1504 = vunpack.c.h.b16 %v225
  %v1505 = vunpack.c.l.b16 %v226
  %v1506 = vunpack.c.h.b16 %v226
  %v1507 = vunpack.c.l.b16 %v227
  %v1508 = vunpack.c.h.b16 %v227
  %v1509 = vunpack.c.l.b16 %v228
  %v1510 = vunpack.c.h.b16 %v228
  %v1511 = vunpack.c.l.b16 %v229
  %v1512 = vunpack.c.h.b16 %v229
  %v1513 = vunpack.c.l.b16 %v230
  %v1514 = vunpack.c.h.b16 %v230
  %v1515 = vunpack.c.l.b16 %v231
  %v1516 = vunpack.c.h.b16 %v231
  %v1517 = vunpack.c.l.b16 %v232
  %v1518 = vunpack.c.h.b16 %v232
  %v1519 = vunpack.c.l.b16 %v233
  %v1520 = vunpack.c.h.b16 %v233
  %v1521 = vunpack.c.l.b16 %v234
  %v1522 = vunpack.c.h.b16 %v234
  %v1523 = vunpack.c.l.b16 %v235
  %v1524 = vunpack.c.h.b16 %v235
  %v1525 = vunpack.c.l.b16 %v236
  %v1526 = vunpack.c.h.b16 %v236
  %v1527 = vunpack.c.l.b16 %v237
  %v1528 = vunpack.c.h.b16 %v237
  %v1529 = vunpack.c.l.b16 %v238
  %v1530 = vunpack.c.h.b16 %v238
  %v1531 = vunpack.c.l.b16 %v239
  %v1532 = vunpack.c.h.b16 %v239
  %v1533 = vunpack.c.l.b16 %v240
  %v1534 = vunpack.c.h.b16 %v240
  %v1535 = vunpack.c.l.b16 %v241
  %v1536 = vunpack.c.h.b16 %v241
  %v1537 = vunpack.c.l.b16 %v242
  %v1538 = vunpack.c.h.b16 %v242
  %v1539 = vunpack.c.l.b16 %v243
  %v1540 = vunpack.c.h.b16 %v243
  %v1541 = vunpack.c.l.b16 %v244
  %v1542 = vunpack.c.h.b16 %v244
  %v1543 = vunpack.c.l.b16 %v245
  %v1544 = vunpack.c.h.b16 %v245
  %v1545 = vunpack.c.l.b16 %v246
  %v1546 = vunpack.c.h.b16 %v246
  %v1547 = vunpack.c.l.b16 %v247
  %v1548 = vunpack.c.h.b16 %v247
  %v1549 = vunpack.c.l.b16 %v248
  %v1550 = vunpack.c.h.b16 %v248
  %v1551 = vunpack.c.l.b16 %v249
  %v1552 = vunpack.c.h.b16 %v249
  %v1553 = vunpack.c.l.b16 %v250
  %v1554 = vunpack.c.h.b16 %v250
  %v1555 = vunpack.c.l.b16 %v251
  %v1556 = vunpack.c.h.b16 %v251
  %v1557 = vunpack.c.l.b16 %v252
  %v1558 = vunpack.c.h.b16 %v252
  %v1559 = vunpack.c.l.b16 %v253
  %v1560 = vunpack.c.h.b16 %v253
  %v1561 = vunpack.c.l.b16 %v254
  %v1562 = vunpack.c.h.b16 %v254
  %v1563 = vunpack.c.l.b16 %v255
  %v1564 = vunpack.c.h.b16 %v255
  %v1565 = vunpack.c.l.b16 %v256
  %v1566 = vunpack.c.h.b16 %v256
  %v1567 = vunpack.c.l.b16 %v257
  %v1568 = vunpack.c.h.b16 %v257
  %v1569 = vunpack.c.l.b16 %v258
  %v1570 = vunpack.c.h.b16 %v258
  %v1571 = vunpack.c.l.b16 %v259
  %v1572 = vunpack.c.h.b16 %v259
  %v1573 = vunpack.c.l.b16 %v260
  %v1574 = vunpack.c.h.b16 %v260
  %v1575 = vunpack.c.l.b16 %v261
  %v1576 = vunpack.c.h.b16 %v261
  %v1577 = vunpack.c.l.b16 %v262
  %v1578 = vunpack.c.h.b16 %v262
  %v1579 = vunpack.c.l.b16 %v263
  %v1580 = vunpack.c.h.b16 %v263
  %v1581 = vunpack.c.l.b16 %v264
  %v1582 = vunpack.c.h.b16 %v264
  %v1583 = vunpack.c.l.b16 %v265
  %v1584 = vunpack.c.h.b16 %v265
  %v1585 = vunpack.c.l.b16 %v266
  %v1586 = vunpack.c.h.b16 %v266
  %v1587 = vunpack.c.l.b16 %v267
  %v1588 = vunpack.c.h.b16 %v267
  %v1589 = vunpack.c.l.b16 %v268
  %v1590 = vunpack.c.h.b16 %v268
  %v1591 = vunpack.c.l.b16 %v269
  %v1592 = vunpack.c.h.b16 %v269
  %v1593 = vunpack.c.l.b16 %v270
  %v1594 = vunpack.c.h.b16 %v270
  %v1595 = vunpack.c.l.b16 %v271
  %v1596 = vunpack.c.h.b16 %v271
  %v1597 = vunpack.c.l.b16 %v272
  %v1598 = vunpack.c.h.b16 %v272
  %v1599 = vunpack.c.l.b16 %v273
  %v1600 = vunpack.c.h.b16 %v273
  %v1601 = vunpack.c.l.b16 %v274
  %v1602 = vunpack.c.h.b16 %v274
  %v1603 = vunpack.c.l.b16 %v275
  %v1604 = vunpack.c.h.b16 %v275
  %v1605 = vunpack.c.l.b16 %v276
  %v1606 = vunpack.c.h.b16 %v276
  %v1607 = vunpack.c.l.b16 %v277
  %v1608 = vunpack.c.h.b16 %v277
  %v1609 = vunpack.c.l.b16 %v278
  %v1610 = vunpack.c.h.b16 %v278
  %v1611 = vunpack.c.l.b16 %v279
  %v1612 = vunpack.c.h.b16 %v279
  %v1613 = vunpack.c.l.b16 %v280
  %v1614 = vunpack.c.h.b16 %v280
  %v1615 = vunpack.c.l.b16 %v281
  %v1616 = vunpack.c.h.b16 %v281
  %v1617 = vunpack.c.l.b16 %v282
  %v1618 = vunpack.c.h.b16 %v282
  %v1619 = vunpack.c.l.b16 %v283
  %v1620 = vunpack.c.h.b16 %v283
  %v1621 = vunpack.c.l.b16 %v284
  %v1622 = vunpack.c.h.b16 %v284
  %v1623 = vunpack.c.l.b16 %v285
  %v1624 = vunpack.c.h.b16 %v285
  %v1625 = vunpack.c.l.b16 %v286
  %v1626 = vunpack.c.h.b16 %v286
  %v1627 = vunpack.c.l.b16 %v287
  %v1628 = vunpack.c.h.b16 %v287
  %v1629 = vunpack.c.l.b16 %v288
  %v1630 = vunpack.c.h.b16 %v288
  %v1631 = vunpack.c.l.b16 %v289
  %v1632 = vunpack.c.h.b16 %v289
  %v1633 = vunpack.c.l.b16 %v290
  %v1634 = vunpack.c.h.b16 %v290
  %v1635 = vunpack.c.l.b16 %v291
  %v1636 = vunpack.c.h.b16 %v291
  %v1637 = vunpack.c.l.b16 %v292
  %v1638 = vunpack.c.h.b16 %v292
  %v1639 = vunpack.c.l.b16 %v293
  %v1640 = vunpack.c.h.b16 %v293
  %v1641 = vunpack.c.l.b16 %v294
  %v1642 = vunpack.c.h.b16 %v294
  %v1643 = vunpack.c.l.b16 %v295
  %v1644 = vunpack.c.h.b16 %v295
  %v1645 = vunpack.c.l.b16 %v296
  %v1646 = vunpack.c.h.b16 %v296
  %v1647 = vunpack.c.l.b16 %v297
  %v1648 = vunpack.c.h.b16 %v297
  %v1649 = vunpack.c.l.b16 %v298
  %v1650 = vunpack.c.h.b16 %v298
  %v1651 = vunpack.c.l.b16 %v299
  %v1652 = vunpack.c.h.b16 %v299
  %v1653 = vunpack.c.l.b16 %v300
  %v1654 = vunpack.c.h.b16 %v300
  %v1655 = vunpack.c.l.b16 %v301
  %v1656 = vunpack.c.h.b16 %v301
  %v1657 = vunpack.c.l.b16 %v302
  %v1658 = vunpack.c.h.b16 %v302
  %v1659 = vunpack.c.l.b16 %v303
  %v1660 = vunpack.c.h.b16 %v303
  %v1661 = vunpack.c.l.b16 %v304
  %v1662 = vunpack.c.h.b16 %v304
  %v1663 = vunpack.c.l.b16 %v305
  %v1664 = vunpack.c.h.b16 %v305
  %v1665 = vunpack.c.l.b16 %v306
  %v1666 = vunpack.c.h.b16 %v306
  %v1667 = vunpack.c.l.b16 %v307
  %v1668 = vunpack.c.h.b16 %v307
  %v1669 = vunpack.c.l.b16 %v308
  %v1670 = vunpack.c.h.b16 %v308
  %v1671 = vunpack.c.l.b16 %v309
  %v1672 = vunpack.c.h.b16 %v309
  %v1673 = vunpack.c.l.b16 %v310
  %v1674 = vunpack.c.h.b16 %v310
  %v1675 = vunpack.c.l.b16 %v311
  %v1676 = vunpack.c.h.b16 %v311
  %v1677 = vunpack.c.l.b16 %v312
  %v1678 = vunpack.c.h.b16 %v312
  %v1679 = vunpack.c.l.b16 %v313
  %v1680 = vunpack.c.h.b16 %v313
  %v1681 = vunpack.c.l.b16 %v314
  %v1682 = vunpack.c.h.b16 %v314
  %v1683 = vunpack.c.l.b16 %v315
  %v1684 = vunpack.c.h.b16 %v315
  %v1685 = vunpack.c.l.b16 %v316
  %v1686 = vunpack.c.h.b16 %v316
  %v1687 = vunpack.c.l.b16 %v317
  %v1688 = vunpack.c.h.b16 %v317
  %v1689 = vunpack.c.l.b16 %v318
  %v1690 = vunpack.c.h.b16 %v318
  %v1691 = vunpack.c.l.b16 %v319
  %v1692 = vunpack.c.h.b16 %v319
  %v1693 = vunpack.c.l.b16 %v320
  %v1694 = vunpack.c.h.b16 %v320
  %v1695 = vunpack.c.l.b16 %v321
  %v1696 = vunpack.c.h.b16 %v321
  %v1697 = vunpack.c.l.b16 %v322
  %v1698 = vunpack.c.h.b16 %v322
  %v1699 = vunpack.c.l.b16 %v323
  %v1700 = vunpack.c.h.b16 %v323
  %v1701 = vunpack.c.l.b16 %v324
  %v1702 = vunpack.c.h.b16 %v324
  %v1703 = vunpack.c.l.b16 %v325
  %v1704 = vunpack.c.h.b16 %v325
  %v1705 = vunpack.c.l.b16 %v326
  %v1706 = vunpack.c.h.b16 %v326
  %v1707 = vunpack.c.l.b16 %v327
  %v1708 = vunpack.c.h.b16 %v327
  %v1709 = vunpack.c.l.b16 %v328
  %v1710 = vunpack.c.h.b16 %v328
  %v1711 = vunpack.c.l.b16 %v329
  %v1712 = vunpack.c.h.b16 %v329
  %v1713 = vunpack.c.l.b16 %v330
  %v1714 = vunpack.c.h.b16 %v330
  %v1715 = vunpack.c.l.b16 %v331
  %v1716 = vunpack.c.h.b16 %v331
  %v1717 = vunpack.c.l.b16 %v332
  %v1718 = vunpack.c.h.b16 %v332
  %v1719 = vunpack.c.l.b16 %v333
  %v1720 = vunpack.c.h.b16 %v333
  %v1721 = vunpack.c.l.b16 %v334
  %v1722 = vunpack.c.h.b16 %v334
  %v1723 = vunpack.c.l.b16 %v335
  %v1724 = vunpack.c.h.b16 %v335
  %v1725 = vunpack.c.l.b16 %v336
  %v1726 = vunpack.c.h.b16 %v336
  %v1727 = vunpack.c.l.b16 %v337
  %v1728 = vunpack.c.h.b16 %v337
  %v1729 = vunpack.c.l.b16 %v338
  %v1730 = vunpack.c.h.b16 %v338
  %v1731 = vunpack.c.l.b16 %v339
  %v1732 = vunpack.c.h.b16 %v339
  %v1733 = vunpack.c.l.b16 %v340
  %v1734 = vunpack.c.h.b16 %v340
  %v1735 = vunpack.c.l.b16 %v341
  %v1736 = vunpack.c.h.b16 %v341
  %v1737 = vunpack.c.l.b16 %v342
  %v1738 = vunpack.c.h.b16 %v342
  %v1739 = vunpack.c.l.b16 %v343
  %v1740 = vunpack.c.h.b16 %v343
  %v1741 = vunpack.c.l.b16 %v344
  %v1742 = vunpack.c.h.b16 %v344
  %v1743 = vunpack.c.l.b16 %v345
  %v1744 = vunpack.c.h.b16 %v345
  %v1745 = vunpack.c.l.b16 %v346
  %v1746 = vunpack.c.h.b16 %v346
  %v1747 = vunpack.c.l.b16 %v347
  %v1748 = vunpack.c.h.b16 %v347
  %v1749 = vunpack.c.l.b16 %v348
  %v1750 = vunpack.c.h.b16 %v348
  %v1751 = vunpack.c.l.b16 %v349
  %v1752 = vunpack.c.h.b16 %v349
  %v1753 = vunpack.c.l.b16 %v350
  %v1754 = vunpack.c.h.b16 %v350
  %v1755 = vunpack.c.l.b16 %v351
  %v1756 = vunpack.c.h.b16 %v351
  %v1757 = vunpack.c.l.b16 %v352
  %v1758 = vunpack.c.h.b16 %v352
  %v1759 = vunpack.c.l.b16 %v353
  %v1760 = vunpack.c.h.b16 %v353
  %v1761 = vunpack.c.l.b16 %v354
  %v1762 = vunpack.c.h.b16 %v354
  %v1763 = vunpack.c.l.b16 %v355
  %v1764 = vunpack.c.h.b16 %v355
  %v1765 = vunpack.c.l.b16 %v356
  %v1766 = vunpack.c.h.b16 %v356
  %v1767 = vunpack.c.l.b16 %v357
  %v1768 = vunpack.c.h.b16 %v357
  %v1769 = vunpack.c.l.b16 %v358
  %v1770 = vunpack.c.h.b16 %v358
  %v1771 = vunpack.c.l.b16 %v359
  %v1772 = vunpack.c.h.b16 %v359
  %v1773 = vunpack.c.l.b16 %v360
  %v1774 = vunpack.c.h.b16 %v360
  %v1775 = vunpack.c.l.b16 %v361
  %v1776 = vunpack.c.h.b16 %v361
  %v1777 = vunpack.c.l.b16 %v362
  %v1778 = vunpack.c.h.b16 %v362
  %v1779 = vunpack.c.l.b16 %v363
  %v1780 = vunpack.c.h.b16 %v363
  %v1781 = vunpack.c.l.b16 %v364
  %v1782 = vunpack.c.h.b16 %v364
  %v1783 = vunpack.c.l.b16 %v365
  %v1784 = vunpack.c.h.b16 %v365
  %v1785 = vunpack.c.l.b16 %v366
  %v1786 = vunpack.c.h.b16 %v366
  %v1787 = vunpack.c.l.b16 %v367
  %v1788 = vunpack.c.h.b16 %v367
  %v1789 = vunpack.c.l.b16 %v368
  %v1790 = vunpack.c.h.b16 %v368
  %v1791 = vunpack.c.l.b16 %v369
  %v1792 = vunpack.c.h.b16 %v369
  %v1793 = vunpack.c.l.b16 %v370
  %v1794 = vunpack.c.h.b16 %v370
  %v1795 = vunpack.c.l.b16 %v371
  %v1796 = vunpack.c.h.b16 %v371
  %v1797 = vunpack.c.l.b16 %v372
  %v1798 = vunpack.c.h.b16 %v372
  %v1799 = vunpack.c.l.b16 %v373
  %v1800 = vunpack.c.h.b16 %v373
  %v1801 = vunpack.c.l.b16 %v374
  %v1802 = vunpack.c.h.b16 %v374
  %v1803 = vunpack.c.l.b16 %v375
  %v1804 = vunpack.c.h.b16 %v375
  %v1805 = vunpack.c.l.b16 %v376
  %v1806 = vunpack.c.h.b16 %v376
  %v1807 = vunpack.c.l.b16 %v377
  %v1808 = vunpack.c.h.b16 %v377
  %v1809 = vunpack.c.l.b16 %v378
  %v1810 = vunpack.c.h.b16 %v378
  %v1811 = vunpack.c.l.b16 %v379
  %v1812 = vunpack.c.h.b16 %v379
  %v1813 = vunpack.c.l.b16 %v380
  %v1814 = vunpack.c.h.b16 %v380
  %v1815 = vunpack.c.l.b16 %v381
  %v1816 = vunpack.c.h.b16 %v381
  %v1817 = vunpack.c.l.b16 %v382
  %v1818 = vunpack.c.h.b16 %v382
  %v1819 = vunpack.c.l.b16 %v383
  %v1820 = vunpack.c.h.b16 %v383
  %v1821 = vunpack.c.l.b16 %v384
  %v1822 = vunpack.c.h.b16 %v384
  %v1823 = vunpack.c.l.b16 %v385
  %v1824 = vunpack.c.h.b16 %v385
  %v1825 = vunpack.c.l.b16 %v386
  %v1826 = vunpack.c.h.b16 %v386
  %v1827 = vunpack.c.l.b16 %v387
  %v1828 = vunpack.c.h.b16 %v387
  %v1829 = vunpack.c.l.b16 %v388
  %v1830 = vunpack.c.h.b16 %v388
  %v1831 = vunpack.c.l.b16 %v389
  %v1832 = vunpack.c.h.b16 %v389
  %v1833 = vunpack.c.l.b16 %v390
  %v1834 = vunpack.c.h.b16 %v390
  %v1835 = vunpack.c.l.b16 %v391
  %v1836 = vunpack.c.h.b16 %v391
  %v1837 = vunpack.c.l.b16 %v392
  %v1838 = vunpack.c.h.b16 %v392
  %v1839 = vunpack.c.l.b16 %v393
  %v1840 = vunpack.c.h.b16 %v393
  %v1841 = vunpack.c.l.b16 %v394
  %v1842 = vunpack.c.h.b16 %v394
  %v1843 = vunpack.c.l.b16 %v395
  %v1844 = vunpack.c.h.b16 %v395
  %v1845 = vunpack.c.l.b16 %v396
  %v1846 = vunpack.c.h.b16 %v396
  %v1847 = vunpack.c.l.b16 %v397
  %v1848 = vunpack.c.h.b16 %v397
  %v1849 = vunpack.c.l.b16 %v398
  %v1850 = vunpack.c.h.b16 %v398
  %v1851 = vunpack.c.l.b16 %v399
  %v1852 = vunpack.c.h.b16 %v399
  %v1853 = vunpack.c.l.b16 %v400
  %v1854 = vunpack.c.h.b16 %v400
  %v1855 = vunpack.c.l.b16 %v401
  %v1856 = vunpack.c.h.b16 %v401
  %v1857 = vunpack.c.l.b16 %v402
  %v1858 = vunpack.c.h.b16 %v402
  %v1859 = vunpack.c.l.b16 %v403
  %v1860 = vunpack.c.h.b16 %v403
  %v1861 = vunpack.c.l.b16 %v404
  %v1862 = vunpack.c.h.b16 %v404
  %v1863 = vunpack.c.l.b16 %v405
  %v1864 = vunpack.c.h.b16 %v405
  %v1865 = vunpack.c.l.b16 %v406
  %v1866 = vunpack.c.h.b16 %v406
  %v1867 = vunpack.c.l.b16 %v407
  %v1868 = vunpack.c.h.b16 %v407
  %v1869 = vunpack.c.l.b16 %v408
  %v1870 = vunpack.c.h.b16 %v408
  %v1871 = vunpack.c.l.b16 %v409
  %v1872 = vunpack.c.h.b16 %v409
  %v1873 = vunpack.c.l.b16 %v410
  %v1874 = vunpack.c.h.b16 %v410
  %v1875 = vunpack.c.l.b16 %v411
  %v1876 = vunpack.c.h.b16 %v411
  %v1877 = vunpack.c.l.b16 %v412
  %v1878 = vunpack.c.h.b16 %v412
  %v1879 = vunpack.c.l.b16 %v413
  %v1880 = vunpack.c.h.b16 %v413
  %v1881 = vunpack.c.l.b16 %v414
  %v1882 = vunpack.c.h.b16 %v414
  %v1883 = vunpack.c.l.b16 %v415
  %v1884 = vunpack.c.h.b16 %v415
  %v1885 = vunpack.c.l.b16 %v416
  %v1886 = vunpack.c.h.b16 %v416
  %v1887 = vunpack.c.l.b16 %v417
  %v1888 = vunpack.c.h.b16 %v417
  %v1889 = vunpack.c.l.b16 %v418
  %v1890 = vunpack.c.h.b16 %v418
  %v1891 = vunpack.c.l.b16 %v419
  %v1892 = vunpack.c.h.b16 %v419
  %v1893 = vunpack.c.l.b16 %v420
  %v1894 = vunpack.c.h.b16 %v420
  %v1895 = vunpack.c.l.b16 %v421
  %v1896 = vunpack.c.h.b16 %v421
  %v1897 = vunpack.c.l.b16 %v422
  %v1898 = vunpack.c.h.b16 %v422
  %v1899 = vunpack.c.l.b16 %v423
  %v1900 = vunpack.c.h.b16 %v423
  %v1901 = vunpack.c.l.b16 %v424
  %v1902 = vunpack.c.h.b16 %v424
  %v1903 = vunpack.c.l.b16 %v425
  %v1904 = vunpack.c.h.b16 %v425
  %v1905 = vunpack.c.l.b16 %v426
  %v1906 = vunpack.c.h.b16 %v426
  %v1907 = vunpack.c.l.b16 %v427
  %v1908 = vunpack.c.h.b16 %v427
  %v1909 = vunpack.c.l.b16 %v428
  %v1910 = vunpack.c.h.b16 %v428
  %v1911 = vunpack.c.l.b16 %v429
  %v1912 = vunpack.c.h.b16 %v429
  %v1913 = vunpack.c.l.b16 %v430
  %v1914 = vunpack.c.h.b16 %v430
  %v1915 = vunpack.c.l.b16 %v431
  %v1916 = vunpack.c.h.b16 %v431
  %v1917 = vunpack.c.l.b16 %v432
  %v1918 = vunpack.c.h.b16 %v432
  %v1919 = vunpack.c.l.b16 %v433
  %v1920 = vunpack.c.h.b16 %v433
  %v1921 = vunpack.c.l.b16 %v434
  %v1922 = vunpack.c.h.b16 %v434
  %v1923 = vunpack.c.l.b16 %v435
  %v1924 = vunpack.c.h.b16 %v435
  %v1925 = vunpack.c.l.b16 %v436
  %v1926 = vunpack.c.h.b16 %v436
  %v1927 = vunpack.c.l.b16 %v437
  %v1928 = vunpack.c.h.b16 %v437
  %v1929 = vunpack.c.l.b16 %v438
  %v1930 = vunpack.c.h.b16 %v438
  %v1931 = vunpack.c.l.b16 %v439
  %v1932 = vunpack.c.h.b16 %v439
  %v1933 = vunpack.c.l.b16 %v440
  %v1934 = vunpack.c.h.b16 %v440
  %v1935 = vunpack.c.l.b16 %v441
  %v1936 = vunpack.c.h.b16 %v441
  %v1937 = vunpack.c.l.b16 %v442
  %v1938 = vunpack.c.h.b16 %v442
  %v1939 = vunpack.c.l.b16 %v443
  %v1940 = vunpack.c.h.b16 %v443
  %v1941 = vunpack.c.l.b16 %v444
  %v1942 = vunpack.c.h.b16 %v444
  %v1943 = vunpack.c.l.b16 %v445
  %v1944 = vunpack.c.h.b16 %v445
  %v1945 = vunpack.c.l.b16 %v446
  %v1946 = vunpack.c.h.b16 %v446
  %v1947 = vunpack.c.l.b16 %v447
  %v1948 = vunpack.c.h.b16 %v447
  %v1949 = vunpack.c.l.b16 %v448
  %v1950 = vunpack.c.h.b16 %v448
  %v1951 = vunpack.c.l.b16 %v449
  %v1952 = vunpack.c.h.b16 %v449
  %v1953 = vunpack.c.l.b16 %v450
  %v1954 = vunpack.c.h.b16 %v450
  %v1955 = vunpack.c.l.b16 %v451
  %v1956 = vunpack.c.h.b16 %v451
  %v1957 = vunpack.c.l.b16 %v452
  %v1958 = vunpack.c.h.b16 %v452
  %v1959 = vunpack.c.l.b16 %v453
  %v1960 = vunpack.c.h.b16 %v453
  %v1961 = vunpack.c.l.b16 %v454
  %v1962 = vunpack.c.h.b16 %v454
  %v1963 = vunpack.c.l.b16 %v455
  %v1964 = vunpack.c.h.b16 %v455
  %v1965 = vunpack.c.l.b16 %v456
  %v1966 = vunpack.c.h.b16 %v456
  %v1967 = vunpack.c.l.b16 %v457
  %v1968 = vunpack.c.h.b16 %v457
  %v1969 = vunpack.c.l.b16 %v458
  %v1970 = vunpack.c.h.b16 %v458
  %v1971 = vunpack.c.l.b16 %v459
  %v1972 = vunpack.c.h.b16 %v459
  %v1973 = vunpack.c.l.b16 %v460
  %v1974 = vunpack.c.h.b16 %v460
  %v1975 = vunpack.c.l.b16 %v461
  %v1976 = vunpack.c.h.b16 %v461
  %v1977 = vunpack.c.l.b16 %v462
  %v1978 = vunpack.c.h.b16 %v462
  %v1979 = vunpack.c.l.b16 %v463
  %v1980 = vunpack.c.h.b16 %v463
  %v1981 = vunpack.c.l.b16 %v464
  %v1982 = vunpack.c.h.b16 %v464
  %v1983 = vunpack.c.l.b16 %v465
  %v1984 = vunpack.c.h.b16 %v465
  %v1985 = vunpack.c.l.b16 %v466
  %v1986 = vunpack.c.h.b16 %v466
  %v1987 = vunpack.c.l.b16 %v467
  %v1988 = vunpack.c.h.b16 %v467
  %v1989 = vunpack.c.l.b16 %v468
  %v1990 = vunpack.c.h.b16 %v468
  %v1991 = vunpack.c.l.b16 %v469
  %v1992 = vunpack.c.h.b16 %v469
  %v1993 = vunpack.c.l.b16 %v470
  %v1994 = vunpack.c.h.b16 %v470
  %v1995 = vunpack.c.l.b16 %v471
  %v1996 = vunpack.c.h.b16 %v471
  %v1997 = vunpack.c.l.b16 %v472
  %v1998 = vunpack.c.h.b16 %v472
  %v1999 = vunpack.c.l.b16 %v473
  %v2000 = vunpack.c.h.b16 %v473
  %v2001 = vunpack.c.l.b16 %v474
  %v2002 = vunpack.c.h.b16 %v474
  %v2003 = vunpack.c.l.b16 %v475
  %v2004 = vunpack.c.h.b16 %v475
  %v2005 = vunpack.c.l.b16 %v476
  %v2006 = vunpack.c.h.b16 %v476
  %v2007 = vunpack.c.l.b16 %v477
  %v2008 = vunpack.c.h.b16 %v477
  %v2009 = vunpack.c.l.b16 %v478
  %v2010 = vunpack.c.h.b16 %v478
  %v2011 = vunpack.c.l.b16 %v479
  %v2012 = vunpack.c.h.b16 %v479
  %v2013 = vunpack.c.l.b16 %v480
  %v2014 = vunpack.c.h.b16 %v480
  %v2015 = vunpack.c.l.b16 %v481
  %v2016 = vunpack.c.h.b16 %v481
  %v2017 = vunpack.c.l.b16 %v482
  %v2018 = vunpack.c.h.b16 %v482
  %v2019 = vunpack.c.l.b16 %v483
  %v2020 = vunpack.c.h.b16 %v483
  %v2021 = vunpack.c.l.b16 %v484
  %v2022 = vunpack.c.h.b16 %v484
  %v2023 = vunpack.c.l.b16 %v485
  %v2024 = vunpack.c.h.b16 %v485
  %v2025 = vunpack.c.l.b16 %v486
  %v2026 = vunpack.c.h.b16 %v486
  %v2027 = vunpack.c.l.b16 %v487
  %v2028 = vunpack.c.h.b16 %v487
  %v2029 = vunpack.c.l.b16 %v488
  %v2030 = vunpack.c.h.b16 %v488
  %v2031 = vunpack.c.l.b16 %v489
  %v2032 = vunpack.c.h.b16 %v489
  %v2033 = vunpack.c.l.b16 %v490
  %v2034 = vunpack.c.h.b16 %v490
  %v2035 = vunpack.c.l.b16 %v491
  %v2036 = vunpack.c.h.b16 %v491
  %v2037 = vunpack.c.l.b16 %v492
  %v2038 = vunpack.c.h.b16 %v492
  %v2039 = vunpack.c.l.b16 %v493
  %v2040 = vunpack.c.h.b16 %v493
  %v2041 = vunpack.c.l.b16 %v494
  %v2042 = vunpack.c.h.b16 %v494
  %v2043 = vunpack.c.l.b16 %v495
  %v2044 = vunpack.c.h.b16 %v495
  %v2045 = vunpack.c.l.b16 %v496
  %v2046 = vunpack.c.h.b16 %v496
  %v2047 = vunpack.c.l.b16 %v497
  %v2048 = vunpack.c.h.b16 %v497
  %v2049 = vunpack.c.l.b16 %v498
  %v2050 = vunpack.c.h.b16 %v498
  %v2051 = vunpack.c.l.b16 %v499
  %v2052 = vunpack.c.h.b16 %v499
  %v2053 = vunpack.c.l.b16 %v500
  %v2054 = vunpack.c.h.b16 %v500
  %v2055 = vunpack.c.l.b16 %v501
  %v2056 = vunpack.c.h.b16 %v501
  %v2057 = vunpack.c.l.b16 %v502
  %v2058 = vunpack.c.h.b16 %v502
  %v2059 = vunpack.c.l.b16 %v503
  %v2060 = vunpack.c.h.b16 %v503
  %v2061 = vunpack.c.l.b16 %v504
  %v2062 = vunpack.c.h.b16 %v504
  %v2063 = vunpack.c.l.b16 %v505
  %v2064 = vunpack.c.h.b16 %v505
  %v2065 = vunpack.c.l.b16 %v506
  %v2066 = vunpack.c.h.b16 %v506
  %v2067 = vunpack.c.l.b16 %v507
  %v2068 = vunpack.c.h.b16 %v507
  %v2069 = vunpack.c.l.b16 %v508
  %v2070 = vunpack.c.h.b16 %v508
  %v2071 = vunpack.c.l.b16 %v509
  %v2072 = vunpack.c.h.b16 %v509
  %v2073 = vunpack.c.l.b16 %v510
  %v2074 = vunpack.c.h.b16 %v510
  %v2075 = vunpack.c.l.b16 %v511
  %v2076 = vunpack.c.h.b16 %v511
  %v2077 = vunpack.c.l.b16 %v512
  %v2078 = vunpack.c.h.b16 %v512
  %v2079 = vunpack.c.l.b16 %v513
  %v2080 = vunpack.c.h.b16 %v513
  %v2081 = vunpack.c.l.b16 %v514
  %v2082 = vunpack.c.h.b16 %v514
  %v2083 = vunpack.c.l.b16 %v515
  %v2084 = vunpack.c.h.b16 %v515
  %v2085 = vunpack.c.l.b16 %v516
  %v2086 = vunpack.c.h.b16 %v516
  %v2087 = vunpack.c.l.b16 %v517
  %v2088 = vunpack.c.h.b16 %v517
  %v2089 = vunpack.c.l.b16 %v518
  %v2090 = vunpack.c.h.b16 %v518
  %v2091 = vunpack.c.l.b16 %v519
  %v2092 = vunpack.c.h.b16 %v519
  %v2093 = vunpack.c.l.b16 %v520
  %v2094 = vunpack.c.h.b16 %v520
  %v2095 = vunpack.c.l.b16 %v521
  %v2096 = vunpack.c.h.b16 %v521
  %v2097 = vunpack.c.l.b16 %v522
  %v2098 = vunpack.c.h.b16 %v522
  %v2099 = vunpack.c.l.b16 %v523
  %v2100 = vunpack.c.h.b16 %v523
  %v2101 = vunpack.c.l.b16 %v524
  %v2102 = vunpack.c.h.b16 %v524
  %v2103 = vunpack.c.l.b16 %v525
  %v2104 = vunpack.c.h.b16 %v525
  %v2105 = vunpack.c.l.b16 %v526
  %v2106 = vunpack.c.h.b16 %v526
  %v2107 = vunpack.c.l.b16 %v527
  %v2108 = vunpack.c.h.b16 %v527
  %v2109 = vunpack.c.l.b16 %v528
  %v2110 = vunpack.c.h.b16 %v528
  %v2111 = vunpack.c.l.b16 %v529
  %v2112 = vunpack.c.h.b16 %v529
  %v2113 = vunpack.c.l.b16 %v530
  %v2114 = vunpack.c.h.b16 %v530
  %v2115 = vunpack.c.l.b16 %v531
  %v2116 = vunpack.c.h.b16 %v531
  %v2117 = vunpack.c.l.b16 %v532
  %v2118 = vunpack.c.h.b16 %v532
  %v2119 = vunpack.c.l.b16 %v533
  %v2120 = vunpack.c.h.b16 %v533
  %v2121 = vunpack.c.l.b16 %v534
  %v2122 = vunpack.c.h.b16 %v534
  %v2123 = vunpack.c.l.b16 %v535
  %v2124 = vunpack.c.h.b16 %v535
  %v2125 = vunpack.c.l.b16 %v536
  %v2126 = vunpack.c.h.b16 %v536
  %v2127 = vunpack.c.l.b16 %v537
  %v2128 = vunpack.c.h.b16 %v537
  %v2129 = vunpack.c.l.b16 %v538
  %v2130 = vunpack.c.h.b16 %v538
  %v2131 = vunpack.c.l.b16 %v539
  %v2132 = vunpack.c.h.b16 %v539
  %v2133 = vunpack.c.l.b16 %v540
  %v2134 = vunpack.c.h.b16 %v540
  %v2135 = vunpack.c.l.b16 %v541
  %v2136 = vunpack.c.h.b16 %v541
  %v2137 = vunpack.c.l.b16 %v542
  %v2138 = vunpack.c.h.b16 %v542
  %v2139 = vunpack.c.l.b16 %v543
  %v2140 = vunpack.c.h.b16 %v543
  %v2141 = vunpack.c.l.b16 %v544
  %v2142 = vunpack.c.h.b16 %v544
  %v2143 = vunpack.c.l.b16 %v545
  %v2144 = vunpack.c.h.b16 %v545
  %v2145 = vunpack.c.l.b16 %v546
  %v2146 = vunpack.c.h.b16 %v546
  %v2147 = vunpack.c.l.b16 %v547
  %v2148 = vunpack.c.h.b16 %v547
  %v2149 = vunpack.c.l.b16 %v548
  %v2150 = vunpack.c.h.b16 %v548
  %v2151 = vunpack.c.l.b16 %v549
  %v2152 = vunpack.c.h.b16 %v549
  %v2153 = vunpack.c.l.b16 %v550
  %v2154 = vunpack.c.h.b16 %v550
  %v2155 = vpack.c.b16 %v1139, %v1131
  %v2156 = vpack.c.b16 %v1140, %v1132
  %v2157 = vpack.c.b16 %v1141, %v1133
  %v2158 = vpack.c.b16 %v1142, %v1134
  %v2159 = vpack.c.b16 %v1143, %v1135
  %v2160 = vpack.c.b16 %v1144, %v1136
  %v2161 = vpack.c.b16 %v1145, %v1137
  %v2162 = vpack.c.b16 %v1146, %v1138
  %v2163 = vpack.c.b16 %v1155, %v1147
  %v2164 = vpack.c.b16 %v1156, %v1148
  %v2165 = vpack.c.b16 %v1157, %v1149
  %v2166 = vpack.c.b16 %v1158, %v1150
  %v2167 = vpack.c.b16 %v1159, %v1151
  %v2168 = vpack.c.b16 %v1160, %v1152
  %v2169 = vpack.c.b16 %v1161, %v1153
  %v2170 = vpack.c.b16 %v1162, %v1154
  %v2171 = vpack.c.b16 %v1171, %v1163
  %v2172 = vpack.c.b16 %v1172, %v1164
  %v2173 = vpack.c.b16 %v1173, %v1165
  %v2174 = vpack.c.b16 %v1174, %v1166
  %v2175 = vpack.c.b16 %v1175, %v1167
  %v2176 = vpack.c.b16 %v1176, %v1168
  %v2177 = vpack.c.b16 %v1177, %v1169
  %v2178 = vpack.c.b16 %v1178, %v1170
  %v2179 = vpack.c.b16 %v1187, %v1179
  %v2180 = vpack.c.b16 %v1188, %v1180
  %v2181 = vpack.c.b16 %v1189, %v1181
  %v2182 = vpack.c.b16 %v1190, %v1182
  %v2183 = vpack.c.b16 %v1191, %v1183
  %v2184 = vpack.c.b16 %v1192, %v1184
  %v2185 = vpack.c.b16 %v1193, %v1185
  %v2186 = vpack.c.b16 %v1194, %v1186
  %v2187 = vpack.c.b16 %v1203, %v1195
  %v2188 = vpack.c.b16 %v1204, %v1196
  %v2189 = vpack.c.b16 %v1205, %v1197
  %v2190 = vpack.c.b16 %v1206, %v1198
  %v2191 = vpack.c.b16 %v1207, %v1199
  %v2192 = vpack.c.b16 %v1208, %v1200
  %v2193 = vpack.c.b16 %v1209, %v1201
  %v2194 = vpack.c.b16 %v1210, %v1202
  %v2195 = vpack.c.b16 %v1219, %v1211
  %v2196 = vpack.c.b16 %v1220, %v1212
  %v2197 = vpack.c.b16 %v1221, %v1213
  %v2198 = vpack.c.b16 %v1222, %v1214
  %v2199 = vpack.c.b16 %v1223, %v1215
  %v2200 = vpack.c.b16 %v1224, %v1216
  %v2201 = vpack.c.b16 %v1225, %v1217
  %v2202 = vpack.c.b16 %v1226, %v1218
  %v2203 = vpack.c.b16 %v1235, %v1227
  %v2204 = vpack.c.b16 %v1236, %v1228
  %v2205 = vpack.c.b16 %v1237, %v1229
  %v2206 = vpack.c.b16 %v1238, %v1230
  %v2207 = vpack.c.b16 %v1239, %v1231
  %v2208 = vpack.c.b16 %v1240, %v1232
  %v2209 = vpack.c.b16 %v1241, %v1233
  %v2210 = vpack.c.b16 %v1242, %v1234
  %v2211 = vpack.c.b16 %v1251, %v1243
  %v2212 = vpack.c.b16 %v1252, %v1244
  %v2213 = vpack.c.b16 %v1253, %v1245
  %v2214 = vpack.c.b16 %v1254, %v1246
  %v2215 = vpack.c.b16 %v1255, %v1247
  %v2216 = vpack.c.b16 %v1256, %v1248
  %v2217 = vpack.c.b16 %v1257, %v1249
  %v2218 = vpack.c.b16 %v1258, %v1250
  %v2219 = vpack.c.b16 %v1267, %v1259
  %v2220 = vpack.c.b16 %v1268, %v1260
  %v2221 = vpack.c.b16 %v1269, %v1261
  %v2222 = vpack.c.b16 %v1270, %v1262
  %v2223 = vpack.c.b16 %v1271, %v1263
  %v2224 = vpack.c.b16 %v1272, %v1264
  %v2225 = vpack.c.b16 %v1273, %v1265
  %v2226 = vpack.c.b16 %v1274, %v1266
  %v2227 = vpack.c.b16 %v1283, %v1275
  %v2228 = vpack.c.b16 %v1284, %v1276
  %v2229 = vpack.c.b16 %v1285, %v1277
  %v2230 = vpack.c.b16 %v1286, %v1278
  %v2231 = vpack.c.b16 %v1287, %v1279
  %v2232 = vpack.c.b16 %v1288, %v1280
  %v2233 = vpack.c.b16 %v1289, %v1281
  %v2234 = vpack.c.b16 %v1290, %v1282
  %v2235 = vpack.c.b16 %v1299, %v1291
  %v2236 = vpack.c.b16 %v1300, %v1292
  %v2237 = vpack.c.b16 %v1301, %v1293
  %v2238 = vpack.c.b16 %v1302, %v1294
  %v2239 = vpack.c.b16 %v1303, %v1295
  %v2240 = vpack.c.b16 %v1304, %v1296
  %v2241 = vpack.c.b16 %v1305, %v1297
  %v2242 = vpack.c.b16 %v1306, %v1298
  %v2243 = vpack.c.b16 %v1315, %v1307
  %v2244 = vpack.c.b16 %v1316, %v1308
  %v2245 = vpack.c.b16 %v1317, %v1309
  %v2246 = vpack.c.b16 %v1318, %v1310
  %v2247 = vpack.c.b16 %v1319, %v1311
  %v2248 = vpack.c.b16 %v1320, %v1312
  %v2249 = vpack.c.b16 %v1321, %v1313
  %v2250 = vpack.c.b16 %v1322, %v1314
  %v2251 = vpack.c.b16 %v1331, %v1323
  %v2252 = vpack.c.b16 %v1332, %v1324
  %v2253 = vpack.c.b16 %v1333, %v1325
  %v2254 = vpack.c.b16 %v1334, %v1326
  %v2255 = vpack.c.b16 %v1335, %v1327
  %v2256 = vpack.c.b16 %v1336, %v1328
  %v2257 = vpack.c.b16 %v1337, %v1329
  %v2258 = vpack.c.b16 %v1338, %v1330
  %v2259 = vpack.c.b16 %v1347, %v1339
  %v2260 = vpack.c.b16 %v1348, %v1340
  %v2261 = vpack.c.b16 %v1349, %v1341
  %v2262 = vpack.c.b16 %v1350, %v1342
  %v2263 = vpack.c.b16 %v1351, %v1343
  %v2264 = vpack.c.b16 %v1352, %v1344
  %v2265 = vpack.c.b16 %v1353, %v1345
  %v2266 = vpack.c.b16 %v1354, %v1346
  %v2267 = vpack.c.b16 %v1363, %v1355
  %v2268 = vpack.c.b16 %v1364, %v1356
  %v2269 = vpack.c.b16 %v1365, %v1357
  %v2270 = vpack.c.b16 %v1366, %v1358
  %v2271 = vpack.c.b16 %v1367, %v1359
  %v2272 = vpack.c.b16 %v1368, %v1360
  %v2273 = vpack.c.b16 %v1369, %v1361
  %v2274 = vpack.c.b16 %v1370, %v1362
  %v2275 = vpack.c.b16 %v1379, %v1371
  %v2276 = vpack.c.b16 %v1380, %v1372
  %v2277 = vpack.c.b16 %v1381, %v1373
  %v2278 = vpack.c.b16 %v1382, %v1374
  %v2279 = vpack.c.b16 %v1383, %v1375
  %v2280 = vpack.c.b16 %v1384, %v1376
  %v2281 = vpack.c.b16 %v1385, %v1377
  %v2282 = vpack.c.b16 %v1386, %v1378
  %v2283 = vpack.c.b16 %v1395, %v1387
  %v2284 = vpack.c.b16 %v1396, %v1388
  %v2285 = vpack.c.b16 %v1397, %v1389
  %v2286 = vpack.c.b16 %v1398, %v1390
  %v2287 = vpack.c.b16 %v1399, %v1391
  %v2288 = vpack.c.b16 %v1400, %v1392
  %v2289 = vpack.c.b16 %v1401, %v1393
  %v2290 = vpack.c.b16 %v1402, %v1394
  %v2291 = vpack.c.b16 %v1411, %v1403
  %v2292 = vpack.c.b16 %v1412, %v1404
  %v2293 = vpack.c.b16 %v1413, %v1405
  %v2294 = vpack.c.b16 %v1414, %v1406
  %v2295 = vpack.c.b16 %v1415, %v1407
  %v2296 = vpack.c.b16 %v1416, %v1408
  %v2297 = vpack.c.b16 %v1417, %v1409
  %v2298 = vpack.c.b16 %v1418, %v1410
  %v2299 = vpack.c.b16 %v1427, %v1419
  %v2300 = vpack.c.b16 %v1428, %v1420
  %v2301 = vpack.c.b16 %v1429, %v1421
  %v2302 = vpack.c.b16 %v1430, %v1422
  %v2303 = vpack.c.b16 %v1431, %v1423
  %v2304 = vpack.c.b16 %v1432, %v1424
  %v2305 = vpack.c.b16 %v1433, %v1425
  %v2306 = vpack.c.b16 %v1434, %v1426
  %v2307 = vpack.c.b16 %v1443, %v1435
  %v2308 = vpack.c.b16 %v1444, %v1436
  %v2309 = vpack.c.b16 %v1445, %v1437
  %v2310 = vpack.c.b16 %v1446, %v1438
  %v2311 = vpack.c.b16 %v1447, %v1439
  %v2312 = vpack.c.b16 %v1448, %v1440
  %v2313 = vpack.c.b16 %v1449, %v1441
  %v2314 = vpack.c.b16 %v1450, %v1442
  %v2315 = vpack.c.b16 %v1459, %v1451
  %v2316 = vpack.c.b16 %v1460, %v1452
  %v2317 = vpack.c.b16 %v1461, %v1453
  %v2318 = vpack.c.b16 %v1462, %v1454
  %v2319 = vpack.c.b16 %v1463, %v1455
  %v2320 = vpack.c.b16 %v1464, %v1456
  %v2321 = vpack.c.b16 %v1465, %v1457
  %v2322 = vpack.c.b16 %v1466, %v1458
  %v2323 = vpack.c.b16 %v1475, %v1467
  %v2324 = vpack.c.b16 %v1476, %v1468
  %v2325 = vpack.c.b16 %v1477, %v1469
  %v2326 = vpack.c.b16 %v1478, %v1470
  %v2327 = vpack.c.b16 %v1479, %v1471
  %v2328 = vpack.c.b16 %v1480, %v1472
  %v2329 = vpack.c.b16 %v1481, %v1473
  %v2330 = vpack.c.b16 %v1482, %v1474
  %v2331 = vpack.c.b16 %v1491, %v1483
  %v2332 = vpack.c.b16 %v1492, %v1484
  %v2333 = vpack.c.b16 %v1493, %v1485
  %v2334 = vpack.c.b16 %v1494, %v1486
  %v2335 = vpack.c.b16 %v1495, %v1487
  %v2336 = vpack.c.b16 %v1496, %v1488
  %v2337 = vpack.c.b16 %v1497, %v1489
  %v2338 = vpack.c.b16 %v1498, %v1490
  %v2339 = vpack.c.b16 %v1507, %v1499
  %v2340 = vpack.c.b16 %v1508, %v1500
  %v2341 = vpack.c.b16 %v1509, %v1501
  %v2342 = vpack.c.b16 %v1510, %v1502
  %v2343 = vpack.c.b16 %v1511, %v1503
  %v2344 = vpack.c.b16 %v1512, %v1504
  %v2345 = vpack.c.b16 %v1513, %v1505
  %v2346 = vpack.c.b16 %v1514, %v1506
  %v2347 = vpack.c.b16 %v1523, %v1515
  %v2348 = vpack.c.b16 %v1524, %v1516
  %v2349 = vpack.c.b16 %v1525, %v1517
  %v2350 = vpack.c.b16 %v1526, %v1518
  %v2351 = vpack.c.b16 %v1527, %v1519
  %v2352 = vpack.c.b16 %v1528, %v1520
  %v2353 = vpack.c.b16 %v1529, %v1521
  %v2354 = vpack.c.b16 %v1530, %v1522
  %v2355 = vpack.c.b16 %v1539, %v1531
  %v2356 = vpack.c.b16 %v1540, %v1532
  %v2357 = vpack.c.b16 %v1541, %v1533
  %v2358 = vpack.c.b16 %v1542, %v1534
  %v2359 = vpack.c.b16 %v1543, %v1535
  %v2360 = vpack.c.b16 %v1544, %v1536
  %v2361 = vpack.c.b16 %v1545, %v1537
  %v2362 = vpack.c.b16 %v1546, %v1538
  %v2363 = vpack.c.b16 %v1555, %v1547
  %v2364 = vpack.c.b16 %v1556, %v1548
  %v2365 = vpack.c.b16 %v1557, %v1549
  %v2366 = vpack.c.b16 %v1558, %v1550
  %v2367 = vpack.c.b16 %v1559, %v1551
  %v2368 = vpack.c.b16 %v1560, %v1552
  %v2369 = vpack.c.b16 %v1561, %v1553
  %v2370 = vpack.c.b16 %v1562, %v1554
  %v2371 = vpack.c.b16 %v1571, %v1563
  %v2372 = vpack.c.b16 %v1572, %v1564
  %v2373 = vpack.c.b16 %v1573, %v1565
  %v2374 = vpack.c.b16 %v1574, %v1566
  %v2375 = vpack.c.b16 %v1575, %v1567
  %v2376 = vpack.c.b16 %v1576, %v1568
  %v2377 = vpack.c.b16 %v1577, %v1569
  %v2378 = vpack.c.b16 %v1578, %v1570
  %v2379 = vpack.c.b16 %v1587, %v1579
  %v2380 = vpack.c.b16 %v1588, %v1580
  %v2381 = vpack.c.b16 %v1589, %v1581
  %v2382 = vpack.c.b16 %v1590, %v1582
  %v2383 = vpack.c.b16 %v1591, %v1583
  %v2384 = vpack.c.b16 %v1592, %v1584
  %v2385 = vpack.c.b16 %v1593, %v1585
  %v2386 = vpack.c.b16 %v1594, %v1586
  %v2387 = vpack.c.b16 %v1603, %v1595
  %v2388 = vpack.c.b16 %v1604, %v1596
  %v2389 = vpack.c.b16 %v1605, %v1597
  %v2390 = vpack.c.b16 %v1606, %v1598
  %v2391 = vpack.c.b16 %v1607, %v1599
  %v2392 = vpack.c.b16 %v1608, %v1600
  %v2393 = vpack.c.b16 %v1609, %v1601
  %v2394 = vpack.c.b16 %v1610, %v1602
  %v2395 = vpack.c.b16 %v1619, %v1611
  %v2396 = vpack.c.b16 %v1620, %v1612
  %v2397 = vpack.c.b16 %v1621, %v1613
  %v2398 = vpack.c.b16 %v1622, %v1614
  %v2399 = vpack.c.b16 %v1623, %v1615
  %v2400 = vpack.c.b16 %v1624, %v1616
  %v2401 = vpack.c.b16 %v1625, %v1617
  %v2402 = vpack.c.b16 %v1626, %v1618
  %v2403 = vpack.c.b16 %v1635, %v1627
  %v2404 = vpack.c.b16 %v1636, %v1628
  %v2405 = vpack.c.b16 %v1637, %v1629
  %v2406 = vpack.c.b16 %v1638, %v1630
  %v2407 = vpack.c.b16 %v1639, %v1631
  %v2408 = vpack.c.b16 %v1640, %v1632
  %v2409 = vpack.c.b16 %v1641, %v1633
  %v2410 = vpack.c.b16 %v1642, %v1634
  %v2411 = vpack.c.b16 %v1651, %v1643
  %v2412 = vpack.c.b16 %v1652, %v1644
  %v2413 = vpack.c.b16 %v1653, %v1645
  %v2414 = vpack.c.b16 %v1654, %v1646
  %v2415 = vpack.c.b16 %v1655, %v1647
  %v2416 = vpack.c.b16 %v1656, %v1648
  %v2417 = vpack.c.b16 %v1657, %v1649
  %v2418 = vpack.c.b16 %v1658, %v1650
  %v2419 = vpack.c.b16 %v1667, %v1659
  %v2420 = vpack.c.b16 %v1668, %v1660
  %v2421 = vpack.c.b16 %v1669, %v1661
  %v2422 = vpack.c.b16 %v1670, %v1662
  %v2423 = vpack.c.b16 %v1671, %v1663
  %v2424 = vpack.c.b16 %v1672, %v1664
  %v2425 = vpack.c.b16 %v1673, %v1665
  %v2426 = vpack.c.b16 %v1674, %v1666
  %v2427 = vpack.c.b16 %v1683, %v1675
  %v2428 = vpack.c.b16 %v1684, %v1676
  %v2429 = vpack.c.b16 %v1685, %v1677
  %v2430 = vpack.c.b16 %v1686, %v1678
  %v2431 = vpack.c.b16 %v1687, %v1679
  %v2432 = vpack.c.b16 %v1688, %v1680
  %v2433 = vpack.c.b16 %v1689, %v1681
  %v2434 = vpack.c.b16 %v1690, %v1682
  %v2435 = vpack.c.b16 %v1699, %v1691
  %v2436 = vpack.c.b16 %v1700, %v1692
  %v2437 = vpack.c.b16 %v1701, %v1693
  %v2438 = vpack.c.b16 %v1702, %v1694
  %v2439 = vpack.c.b16 %v1703, %v1695
  %v2440 = vpack.c.b16 %v1704, %v1696
  %v2441 = vpack.c.b16 %v1705, %v1697
  %v2442 = vpack.c.b16 %v1706, %v1698
  %v2443 = vpack.c.b16 %v1715, %v1707
  %v2444 = vpack.c.b16 %v1716, %v1708
  %v2445 = vpack.c.b16 %v1717, %v1709
  %v2446 = vpack.c.b16 %v1718, %v1710
  %v2447 = vpack.c.b16 %v1719, %v1711
  %v2448 = vpack.c.b16 %v1720, %v1712
  %v2449 = vpack.c.b16 %v1721, %v1713
  %v2450 = vpack.c.b16 %v1722, %v1714
  %v2451 = vpack.c.b16 %v1731, %v1723
  %v2452 = vpack.c.b16 %v1732, %v1724
  %v2453 = vpack.c.b16 %v1733, %v1725
  %v2454 = vpack.c.b16 %v1734, %v1726
  %v2455 = vpack.c.b16 %v1735, %v1727
  %v2456 = vpack.c.b16 %v1736, %v1728
  %v2457 = vpack.c.b16 %v1737, %v1729
  %v2458 = vpack.c.b16 %v1738, %v1730
  %v2459 = vpack.c.b16 %v1747, %v1739
  %v2460 = vpack.c.b16 %v1748, %v1740
  %v2461 = vpack.c.b16 %v1749, %v1741
  %v2462 = vpack.c.b16 %v1750, %v1742
  %v2463 = vpack.c.b16 %v1751, %v1743
  %v2464 = vpack.c.b16 %v1752, %v1744
  %v2465 = vpack.c.b16 %v1753, %v1745
  %v2466 = vpack.c.b16 %v1754, %v1746
  %v2467 = vpack.c.b16 %v1763, %v1755
  %v2468 = vpack.c.b16 %v1764, %v1756
  %v2469 = vpack.c.b16 %v1765, %v1757
  %v2470 = vpack.c.b16 %v1766, %v1758
  %v2471 = vpack.c.b16 %v1767, %v1759
  %v2472 = vpack.c.b16 %v1768, %v1760
  %v2473 = vpack.c.b16 %v1769, %v1761
  %v2474 = vpack.c.b16 %v1770, %v1762
  %v2475 = vpack.c.b16 %v1779, %v1771
  %v2476 = vpack.c.b16 %v1780, %v1772
  %v2477 = vpack.c.b16 %v1781, %v1773
  %v2478 = vpack.c.b16 %v1782, %v1774
  %v2479 = vpack.c.b16 %v1783, %v1775
  %v2480 = vpack.c.b16 %v1784, %v1776
  %v2481 = vpack.c.b16 %v1785, %v1777
  %v2482 = vpack.c.b16 %v1786, %v1778
  %v2483 = vpack.c.b16 %v1795, %v1787
  %v2484 = vpack.c.b16 %v1796, %v1788
  %v2485 = vpack.c.b16 %v1797, %v1789
  %v2486 = vpack.c.b16 %v1798, %v1790
  %v2487 = vpack.c.b16 %v1799, %v1791
  %v2488 = vpack.c.b16 %v1800, %v1792
  %v2489 = vpack.c.b16 %v1801, %v1793
  %v2490 = vpack.c.b16 %v1802, %v1794
  %v2491 = vpack.c.b16 %v1811, %v1803
  %v2492 = vpack.c.b16 %v1812, %v1804
  %v2493 = vpack.c.b16 %v1813, %v1805
  %v2494 = vpack.c.b16 %v1814, %v1806
  %v2495 = vpack.c.b16 %v1815, %v1807
  %v2496 = vpack.c.b16 %v1816, %v1808
  %v2497 = vpack.c.b16 %v1817, %v1809
  %v2498 = vpack.c.b16 %v1818, %v1810
  %v2499 = vpack.c.b16 %v1827, %v1819
  %v2500 = vpack.c.b16 %v1828, %v1820
  %v2501 = vpack.c.b16 %v1829, %v1821
  %v2502 = vpack.c.b16 %v1830, %v1822
  %v2503 = vpack.c.b16 %v1831, %v1823
  %v2504 = vpack.c.b16 %v1832, %v1824
  %v2505 = vpack.c.b16 %v1833, %v1825
  %v2506 = vpack.c.b16 %v1834, %v1826
  %v2507 = vpack.c.b16 %v1843, %v1835
  %v2508 = vpack.c.b16 %v1844, %v1836
  %v2509 = vpack.c.b16 %v1845, %v1837
  %v2510 = vpack.c.b16 %v1846, %v1838
  %v2511 = vpack.c.b16 %v1847, %v1839
  %v2512 = vpack.c.b16 %v1848, %v1840
  %v2513 = vpack.c.b16 %v1849, %v1841
  %v2514 = vpack.c.b16 %v1850, %v1842
  %v2515 = vpack.c.b16 %v1859, %v1851
  %v2516 = vpack.c.b16 %v1860, %v1852
  %v2517 = vpack.c.b16 %v1861, %v1853
  %v2518 = vpack.c.b16 %v1862, %v1854
  %v2519 = vpack.c.b16 %v1863, %v1855
  %v2520 = vpack.c.b16 %v1864, %v1856
  %v2521 = vpack.c.b16 %v1865, %v1857
  %v2522 = vpack.c.b16 %v1866, %v1858
  %v2523 = vpack.c.b16 %v1875, %v1867
  %v2524 = vpack.c.b16 %v1876, %v1868
  %v2525 = vpack.c.b16 %v1877, %v1869
  %v2526 = vpack.c.b16 %v1878, %v1870
  %v2527 = vpack.c.b16 %v1879, %v1871
  %v2528 = vpack.c.b16 %v1880, %v1872
  %v2529 = vpack.c.b16 %v1881, %v1873
  %v2530 = vpack.c.b16 %v1882, %v1874
  %v2531 = vpack.c.b16 %v1891, %v1883
  %v2532 = vpack.c.b16 %v1892, %v1884
  %v2533 = vpack.c.b16 %v1893, %v1885
  %v2534 = vpack.c.b16 %v1894, %v1886
  %v2535 = vpack.c.b16 %v1895, %v1887
  %v2536 = vpack.c.b16 %v1896, %v1888
  %v2537 = vpack.c.b16 %v1897, %v1889
  %v2538 = vpack.c.b16 %v1898, %v1890
  %v2539 = vpack.c.b16 %v1907, %v1899
  %v2540 = vpack.c.b16 %v1908, %v1900
  %v2541 = vpack.c.b16 %v1909, %v1901
  %v2542 = vpack.c.b16 %v1910, %v1902
  %v2543 = vpack.c.b16 %v1911, %v1903
  %v2544 = vpack.c.b16 %v1912, %v1904
  %v2545 = vpack.c.b16 %v1913, %v1905
  %v2546 = vpack.c.b16 %v1914, %v1906
  %v2547 = vpack.c.b16 %v1923, %v1915
  %v2548 = vpack.c.b16 %v1924, %v1916
  %v2549 = vpack.c.b16 %v1925, %v1917
  %v2550 = vpack.c.b16 %v1926, %v1918
  %v2551 = vpack.c.b16 %v1927, %v1919
  %v2552 = vpack.c.b16 %v1928, %v1920
  %v2553 = vpack.c.b16 %v1929, %v1921
  %v2554 = vpack.c.b16 %v1930, %v1922
  %v2555 = vpack.c.b16 %v1939, %v1931
  %v2556 = vpack.c.b16 %v1940, %v1932
  %v2557 = vpack.c.b16 %v1941, %v1933
  %v2558 = vpack.c.b16 %v1942, %v1934
  %v2559 = vpack.c.b16 %v1943, %v1935
  %v2560 = vpack.c.b16 %v1944, %v1936
  %v2561 = vpack.c.b16 %v1945, %v1937
  %v2562 = vpack.c.b16 %v1946, %v1938
  %v2563 = vpack.c.b16 %v1955, %v1947
  %v2564 = vpack.c.b16 %v1956, %v1948
  %v2565 = vpack.c.b16 %v1957, %v1949
  %v2566 = vpack.c.b16 %v1958, %v1950
  %v2567 = vpack.c.b16 %v1959, %v1951
  %v2568 = vpack.c.b16 %v1960, %v1952
  %v2569 = vpack.c.b16 %v1961, %v1953
  %v2570 = vpack.c.b16 %v1962, %v1954
  %v2571 = vpack.c.b16 %v1971, %v1963
  %v2572 = vpack.c.b16 %v1972, %v1964
  %v2573 = vpack.c.b16 %v1973, %v1965
  %v2574 = vpack.c.b16 %v1974, %v1966
  %v2575 = vpack.c.b16 %v1975, %v1967
  %v2576 = vpack.c.b16 %v1976, %v1968
  %v2577 = vpack.c.b16 %v1977, %v1969
  %v2578 = vpack.c.b16 %v1978, %v1970
  %v2579 = vpack.c.b16 %v1987, %v1979
  %v2580 = vpack.c.b16 %v1988, %v1980
  %v2581 = vpack.c.b16 %v1989, %v1981
  %v2582 = vpack.c.b16 %v1990, %v1982
  %v2583 = vpack.c.b16 %v1991, %v1983
  %v2584 = vpack.c.b16 %v1992, %v1984
  %v2585 = vpack.c.b16 %v1993, %v1985
  %v2586 = vpack.c.b16 %v1994, %v1986
  %v2587 = vpack.c.b16 %v2003, %v1995
  %v2588 = vpack.c.b16 %v2004, %v1996
  %v2589 = vpack.c.b16 %v2005, %v1997
  %v2590 = vpack.c.b16 %v2006, %v1998
  %v2591 = vpack.c.b16 %v2007, %v1999
  %v2592 = vpack.c.b16 %v2008, %v2000
  %v2593 = vpack.c.b16 %v2009, %v2001
  %v2594 = vpack.c.b16 %v2010, %v2002
  %v2595 = vpack.c.b16 %v2019, %v2011
  %v2596 = vpack.c.b16 %v2020, %v2012
  %v2597 = vpack.c.b16 %v2021, %v2013
  %v2598 = vpack.c.b16 %v2022, %v2014
  %v2599 = vpack.c.b16 %v2023, %v2015
  %v2600 = vpack.c.b16 %v2024, %v2016
  %v2601 = vpack.c.b16 %v2025, %v2017
  %v2602 = vpack.c.b16 %v2026, %v2018
  %v2603 = vpack.c.b16 %v2035, %v2027
  %v2604 = vpack.c.b16 %v2036, %v2028
  %v2605 = vpack.c.b16 %v2037, %v2029
  %v2606 = vpack.c.b16 %v2038, %v2030
  %v2607 = vpack.c.b16 %v2039, %v2031
  %v2608 = vpack.c.b16 %v2040, %v2032
  %v2609 = vpack.c.b16 %v2041, %v2033
  %v2610 = vpack.c.b16 %v2042, %v2034
  %v2611 = vpack.c.b16 %v2051, %v2043
  %v2612 = vpack.c.b16 %v2052, %v2044
  %v2613 = vpack.c.b16 %v2053, %v2045
  %v2614 = vpack.c.b16 %v2054, %v2046
  %v2615 = vpack.c.b16 %v2055, %v2047
  %v2616 = vpack.c.b16 %v2056, %v2048
  %v2617 = vpack.c.b16 %v2057, %v2049
  %v2618 = vpack.c.b16 %v2058, %v2050
  %v2619 = vpack.c.b16 %v2067, %v2059
  %v2620 = vpack.c.b16 %v2068, %v2060
  %v2621 = vpack.c.b16 %v2069, %v2061
  %v2622 = vpack.c.b16 %v2070, %v2062
  %v2623 = vpack.c.b16 %v2071, %v2063
  %v2624 = vpack.c.b16 %v2072, %v2064
  %v2625 = vpack.c.b16 %v2073, %v2065
  %v2626 = vpack.c.b16 %v2074, %v2066
  %v2627 = vpack.c.b16 %v2083, %v2075
  %v2628 = vpack.c.b16 %v2084, %v2076
  %v2629 = vpack.c.b16 %v2085, %v2077
  %v2630 = vpack.c.b16 %v2086, %v2078
  %v2631 = vpack.c.b16 %v2087, %v2079
  %v2632 = vpack.c.b16 %v2088, %v2080
  %v2633 = vpack.c.b16 %v2089, %v2081
  %v2634 = vpack.c.b16 %v2090, %v2082
  %v2635 = vpack.c.b16 %v2099, %v2091
  %v2636 = vpack.c.b16 %v2100, %v2092
  %v2637 = vpack.c.b16 %v2101, %v2093
  %v2638 = vpack.c.b16 %v2102, %v2094
  %v2639 = vpack.c.b16 %v2103, %v2095
  %v2640 = vpack.c.b16 %v2104, %v2096
  %v2641 = vpack.c.b16 %v2105, %v2097
  %v2642 = vpack.c.b16 %v2106, %v2098
  %v2643 = vpack.c.b16 %v2115, %v2107
  %v2644 = vpack.c.b16 %v2116, %v2108
  %v2645 = vpack.c.b16 %v2117, %v2109
  %v2646 = vpack.c.b16 %v2118, %v2110
  %v2647 = vpack.c.b16 %v2119, %v2111
  %v2648 = vpack.c.b16 %v2120, %v2112
  %v2649 = vpack.c.b16 %v2121, %v2113
  %v2650 = vpack.c.b16 %v2122, %v2114
  %v2651 = vpack.c.b16 %v2131, %v2123
  %v2652 = vpack.c.b16 %v2132, %v2124
  %v2653 = vpack.c.b16 %v2133, %v2125
  %v2654 = vpack.c.b16 %v2134, %v2126
  %v2655 = vpack.c.b16 %v2135, %v2127
  %v2656 = vpack.c.b16 %v2136, %v2128
  %v2657 = vpack.c.b16 %v2137, %v2129
  %v2658 = vpack.c.b16 %v2138, %v2130
  %v2659 = vpack.c.b16 %v2147, %v2139
  %v2660 = vpack.c.b16 %v2148, %v2140
  %v2661 = vpack.c.b16 %v2149, %v2141
  %v2662 = vpack.c.b16 %v2150, %v2142
  %v2663 = vpack.c.b16 %v2151, %v2143
  %v2664 = vpack.c.b16 %v2152, %v2144
  %v2665 = vpack.c.b16 %v2153, %v2145
  %v2666 = vpack.c.b16 %v2154, %v2146
  %3179 = vmatprep.subr.bf16.mxu0 %v2156
  %3180 = vmatpush1.bf16.msra.mxu0 %v2155
  %3181 = vmatprep.subr.bf16.mxu0 %v2164
  %3182 = vmatpush1.bf16.msra.mxu0 %v2163
  %3183 = vmatprep.subr.bf16.mxu0 %v2172
  %3184 = vmatpush1.bf16.msra.mxu0 %v2171
  %3185 = vmatprep.subr.bf16.mxu0 %v2180
  %3186 = vmatpush1.bf16.msra.mxu0 %v2179
  %3187 = vmatprep.subr.bf16.mxu0 %v2188
  %3188 = vmatpush1.bf16.msra.mxu0 %v2187
  %3189 = vmatprep.subr.bf16.mxu0 %v2196
  %3190 = vmatpush1.bf16.msra.mxu0 %v2195
  %3191 = vmatprep.subr.bf16.mxu0 %v2204
  %3192 = vmatpush1.bf16.msra.mxu0 %v2203
  %3193 = vmatprep.subr.bf16.mxu0 %v2212
  %3194 = vmatpush1.bf16.msra.mxu0 %v2211
  %3195 = vmatprep.subr.bf16.mxu0 %v2220
  %3196 = vmatpush1.bf16.msra.mxu0 %v2219
  %3197 = vmatprep.subr.bf16.mxu0 %v2228
  %3198 = vmatpush1.bf16.msra.mxu0 %v2227
  %3199 = vmatprep.subr.bf16.mxu0 %v2236
  %3200 = vmatpush1.bf16.msra.mxu0 %v2235
  %3201 = vmatprep.subr.bf16.mxu0 %v2244
  %3202 = vmatpush1.bf16.msra.mxu0 %v2243
  %3203 = vmatprep.subr.bf16.mxu0 %v2252
  %3204 = vmatpush1.bf16.msra.mxu0 %v2251
  %3205 = vmatprep.subr.bf16.mxu0 %v2260
  %3206 = vmatpush1.bf16.msra.mxu0 %v2259
  %3207 = vmatprep.subr.bf16.mxu0 %v2268
  %3208 = vmatpush1.bf16.msra.mxu0 %v2267
  %3209 = vmatprep.subr.bf16.mxu0 %v2276
  %3210 = vmatpush1.bf16.msra.mxu0 %v2275
  %3211 = vmatprep.mubr.bf16.mxu0 %v588
  %3212 = vmatmul.mubr.bf16.gmra.mrb[0].mxu0 %v587
  %v3213 = vpop.f32.mrb[0].mxu0
  %v3214 = vadd.f32 0.0, %v3213
  %v3215 = vpop.f32.mrb[0].mxu0
  %v3216 = vadd.f32 0.0, %v3215
  %v3217 = vpop.f32.mrb[0].mxu0
  %v3218 = vadd.f32 0.0, %v3217
  %v3219 = vpop.f32.mrb[0].mxu0
  %v3220 = vadd.f32 0.0, %v3219
  %3221 = vmatprep.mubr.bf16.mxu0 %v596
  %3222 = vmatmul.mubr.bf16.gmra.mrb[0].mxu0 %v595
  %v3223 = vpop.f32.mrb[0].mxu0
  %v3224 = vadd.f32 0.0, %v3223
  %v3225 = vpop.f32.mrb[0].mxu0
  %v3226 = vadd.f32 0.0, %v3225
  %v3227 = vpop.f32.mrb[0].mxu0
  %v3228 = vpop.f32.mrb[0].mxu0
  %3229 = vdwg.mxu0
  %3230 = vmatprep.subr.bf16.mxu0 %v2284
  %3231 = vmatpush1.bf16.msra.mxu0 %v2283
  %3232 = vmatprep.subr.bf16.mxu0 %v2292
  %3233 = vmatpush1.bf16.msra.mxu0 %v2291
  %3234 = vmatprep.subr.bf16.mxu0 %v2300
  %3235 = vmatpush1.bf16.msra.mxu0 %v2299
  %3236 = vmatprep.subr.bf16.mxu0 %v2308
  %3237 = vmatpush1.bf16.msra.mxu0 %v2307
  %3238 = vmatprep.subr.bf16.mxu0 %v2316
  %3239 = vmatpush1.bf16.msra.mxu0 %v2315
  %3240 = vmatprep.subr.bf16.mxu0 %v2324
  %3241 = vmatpush1.bf16.msra.mxu0 %v2323
  %3242 = vmatprep.subr.bf16.mxu0 %v2332
  %3243 = vmatpush1.bf16.msra.mxu0 %v2331
  %3244 = vmatprep.subr.bf16.mxu0 %v2340
  %3245 = vmatpush1.bf16.msra.mxu0 %v2339
  %3246 = vmatprep.subr.bf16.mxu0 %v2348
  %3247 = vmatpush1.bf16.msra.mxu0 %v2347
  %3248 = vmatprep.subr.bf16.mxu0 %v2356
  %3249 = vmatpush1.bf16.msra.mxu0 %v2355
  %3250 = vmatprep.subr.bf16.mxu0 %v2364
  %3251 = vmatpush1.bf16.msra.mxu0 %v2363
  %3252 = vmatprep.subr.bf16.mxu0 %v2372
  %3253 = vmatpush1.bf16.msra.mxu0 %v2371
  %3254 = vmatprep.subr.bf16.mxu0 %v2380
  %3255 = vmatpush1.bf16.msra.mxu0 %v2379
  %3256 = vmatprep.subr.bf16.mxu0 %v2388
  %3257 = vmatpush1.bf16.msra.mxu0 %v2387
  %3258 = vmatprep.subr.bf16.mxu0 %v2396
  %3259 = vmatpush1.bf16.msra.mxu0 %v2395
  %3260 = vmatprep.subr.bf16.mxu0 %v2404
  %3261 = vmatpush1.bf16.msra.mxu0 %v2403
  %3262 = vmatprep.mubr.bf16.mxu0 %v590
  %3263 = vmatmul.mubr.bf16.gmra.mrb[0].mxu0 %v589
  %v3264 = vpop.f32.mrb[0].mxu0
  %v3265 = vadd.f32 %v3214, %v3264
  %v3266 = vpop.f32.mrb[0].mxu0
  %v3267 = vadd.f32 %v3216, %v3266
  %v3268 = vpop.f32.mrb[0].mxu0
  %v3269 = vadd.f32 %v3218, %v3268
  %v3270 = vpop.f32.mrb[0].mxu0
  %v3271 = vadd.f32 %v3220, %v3270
  %3272 = vmatprep.mubr.bf16.mxu0 %v598
  %3273 = vmatmul.mubr.bf16.gmra.mrb[0].mxu0 %v597
  %v3274 = vpop.f32.mrb[0].mxu0
  %v3275 = vadd.f32 %v3224, %v3274
  %v3276 = vpop.f32.mrb[0].mxu0
  %v3277 = vadd.f32 %v3226, %v3276
  %v3278 = vpop.f32.mrb[0].mxu0
  %v3279 = vpop.f32.mrb[0].mxu0
  %3280 = vdwg.mxu0
  %3281 = vmatprep.subr.bf16.mxu0 %v2412
  %3282 = vmatpush1.bf16.msra.mxu0 %v2411
  %3283 = vmatprep.subr.bf16.mxu0 %v2420
  %3284 = vmatpush1.bf16.msra.mxu0 %v2419
  %3285 = vmatprep.subr.bf16.mxu0 %v2428
  %3286 = vmatpush1.bf16.msra.mxu0 %v2427
  %3287 = vmatprep.subr.bf16.mxu0 %v2436
  %3288 = vmatpush1.bf16.msra.mxu0 %v2435
  %3289 = vmatprep.subr.bf16.mxu0 %v2444
  %3290 = vmatpush1.bf16.msra.mxu0 %v2443
  %3291 = vmatprep.subr.bf16.mxu0 %v2452
  %3292 = vmatpush1.bf16.msra.mxu0 %v2451
  %3293 = vmatprep.subr.bf16.mxu0 %v2460
  %3294 = vmatpush1.bf16.msra.mxu0 %v2459
  %3295 = vmatprep.subr.bf16.mxu0 %v2468
  %3296 = vmatpush1.bf16.msra.mxu0 %v2467
  %3297 = vmatprep.subr.bf16.mxu0 %v2476
  %3298 = vmatpush1.bf16.msra.mxu0 %v2475
  %3299 = vmatprep.subr.bf16.mxu0 %v2484
  %3300 = vmatpush1.bf16.msra.mxu0 %v2483
  %3301 = vmatprep.subr.bf16.mxu0 %v2492
  %3302 = vmatpush1.bf16.msra.mxu0 %v2491
  %3303 = vmatprep.subr.bf16.mxu0 %v2500
  %3304 = vmatpush1.bf16.msra.mxu0 %v2499
  %3305 = vmatprep.subr.bf16.mxu0 %v2508
  %3306 = vmatpush1.bf16.msra.mxu0 %v2507
  %3307 = vmatprep.subr.bf16.mxu0 %v2516
  %3308 = vmatpush1.bf16.msra.mxu0 %v2515
  %3309 = vmatprep.subr.bf16.mxu0 %v2524
  %3310 = vmatpush1.bf16.msra.mxu0 %v2523
  %3311 = vmatprep.subr.bf16.mxu0 %v2532
  %3312 = vmatpush1.bf16.msra.mxu0 %v2531
  %3313 = vmatprep.mubr.bf16.mxu0 %v592
  %3314 = vmatmul.mubr.bf16.gmra.mrb[0].mxu0 %v591
  %v3315 = vpop.f32.mrb[0].mxu0
  %v3316 = vadd.f32 %v3265, %v3315
  %v3317 = vpop.f32.mrb[0].mxu0
  %v3318 = vadd.f32 %v3267, %v3317
  %v3319 = vpop.f32.mrb[0].mxu0
  %v3320 = vadd.f32 %v3269, %v3319
  %v3321 = vpop.f32.mrb[0].mxu0
  %v3322 = vadd.f32 %v3271, %v3321
  %3323 = vmatprep.mubr.bf16.mxu0 %v600
  %3324 = vmatmul.mubr.bf16.gmra.mrb[0].mxu0 %v599
  %v3325 = vpop.f32.mrb[0].mxu0
  %v3326 = vadd.f32 %v3275, %v3325
  %v3327 = vpop.f32.mrb[0].mxu0
  %v3328 = vadd.f32 %v3277, %v3327
  %v3329 = vpop.f32.mrb[0].mxu0
  %v3330 = vpop.f32.mrb[0].mxu0
  %3331 = vdwg.mxu0
  %3332 = vmatprep.subr.bf16.mxu0 %v2540
  %3333 = vmatpush1.bf16.msra.mxu0 %v2539
  %3334 = vmatprep.subr.bf16.mxu0 %v2548
  %3335 = vmatpush1.bf16.msra.mxu0 %v2547
  %3336 = vmatprep.subr.bf16.mxu0 %v2556
  %3337 = vmatpush1.bf16.msra.mxu0 %v2555
  %3338 = vmatprep.subr.bf16.mxu0 %v2564
  %3339 = vmatpush1.bf16.msra.mxu0 %v2563
  %3340 = vmatprep.subr.bf16.mxu0 %v2572
  %3341 = vmatpush1.bf16.msra.mxu0 %v2571
  %3342 = vmatprep.subr.bf16.mxu0 %v2580
  %3343 = vmatpush1.bf16.msra.mxu0 %v2579
  %3344 = vmatprep.subr.bf16.mxu0 %v2588
  %3345 = vmatpush1.bf16.msra.mxu0 %v2587
  %3346 = vmatprep.subr.bf16.mxu0 %v2596
  %3347 = vmatpush1.bf16.msra.mxu0 %v2595
  %3348 = vmatprep.subr.bf16.mxu0 %v2604
  %3349 = vmatpush1.bf16.msra.mxu0 %v2603
  %3350 = vmatprep.subr.bf16.mxu0 %v2612
  %3351 = vmatpush1.bf16.msra.mxu0 %v2611
  %3352 = vmatprep.subr.bf16.mxu0 %v2620
  %3353 = vmatpush1.bf16.msra.mxu0 %v2619
  %3354 = vmatprep.subr.bf16.mxu0 %v2628
  %3355 = vmatpush1.bf16.msra.mxu0 %v2627
  %3356 = vmatprep.subr.bf16.mxu0 %v2636
  %3357 = vmatpush1.bf16.msra.mxu0 %v2635
  %3358 = vmatprep.subr.bf16.mxu0 %v2644
  %3359 = vmatpush1.bf16.msra.mxu0 %v2643
  %3360 = vmatprep.subr.bf16.mxu0 %v2652
  %3361 = vmatpush1.bf16.msra.mxu0 %v2651
  %3362 = vmatprep.subr.bf16.mxu0 %v2660
  %3363 = vmatpush1.bf16.msra.mxu0 %v2659
  %3364 = vmatprep.mubr.bf16.mxu0 %v594
  %3365 = vmatmul.mubr.bf16.gmra.mrb[0].mxu0 %v593
  %v3366 = vpop.f32.mrb[0].mxu0
  %v3367 = vadd.f32 %v3316, %v3366
  %v3368 = vpop.f32.mrb[0].mxu0
  %v3369 = vadd.f32 %v3318, %v3368
  %v3370 = vpop.f32.mrb[0].mxu0
  %v3371 = vadd.f32 %v3320, %v3370
  %v3372 = vpop.f32.mrb[0].mxu0
  %v3373 = vadd.f32 %v3322, %v3372
  %3374 = vmatprep.mubr.bf16.mxu0 %v602
  %3375 = vmatmul.mubr.bf16.gmra.mrb[0].mxu0 %v601
  %v3376 = vpop.f32.mrb[0].mxu0
  %v3377 = vadd.f32 %v3326, %v3376
  %v3378 = vpop.f32.mrb[0].mxu0
  %v3379 = vadd.f32 %v3328, %v3378
  %v3380 = vpop.f32.mrb[0].mxu0
  %v3381 = vpop.f32.mrb[0].mxu0
  %3382 = vdwg.mxu0
  %3383 = vmatprep.subr.bf16.mxu0 %v2158
  %3384 = vmatpush1.bf16.msra.mxu0 %v2157
  %3385 = vmatprep.subr.bf16.mxu0 %v2166
  %3386 = vmatpush1.bf16.msra.mxu0 %v2165
  %3387 = vmatprep.subr.bf16.mxu0 %v2174
  %3388 = vmatpush1.bf16.msra.mxu0 %v2173
  %3389 = vmatprep.subr.bf16.mxu0 %v2182
  %3390 = vmatpush1.bf16.msra.mxu0 %v2181
  %3391 = vmatprep.subr.bf16.mxu0 %v2190
  %3392 = vmatpush1.bf16.msra.mxu0 %v2189
  %3393 = vmatprep.subr.bf16.mxu0 %v2198
  %3394 = vmatpush1.bf16.msra.mxu0 %v2197
  %3395 = vmatprep.subr.bf16.mxu0 %v2206
  %3396 = vmatpush1.bf16.msra.mxu0 %v2205
  %3397 = vmatprep.subr.bf16.mxu0 %v2214
  %3398 = vmatpush1.bf16.msra.mxu0 %v2213
  %3399 = vmatprep.subr.bf16.mxu0 %v2222
  %3400 = vmatpush1.bf16.msra.mxu0 %v2221
  %3401 = vmatprep.subr.bf16.mxu0 %v2230
  %3402 = vmatpush1.bf16.msra.mxu0 %v2229
  %3403 = vmatprep.subr.bf16.mxu0 %v2238
  %3404 = vmatpush1.bf16.msra.mxu0 %v2237
  %3405 = vmatprep.subr.bf16.mxu0 %v2246
  %3406 = vmatpush1.bf16.msra.mxu0 %v2245
  %3407 = vmatprep.subr.bf16.mxu0 %v2254
  %3408 = vmatpush1.bf16.msra.mxu0 %v2253
  %3409 = vmatprep.subr.bf16.mxu0 %v2262
  %3410 = vmatpush1.bf16.msra.mxu0 %v2261
  %3411 = vmatprep.subr.bf16.mxu0 %v2270
  %3412 = vmatpush1.bf16.msra.mxu0 %v2269
  %3413 = vmatprep.subr.bf16.mxu0 %v2278
  %3414 = vmatpush1.bf16.msra.mxu0 %v2277
  %3415 = vmatprep.mubr.bf16.mxu0 %v588
  %3416 = vmatmul.mubr.bf16.gmra.mrb[0].mxu0 %v587
  %v3417 = vpop.f32.mrb[0].mxu0
  %v3418 = vadd.f32 0.0, %v3417
  %v3419 = vpop.f32.mrb[0].mxu0
  %v3420 = vadd.f32 0.0, %v3419
  %v3421 = vpop.f32.mrb[0].mxu0
  %v3422 = vadd.f32 0.0, %v3421
  %v3423 = vpop.f32.mrb[0].mxu0
  %v3424 = vadd.f32 0.0, %v3423
  %3425 = vmatprep.mubr.bf16.mxu0 %v596
  %3426 = vmatmul.mubr.bf16.gmra.mrb[0].mxu0 %v595
  %v3427 = vpop.f32.mrb[0].mxu0
  %v3428 = vadd.f32 0.0, %v3427
  %v3429 = vpop.f32.mrb[0].mxu0
  %v3430 = vadd.f32 0.0, %v3429
  %v3431 = vpop.f32.mrb[0].mxu0
  %v3432 = vpop.f32.mrb[0].mxu0
  %3433 = vdwg.mxu0
  %3434 = vmatprep.subr.bf16.mxu0 %v2286
  %3435 = vmatpush1.bf16.msra.mxu0 %v2285
  %3436 = vmatprep.subr.bf16.mxu0 %v2294
  %3437 = vmatpush1.bf16.msra.mxu0 %v2293
  %3438 = vmatprep.subr.bf16.mxu0 %v2302
  %3439 = vmatpush1.bf16.msra.mxu0 %v2301
  %3440 = vmatprep.subr.bf16.mxu0 %v2310
  %3441 = vmatpush1.bf16.msra.mxu0 %v2309
  %3442 = vmatprep.subr.bf16.mxu0 %v2318
  %3443 = vmatpush1.bf16.msra.mxu0 %v2317
  %3444 = vmatprep.subr.bf16.mxu0 %v2326
  %3445 = vmatpush1.bf16.msra.mxu0 %v2325
  %3446 = vmatprep.subr.bf16.mxu0 %v2334
  %3447 = vmatpush1.bf16.msra.mxu0 %v2333
  %3448 = vmatprep.subr.bf16.mxu0 %v2342
  %3449 = vmatpush1.bf16.msra.mxu0 %v2341
  %3450 = vmatprep.subr.bf16.mxu0 %v2350
  %3451 = vmatpush1.bf16.msra.mxu0 %v2349
  %3452 = vmatprep.subr.bf16.mxu0 %v2358
  %3453 = vmatpush1.bf16.msra.mxu0 %v2357
  %3454 = vmatprep.subr.bf16.mxu0 %v2366
  %3455 = vmatpush1.bf16.msra.mxu0 %v2365
  %3456 = vmatprep.subr.bf16.mxu0 %v2374
  %3457 = vmatpush1.bf16.msra.mxu0 %v2373
  %3458 = vmatprep.subr.bf16.mxu0 %v2382
  %3459 = vmatpush1.bf16.msra.mxu0 %v2381
  %3460 = vmatprep.subr.bf16.mxu0 %v2390
  %3461 = vmatpush1.bf16.msra.mxu0 %v2389
  %3462 = vmatprep.subr.bf16.mxu0 %v2398
  %3463 = vmatpush1.bf16.msra.mxu0 %v2397
  %3464 = vmatprep.subr.bf16.mxu0 %v2406
  %3465 = vmatpush1.bf16.msra.mxu0 %v2405
  %3466 = vmatprep.mubr.bf16.mxu0 %v590
  %3467 = vmatmul.mubr.bf16.gmra.mrb[0].mxu0 %v589
  %v3468 = vpop.f32.mrb[0].mxu0
  %v3469 = vadd.f32 %v3418, %v3468
  %v3470 = vpop.f32.mrb[0].mxu0
  %v3471 = vadd.f32 %v3420, %v3470
  %v3472 = vpop.f32.mrb[0].mxu0
  %v3473 = vadd.f32 %v3422, %v3472
  %v3474 = vpop.f32.mrb[0].mxu0
  %v3475 = vadd.f32 %v3424, %v3474
  %3476 = vmatprep.mubr.bf16.mxu0 %v598
  %3477 = vmatmul.mubr.bf16.gmra.mrb[0].mxu0 %v597
  %v3478 = vpop.f32.mrb[0].mxu0
  %v3479 = vadd.f32 %v3428, %v3478
  %v3480 = vpop.f32.mrb[0].mxu0
  %v3481 = vadd.f32 %v3430, %v3480
  %v3482 = vpop.f32.mrb[0].mxu0
  %v3483 = vpop.f32.mrb[0].mxu0
  %3484 = vdwg.mxu0
  %3485 = vmatprep.subr.bf16.mxu0 %v2414
  %3486 = vmatpush1.bf16.msra.mxu0 %v2413
  %3487 = vmatprep.subr.bf16.mxu0 %v2422
  %3488 = vmatpush1.bf16.msra.mxu0 %v2421
  %3489 = vmatprep.subr.bf16.mxu0 %v2430
  %3490 = vmatpush1.bf16.msra.mxu0 %v2429
  %3491 = vmatprep.subr.bf16.mxu0 %v2438
  %3492 = vmatpush1.bf16.msra.mxu0 %v2437
  %3493 = vmatprep.subr.bf16.mxu0 %v2446
  %3494 = vmatpush1.bf16.msra.mxu0 %v2445
  %3495 = vmatprep.subr.bf16.mxu0 %v2454
  %3496 = vmatpush1.bf16.msra.mxu0 %v2453
  %3497 = vmatprep.subr.bf16.mxu0 %v2462
  %3498 = vmatpush1.bf16.msra.mxu0 %v2461
  %3499 = vmatprep.subr.bf16.mxu0 %v2470
  %3500 = vmatpush1.bf16.msra.mxu0 %v2469
  %3501 = vmatprep.subr.bf16.mxu0 %v2478
  %3502 = vmatpush1.bf16.msra.mxu0 %v2477
  %3503 = vmatprep.subr.bf16.mxu0 %v2486
  %3504 = vmatpush1.bf16.msra.mxu0 %v2485
  %3505 = vmatprep.subr.bf16.mxu0 %v2494
  %3506 = vmatpush1.bf16.msra.mxu0 %v2493
  %3507 = vmatprep.subr.bf16.mxu0 %v2502
  %3508 = vmatpush1.bf16.msra.mxu0 %v2501
  %3509 = vmatprep.subr.bf16.mxu0 %v2510
  %3510 = vmatpush1.bf16.msra.mxu0 %v2509
  %3511 = vmatprep.subr.bf16.mxu0 %v2518
  %3512 = vmatpush1.bf16.msra.mxu0 %v2517
  %3513 = vmatprep.subr.bf16.mxu0 %v2526
  %3514 = vmatpush1.bf16.msra.mxu0 %v2525
  %3515 = vmatprep.subr.bf16.mxu0 %v2534
  %3516 = vmatpush1.bf16.msra.mxu0 %v2533
  %3517 = vmatprep.mubr.bf16.mxu0 %v592
  %3518 = vmatmul.mubr.bf16.gmra.mrb[0].mxu0 %v591
  %v3519 = vpop.f32.mrb[0].mxu0
  %v3520 = vadd.f32 %v3469, %v3519
  %v3521 = vpop.f32.mrb[0].mxu0
  %v3522 = vadd.f32 %v3471, %v3521
  %v3523 = vpop.f32.mrb[0].mxu0
  %v3524 = vadd.f32 %v3473, %v3523
  %v3525 = vpop.f32.mrb[0].mxu0
  %v3526 = vadd.f32 %v3475, %v3525
  %3527 = vmatprep.mubr.bf16.mxu0 %v600
  %3528 = vmatmul.mubr.bf16.gmra.mrb[0].mxu0 %v599
  %v3529 = vpop.f32.mrb[0].mxu0
  %v3530 = vadd.f32 %v3479, %v3529
  %v3531 = vpop.f32.mrb[0].mxu0
  %v3532 = vadd.f32 %v3481, %v3531
  %v3533 = vpop.f32.mrb[0].mxu0
  %v3534 = vpop.f32.mrb[0].mxu0
  %3535 = vdwg.mxu0
  %3536 = vmatprep.subr.bf16.mxu0 %v2542
  %3537 = vmatpush1.bf16.msra.mxu0 %v2541
  %3538 = vmatprep.subr.bf16.mxu0 %v2550
  %3539 = vmatpush1.bf16.msra.mxu0 %v2549
  %3540 = vmatprep.subr.bf16.mxu0 %v2558
  %3541 = vmatpush1.bf16.msra.mxu0 %v2557
  %3542 = vmatprep.subr.bf16.mxu0 %v2566
  %3543 = vmatpush1.bf16.msra.mxu0 %v2565
  %3544 = vmatprep.subr.bf16.mxu0 %v2574
  %3545 = vmatpush1.bf16.msra.mxu0 %v2573
  %3546 = vmatprep.subr.bf16.mxu0 %v2582
  %3547 = vmatpush1.bf16.msra.mxu0 %v2581
  %3548 = vmatprep.subr.bf16.mxu0 %v2590
  %3549 = vmatpush1.bf16.msra.mxu0 %v2589
  %3550 = vmatprep.subr.bf16.mxu0 %v2598
  %3551 = vmatpush1.bf16.msra.mxu0 %v2597
  %3552 = vmatprep.subr.bf16.mxu0 %v2606
  %3553 = vmatpush1.bf16.msra.mxu0 %v2605
  %3554 = vmatprep.subr.bf16.mxu0 %v2614
  %3555 = vmatpush1.bf16.msra.mxu0 %v2613
  %3556 = vmatprep.subr.bf16.mxu0 %v2622
  %3557 = vmatpush1.bf16.msra.mxu0 %v2621
  %3558 = vmatprep.subr.bf16.mxu0 %v2630
  %3559 = vmatpush1.bf16.msra.mxu0 %v2629
  %3560 = vmatprep.subr.bf16.mxu0 %v2638
  %3561 = vmatpush1.bf16.msra.mxu0 %v2637
  %3562 = vmatprep.subr.bf16.mxu0 %v2646
  %3563 = vmatpush1.bf16.msra.mxu0 %v2645
  %3564 = vmatprep.subr.bf16.mxu0 %v2654
  %3565 = vmatpush1.bf16.msra.mxu0 %v2653
  %3566 = vmatprep.subr.bf16.mxu0 %v2662
  %3567 = vmatpush1.bf16.msra.mxu0 %v2661
  %3568 = vmatprep.mubr.bf16.mxu0 %v594
  %3569 = vmatmul.mubr.bf16.gmra.mrb[0].mxu0 %v593
  %v3570 = vpop.f32.mrb[0].mxu0
  %v3571 = vadd.f32 %v3520, %v3570
  %v3572 = vpop.f32.mrb[0].mxu0
  %v3573 = vadd.f32 %v3522, %v3572
  %v3574 = vpop.f32.mrb[0].mxu0
  %v3575 = vadd.f32 %v3524, %v3574
  %v3576 = vpop.f32.mrb[0].mxu0
  %v3577 = vadd.f32 %v3526, %v3576
  %3578 = vmatprep.mubr.bf16.mxu0 %v602
  %3579 = vmatmul.mubr.bf16.gmra.mrb[0].mxu0 %v601
  %v3580 = vpop.f32.mrb[0].mxu0
  %v3581 = vadd.f32 %v3530, %v3580
  %v3582 = vpop.f32.mrb[0].mxu0
  %v3583 = vadd.f32 %v3532, %v3582
  %v3584 = vpop.f32.mrb[0].mxu0
  %v3585 = vpop.f32.mrb[0].mxu0
  %3586 = vdwg.mxu0
  %3587 = vmatprep.subr.bf16.mxu0 %v2160
  %3588 = vmatpush1.bf16.msra.mxu0 %v2159
  %3589 = vmatprep.subr.bf16.mxu0 %v2168
  %3590 = vmatpush1.bf16.msra.mxu0 %v2167
  %3591 = vmatprep.subr.bf16.mxu0 %v2176
  %3592 = vmatpush1.bf16.msra.mxu0 %v2175
  %3593 = vmatprep.subr.bf16.mxu0 %v2184
  %3594 = vmatpush1.bf16.msra.mxu0 %v2183
  %3595 = vmatprep.subr.bf16.mxu0 %v2192
  %3596 = vmatpush1.bf16.msra.mxu0 %v2191
  %3597 = vmatprep.subr.bf16.mxu0 %v2200
  %3598 = vmatpush1.bf16.msra.mxu0 %v2199
  %3599 = vmatprep.subr.bf16.mxu0 %v2208
  %3600 = vmatpush1.bf16.msra.mxu0 %v2207
  %3601 = vmatprep.subr.bf16.mxu0 %v2216
  %3602 = vmatpush1.bf16.msra.mxu0 %v2215
  %3603 = vmatprep.subr.bf16.mxu0 %v2224
  %3604 = vmatpush1.bf16.msra.mxu0 %v2223
  %3605 = vmatprep.subr.bf16.mxu0 %v2232
  %3606 = vmatpush1.bf16.msra.mxu0 %v2231
  %3607 = vmatprep.subr.bf16.mxu0 %v2240
  %3608 = vmatpush1.bf16.msra.mxu0 %v2239
  %3609 = vmatprep.subr.bf16.mxu0 %v2248
  %3610 = vmatpush1.bf16.msra.mxu0 %v2247
  %3611 = vmatprep.subr.bf16.mxu0 %v2256
  %3612 = vmatpush1.bf16.msra.mxu0 %v2255
  %3613 = vmatprep.subr.bf16.mxu0 %v2264
  %3614 = vmatpush1.bf16.msra.mxu0 %v2263
  %3615 = vmatprep.subr.bf16.mxu0 %v2272
  %3616 = vmatpush1.bf16.msra.mxu0 %v2271
  %3617 = vmatprep.subr.bf16.mxu0 %v2280
  %3618 = vmatpush1.bf16.msra.mxu0 %v2279
  %3619 = vmatprep.mubr.bf16.mxu0 %v588
  %3620 = vmatmul.mubr.bf16.gmra.mrb[0].mxu0 %v587
  %v3621 = vpop.f32.mrb[0].mxu0
  %v3622 = vadd.f32 0.0, %v3621
  %v3623 = vpop.f32.mrb[0].mxu0
  %v3624 = vadd.f32 0.0, %v3623
  %v3625 = vpop.f32.mrb[0].mxu0
  %v3626 = vadd.f32 0.0, %v3625
  %v3627 = vpop.f32.mrb[0].mxu0
  %v3628 = vadd.f32 0.0, %v3627
  %3629 = vmatprep.mubr.bf16.mxu0 %v596
  %3630 = vmatmul.mubr.bf16.gmra.mrb[0].mxu0 %v595
  %v3631 = vpop.f32.mrb[0].mxu0
  %v3632 = vadd.f32 0.0, %v3631
  %v3633 = vpop.f32.mrb[0].mxu0
  %v3634 = vadd.f32 0.0, %v3633
  %v3635 = vpop.f32.mrb[0].mxu0
  %v3636 = vpop.f32.mrb[0].mxu0
  %3637 = vdwg.mxu0
  %3638 = vmatprep.subr.bf16.mxu0 %v2288
  %3639 = vmatpush1.bf16.msra.mxu0 %v2287
  %3640 = vmatprep.subr.bf16.mxu0 %v2296
  %3641 = vmatpush1.bf16.msra.mxu0 %v2295
  %3642 = vmatprep.subr.bf16.mxu0 %v2304
  %3643 = vmatpush1.bf16.msra.mxu0 %v2303
  %3644 = vmatprep.subr.bf16.mxu0 %v2312
  %3645 = vmatpush1.bf16.msra.mxu0 %v2311
  %3646 = vmatprep.subr.bf16.mxu0 %v2320
  %3647 = vmatpush1.bf16.msra.mxu0 %v2319
  %3648 = vmatprep.subr.bf16.mxu0 %v2328
  %3649 = vmatpush1.bf16.msra.mxu0 %v2327
  %3650 = vmatprep.subr.bf16.mxu0 %v2336
  %3651 = vmatpush1.bf16.msra.mxu0 %v2335
  %3652 = vmatprep.subr.bf16.mxu0 %v2344
  %3653 = vmatpush1.bf16.msra.mxu0 %v2343
  %3654 = vmatprep.subr.bf16.mxu0 %v2352
  %3655 = vmatpush1.bf16.msra.mxu0 %v2351
  %3656 = vmatprep.subr.bf16.mxu0 %v2360
  %3657 = vmatpush1.bf16.msra.mxu0 %v2359
  %3658 = vmatprep.subr.bf16.mxu0 %v2368
  %3659 = vmatpush1.bf16.msra.mxu0 %v2367
  %3660 = vmatprep.subr.bf16.mxu0 %v2376
  %3661 = vmatpush1.bf16.msra.mxu0 %v2375
  %3662 = vmatprep.subr.bf16.mxu0 %v2384
  %3663 = vmatpush1.bf16.msra.mxu0 %v2383
  %3664 = vmatprep.subr.bf16.mxu0 %v2392
  %3665 = vmatpush1.bf16.msra.mxu0 %v2391
  %3666 = vmatprep.subr.bf16.mxu0 %v2400
  %3667 = vmatpush1.bf16.msra.mxu0 %v2399
  %3668 = vmatprep.subr.bf16.mxu0 %v2408
  %3669 = vmatpush1.bf16.msra.mxu0 %v2407
  %3670 = vmatprep.mubr.bf16.mxu0 %v590
  %3671 = vmatmul.mubr.bf16.gmra.mrb[0].mxu0 %v589
  %v3672 = vpop.f32.mrb[0].mxu0
  %v3673 = vadd.f32 %v3622, %v3672
  %v3674 = vpop.f32.mrb[0].mxu0
  %v3675 = vadd.f32 %v3624, %v3674
  %v3676 = vpop.f32.mrb[0].mxu0
  %v3677 = vadd.f32 %v3626, %v3676
  %v3678 = vpop.f32.mrb[0].mxu0
  %v3679 = vadd.f32 %v3628, %v3678
  %3680 = vmatprep.mubr.bf16.mxu0 %v598
  %3681 = vmatmul.mubr.bf16.gmra.mrb[0].mxu0 %v597
  %v3682 = vpop.f32.mrb[0].mxu0
  %v3683 = vadd.f32 %v3632, %v3682
  %v3684 = vpop.f32.mrb[0].mxu0
  %v3685 = vadd.f32 %v3634, %v3684
  %v3686 = vpop.f32.mrb[0].mxu0
  %v3687 = vpop.f32.mrb[0].mxu0
  %3688 = vdwg.mxu0
  %3689 = vmatprep.subr.bf16.mxu0 %v2416
  %3690 = vmatpush1.bf16.msra.mxu0 %v2415
  %3691 = vmatprep.subr.bf16.mxu0 %v2424
  %3692 = vmatpush1.bf16.msra.mxu0 %v2423
  %3693 = vmatprep.subr.bf16.mxu0 %v2432
  %3694 = vmatpush1.bf16.msra.mxu0 %v2431
  %3695 = vmatprep.subr.bf16.mxu0 %v2440
  %3696 = vmatpush1.bf16.msra.mxu0 %v2439
  %3697 = vmatprep.subr.bf16.mxu0 %v2448
  %3698 = vmatpush1.bf16.msra.mxu0 %v2447
  %3699 = vmatprep.subr.bf16.mxu0 %v2456
  %3700 = vmatpush1.bf16.msra.mxu0 %v2455
  %3701 = vmatprep.subr.bf16.mxu0 %v2464
  %3702 = vmatpush1.bf16.msra.mxu0 %v2463
  %3703 = vmatprep.subr.bf16.mxu0 %v2472
  %3704 = vmatpush1.bf16.msra.mxu0 %v2471
  %3705 = vmatprep.subr.bf16.mxu0 %v2480
  %3706 = vmatpush1.bf16.msra.mxu0 %v2479
  %3707 = vmatprep.subr.bf16.mxu0 %v2488
  %3708 = vmatpush1.bf16.msra.mxu0 %v2487
  %3709 = vmatprep.subr.bf16.mxu0 %v2496
  %3710 = vmatpush1.bf16.msra.mxu0 %v2495
  %3711 = vmatprep.subr.bf16.mxu0 %v2504
  %3712 = vmatpush1.bf16.msra.mxu0 %v2503
  %3713 = vmatprep.subr.bf16.mxu0 %v2512
  %3714 = vmatpush1.bf16.msra.mxu0 %v2511
  %3715 = vmatprep.subr.bf16.mxu0 %v2520
  %3716 = vmatpush1.bf16.msra.mxu0 %v2519
  %3717 = vmatprep.subr.bf16.mxu0 %v2528
  %3718 = vmatpush1.bf16.msra.mxu0 %v2527
  %3719 = vmatprep.subr.bf16.mxu0 %v2536
  %3720 = vmatpush1.bf16.msra.mxu0 %v2535
  %3721 = vmatprep.mubr.bf16.mxu0 %v592
  %3722 = vmatmul.mubr.bf16.gmra.mrb[0].mxu0 %v591
  %v3723 = vpop.f32.mrb[0].mxu0
  %v3724 = vadd.f32 %v3673, %v3723
  %v3725 = vpop.f32.mrb[0].mxu0
  %v3726 = vadd.f32 %v3675, %v3725
  %v3727 = vpop.f32.mrb[0].mxu0
  %v3728 = vadd.f32 %v3677, %v3727
  %v3729 = vpop.f32.mrb[0].mxu0
  %v3730 = vadd.f32 %v3679, %v3729
  %3731 = vmatprep.mubr.bf16.mxu0 %v600
  %3732 = vmatmul.mubr.bf16.gmra.mrb[0].mxu0 %v599
  %v3733 = vpop.f32.mrb[0].mxu0
  %v3734 = vadd.f32 %v3683, %v3733
  %v3735 = vpop.f32.mrb[0].mxu0
  %v3736 = vadd.f32 %v3685, %v3735
  %v3737 = vpop.f32.mrb[0].mxu0
  %v3738 = vpop.f32.mrb[0].mxu0
  %3739 = vdwg.mxu0
  %3740 = vmatprep.subr.bf16.mxu0 %v2544
  %3741 = vmatpush1.bf16.msra.mxu0 %v2543
  %3742 = vmatprep.subr.bf16.mxu0 %v2552
  %3743 = vmatpush1.bf16.msra.mxu0 %v2551
  %3744 = vmatprep.subr.bf16.mxu0 %v2560
  %3745 = vmatpush1.bf16.msra.mxu0 %v2559
  %3746 = vmatprep.subr.bf16.mxu0 %v2568
  %3747 = vmatpush1.bf16.msra.mxu0 %v2567
  %3748 = vmatprep.subr.bf16.mxu0 %v2576
  %3749 = vmatpush1.bf16.msra.mxu0 %v2575
  %3750 = vmatprep.subr.bf16.mxu0 %v2584
  %3751 = vmatpush1.bf16.msra.mxu0 %v2583
  %3752 = vmatprep.subr.bf16.mxu0 %v2592
  %3753 = vmatpush1.bf16.msra.mxu0 %v2591
  %3754 = vmatprep.subr.bf16.mxu0 %v2600
  %3755 = vmatpush1.bf16.msra.mxu0 %v2599
  %3756 = vmatprep.subr.bf16.mxu0 %v2608
  %3757 = vmatpush1.bf16.msra.mxu0 %v2607
  %3758 = vmatprep.subr.bf16.mxu0 %v2616
  %3759 = vmatpush1.bf16.msra.mxu0 %v2615
  %3760 = vmatprep.subr.bf16.mxu0 %v2624
  %3761 = vmatpush1.bf16.msra.mxu0 %v2623
  %3762 = vmatprep.subr.bf16.mxu0 %v2632
  %3763 = vmatpush1.bf16.msra.mxu0 %v2631
  %3764 = vmatprep.subr.bf16.mxu0 %v2640
  %3765 = vmatpush1.bf16.msra.mxu0 %v2639
  %3766 = vmatprep.subr.bf16.mxu0 %v2648
  %3767 = vmatpush1.bf16.msra.mxu0 %v2647
  %3768 = vmatprep.subr.bf16.mxu0 %v2656
  %3769 = vmatpush1.bf16.msra.mxu0 %v2655
  %3770 = vmatprep.subr.bf16.mxu0 %v2664
  %3771 = vmatpush1.bf16.msra.mxu0 %v2663
  %3772 = vmatprep.mubr.bf16.mxu0 %v594
  %3773 = vmatmul.mubr.bf16.gmra.mrb[0].mxu0 %v593
  %v3774 = vpop.f32.mrb[0].mxu0
  %v3775 = vadd.f32 %v3724, %v3774
  %v3776 = vpop.f32.mrb[0].mxu0
  %v3777 = vadd.f32 %v3726, %v3776
  %v3778 = vpop.f32.mrb[0].mxu0
  %v3779 = vadd.f32 %v3728, %v3778
  %v3780 = vpop.f32.mrb[0].mxu0
  %v3781 = vadd.f32 %v3730, %v3780
  %3782 = vmatprep.mubr.bf16.mxu0 %v602
  %3783 = vmatmul.mubr.bf16.gmra.mrb[0].mxu0 %v601
  %v3784 = vpop.f32.mrb[0].mxu0
  %v3785 = vadd.f32 %v3734, %v3784
  %v3786 = vpop.f32.mrb[0].mxu0
  %v3787 = vadd.f32 %v3736, %v3786
  %v3788 = vpop.f32.mrb[0].mxu0
  %v3789 = vpop.f32.mrb[0].mxu0
  %3790 = vdwg.mxu0
  %3791 = vmatprep.subr.bf16.mxu0 %v2162
  %3792 = vmatpush1.bf16.msra.mxu0 %v2161
  %3793 = vmatprep.subr.bf16.mxu0 %v2170
  %3794 = vmatpush1.bf16.msra.mxu0 %v2169
  %3795 = vmatprep.subr.bf16.mxu0 %v2178
  %3796 = vmatpush1.bf16.msra.mxu0 %v2177
  %3797 = vmatprep.subr.bf16.mxu0 %v2186
  %3798 = vmatpush1.bf16.msra.mxu0 %v2185
  %3799 = vmatprep.subr.bf16.mxu0 %v2194
  %3800 = vmatpush1.bf16.msra.mxu0 %v2193
  %3801 = vmatprep.subr.bf16.mxu0 %v2202
  %3802 = vmatpush1.bf16.msra.mxu0 %v2201
  %3803 = vmatprep.subr.bf16.mxu0 %v2210
  %3804 = vmatpush1.bf16.msra.mxu0 %v2209
  %3805 = vmatprep.subr.bf16.mxu0 %v2218
  %3806 = vmatpush1.bf16.msra.mxu0 %v2217
  %3807 = vmatprep.subr.bf16.mxu0 %v2226
  %3808 = vmatpush1.bf16.msra.mxu0 %v2225
  %3809 = vmatprep.subr.bf16.mxu0 %v2234
  %3810 = vmatpush1.bf16.msra.mxu0 %v2233
  %3811 = vmatprep.subr.bf16.mxu0 %v2242
  %3812 = vmatpush1.bf16.msra.mxu0 %v2241
  %3813 = vmatprep.subr.bf16.mxu0 %v2250
  %3814 = vmatpush1.bf16.msra.mxu0 %v2249
  %3815 = vmatprep.subr.bf16.mxu0 %v2258
  %3816 = vmatpush1.bf16.msra.mxu0 %v2257
  %3817 = vmatprep.subr.bf16.mxu0 %v2266
  %3818 = vmatpush1.bf16.msra.mxu0 %v2265
  %3819 = vmatprep.subr.bf16.mxu0 %v2274
  %3820 = vmatpush1.bf16.msra.mxu0 %v2273
  %3821 = vmatprep.subr.bf16.mxu0 %v2282
  %3822 = vmatpush1.bf16.msra.mxu0 %v2281
  %3823 = vmatprep.mubr.bf16.mxu0 %v588
  %3824 = vmatmul.mubr.bf16.gmra.mrb[0].mxu0 %v587
  %v3825 = vpop.f32.mrb[0].mxu0
  %v3826 = vadd.f32 0.0, %v3825
  %v3827 = vpop.f32.mrb[0].mxu0
  %v3828 = vadd.f32 0.0, %v3827
  %v3829 = vpop.f32.mrb[0].mxu0
  %v3830 = vadd.f32 0.0, %v3829
  %v3831 = vpop.f32.mrb[0].mxu0
  %v3832 = vadd.f32 0.0, %v3831
  %3833 = vmatprep.mubr.bf16.mxu0 %v596
  %3834 = vmatmul.mubr.bf16.gmra.mrb[0].mxu0 %v595
  %v3835 = vpop.f32.mrb[0].mxu0
  %v3836 = vadd.f32 0.0, %v3835
  %v3837 = vpop.f32.mrb[0].mxu0
  %v3838 = vadd.f32 0.0, %v3837
  %v3839 = vpop.f32.mrb[0].mxu0
  %v3840 = vpop.f32.mrb[0].mxu0
  %3841 = vdwg.mxu0
  %3842 = vmatprep.subr.bf16.mxu0 %v2290
  %3843 = vmatpush1.bf16.msra.mxu0 %v2289
  %3844 = vmatprep.subr.bf16.mxu0 %v2298
  %3845 = vmatpush1.bf16.msra.mxu0 %v2297
  %3846 = vmatprep.subr.bf16.mxu0 %v2306
  %3847 = vmatpush1.bf16.msra.mxu0 %v2305
  %3848 = vmatprep.subr.bf16.mxu0 %v2314
  %3849 = vmatpush1.bf16.msra.mxu0 %v2313
  %3850 = vmatprep.subr.bf16.mxu0 %v2322
  %3851 = vmatpush1.bf16.msra.mxu0 %v2321
  %3852 = vmatprep.subr.bf16.mxu0 %v2330
  %3853 = vmatpush1.bf16.msra.mxu0 %v2329
  %3854 = vmatprep.subr.bf16.mxu0 %v2338
  %3855 = vmatpush1.bf16.msra.mxu0 %v2337
  %3856 = vmatprep.subr.bf16.mxu0 %v2346
  %3857 = vmatpush1.bf16.msra.mxu0 %v2345
  %3858 = vmatprep.subr.bf16.mxu0 %v2354
  %3859 = vmatpush1.bf16.msra.mxu0 %v2353
  %3860 = vmatprep.subr.bf16.mxu0 %v2362
  %3861 = vmatpush1.bf16.msra.mxu0 %v2361
  %3862 = vmatprep.subr.bf16.mxu0 %v2370
  %3863 = vmatpush1.bf16.msra.mxu0 %v2369
  %3864 = vmatprep.subr.bf16.mxu0 %v2378
  %3865 = vmatpush1.bf16.msra.mxu0 %v2377
  %3866 = vmatprep.subr.bf16.mxu0 %v2386
  %3867 = vmatpush1.bf16.msra.mxu0 %v2385
  %3868 = vmatprep.subr.bf16.mxu0 %v2394
  %3869 = vmatpush1.bf16.msra.mxu0 %v2393
  %3870 = vmatprep.subr.bf16.mxu0 %v2402
  %3871 = vmatpush1.bf16.msra.mxu0 %v2401
  %3872 = vmatprep.subr.bf16.mxu0 %v2410
  %3873 = vmatpush1.bf16.msra.mxu0 %v2409
  %3874 = vmatprep.mubr.bf16.mxu0 %v590
  %3875 = vmatmul.mubr.bf16.gmra.mrb[0].mxu0 %v589
  %v3876 = vpop.f32.mrb[0].mxu0
  %v3877 = vadd.f32 %v3826, %v3876
  %v3878 = vpop.f32.mrb[0].mxu0
  %v3879 = vadd.f32 %v3828, %v3878
  %v3880 = vpop.f32.mrb[0].mxu0
  %v3881 = vadd.f32 %v3830, %v3880
  %v3882 = vpop.f32.mrb[0].mxu0
  %v3883 = vadd.f32 %v3832, %v3882
  %3884 = vmatprep.mubr.bf16.mxu0 %v598
  %3885 = vmatmul.mubr.bf16.gmra.mrb[0].mxu0 %v597
  %v3886 = vpop.f32.mrb[0].mxu0
  %v3887 = vadd.f32 %v3836, %v3886
  %v3888 = vpop.f32.mrb[0].mxu0
  %v3889 = vadd.f32 %v3838, %v3888
  %v3890 = vpop.f32.mrb[0].mxu0
  %v3891 = vpop.f32.mrb[0].mxu0
  %3892 = vdwg.mxu0
  %3893 = vmatprep.subr.bf16.mxu0 %v2418
  %3894 = vmatpush1.bf16.msra.mxu0 %v2417
  %3895 = vmatprep.subr.bf16.mxu0 %v2426
  %3896 = vmatpush1.bf16.msra.mxu0 %v2425
  %3897 = vmatprep.subr.bf16.mxu0 %v2434
  %3898 = vmatpush1.bf16.msra.mxu0 %v2433
  %3899 = vmatprep.subr.bf16.mxu0 %v2442
  %3900 = vmatpush1.bf16.msra.mxu0 %v2441
  %3901 = vmatprep.subr.bf16.mxu0 %v2450
  %3902 = vmatpush1.bf16.msra.mxu0 %v2449
  %3903 = vmatprep.subr.bf16.mxu0 %v2458
  %3904 = vmatpush1.bf16.msra.mxu0 %v2457
  %3905 = vmatprep.subr.bf16.mxu0 %v2466
  %3906 = vmatpush1.bf16.msra.mxu0 %v2465
  %3907 = vmatprep.subr.bf16.mxu0 %v2474
  %3908 = vmatpush1.bf16.msra.mxu0 %v2473
  %3909 = vmatprep.subr.bf16.mxu0 %v2482
  %3910 = vmatpush1.bf16.msra.mxu0 %v2481
  %3911 = vmatprep.subr.bf16.mxu0 %v2490
  %3912 = vmatpush1.bf16.msra.mxu0 %v2489
  %3913 = vmatprep.subr.bf16.mxu0 %v2498
  %3914 = vmatpush1.bf16.msra.mxu0 %v2497
  %3915 = vmatprep.subr.bf16.mxu0 %v2506
  %3916 = vmatpush1.bf16.msra.mxu0 %v2505
  %3917 = vmatprep.subr.bf16.mxu0 %v2514
  %3918 = vmatpush1.bf16.msra.mxu0 %v2513
  %3919 = vmatprep.subr.bf16.mxu0 %v2522
  %3920 = vmatpush1.bf16.msra.mxu0 %v2521
  %3921 = vmatprep.subr.bf16.mxu0 %v2530
  %3922 = vmatpush1.bf16.msra.mxu0 %v2529
  %3923 = vmatprep.subr.bf16.mxu0 %v2538
  %3924 = vmatpush1.bf16.msra.mxu0 %v2537
  %3925 = vmatprep.mubr.bf16.mxu0 %v592
  %3926 = vmatmul.mubr.bf16.gmra.mrb[0].mxu0 %v591
  %v3927 = vpop.f32.mrb[0].mxu0
  %v3928 = vadd.f32 %v3877, %v3927
  %v3929 = vpop.f32.mrb[0].mxu0
  %v3930 = vadd.f32 %v3879, %v3929
  %v3931 = vpop.f32.mrb[0].mxu0
  %v3932 = vadd.f32 %v3881, %v3931
  %v3933 = vpop.f32.mrb[0].mxu0
  %v3934 = vadd.f32 %v3883, %v3933
  %3935 = vmatprep.mubr.bf16.mxu0 %v600
  %3936 = vmatmul.mubr.bf16.gmra.mrb[0].mxu0 %v599
  %v3937 = vpop.f32.mrb[0].mxu0
  %v3938 = vadd.f32 %v3887, %v3937
  %v3939 = vpop.f32.mrb[0].mxu0
  %v3940 = vadd.f32 %v3889, %v3939
  %v3941 = vpop.f32.mrb[0].mxu0
  %v3942 = vpop.f32.mrb[0].mxu0
  %3943 = vdwg.mxu0
  %3944 = vmatprep.subr.bf16.mxu0 %v2546
  %3945 = vmatpush1.bf16.msra.mxu0 %v2545
  %3946 = vmatprep.subr.bf16.mxu0 %v2554
  %3947 = vmatpush1.bf16.msra.mxu0 %v2553
  %3948 = vmatprep.subr.bf16.mxu0 %v2562
  %3949 = vmatpush1.bf16.msra.mxu0 %v2561
  %3950 = vmatprep.subr.bf16.mxu0 %v2570
  %3951 = vmatpush1.bf16.msra.mxu0 %v2569
  %3952 = vmatprep.subr.bf16.mxu0 %v2578
  %3953 = vmatpush1.bf16.msra.mxu0 %v2577
  %3954 = vmatprep.subr.bf16.mxu0 %v2586
  %3955 = vmatpush1.bf16.msra.mxu0 %v2585
  %3956 = vmatprep.subr.bf16.mxu0 %v2594
  %3957 = vmatpush1.bf16.msra.mxu0 %v2593
  %3958 = vmatprep.subr.bf16.mxu0 %v2602
  %3959 = vmatpush1.bf16.msra.mxu0 %v2601
  %3960 = vmatprep.subr.bf16.mxu0 %v2610
  %3961 = vmatpush1.bf16.msra.mxu0 %v2609
  %3962 = vmatprep.subr.bf16.mxu0 %v2618
  %3963 = vmatpush1.bf16.msra.mxu0 %v2617
  %3964 = vmatprep.subr.bf16.mxu0 %v2626
  %3965 = vmatpush1.bf16.msra.mxu0 %v2625
  %3966 = vmatprep.subr.bf16.mxu0 %v2634
  %3967 = vmatpush1.bf16.msra.mxu0 %v2633
  %3968 = vmatprep.subr.bf16.mxu0 %v2642
  %3969 = vmatpush1.bf16.msra.mxu0 %v2641
  %3970 = vmatprep.subr.bf16.mxu0 %v2650
  %3971 = vmatpush1.bf16.msra.mxu0 %v2649
  %3972 = vmatprep.subr.bf16.mxu0 %v2658
  %3973 = vmatpush1.bf16.msra.mxu0 %v2657
  %3974 = vmatprep.subr.bf16.mxu0 %v2666
  %3975 = vmatpush1.bf16.msra.mxu0 %v2665
  %3976 = vmatprep.mubr.bf16.mxu0 %v594
  %3977 = vmatmul.mubr.bf16.gmra.mrb[0].mxu0 %v593
  %v3978 = vpop.f32.mrb[0].mxu0
  %v3979 = vadd.f32 %v3928, %v3978
  %v3980 = vpop.f32.mrb[0].mxu0
  %v3981 = vadd.f32 %v3930, %v3980
  %v3982 = vpop.f32.mrb[0].mxu0
  %v3983 = vadd.f32 %v3932, %v3982
  %v3984 = vpop.f32.mrb[0].mxu0
  %v3985 = vadd.f32 %v3934, %v3984
  %3986 = vmatprep.mubr.bf16.mxu0 %v602
  %3987 = vmatmul.mubr.bf16.gmra.mrb[0].mxu0 %v601
  %v3988 = vpop.f32.mrb[0].mxu0
  %v3989 = vadd.f32 %v3938, %v3988
  %v3990 = vpop.f32.mrb[0].mxu0
  %v3991 = vadd.f32 %v3940, %v3990
  %v3992 = vpop.f32.mrb[0].mxu0
  %v3993 = vpop.f32.mrb[0].mxu0
  %3994 = vdwg.mxu0
  %v3995 = vrot.slane %v3367, 4
  %v3996 = vadd.f32 %v3367, %v3995
  %v3997 = vrot.slane %v3996, 2
  %v3998 = vadd.f32 %v3996, %v3997
  %v3999 = vrot.slane %v3998, 1
  %v4000 = vadd.f32 %v3998, %v3999
  %v4001 = vrot.slane %v3369, 4
  %v4002 = vadd.f32 %v3369, %v4001
  %v4003 = vrot.slane %v4002, 2
  %v4004 = vadd.f32 %v4002, %v4003
  %v4005 = vrot.slane %v4004, 1
  %v4006 = vadd.f32 %v4004, %v4005
  %v4007 = vrot.slane %v3571, 4
  %v4008 = vadd.f32 %v3571, %v4007
  %v4009 = vrot.slane %v4008, 2
  %v4010 = vadd.f32 %v4008, %v4009
  %v4011 = vrot.slane %v4010, 1
  %v4012 = vadd.f32 %v4010, %v4011
  %v4013 = vrot.slane %v3573, 4
  %v4014 = vadd.f32 %v3573, %v4013
  %v4015 = vrot.slane %v4014, 2
  %v4016 = vadd.f32 %v4014, %v4015
  %v4017 = vrot.slane %v4016, 1
  %v4018 = vadd.f32 %v4016, %v4017
  %v4019 = vrot.slane %v3775, 4
  %v4020 = vadd.f32 %v3775, %v4019
  %v4021 = vrot.slane %v4020, 2
  %v4022 = vadd.f32 %v4020, %v4021
  %v4023 = vrot.slane %v4022, 1
  %v4024 = vadd.f32 %v4022, %v4023
  %v4025 = vrot.slane %v3777, 4
  %v4026 = vadd.f32 %v3777, %v4025
  %v4027 = vrot.slane %v4026, 2
  %v4028 = vadd.f32 %v4026, %v4027
  %v4029 = vrot.slane %v4028, 1
  %v4030 = vadd.f32 %v4028, %v4029
  %v4031 = vrot.slane %v3979, 4
  %v4032 = vadd.f32 %v3979, %v4031
  %v4033 = vrot.slane %v4032, 2
  %v4034 = vadd.f32 %v4032, %v4033
  %v4035 = vrot.slane %v4034, 1
  %v4036 = vadd.f32 %v4034, %v4035
  %v4037 = vrot.slane %v3981, 4
  %v4038 = vadd.f32 %v3981, %v4037
  %v4039 = vrot.slane %v4038, 2
  %v4040 = vadd.f32 %v4038, %v4039
  %v4041 = vrot.slane %v4040, 1
  %v4042 = vadd.f32 %v4040, %v4041
  %v4043 = vrot.slane %v3371, 4
  %v4044 = vadd.f32 %v3371, %v4043
  %v4045 = vrot.slane %v4044, 2
  %v4046 = vadd.f32 %v4044, %v4045
  %v4047 = vrot.slane %v4046, 1
  %v4048 = vadd.f32 %v4046, %v4047
  %v4049 = vrot.slane %v3373, 4
  %v4050 = vadd.f32 %v3373, %v4049
  %v4051 = vrot.slane %v4050, 2
  %v4052 = vadd.f32 %v4050, %v4051
  %v4053 = vrot.slane %v4052, 1
  %v4054 = vadd.f32 %v4052, %v4053
  %v4055 = vrot.slane %v3575, 4
  %v4056 = vadd.f32 %v3575, %v4055
  %v4057 = vrot.slane %v4056, 2
  %v4058 = vadd.f32 %v4056, %v4057
  %v4059 = vrot.slane %v4058, 1
  %v4060 = vadd.f32 %v4058, %v4059
  %v4061 = vrot.slane %v3577, 4
  %v4062 = vadd.f32 %v3577, %v4061
  %v4063 = vrot.slane %v4062, 2
  %v4064 = vadd.f32 %v4062, %v4063
  %v4065 = vrot.slane %v4064, 1
  %v4066 = vadd.f32 %v4064, %v4065
  %v4067 = vrot.slane %v3779, 4
  %v4068 = vadd.f32 %v3779, %v4067
  %v4069 = vrot.slane %v4068, 2
  %v4070 = vadd.f32 %v4068, %v4069
  %v4071 = vrot.slane %v4070, 1
  %v4072 = vadd.f32 %v4070, %v4071
  %v4073 = vrot.slane %v3781, 4
  %v4074 = vadd.f32 %v3781, %v4073
  %v4075 = vrot.slane %v4074, 2
  %v4076 = vadd.f32 %v4074, %v4075
  %v4077 = vrot.slane %v4076, 1
  %v4078 = vadd.f32 %v4076, %v4077
  %v4079 = vrot.slane %v3983, 4
  %v4080 = vadd.f32 %v3983, %v4079
  %v4081 = vrot.slane %v4080, 2
  %v4082 = vadd.f32 %v4080, %v4081
  %v4083 = vrot.slane %v4082, 1
  %v4084 = vadd.f32 %v4082, %v4083
  %v4085 = vrot.slane %v3985, 4
  %v4086 = vadd.f32 %v3985, %v4085
  %v4087 = vrot.slane %v4086, 2
  %v4088 = vadd.f32 %v4086, %v4087
  %v4089 = vrot.slane %v4088, 1
  %v4090 = vadd.f32 %v4088, %v4089
  %v4091 = vrot.slane %v3377, 4
  %v4092 = vadd.f32 %v3377, %v4091
  %v4093 = vrot.slane %v4092, 2
  %v4094 = vadd.f32 %v4092, %v4093
  %v4095 = vrot.slane %v4094, 1
  %v4096 = vadd.f32 %v4094, %v4095
  %v4097 = vrot.slane %v3379, 4
  %v4098 = vadd.f32 %v3379, %v4097
  %v4099 = vrot.slane %v4098, 2
  %v4100 = vadd.f32 %v4098, %v4099
  %v4101 = vrot.slane %v4100, 1
  %v4102 = vadd.f32 %v4100, %v4101
  %v4103 = vrot.slane %v3581, 4
  %v4104 = vadd.f32 %v3581, %v4103
  %v4105 = vrot.slane %v4104, 2
  %v4106 = vadd.f32 %v4104, %v4105
  %v4107 = vrot.slane %v4106, 1
  %v4108 = vadd.f32 %v4106, %v4107
  %v4109 = vrot.slane %v3583, 4
  %v4110 = vadd.f32 %v3583, %v4109
  %v4111 = vrot.slane %v4110, 2
  %v4112 = vadd.f32 %v4110, %v4111
  %v4113 = vrot.slane %v4112, 1
  %v4114 = vadd.f32 %v4112, %v4113
  %v4115 = vrot.slane %v3785, 4
  %v4116 = vadd.f32 %v3785, %v4115
  %v4117 = vrot.slane %v4116, 2
  %v4118 = vadd.f32 %v4116, %v4117
  %v4119 = vrot.slane %v4118, 1
  %v4120 = vadd.f32 %v4118, %v4119
  %v4121 = vrot.slane %v3787, 4
  %v4122 = vadd.f32 %v3787, %v4121
  %v4123 = vrot.slane %v4122, 2
  %v4124 = vadd.f32 %v4122, %v4123
  %v4125 = vrot.slane %v4124, 1
  %v4126 = vadd.f32 %v4124, %v4125
  %v4127 = vrot.slane %v3989, 4
  %v4128 = vadd.f32 %v3989, %v4127
  %v4129 = vrot.slane %v4128, 2
  %v4130 = vadd.f32 %v4128, %v4129
  %v4131 = vrot.slane %v4130, 1
  %v4132 = vadd.f32 %v4130, %v4131
  %v4133 = vrot.slane %v3991, 4
  %v4134 = vadd.f32 %v3991, %v4133
  %v4135 = vrot.slane %v4134, 2
  %v4136 = vadd.f32 %v4134, %v4135
  %v4137 = vrot.slane %v4136, 1
  %v4138 = vadd.f32 %v4136, %v4137
  %v4139 = vrcp.pop 8.0
  %v4140 = vmul.f32 %v4000, %v4139
  %v4141 = vmul.f32 %v4006, %v4139
  %v4142 = vmul.f32 %v4012, %v4139
  %v4143 = vmul.f32 %v4018, %v4139
  %v4144 = vmul.f32 %v4024, %v4139
  %v4145 = vmul.f32 %v4030, %v4139
  %v4146 = vmul.f32 %v4036, %v4139
  %v4147 = vmul.f32 %v4042, %v4139
  %v4148 = vmul.f32 %v4048, %v4139
  %v4149 = vmul.f32 %v4054, %v4139
  %v4150 = vmul.f32 %v4060, %v4139
  %v4151 = vmul.f32 %v4066, %v4139
  %v4152 = vmul.f32 %v4072, %v4139
  %v4153 = vmul.f32 %v4078, %v4139
  %v4154 = vmul.f32 %v4084, %v4139
  %v4155 = vmul.f32 %v4090, %v4139
  %v4156 = vmul.f32 %v4096, %v4139
  %v4157 = vmul.f32 %v4102, %v4139
  %v4158 = vmul.f32 %v4108, %v4139
  %v4159 = vmul.f32 %v4114, %v4139
  %v4160 = vmul.f32 %v4120, %v4139
  %v4161 = vmul.f32 %v4126, %v4139
  %v4162 = vmul.f32 %v4132, %v4139
  %v4163 = vmul.f32 %v4138, %v4139
  %v4164 = vsub.f32 %v3367, %v4140
  %v4165 = vsub.f32 %v3369, %v4141
  %v4166 = vsub.f32 %v3571, %v4142
  %v4167 = vsub.f32 %v3573, %v4143
  %v4168 = vsub.f32 %v3775, %v4144
  %v4169 = vsub.f32 %v3777, %v4145
  %v4170 = vsub.f32 %v3979, %v4146
  %v4171 = vsub.f32 %v3981, %v4147
  %v4172 = vsub.f32 %v3371, %v4148
  %v4173 = vsub.f32 %v3373, %v4149
  %v4174 = vsub.f32 %v3575, %v4150
  %v4175 = vsub.f32 %v3577, %v4151
  %v4176 = vsub.f32 %v3779, %v4152
  %v4177 = vsub.f32 %v3781, %v4153
  %v4178 = vsub.f32 %v3983, %v4154
  %v4179 = vsub.f32 %v3985, %v4155
  %v4180 = vsub.f32 %v3377, %v4156
  %v4181 = vsub.f32 %v3379, %v4157
  %v4182 = vsub.f32 %v3581, %v4158
  %v4183 = vsub.f32 %v3583, %v4159
  %v4184 = vsub.f32 %v3785, %v4160
  %v4185 = vsub.f32 %v3787, %v4161
  %v4186 = vsub.f32 %v3989, %v4162
  %v4187 = vsub.f32 %v3991, %v4163
  %v4188 = vmul.f32 %v4164, %v4164
  %v4189 = vmul.f32 %v4165, %v4165
  %v4190 = vmul.f32 %v4166, %v4166
  %v4191 = vmul.f32 %v4167, %v4167
  %v4192 = vmul.f32 %v4168, %v4168
  %v4193 = vmul.f32 %v4169, %v4169
  %v4194 = vmul.f32 %v4170, %v4170
  %v4195 = vmul.f32 %v4171, %v4171
  %v4196 = vmul.f32 %v4172, %v4172
  %v4197 = vmul.f32 %v4173, %v4173
  %v4198 = vmul.f32 %v4174, %v4174
  %v4199 = vmul.f32 %v4175, %v4175
  %v4200 = vmul.f32 %v4176, %v4176
  %v4201 = vmul.f32 %v4177, %v4177
  %v4202 = vmul.f32 %v4178, %v4178
  %v4203 = vmul.f32 %v4179, %v4179
  %v4204 = vmul.f32 %v4180, %v4180
  %v4205 = vmul.f32 %v4181, %v4181
  %v4206 = vmul.f32 %v4182, %v4182
  %v4207 = vmul.f32 %v4183, %v4183
  %v4208 = vmul.f32 %v4184, %v4184
  %v4209 = vmul.f32 %v4185, %v4185
  %v4210 = vmul.f32 %v4186, %v4186
  %v4211 = vmul.f32 %v4187, %v4187
  %v4212 = vrot.slane %v4188, 4
  %v4213 = vadd.f32 %v4188, %v4212
  %v4214 = vrot.slane %v4213, 2
  %v4215 = vadd.f32 %v4213, %v4214
  %v4216 = vrot.slane %v4215, 1
  %v4217 = vadd.f32 %v4215, %v4216
  %v4218 = vrot.slane %v4189, 4
  %v4219 = vadd.f32 %v4189, %v4218
  %v4220 = vrot.slane %v4219, 2
  %v4221 = vadd.f32 %v4219, %v4220
  %v4222 = vrot.slane %v4221, 1
  %v4223 = vadd.f32 %v4221, %v4222
  %v4224 = vrot.slane %v4190, 4
  %v4225 = vadd.f32 %v4190, %v4224
  %v4226 = vrot.slane %v4225, 2
  %v4227 = vadd.f32 %v4225, %v4226
  %v4228 = vrot.slane %v4227, 1
  %v4229 = vadd.f32 %v4227, %v4228
  %v4230 = vrot.slane %v4191, 4
  %v4231 = vadd.f32 %v4191, %v4230
  %v4232 = vrot.slane %v4231, 2
  %v4233 = vadd.f32 %v4231, %v4232
  %v4234 = vrot.slane %v4233, 1
  %v4235 = vadd.f32 %v4233, %v4234
  %v4236 = vrot.slane %v4192, 4
  %v4237 = vadd.f32 %v4192, %v4236
  %v4238 = vrot.slane %v4237, 2
  %v4239 = vadd.f32 %v4237, %v4238
  %v4240 = vrot.slane %v4239, 1
  %v4241 = vadd.f32 %v4239, %v4240
  %v4242 = vrot.slane %v4193, 4
  %v4243 = vadd.f32 %v4193, %v4242
  %v4244 = vrot.slane %v4243, 2
  %v4245 = vadd.f32 %v4243, %v4244
  %v4246 = vrot.slane %v4245, 1
  %v4247 = vadd.f32 %v4245, %v4246
  %v4248 = vrot.slane %v4194, 4
  %v4249 = vadd.f32 %v4194, %v4248
  %v4250 = vrot.slane %v4249, 2
  %v4251 = vadd.f32 %v4249, %v4250
  %v4252 = vrot.slane %v4251, 1
  %v4253 = vadd.f32 %v4251, %v4252
  %v4254 = vrot.slane %v4195, 4
  %v4255 = vadd.f32 %v4195, %v4254
  %v4256 = vrot.slane %v4255, 2
  %v4257 = vadd.f32 %v4255, %v4256
  %v4258 = vrot.slane %v4257, 1
  %v4259 = vadd.f32 %v4257, %v4258
  %v4260 = vrot.slane %v4196, 4
  %v4261 = vadd.f32 %v4196, %v4260
  %v4262 = vrot.slane %v4261, 2
  %v4263 = vadd.f32 %v4261, %v4262
  %v4264 = vrot.slane %v4263, 1
  %v4265 = vadd.f32 %v4263, %v4264
  %v4266 = vrot.slane %v4197, 4
  %v4267 = vadd.f32 %v4197, %v4266
  %v4268 = vrot.slane %v4267, 2
  %v4269 = vadd.f32 %v4267, %v4268
  %v4270 = vrot.slane %v4269, 1
  %v4271 = vadd.f32 %v4269, %v4270
  %v4272 = vrot.slane %v4198, 4
  %v4273 = vadd.f32 %v4198, %v4272
  %v4274 = vrot.slane %v4273, 2
  %v4275 = vadd.f32 %v4273, %v4274
  %v4276 = vrot.slane %v4275, 1
  %v4277 = vadd.f32 %v4275, %v4276
  %v4278 = vrot.slane %v4199, 4
  %v4279 = vadd.f32 %v4199, %v4278
  %v4280 = vrot.slane %v4279, 2
  %v4281 = vadd.f32 %v4279, %v4280
  %v4282 = vrot.slane %v4281, 1
  %v4283 = vadd.f32 %v4281, %v4282
  %v4284 = vrot.slane %v4200, 4
  %v4285 = vadd.f32 %v4200, %v4284
  %v4286 = vrot.slane %v4285, 2
  %v4287 = vadd.f32 %v4285, %v4286
  %v4288 = vrot.slane %v4287, 1
  %v4289 = vadd.f32 %v4287, %v4288
  %v4290 = vrot.slane %v4201, 4
  %v4291 = vadd.f32 %v4201, %v4290
  %v4292 = vrot.slane %v4291, 2
  %v4293 = vadd.f32 %v4291, %v4292
  %v4294 = vrot.slane %v4293, 1
  %v4295 = vadd.f32 %v4293, %v4294
  %v4296 = vrot.slane %v4202, 4
  %v4297 = vadd.f32 %v4202, %v4296
  %v4298 = vrot.slane %v4297, 2
  %v4299 = vadd.f32 %v4297, %v4298
  %v4300 = vrot.slane %v4299, 1
  %v4301 = vadd.f32 %v4299, %v4300
  %v4302 = vrot.slane %v4203, 4
  %v4303 = vadd.f32 %v4203, %v4302
  %v4304 = vrot.slane %v4303, 2
  %v4305 = vadd.f32 %v4303, %v4304
  %v4306 = vrot.slane %v4305, 1
  %v4307 = vadd.f32 %v4305, %v4306
  %v4308 = vrot.slane %v4204, 4
  %v4309 = vadd.f32 %v4204, %v4308
  %v4310 = vrot.slane %v4309, 2
  %v4311 = vadd.f32 %v4309, %v4310
  %v4312 = vrot.slane %v4311, 1
  %v4313 = vadd.f32 %v4311, %v4312
  %v4314 = vrot.slane %v4205, 4
  %v4315 = vadd.f32 %v4205, %v4314
  %v4316 = vrot.slane %v4315, 2
  %v4317 = vadd.f32 %v4315, %v4316
  %v4318 = vrot.slane %v4317, 1
  %v4319 = vadd.f32 %v4317, %v4318
  %v4320 = vrot.slane %v4206, 4
  %v4321 = vadd.f32 %v4206, %v4320
  %v4322 = vrot.slane %v4321, 2
  %v4323 = vadd.f32 %v4321, %v4322
  %v4324 = vrot.slane %v4323, 1
  %v4325 = vadd.f32 %v4323, %v4324
  %v4326 = vrot.slane %v4207, 4
  %v4327 = vadd.f32 %v4207, %v4326
  %v4328 = vrot.slane %v4327, 2
  %v4329 = vadd.f32 %v4327, %v4328
  %v4330 = vrot.slane %v4329, 1
  %v4331 = vadd.f32 %v4329, %v4330
  %v4332 = vrot.slane %v4208, 4
  %v4333 = vadd.f32 %v4208, %v4332
  %v4334 = vrot.slane %v4333, 2
  %v4335 = vadd.f32 %v4333, %v4334
  %v4336 = vrot.slane %v4335, 1
  %v4337 = vadd.f32 %v4335, %v4336
  %v4338 = vrot.slane %v4209, 4
  %v4339 = vadd.f32 %v4209, %v4338
  %v4340 = vrot.slane %v4339, 2
  %v4341 = vadd.f32 %v4339, %v4340
  %v4342 = vrot.slane %v4341, 1
  %v4343 = vadd.f32 %v4341, %v4342
  %v4344 = vrot.slane %v4210, 4
  %v4345 = vadd.f32 %v4210, %v4344
  %v4346 = vrot.slane %v4345, 2
  %v4347 = vadd.f32 %v4345, %v4346
  %v4348 = vrot.slane %v4347, 1
  %v4349 = vadd.f32 %v4347, %v4348
  %v4350 = vrot.slane %v4211, 4
  %v4351 = vadd.f32 %v4211, %v4350
  %v4352 = vrot.slane %v4351, 2
  %v4353 = vadd.f32 %v4351, %v4352
  %v4354 = vrot.slane %v4353, 1
  %v4355 = vadd.f32 %v4353, %v4354
  %v4356 = vmul.f32 %v4217, %v4139
  %v4357 = vmul.f32 %v4223, %v4139
  %v4358 = vmul.f32 %v4229, %v4139
  %v4359 = vmul.f32 %v4235, %v4139
  %v4360 = vmul.f32 %v4241, %v4139
  %v4361 = vmul.f32 %v4247, %v4139
  %v4362 = vmul.f32 %v4253, %v4139
  %v4363 = vmul.f32 %v4259, %v4139
  %v4364 = vmul.f32 %v4265, %v4139
  %v4365 = vmul.f32 %v4271, %v4139
  %v4366 = vmul.f32 %v4277, %v4139
  %v4367 = vmul.f32 %v4283, %v4139
  %v4368 = vmul.f32 %v4289, %v4139
  %v4369 = vmul.f32 %v4295, %v4139
  %v4370 = vmul.f32 %v4301, %v4139
  %v4371 = vmul.f32 %v4307, %v4139
  %v4372 = vmul.f32 %v4313, %v4139
  %v4373 = vmul.f32 %v4319, %v4139
  %v4374 = vmul.f32 %v4325, %v4139
  %v4375 = vmul.f32 %v4331, %v4139
  %v4376 = vmul.f32 %v4337, %v4139
  %v4377 = vmul.f32 %v4343, %v4139
  %v4378 = vmul.f32 %v4349, %v4139
  %v4379 = vmul.f32 %v4355, %v4139
  %v4380 = vld [vmem:[%s2] sm:$0xff]
  %v4381 = vld [vmem:[%s2 + $0x8] sm:$0xff]
  %v4382 = vadd.f32 %v4356, 1e-05
  %v4383 = vadd.f32 %v4357, 1e-05
  %v4384 = vadd.f32 %v4358, 1e-05
  %v4385 = vadd.f32 %v4359, 1e-05
  %v4386 = vadd.f32 %v4360, 1e-05
  %v4387 = vadd.f32 %v4361, 1e-05
  %v4388 = vadd.f32 %v4362, 1e-05
  %v4389 = vadd.f32 %v4363, 1e-05
  %v4390 = vadd.f32 %v4364, 1e-05
  %v4391 = vadd.f32 %v4365, 1e-05
  %v4392 = vadd.f32 %v4366, 1e-05
  %v4393 = vadd.f32 %v4367, 1e-05
  %v4394 = vadd.f32 %v4368, 1e-05
  %v4395 = vadd.f32 %v4369, 1e-05
  %v4396 = vadd.f32 %v4370, 1e-05
  %v4397 = vadd.f32 %v4371, 1e-05
  %v4398 = vadd.f32 %v4372, 1e-05
  %v4399 = vadd.f32 %v4373, 1e-05
  %v4400 = vadd.f32 %v4374, 1e-05
  %v4401 = vadd.f32 %v4375, 1e-05
  %v4402 = vadd.f32 %v4376, 1e-05
  %v4403 = vadd.f32 %v4377, 1e-05
  %v4404 = vadd.f32 %v4378, 1e-05
  %v4405 = vadd.f32 %v4379, 1e-05
  %v4406 = vrsqrt.pop %v4382
  %v4407 = vrsqrt.pop %v4383
  %v4408 = vrsqrt.pop %v4384
  %v4409 = vrsqrt.pop %v4385
  %v4410 = vrsqrt.pop %v4386
  %v4411 = vrsqrt.pop %v4387
  %v4412 = vrsqrt.pop %v4388
  %v4413 = vrsqrt.pop %v4389
  %v4414 = vrsqrt.pop %v4390
  %v4415 = vrsqrt.pop %v4391
  %v4416 = vrsqrt.pop %v4392
  %v4417 = vrsqrt.pop %v4393
  %v4418 = vrsqrt.pop %v4394
  %v4419 = vrsqrt.pop %v4395
  %v4420 = vrsqrt.pop %v4396
  %v4421 = vrsqrt.pop %v4397
  %v4422 = vrsqrt.pop %v4398
  %v4423 = vrsqrt.pop %v4399
  %v4424 = vrsqrt.pop %v4400
  %v4425 = vrsqrt.pop %v4401
  %v4426 = vrsqrt.pop %v4402
  %v4427 = vrsqrt.pop %v4403
  %v4428 = vrsqrt.pop %v4404
  %v4429 = vrsqrt.pop %v4405
  %v4454 = vcombine.low %v4406, %v4407
  %v4455 = vcombine.low %v4408, %v4409
  %v4457 = vunpack.c.l.s4 1983009808
  %v4458 = vunpack.c.0.s8 %v4457
  %v4459 = vlaneseq
  %v4460 = vshrl.u32 %v4459, 7
  %v4461 = vsub.s32 %v4458, %v4460
  %v4462 = vrot.slane %v4454, %v4461
  %v4464 = vunpack.c.l.s4 1983009808
  %v4465 = vunpack.c.0.s8 %v4464
  %v4466 = vlaneseq
  %v4467 = vshrl.u32 %v4466, 7
  %v4468 = vsub.s32 %v4465, %v4467
  %v4469 = vrot.slane %v4455, %v4468
  %v4470 = vcombine.low %v4462, %v4469
  %v4471 = vcombine.low %v4410, %v4411
  %v4472 = vcombine.low %v4412, %v4413
  %v4474 = vunpack.c.l.s4 1983009808
  %v4475 = vunpack.c.0.s8 %v4474
  %v4476 = vlaneseq
  %v4477 = vshrl.u32 %v4476, 7
  %v4478 = vsub.s32 %v4475, %v4477
  %v4479 = vrot.slane %v4471, %v4478
  %v4481 = vunpack.c.l.s4 1983009808
  %v4482 = vunpack.c.0.s8 %v4481
  %v4483 = vlaneseq
  %v4484 = vshrl.u32 %v4483, 7
  %v4485 = vsub.s32 %v4482, %v4484
  %v4486 = vrot.slane %v4472, %v4485
  %v4487 = vcombine.low %v4479, %v4486
  %v4488 = vcombine.low %v4414, %v4415
  %v4489 = vcombine.low %v4416, %v4417
  %v4491 = vunpack.c.l.s4 1983009808
  %v4492 = vunpack.c.0.s8 %v4491
  %v4493 = vlaneseq
  %v4494 = vshrl.u32 %v4493, 7
  %v4495 = vsub.s32 %v4492, %v4494
  %v4496 = vrot.slane %v4488, %v4495
  %v4498 = vunpack.c.l.s4 1983009808
  %v4499 = vunpack.c.0.s8 %v4498
  %v4500 = vlaneseq
  %v4501 = vshrl.u32 %v4500, 7
  %v4502 = vsub.s32 %v4499, %v4501
  %v4503 = vrot.slane %v4489, %v4502
  %v4504 = vcombine.low %v4496, %v4503
  %v4505 = vcombine.low %v4418, %v4419
  %v4506 = vcombine.low %v4420, %v4421
  %v4508 = vunpack.c.l.s4 1983009808
  %v4509 = vunpack.c.0.s8 %v4508
  %v4510 = vlaneseq
  %v4511 = vshrl.u32 %v4510, 7
  %v4512 = vsub.s32 %v4509, %v4511
  %v4513 = vrot.slane %v4505, %v4512
  %v4515 = vunpack.c.l.s4 1983009808
  %v4516 = vunpack.c.0.s8 %v4515
  %v4517 = vlaneseq
  %v4518 = vshrl.u32 %v4517, 7
  %v4519 = vsub.s32 %v4516, %v4518
  %v4520 = vrot.slane %v4506, %v4519
  %v4521 = vcombine.low %v4513, %v4520
  %v4522 = vcombine.low %v4422, %v4423
  %v4523 = vcombine.low %v4424, %v4425
  %v4525 = vunpack.c.l.s4 1983009808
  %v4526 = vunpack.c.0.s8 %v4525
  %v4527 = vlaneseq
  %v4528 = vshrl.u32 %v4527, 7
  %v4529 = vsub.s32 %v4526, %v4528
  %v4530 = vrot.slane %v4522, %v4529
  %v4532 = vunpack.c.l.s4 1983009808
  %v4533 = vunpack.c.0.s8 %v4532
  %v4534 = vlaneseq
  %v4535 = vshrl.u32 %v4534, 7
  %v4536 = vsub.s32 %v4533, %v4535
  %v4537 = vrot.slane %v4523, %v4536
  %v4538 = vcombine.low %v4530, %v4537
  %v4539 = vcombine.low %v4426, %v4427
  %v4540 = vcombine.low %v4428, %v4429
  %v4542 = vunpack.c.l.s4 1983009808
  %v4543 = vunpack.c.0.s8 %v4542
  %v4544 = vlaneseq
  %v4545 = vshrl.u32 %v4544, 7
  %v4546 = vsub.s32 %v4543, %v4545
  %v4547 = vrot.slane %v4539, %v4546
  %v4549 = vunpack.c.l.s4 1983009808
  %v4550 = vunpack.c.0.s8 %v4549
  %v4551 = vlaneseq
  %v4552 = vshrl.u32 %v4551, 7
  %v4553 = vsub.s32 %v4550, %v4552
  %v4554 = vrot.slane %v4540, %v4553
  %v4555 = vcombine.low %v4547, %v4554
  %v4562 = vmul.f32 %v4380, %v4470
  %v4563 = vmul.f32 %v4381, %v4487
  %v4564 = vmul.f32 %v4380, %v4504
  %v4565 = vmul.f32 %v4381, %v4521
  %v4566 = vmul.f32 %v4380, %v4538
  %v4567 = vmul.f32 %v4381, %v4555
  %v4574 = vlaneseq
  %v4575 = vshrl.u32 %v4574, 7
  %v4576 = vsub.s32 0, %v4575
  %v4577 = vrot.slane %v4562, %v4576
  %v4578 = vlaneseq
  %v4579 = vshrl.u32 %v4578, 7
  %v4580 = vsub.s32 2, %v4579
  %v4581 = vrot.slane %v4562, %v4580
  %v4582 = vlaneseq
  %v4583 = vshrl.u32 %v4582, 7
  %v4584 = vsub.s32 4, %v4583
  %v4585 = vrot.slane %v4562, %v4584
  %v4586 = vlaneseq
  %v4587 = vshrl.u32 %v4586, 7
  %v4588 = vsub.s32 6, %v4587
  %v4589 = vrot.slane %v4562, %v4588
  %v4590 = vlaneseq
  %v4591 = vshrl.u32 %v4590, 7
  %v4592 = vsub.s32 0, %v4591
  %v4593 = vrot.slane %v4563, %v4592
  %v4594 = vlaneseq
  %v4595 = vshrl.u32 %v4594, 7
  %v4596 = vsub.s32 2, %v4595
  %v4597 = vrot.slane %v4563, %v4596
  %v4598 = vlaneseq
  %v4599 = vshrl.u32 %v4598, 7
  %v4600 = vsub.s32 4, %v4599
  %v4601 = vrot.slane %v4563, %v4600
  %v4602 = vlaneseq
  %v4603 = vshrl.u32 %v4602, 7
  %v4604 = vsub.s32 6, %v4603
  %v4605 = vrot.slane %v4563, %v4604
  %v4606 = vlaneseq
  %v4607 = vshrl.u32 %v4606, 7
  %v4608 = vsub.s32 0, %v4607
  %v4609 = vrot.slane %v4564, %v4608
  %v4610 = vlaneseq
  %v4611 = vshrl.u32 %v4610, 7
  %v4612 = vsub.s32 2, %v4611
  %v4613 = vrot.slane %v4564, %v4612
  %v4614 = vlaneseq
  %v4615 = vshrl.u32 %v4614, 7
  %v4616 = vsub.s32 4, %v4615
  %v4617 = vrot.slane %v4564, %v4616
  %v4618 = vlaneseq
  %v4619 = vshrl.u32 %v4618, 7
  %v4620 = vsub.s32 6, %v4619
  %v4621 = vrot.slane %v4564, %v4620
  %v4622 = vlaneseq
  %v4623 = vshrl.u32 %v4622, 7
  %v4624 = vsub.s32 0, %v4623
  %v4625 = vrot.slane %v4565, %v4624
  %v4626 = vlaneseq
  %v4627 = vshrl.u32 %v4626, 7
  %v4628 = vsub.s32 2, %v4627
  %v4629 = vrot.slane %v4565, %v4628
  %v4630 = vlaneseq
  %v4631 = vshrl.u32 %v4630, 7
  %v4632 = vsub.s32 4, %v4631
  %v4633 = vrot.slane %v4565, %v4632
  %v4634 = vlaneseq
  %v4635 = vshrl.u32 %v4634, 7
  %v4636 = vsub.s32 6, %v4635
  %v4637 = vrot.slane %v4565, %v4636
  %v4638 = vlaneseq
  %v4639 = vshrl.u32 %v4638, 7
  %v4640 = vsub.s32 0, %v4639
  %v4641 = vrot.slane %v4566, %v4640
  %v4642 = vlaneseq
  %v4643 = vshrl.u32 %v4642, 7
  %v4644 = vsub.s32 2, %v4643
  %v4645 = vrot.slane %v4566, %v4644
  %v4646 = vlaneseq
  %v4647 = vshrl.u32 %v4646, 7
  %v4648 = vsub.s32 4, %v4647
  %v4649 = vrot.slane %v4566, %v4648
  %v4650 = vlaneseq
  %v4651 = vshrl.u32 %v4650, 7
  %v4652 = vsub.s32 6, %v4651
  %v4653 = vrot.slane %v4566, %v4652
  %v4654 = vlaneseq
  %v4655 = vshrl.u32 %v4654, 7
  %v4656 = vsub.s32 0, %v4655
  %v4657 = vrot.slane %v4567, %v4656
  %v4658 = vlaneseq
  %v4659 = vshrl.u32 %v4658, 7
  %v4660 = vsub.s32 2, %v4659
  %v4661 = vrot.slane %v4567, %v4660
  %v4662 = vlaneseq
  %v4663 = vshrl.u32 %v4662, 7
  %v4664 = vsub.s32 4, %v4663
  %v4665 = vrot.slane %v4567, %v4664
  %v4666 = vlaneseq
  %v4667 = vshrl.u32 %v4666, 7
  %v4668 = vsub.s32 6, %v4667
  %v4669 = vrot.slane %v4567, %v4668
  %v4694 = vmul.f32 %v4140, %v4577
  %v4695 = vmul.f32 %v4141, %v4581
  %v4696 = vmul.f32 %v4142, %v4585
  %v4697 = vmul.f32 %v4143, %v4589
  %v4698 = vmul.f32 %v4144, %v4593
  %v4699 = vmul.f32 %v4145, %v4597
  %v4700 = vmul.f32 %v4146, %v4601
  %v4701 = vmul.f32 %v4147, %v4605
  %v4702 = vmul.f32 %v4148, %v4609
  %v4703 = vmul.f32 %v4149, %v4613
  %v4704 = vmul.f32 %v4150, %v4617
  %v4705 = vmul.f32 %v4151, %v4621
  %v4706 = vmul.f32 %v4152, %v4625
  %v4707 = vmul.f32 %v4153, %v4629
  %v4708 = vmul.f32 %v4154, %v4633
  %v4709 = vmul.f32 %v4155, %v4637
  %v4710 = vmul.f32 %v4156, %v4641
  %v4711 = vmul.f32 %v4157, %v4645
  %v4712 = vmul.f32 %v4158, %v4649
  %v4713 = vmul.f32 %v4159, %v4653
  %v4714 = vmul.f32 %v4160, %v4657
  %v4715 = vmul.f32 %v4161, %v4661
  %v4716 = vmul.f32 %v4162, %v4665
  %v4717 = vmul.f32 %v4163, %v4669
  %v4742 = vcombine.low %v4694, %v4695
  %v4743 = vcombine.low %v4696, %v4697
  %v4745 = vunpack.c.l.s4 1983009808
  %v4746 = vunpack.c.0.s8 %v4745
  %v4747 = vlaneseq
  %v4748 = vshrl.u32 %v4747, 7
  %v4749 = vsub.s32 %v4746, %v4748
  %v4750 = vrot.slane %v4742, %v4749
  %v4752 = vunpack.c.l.s4 1983009808
  %v4753 = vunpack.c.0.s8 %v4752
  %v4754 = vlaneseq
  %v4755 = vshrl.u32 %v4754, 7
  %v4756 = vsub.s32 %v4753, %v4755
  %v4757 = vrot.slane %v4743, %v4756
  %v4758 = vcombine.low %v4750, %v4757
  %v4759 = vcombine.low %v4698, %v4699
  %v4760 = vcombine.low %v4700, %v4701
  %v4762 = vunpack.c.l.s4 1983009808
  %v4763 = vunpack.c.0.s8 %v4762
  %v4764 = vlaneseq
  %v4765 = vshrl.u32 %v4764, 7
  %v4766 = vsub.s32 %v4763, %v4765
  %v4767 = vrot.slane %v4759, %v4766
  %v4769 = vunpack.c.l.s4 1983009808
  %v4770 = vunpack.c.0.s8 %v4769
  %v4771 = vlaneseq
  %v4772 = vshrl.u32 %v4771, 7
  %v4773 = vsub.s32 %v4770, %v4772
  %v4774 = vrot.slane %v4760, %v4773
  %v4775 = vcombine.low %v4767, %v4774
  %v4776 = vcombine.low %v4702, %v4703
  %v4777 = vcombine.low %v4704, %v4705
  %v4779 = vunpack.c.l.s4 1983009808
  %v4780 = vunpack.c.0.s8 %v4779
  %v4781 = vlaneseq
  %v4782 = vshrl.u32 %v4781, 7
  %v4783 = vsub.s32 %v4780, %v4782
  %v4784 = vrot.slane %v4776, %v4783
  %v4786 = vunpack.c.l.s4 1983009808
  %v4787 = vunpack.c.0.s8 %v4786
  %v4788 = vlaneseq
  %v4789 = vshrl.u32 %v4788, 7
  %v4790 = vsub.s32 %v4787, %v4789
  %v4791 = vrot.slane %v4777, %v4790
  %v4792 = vcombine.low %v4784, %v4791
  %v4793 = vcombine.low %v4706, %v4707
  %v4794 = vcombine.low %v4708, %v4709
  %v4796 = vunpack.c.l.s4 1983009808
  %v4797 = vunpack.c.0.s8 %v4796
  %v4798 = vlaneseq
  %v4799 = vshrl.u32 %v4798, 7
  %v4800 = vsub.s32 %v4797, %v4799
  %v4801 = vrot.slane %v4793, %v4800
  %v4803 = vunpack.c.l.s4 1983009808
  %v4804 = vunpack.c.0.s8 %v4803
  %v4805 = vlaneseq
  %v4806 = vshrl.u32 %v4805, 7
  %v4807 = vsub.s32 %v4804, %v4806
  %v4808 = vrot.slane %v4794, %v4807
  %v4809 = vcombine.low %v4801, %v4808
  %v4810 = vcombine.low %v4710, %v4711
  %v4811 = vcombine.low %v4712, %v4713
  %v4813 = vunpack.c.l.s4 1983009808
  %v4814 = vunpack.c.0.s8 %v4813
  %v4815 = vlaneseq
  %v4816 = vshrl.u32 %v4815, 7
  %v4817 = vsub.s32 %v4814, %v4816
  %v4818 = vrot.slane %v4810, %v4817
  %v4820 = vunpack.c.l.s4 1983009808
  %v4821 = vunpack.c.0.s8 %v4820
  %v4822 = vlaneseq
  %v4823 = vshrl.u32 %v4822, 7
  %v4824 = vsub.s32 %v4821, %v4823
  %v4825 = vrot.slane %v4811, %v4824
  %v4826 = vcombine.low %v4818, %v4825
  %v4827 = vcombine.low %v4714, %v4715
  %v4828 = vcombine.low %v4716, %v4717
  %v4830 = vunpack.c.l.s4 1983009808
  %v4831 = vunpack.c.0.s8 %v4830
  %v4832 = vlaneseq
  %v4833 = vshrl.u32 %v4832, 7
  %v4834 = vsub.s32 %v4831, %v4833
  %v4835 = vrot.slane %v4827, %v4834
  %v4837 = vunpack.c.l.s4 1983009808
  %v4838 = vunpack.c.0.s8 %v4837
  %v4839 = vlaneseq
  %v4840 = vshrl.u32 %v4839, 7
  %v4841 = vsub.s32 %v4838, %v4840
  %v4842 = vrot.slane %v4828, %v4841
  %v4843 = vcombine.low %v4835, %v4842
  %v4844 = vrot.slane %v4758, 7
  %v4845 = vrot.slane %v4775, 7
  %v4846 = vrot.slane %v4792, 7
  %v4847 = vrot.slane %v4809, 7
  %v4848 = vrot.slane %v4826, 7
  %v4849 = vrot.slane %v4843, 7
  %v4856 = vsub.f32 %v4380, %v4844
  %v4857 = vsub.f32 %v4381, %v4845
  %v4858 = vsub.f32 %v4380, %v4846
  %v4859 = vsub.f32 %v4381, %v4847
  %v4860 = vsub.f32 %v4380, %v4848
  %v4861 = vsub.f32 %v4381, %v4849
  %v4862 = vlaneseq
  %v4863 = vshrl.u32 %v4862, 7
  %v4864 = vsub.s32 0, %v4863
  %v4865 = vrot.slane %v4577, %v4864
  %v4866 = vlaneseq
  %v4867 = vshrl.u32 %v4866, 7
  %v4868 = vsub.s32 0, %v4867
  %v4869 = vrot.slane %v4581, %v4868
  %v4870 = vlaneseq
  %v4871 = vshrl.u32 %v4870, 7
  %v4872 = vsub.s32 0, %v4871
  %v4873 = vrot.slane %v4585, %v4872
  %v4874 = vlaneseq
  %v4875 = vshrl.u32 %v4874, 7
  %v4876 = vsub.s32 0, %v4875
  %v4877 = vrot.slane %v4589, %v4876
  %v4878 = vlaneseq
  %v4879 = vshrl.u32 %v4878, 7
  %v4880 = vsub.s32 0, %v4879
  %v4881 = vrot.slane %v4593, %v4880
  %v4882 = vlaneseq
  %v4883 = vshrl.u32 %v4882, 7
  %v4884 = vsub.s32 0, %v4883
  %v4885 = vrot.slane %v4597, %v4884
  %v4886 = vlaneseq
  %v4887 = vshrl.u32 %v4886, 7
  %v4888 = vsub.s32 0, %v4887
  %v4889 = vrot.slane %v4601, %v4888
  %v4890 = vlaneseq
  %v4891 = vshrl.u32 %v4890, 7
  %v4892 = vsub.s32 0, %v4891
  %v4893 = vrot.slane %v4605, %v4892
  %v4894 = vlaneseq
  %v4895 = vshrl.u32 %v4894, 7
  %v4896 = vsub.s32 0, %v4895
  %v4897 = vrot.slane %v4609, %v4896
  %v4898 = vlaneseq
  %v4899 = vshrl.u32 %v4898, 7
  %v4900 = vsub.s32 0, %v4899
  %v4901 = vrot.slane %v4613, %v4900
  %v4902 = vlaneseq
  %v4903 = vshrl.u32 %v4902, 7
  %v4904 = vsub.s32 0, %v4903
  %v4905 = vrot.slane %v4617, %v4904
  %v4906 = vlaneseq
  %v4907 = vshrl.u32 %v4906, 7
  %v4908 = vsub.s32 0, %v4907
  %v4909 = vrot.slane %v4621, %v4908
  %v4910 = vlaneseq
  %v4911 = vshrl.u32 %v4910, 7
  %v4912 = vsub.s32 0, %v4911
  %v4913 = vrot.slane %v4625, %v4912
  %v4914 = vlaneseq
  %v4915 = vshrl.u32 %v4914, 7
  %v4916 = vsub.s32 0, %v4915
  %v4917 = vrot.slane %v4629, %v4916
  %v4918 = vlaneseq
  %v4919 = vshrl.u32 %v4918, 7
  %v4920 = vsub.s32 0, %v4919
  %v4921 = vrot.slane %v4633, %v4920
  %v4922 = vlaneseq
  %v4923 = vshrl.u32 %v4922, 7
  %v4924 = vsub.s32 0, %v4923
  %v4925 = vrot.slane %v4637, %v4924
  %v4926 = vlaneseq
  %v4927 = vshrl.u32 %v4926, 7
  %v4928 = vsub.s32 0, %v4927
  %v4929 = vrot.slane %v4641, %v4928
  %v4930 = vlaneseq
  %v4931 = vshrl.u32 %v4930, 7
  %v4932 = vsub.s32 0, %v4931
  %v4933 = vrot.slane %v4645, %v4932
  %v4934 = vlaneseq
  %v4935 = vshrl.u32 %v4934, 7
  %v4936 = vsub.s32 0, %v4935
  %v4937 = vrot.slane %v4649, %v4936
  %v4938 = vlaneseq
  %v4939 = vshrl.u32 %v4938, 7
  %v4940 = vsub.s32 0, %v4939
  %v4941 = vrot.slane %v4653, %v4940
  %v4942 = vlaneseq
  %v4943 = vshrl.u32 %v4942, 7
  %v4944 = vsub.s32 0, %v4943
  %v4945 = vrot.slane %v4657, %v4944
  %v4946 = vlaneseq
  %v4947 = vshrl.u32 %v4946, 7
  %v4948 = vsub.s32 0, %v4947
  %v4949 = vrot.slane %v4661, %v4948
  %v4950 = vlaneseq
  %v4951 = vshrl.u32 %v4950, 7
  %v4952 = vsub.s32 0, %v4951
  %v4953 = vrot.slane %v4665, %v4952
  %v4954 = vlaneseq
  %v4955 = vshrl.u32 %v4954, 7
  %v4956 = vsub.s32 0, %v4955
  %v4957 = vrot.slane %v4669, %v4956
  %v4958 = vmul.f32 %v3367, %v4865
  %v4959 = vmul.f32 %v3369, %v4869
  %v4960 = vmul.f32 %v3571, %v4873
  %v4961 = vmul.f32 %v3573, %v4877
  %v4962 = vmul.f32 %v3775, %v4881
  %v4963 = vmul.f32 %v3777, %v4885
  %v4964 = vmul.f32 %v3979, %v4889
  %v4965 = vmul.f32 %v3981, %v4893
  %v4966 = vmul.f32 %v3371, %v4897
  %v4967 = vmul.f32 %v3373, %v4901
  %v4968 = vmul.f32 %v3575, %v4905
  %v4969 = vmul.f32 %v3577, %v4909
  %v4970 = vmul.f32 %v3779, %v4913
  %v4971 = vmul.f32 %v3781, %v4917
  %v4972 = vmul.f32 %v3983, %v4921
  %v4973 = vmul.f32 %v3985, %v4925
  %v4974 = vmul.f32 %v3377, %v4929
  %v4975 = vmul.f32 %v3379, %v4933
  %v4976 = vmul.f32 %v3581, %v4937
  %v4977 = vmul.f32 %v3583, %v4941
  %v4978 = vmul.f32 %v3785, %v4945
  %v4979 = vmul.f32 %v3787, %v4949
  %v4980 = vmul.f32 %v3989, %v4953
  %v4981 = vmul.f32 %v3991, %v4957
  %v4988 = vlaneseq
  %v4989 = vshrl.u32 %v4988, 7
  %v4990 = vsub.s32 1, %v4989
  %v4991 = vrot.slane %v4856, %v4990
  %v4992 = vlaneseq
  %v4993 = vshrl.u32 %v4992, 7
  %v4994 = vsub.s32 3, %v4993
  %v4995 = vrot.slane %v4856, %v4994
  %v4996 = vlaneseq
  %v4997 = vshrl.u32 %v4996, 7
  %v4998 = vsub.s32 5, %v4997
  %v4999 = vrot.slane %v4856, %v4998
  %v5000 = vlaneseq
  %v5001 = vshrl.u32 %v5000, 7
  %v5002 = vsub.s32 7, %v5001
  %v5003 = vrot.slane %v4856, %v5002
  %v5004 = vlaneseq
  %v5005 = vshrl.u32 %v5004, 7
  %v5006 = vsub.s32 1, %v5005
  %v5007 = vrot.slane %v4857, %v5006
  %v5008 = vlaneseq
  %v5009 = vshrl.u32 %v5008, 7
  %v5010 = vsub.s32 3, %v5009
  %v5011 = vrot.slane %v4857, %v5010
  %v5012 = vlaneseq
  %v5013 = vshrl.u32 %v5012, 7
  %v5014 = vsub.s32 5, %v5013
  %v5015 = vrot.slane %v4857, %v5014
  %v5016 = vlaneseq
  %v5017 = vshrl.u32 %v5016, 7
  %v5018 = vsub.s32 7, %v5017
  %v5019 = vrot.slane %v4857, %v5018
  %v5020 = vlaneseq
  %v5021 = vshrl.u32 %v5020, 7
  %v5022 = vsub.s32 1, %v5021
  %v5023 = vrot.slane %v4858, %v5022
  %v5024 = vlaneseq
  %v5025 = vshrl.u32 %v5024, 7
  %v5026 = vsub.s32 3, %v5025
  %v5027 = vrot.slane %v4858, %v5026
  %v5028 = vlaneseq
  %v5029 = vshrl.u32 %v5028, 7
  %v5030 = vsub.s32 5, %v5029
  %v5031 = vrot.slane %v4858, %v5030
  %v5032 = vlaneseq
  %v5033 = vshrl.u32 %v5032, 7
  %v5034 = vsub.s32 7, %v5033
  %v5035 = vrot.slane %v4858, %v5034
  %v5036 = vlaneseq
  %v5037 = vshrl.u32 %v5036, 7
  %v5038 = vsub.s32 1, %v5037
  %v5039 = vrot.slane %v4859, %v5038
  %v5040 = vlaneseq
  %v5041 = vshrl.u32 %v5040, 7
  %v5042 = vsub.s32 3, %v5041
  %v5043 = vrot.slane %v4859, %v5042
  %v5044 = vlaneseq
  %v5045 = vshrl.u32 %v5044, 7
  %v5046 = vsub.s32 5, %v5045
  %v5047 = vrot.slane %v4859, %v5046
  %v5048 = vlaneseq
  %v5049 = vshrl.u32 %v5048, 7
  %v5050 = vsub.s32 7, %v5049
  %v5051 = vrot.slane %v4859, %v5050
  %v5052 = vlaneseq
  %v5053 = vshrl.u32 %v5052, 7
  %v5054 = vsub.s32 1, %v5053
  %v5055 = vrot.slane %v4860, %v5054
  %v5056 = vlaneseq
  %v5057 = vshrl.u32 %v5056, 7
  %v5058 = vsub.s32 3, %v5057
  %v5059 = vrot.slane %v4860, %v5058
  %v5060 = vlaneseq
  %v5061 = vshrl.u32 %v5060, 7
  %v5062 = vsub.s32 5, %v5061
  %v5063 = vrot.slane %v4860, %v5062
  %v5064 = vlaneseq
  %v5065 = vshrl.u32 %v5064, 7
  %v5066 = vsub.s32 7, %v5065
  %v5067 = vrot.slane %v4860, %v5066
  %v5068 = vlaneseq
  %v5069 = vshrl.u32 %v5068, 7
  %v5070 = vsub.s32 1, %v5069
  %v5071 = vrot.slane %v4861, %v5070
  %v5072 = vlaneseq
  %v5073 = vshrl.u32 %v5072, 7
  %v5074 = vsub.s32 3, %v5073
  %v5075 = vrot.slane %v4861, %v5074
  %v5076 = vlaneseq
  %v5077 = vshrl.u32 %v5076, 7
  %v5078 = vsub.s32 5, %v5077
  %v5079 = vrot.slane %v4861, %v5078
  %v5080 = vlaneseq
  %v5081 = vshrl.u32 %v5080, 7
  %v5082 = vsub.s32 7, %v5081
  %v5083 = vrot.slane %v4861, %v5082
  %v5108 = vlaneseq
  %v5109 = vshrl.u32 %v5108, 7
  %v5110 = vsub.s32 1, %v5109
  %v5111 = vrot.slane %v4991, %v5110
  %v5112 = vlaneseq
  %v5113 = vshrl.u32 %v5112, 7
  %v5114 = vsub.s32 1, %v5113
  %v5115 = vrot.slane %v4995, %v5114
  %v5116 = vlaneseq
  %v5117 = vshrl.u32 %v5116, 7
  %v5118 = vsub.s32 1, %v5117
  %v5119 = vrot.slane %v4999, %v5118
  %v5120 = vlaneseq
  %v5121 = vshrl.u32 %v5120, 7
  %v5122 = vsub.s32 1, %v5121
  %v5123 = vrot.slane %v5003, %v5122
  %v5124 = vlaneseq
  %v5125 = vshrl.u32 %v5124, 7
  %v5126 = vsub.s32 1, %v5125
  %v5127 = vrot.slane %v5007, %v5126
  %v5128 = vlaneseq
  %v5129 = vshrl.u32 %v5128, 7
  %v5130 = vsub.s32 1, %v5129
  %v5131 = vrot.slane %v5011, %v5130
  %v5132 = vlaneseq
  %v5133 = vshrl.u32 %v5132, 7
  %v5134 = vsub.s32 1, %v5133
  %v5135 = vrot.slane %v5015, %v5134
  %v5136 = vlaneseq
  %v5137 = vshrl.u32 %v5136, 7
  %v5138 = vsub.s32 1, %v5137
  %v5139 = vrot.slane %v5019, %v5138
  %v5140 = vlaneseq
  %v5141 = vshrl.u32 %v5140, 7
  %v5142 = vsub.s32 1, %v5141
  %v5143 = vrot.slane %v5023, %v5142
  %v5144 = vlaneseq
  %v5145 = vshrl.u32 %v5144, 7
  %v5146 = vsub.s32 1, %v5145
  %v5147 = vrot.slane %v5027, %v5146
  %v5148 = vlaneseq
  %v5149 = vshrl.u32 %v5148, 7
  %v5150 = vsub.s32 1, %v5149
  %v5151 = vrot.slane %v5031, %v5150
  %v5152 = vlaneseq
  %v5153 = vshrl.u32 %v5152, 7
  %v5154 = vsub.s32 1, %v5153
  %v5155 = vrot.slane %v5035, %v5154
  %v5156 = vlaneseq
  %v5157 = vshrl.u32 %v5156, 7
  %v5158 = vsub.s32 1, %v5157
  %v5159 = vrot.slane %v5039, %v5158
  %v5160 = vlaneseq
  %v5161 = vshrl.u32 %v5160, 7
  %v5162 = vsub.s32 1, %v5161
  %v5163 = vrot.slane %v5043, %v5162
  %v5164 = vlaneseq
  %v5165 = vshrl.u32 %v5164, 7
  %v5166 = vsub.s32 1, %v5165
  %v5167 = vrot.slane %v5047, %v5166
  %v5168 = vlaneseq
  %v5169 = vshrl.u32 %v5168, 7
  %v5170 = vsub.s32 1, %v5169
  %v5171 = vrot.slane %v5051, %v5170
  %v5172 = vlaneseq
  %v5173 = vshrl.u32 %v5172, 7
  %v5174 = vsub.s32 1, %v5173
  %v5175 = vrot.slane %v5055, %v5174
  %v5176 = vlaneseq
  %v5177 = vshrl.u32 %v5176, 7
  %v5178 = vsub.s32 1, %v5177
  %v5179 = vrot.slane %v5059, %v5178
  %v5180 = vlaneseq
  %v5181 = vshrl.u32 %v5180, 7
  %v5182 = vsub.s32 1, %v5181
  %v5183 = vrot.slane %v5063, %v5182
  %v5184 = vlaneseq
  %v5185 = vshrl.u32 %v5184, 7
  %v5186 = vsub.s32 1, %v5185
  %v5187 = vrot.slane %v5067, %v5186
  %v5188 = vlaneseq
  %v5189 = vshrl.u32 %v5188, 7
  %v5190 = vsub.s32 1, %v5189
  %v5191 = vrot.slane %v5071, %v5190
  %v5192 = vlaneseq
  %v5193 = vshrl.u32 %v5192, 7
  %v5194 = vsub.s32 1, %v5193
  %v5195 = vrot.slane %v5075, %v5194
  %v5196 = vlaneseq
  %v5197 = vshrl.u32 %v5196, 7
  %v5198 = vsub.s32 1, %v5197
  %v5199 = vrot.slane %v5079, %v5198
  %v5200 = vlaneseq
  %v5201 = vshrl.u32 %v5200, 7
  %v5202 = vsub.s32 1, %v5201
  %v5203 = vrot.slane %v5083, %v5202
  %v5204 = vadd.f32 %v4958, %v5111
  %v5205 = vadd.f32 %v4959, %v5115
  %v5206 = vadd.f32 %v4960, %v5119
  %v5207 = vadd.f32 %v4961, %v5123
  %v5208 = vadd.f32 %v4962, %v5127
  %v5209 = vadd.f32 %v4963, %v5131
  %v5210 = vadd.f32 %v4964, %v5135
  %v5211 = vadd.f32 %v4965, %v5139
  %v5212 = vadd.f32 %v4966, %v5143
  %v5213 = vadd.f32 %v4967, %v5147
  %v5214 = vadd.f32 %v4968, %v5151
  %v5215 = vadd.f32 %v4969, %v5155
  %v5216 = vadd.f32 %v4970, %v5159
  %v5217 = vadd.f32 %v4971, %v5163
  %v5218 = vadd.f32 %v4972, %v5167
  %v5219 = vadd.f32 %v4973, %v5171
  %v5220 = vadd.f32 %v4974, %v5175
  %v5221 = vadd.f32 %v4975, %v5179
  %v5222 = vadd.f32 %v4976, %v5183
  %v5223 = vadd.f32 %v4977, %v5187
  %v5224 = vadd.f32 %v4978, %v5191
  %v5225 = vadd.f32 %v4979, %v5195
  %v5226 = vadd.f32 %v4980, %v5199
  %v5227 = vadd.f32 %v4981, %v5203
  %v5228 = vmax.f32 %v5204, 0.0
  %v5229 = vmax.f32 %v5205, 0.0
  %v5230 = vmax.f32 %v5206, 0.0
  %v5231 = vmax.f32 %v5207, 0.0
  %v5232 = vmax.f32 %v5208, 0.0
  %v5233 = vmax.f32 %v5209, 0.0
  %v5234 = vmax.f32 %v5210, 0.0
  %v5235 = vmax.f32 %v5211, 0.0
  %v5236 = vmax.f32 %v5212, 0.0
  %v5237 = vmax.f32 %v5213, 0.0
  %v5238 = vmax.f32 %v5214, 0.0
  %v5239 = vmax.f32 %v5215, 0.0
  %v5240 = vmax.f32 %v5216, 0.0
  %v5241 = vmax.f32 %v5217, 0.0
  %v5242 = vmax.f32 %v5218, 0.0
  %v5243 = vmax.f32 %v5219, 0.0
  %v5244 = vmax.f32 %v5220, 0.0
  %v5245 = vmax.f32 %v5221, 0.0
  %v5246 = vmax.f32 %v5222, 0.0
  %v5247 = vmax.f32 %v5223, 0.0
  %v5248 = vmax.f32 %v5224, 0.0
  %v5249 = vmax.f32 %v5225, 0.0
  %v5250 = vmax.f32 %v5226, 0.0
  %v5251 = vmax.f32 %v5227, 0.0
  %v5252 = vpack.c.bf16 %v5236, %v5228
  %v5253 = vpack.c.bf16 %v5237, %v5229
  %v5254 = vpack.c.bf16 %v5238, %v5230
  %v5255 = vpack.c.bf16 %v5239, %v5231
  %v5256 = vpack.c.bf16 %v5240, %v5232
  %v5257 = vpack.c.bf16 %v5241, %v5233
  %v5258 = vpack.c.bf16 %v5242, %v5234
  %v5259 = vpack.c.bf16 %v5243, %v5235
  %v5260 = vpack.c.bf16 %v5244, %v5244
  %v5261 = vpack.c.bf16 %v5245, %v5245
  %v5262 = vpack.c.bf16 %v5246, %v5246
  %v5263 = vpack.c.bf16 %v5247, %v5247
  %v5264 = vpack.c.bf16 %v5248, %v5248
  %v5265 = vpack.c.bf16 %v5249, %v5249
  %v5266 = vpack.c.bf16 %v5250, %v5250
  %v5267 = vpack.c.bf16 %v5251, %v5251
  %v5268 = vld [vmem:[%s3] sm:$0xff]
  %v5269 = vld [vmem:[%s3 + $0x8] sm:$0xff]
  %v5270 = vld [vmem:[%s3 + $0x10] sm:$0xff]
  %v5271 = vld [vmem:[%s3 + $0x18] sm:$0xff]
  %v5272 = vld [vmem:[%s3 + $0x20] sm:$0xff]
  %v5273 = vld [vmem:[%s3 + $0x28] sm:$0xff]
  %v5274 = vld [vmem:[%s3 + $0x30] sm:$0xff]
  %v5275 = vld [vmem:[%s3 + $0x38] sm:$0xff]
  %v5276 = vld [vmem:[%s3 + $0x40] sm:$0xff]
  %v5277 = vld [vmem:[%s3 + $0x48] sm:$0xff]
  %v5278 = vld [vmem:[%s3 + $0x50] sm:$0xff]
  %v5279 = vld [vmem:[%s3 + $0x58] sm:$0xff]
  %v5280 = vld [vmem:[%s3 + $0x60] sm:$0xff]
  %v5281 = vld [vmem:[%s3 + $0x68] sm:$0xff]
  %v5282 = vld [vmem:[%s3 + $0x70] sm:$0xff]
  %v5283 = vld [vmem:[%s3 + $0x78] sm:$0xff]
  %v5284 = vld [vmem:[%s3 + $0x80] sm:$0xff]
  %v5285 = vld [vmem:[%s3 + $0x88] sm:$0xff]
  %v5286 = vld [vmem:[%s3 + $0x90] sm:$0xff]
  %v5287 = vld [vmem:[%s3 + $0x98] sm:$0xff]
  %v5288 = vld [vmem:[%s3 + $0xa0] sm:$0xff]
  %v5289 = vld [vmem:[%s3 + $0xa8] sm:$0xff]
  %v5290 = vld [vmem:[%s3 + $0xb0] sm:$0xff]
  %v5291 = vld [vmem:[%s3 + $0xb8] sm:$0xff]
  %v5292 = vld [vmem:[%s3 + $0xc0] sm:$0xff]
  %v5293 = vld [vmem:[%s3 + $0xc8] sm:$0xff]
  %v5294 = vld [vmem:[%s3 + $0xd0] sm:$0xff]
  %v5295 = vld [vmem:[%s3 + $0xd8] sm:$0xff]
  %v5296 = vld [vmem:[%s3 + $0xe0] sm:$0xff]
  %v5297 = vld [vmem:[%s3 + $0xe8] sm:$0xff]
  %v5298 = vld [vmem:[%s3 + $0xf0] sm:$0xff]
  %v5299 = vld [vmem:[%s3 + $0xf8] sm:$0xff]
  %v5300 = vld [vmem:[%s3 + $0x100] sm:$0xff]
  %v5301 = vld [vmem:[%s3 + $0x108] sm:$0xff]
  %v5302 = vld [vmem:[%s3 + $0x110] sm:$0xff]
  %v5303 = vld [vmem:[%s3 + $0x118] sm:$0xff]
  %v5304 = vld [vmem:[%s3 + $0x120] sm:$0xff]
  %v5305 = vld [vmem:[%s3 + $0x128] sm:$0xff]
  %v5306 = vld [vmem:[%s3 + $0x130] sm:$0xff]
  %v5307 = vld [vmem:[%s3 + $0x138] sm:$0xff]
  %v5308 = vld [vmem:[%s3 + $0x140] sm:$0xff]
  %v5309 = vld [vmem:[%s3 + $0x148] sm:$0xff]
  %v5310 = vld [vmem:[%s3 + $0x150] sm:$0xff]
  %v5311 = vld [vmem:[%s3 + $0x158] sm:$0xff]
  %v5312 = vld [vmem:[%s3 + $0x160] sm:$0xff]
  %v5313 = vld [vmem:[%s3 + $0x168] sm:$0xff]
  %v5314 = vld [vmem:[%s3 + $0x170] sm:$0xff]
  %v5315 = vld [vmem:[%s3 + $0x178] sm:$0xff]
  %v5316 = vld [vmem:[%s3 + $0x180] sm:$0xff]
  %v5317 = vld [vmem:[%s3 + $0x188] sm:$0xff]
  %v5318 = vld [vmem:[%s3 + $0x190] sm:$0xff]
  %v5319 = vld [vmem:[%s3 + $0x198] sm:$0xff]
  %v5320 = vld [vmem:[%s3 + $0x1a0] sm:$0xff]
  %v5321 = vld [vmem:[%s3 + $0x1a8] sm:$0xff]
  %v5322 = vld [vmem:[%s3 + $0x1b0] sm:$0xff]
  %v5323 = vld [vmem:[%s3 + $0x1b8] sm:$0xff]
  %v5324 = vld [vmem:[%s3 + $0x1c0] sm:$0xff]
  %v5325 = vld [vmem:[%s3 + $0x1c8] sm:$0xff]
  %v5326 = vld [vmem:[%s3 + $0x1d0] sm:$0xff]
  %v5327 = vld [vmem:[%s3 + $0x1d8] sm:$0xff]
  %v5328 = vld [vmem:[%s3 + $0x1e0] sm:$0xff]
  %v5329 = vld [vmem:[%s3 + $0x1e8] sm:$0xff]
  %v5330 = vld [vmem:[%s3 + $0x1f0] sm:$0xff]
  %v5331 = vld [vmem:[%s3 + $0x1f8] sm:$0xff]
  %v5332 = vld [vmem:[%s3 + $0x200] sm:$0xff]
  %v5333 = vld [vmem:[%s3 + $0x208] sm:$0xff]
  %v5334 = vld [vmem:[%s3 + $0x210] sm:$0xff]
  %v5335 = vld [vmem:[%s3 + $0x218] sm:$0xff]
  %v5336 = vld [vmem:[%s3 + $0x220] sm:$0xff]
  %v5337 = vld [vmem:[%s3 + $0x228] sm:$0xff]
  %v5338 = vld [vmem:[%s3 + $0x230] sm:$0xff]
  %v5339 = vld [vmem:[%s3 + $0x238] sm:$0xff]
  %v5340 = vld [vmem:[%s3 + $0x240] sm:$0xff]
  %v5341 = vld [vmem:[%s3 + $0x248] sm:$0xff]
  %v5342 = vld [vmem:[%s3 + $0x250] sm:$0xff]
  %v5343 = vld [vmem:[%s3 + $0x258] sm:$0xff]
  %v5344 = vld [vmem:[%s3 + $0x260] sm:$0xff]
  %v5345 = vld [vmem:[%s3 + $0x268] sm:$0xff]
  %v5346 = vld [vmem:[%s3 + $0x270] sm:$0xff]
  %v5347 = vld [vmem:[%s3 + $0x278] sm:$0xff]
  %v5348 = vld [vmem:[%s3 + $0x280] sm:$0xff]
  %v5349 = vld [vmem:[%s3 + $0x288] sm:$0xff]
  %v5350 = vld [vmem:[%s3 + $0x290] sm:$0xff]
  %v5351 = vld [vmem:[%s3 + $0x298] sm:$0xff]
  %v5352 = vld [vmem:[%s3 + $0x2a0] sm:$0xff]
  %v5353 = vld [vmem:[%s3 + $0x2a8] sm:$0xff]
  %v5354 = vld [vmem:[%s3 + $0x2b0] sm:$0xff]
  %v5355 = vld [vmem:[%s3 + $0x2b8] sm:$0xff]
  %v5356 = vld [vmem:[%s3 + $0x2c0] sm:$0xff]
  %v5357 = vld [vmem:[%s3 + $0x2c8] sm:$0xff]
  %v5358 = vld [vmem:[%s3 + $0x2d0] sm:$0xff]
  %v5359 = vld [vmem:[%s3 + $0x2d8] sm:$0xff]
  %v5360 = vld [vmem:[%s3 + $0x2e0] sm:$0xff]
  %v5361 = vld [vmem:[%s3 + $0x2e8] sm:$0xff]
  %v5362 = vld [vmem:[%s3 + $0x2f0] sm:$0xff]
  %v5363 = vld [vmem:[%s3 + $0x2f8] sm:$0xff]
  %v5364 = vld [vmem:[%s3 + $0x300] sm:$0xff]
  %v5365 = vld [vmem:[%s3 + $0x308] sm:$0xff]
  %v5366 = vld [vmem:[%s3 + $0x310] sm:$0xff]
  %v5367 = vld [vmem:[%s3 + $0x318] sm:$0xff]
  %v5368 = vld [vmem:[%s3 + $0x320] sm:$0xff]
  %v5369 = vld [vmem:[%s3 + $0x328] sm:$0xff]
  %v5370 = vld [vmem:[%s3 + $0x330] sm:$0xff]
  %v5371 = vld [vmem:[%s3 + $0x338] sm:$0xff]
  %v5372 = vld [vmem:[%s3 + $0x340] sm:$0xff]
  %v5373 = vld [vmem:[%s3 + $0x348] sm:$0xff]
  %v5374 = vld [vmem:[%s3 + $0x350] sm:$0xff]
  %v5375 = vld [vmem:[%s3 + $0x358] sm:$0xff]
  %v5376 = vld [vmem:[%s3 + $0x360] sm:$0xff]
  %v5377 = vld [vmem:[%s3 + $0x368] sm:$0xff]
  %v5378 = vld [vmem:[%s3 + $0x370] sm:$0xff]
  %v5379 = vld [vmem:[%s3 + $0x378] sm:$0xff]
  %v5380 = vld [vmem:[%s3 + $0x380] sm:$0xff]
  %v5381 = vld [vmem:[%s3 + $0x388] sm:$0xff]
  %v5382 = vld [vmem:[%s3 + $0x390] sm:$0xff]
  %v5383 = vld [vmem:[%s3 + $0x398] sm:$0xff]
  %v5384 = vld [vmem:[%s3 + $0x3a0] sm:$0xff]
  %v5385 = vld [vmem:[%s3 + $0x3a8] sm:$0xff]
  %v5386 = vld [vmem:[%s3 + $0x3b0] sm:$0xff]
  %v5387 = vld [vmem:[%s3 + $0x3b8] sm:$0xff]
  %v5388 = vld [vmem:[%s3 + $0x3c0] sm:$0xff]
  %v5389 = vld [vmem:[%s3 + $0x3c8] sm:$0xff]
  %v5390 = vld [vmem:[%s3 + $0x3d0] sm:$0xff]
  %v5391 = vld [vmem:[%s3 + $0x3d8] sm:$0xff]
  %v5392 = vld [vmem:[%s3 + $0x3e0] sm:$0xff]
  %v5393 = vld [vmem:[%s3 + $0x3e8] sm:$0xff]
  %v5394 = vld [vmem:[%s3 + $0x3f0] sm:$0xff]
  %v5395 = vld [vmem:[%s3 + $0x3f8] sm:$0xff]
  %v5396 = vld [vmem:[%s3 + $0x400] sm:$0xff]
  %v5397 = vld [vmem:[%s3 + $0x408] sm:$0xff]
  %v5398 = vld [vmem:[%s3 + $0x410] sm:$0xff]
  %v5399 = vld [vmem:[%s3 + $0x418] sm:$0xff]
  %v5400 = vld [vmem:[%s3 + $0x420] sm:$0xff]
  %v5401 = vld [vmem:[%s3 + $0x428] sm:$0xff]
  %v5402 = vld [vmem:[%s3 + $0x430] sm:$0xff]
  %v5403 = vld [vmem:[%s3 + $0x438] sm:$0xff]
  %v5404 = vld [vmem:[%s3 + $0x440] sm:$0xff]
  %v5405 = vld [vmem:[%s3 + $0x448] sm:$0xff]
  %v5406 = vld [vmem:[%s3 + $0x450] sm:$0xff]
  %v5407 = vld [vmem:[%s3 + $0x458] sm:$0xff]
  %v5408 = vld [vmem:[%s3 + $0x460] sm:$0xff]
  %v5409 = vld [vmem:[%s3 + $0x468] sm:$0xff]
  %v5410 = vld [vmem:[%s3 + $0x470] sm:$0xff]
  %v5411 = vld [vmem:[%s3 + $0x478] sm:$0xff]
  %v5412 = vld [vmem:[%s3 + $0x480] sm:$0xff]
  %v5413 = vld [vmem:[%s3 + $0x488] sm:$0xff]
  %v5414 = vld [vmem:[%s3 + $0x490] sm:$0xff]
  %v5415 = vld [vmem:[%s3 + $0x498] sm:$0xff]
  %v5416 = vld [vmem:[%s3 + $0x4a0] sm:$0xff]
  %v5417 = vld [vmem:[%s3 + $0x4a8] sm:$0xff]
  %v5418 = vld [vmem:[%s3 + $0x4b0] sm:$0xff]
  %v5419 = vld [vmem:[%s3 + $0x4b8] sm:$0xff]
  %v5420 = vld [vmem:[%s3 + $0x4c0] sm:$0xff]
  %v5421 = vld [vmem:[%s3 + $0x4c8] sm:$0xff]
  %v5422 = vld [vmem:[%s3 + $0x4d0] sm:$0xff]
  %v5423 = vld [vmem:[%s3 + $0x4d8] sm:$0xff]
  %v5424 = vld [vmem:[%s3 + $0x4e0] sm:$0xff]
  %v5425 = vld [vmem:[%s3 + $0x4e8] sm:$0xff]
  %v5426 = vld [vmem:[%s3 + $0x4f0] sm:$0xff]
  %v5427 = vld [vmem:[%s3 + $0x4f8] sm:$0xff]
  %v5428 = vld [vmem:[%s3 + $0x500] sm:$0xff]
  %v5429 = vld [vmem:[%s3 + $0x508] sm:$0xff]
  %v5430 = vld [vmem:[%s3 + $0x510] sm:$0xff]
  %v5431 = vld [vmem:[%s3 + $0x518] sm:$0xff]
  %v5432 = vld [vmem:[%s3 + $0x520] sm:$0xff]
  %v5433 = vld [vmem:[%s3 + $0x528] sm:$0xff]
  %v5434 = vld [vmem:[%s3 + $0x530] sm:$0xff]
  %v5435 = vld [vmem:[%s3 + $0x538] sm:$0xff]
  %v5436 = vld [vmem:[%s3 + $0x540] sm:$0xff]
  %v5437 = vld [vmem:[%s3 + $0x548] sm:$0xff]
  %v5438 = vld [vmem:[%s3 + $0x550] sm:$0xff]
  %v5439 = vld [vmem:[%s3 + $0x558] sm:$0xff]
  %v5440 = vld [vmem:[%s3 + $0x560] sm:$0xff]
  %v5441 = vld [vmem:[%s3 + $0x568] sm:$0xff]
  %v5442 = vld [vmem:[%s3 + $0x570] sm:$0xff]
  %v5443 = vld [vmem:[%s3 + $0x578] sm:$0xff]
  %v5444 = vld [vmem:[%s3 + $0x580] sm:$0xff]
  %v5445 = vld [vmem:[%s3 + $0x588] sm:$0xff]
  %v5446 = vld [vmem:[%s3 + $0x590] sm:$0xff]
  %v5447 = vld [vmem:[%s3 + $0x598] sm:$0xff]
  %v5448 = vld [vmem:[%s3 + $0x5a0] sm:$0xff]
  %v5449 = vld [vmem:[%s3 + $0x5a8] sm:$0xff]
  %v5450 = vld [vmem:[%s3 + $0x5b0] sm:$0xff]
  %v5451 = vld [vmem:[%s3 + $0x5b8] sm:$0xff]
  %v5452 = vld [vmem:[%s3 + $0x5c0] sm:$0xff]
  %v5453 = vld [vmem:[%s3 + $0x5c8] sm:$0xff]
  %v5454 = vld [vmem:[%s3 + $0x5d0] sm:$0xff]
  %v5455 = vld [vmem:[%s3 + $0x5d8] sm:$0xff]
  %v5456 = vld [vmem:[%s3 + $0x5e0] sm:$0xff]
  %v5457 = vld [vmem:[%s3 + $0x5e8] sm:$0xff]
  %v5458 = vld [vmem:[%s3 + $0x5f0] sm:$0xff]
  %v5459 = vld [vmem:[%s3 + $0x5f8] sm:$0xff]
  %v5460 = vld [vmem:[%s3 + $0x600] sm:$0xff]
  %v5461 = vld [vmem:[%s3 + $0x608] sm:$0xff]
  %v5462 = vld [vmem:[%s3 + $0x610] sm:$0xff]
  %v5463 = vld [vmem:[%s3 + $0x618] sm:$0xff]
  %v5464 = vld [vmem:[%s3 + $0x620] sm:$0xff]
  %v5465 = vld [vmem:[%s3 + $0x628] sm:$0xff]
  %v5466 = vld [vmem:[%s3 + $0x630] sm:$0xff]
  %v5467 = vld [vmem:[%s3 + $0x638] sm:$0xff]
  %v5468 = vld [vmem:[%s3 + $0x640] sm:$0xff]
  %v5469 = vld [vmem:[%s3 + $0x648] sm:$0xff]
  %v5470 = vld [vmem:[%s3 + $0x650] sm:$0xff]
  %v5471 = vld [vmem:[%s3 + $0x658] sm:$0xff]
  %v5472 = vld [vmem:[%s3 + $0x660] sm:$0xff]
  %v5473 = vld [vmem:[%s3 + $0x668] sm:$0xff]
  %v5474 = vld [vmem:[%s3 + $0x670] sm:$0xff]
  %v5475 = vld [vmem:[%s3 + $0x678] sm:$0xff]
  %v5476 = vld [vmem:[%s3 + $0x680] sm:$0xff]
  %v5477 = vld [vmem:[%s3 + $0x688] sm:$0xff]
  %v5478 = vld [vmem:[%s3 + $0x690] sm:$0xff]
  %v5479 = vld [vmem:[%s3 + $0x698] sm:$0xff]
  %v5480 = vld [vmem:[%s3 + $0x6a0] sm:$0xff]
  %v5481 = vld [vmem:[%s3 + $0x6a8] sm:$0xff]
  %v5482 = vld [vmem:[%s3 + $0x6b0] sm:$0xff]
  %v5483 = vld [vmem:[%s3 + $0x6b8] sm:$0xff]
  %v5484 = vld [vmem:[%s3 + $0x6c0] sm:$0xff]
  %v5485 = vld [vmem:[%s3 + $0x6c8] sm:$0xff]
  %v5486 = vld [vmem:[%s3 + $0x6d0] sm:$0xff]
  %v5487 = vld [vmem:[%s3 + $0x6d8] sm:$0xff]
  %v5488 = vld [vmem:[%s3 + $0x6e0] sm:$0xff]
  %v5489 = vld [vmem:[%s3 + $0x6e8] sm:$0xff]
  %v5490 = vld [vmem:[%s3 + $0x6f0] sm:$0xff]
  %v5491 = vld [vmem:[%s3 + $0x6f8] sm:$0xff]
  %v5492 = vld [vmem:[%s3 + $0x700] sm:$0xff]
  %v5493 = vld [vmem:[%s3 + $0x708] sm:$0xff]
  %v5494 = vld [vmem:[%s3 + $0x710] sm:$0xff]
  %v5495 = vld [vmem:[%s3 + $0x718] sm:$0xff]
  %v5496 = vld [vmem:[%s3 + $0x720] sm:$0xff]
  %v5497 = vld [vmem:[%s3 + $0x728] sm:$0xff]
  %v5498 = vld [vmem:[%s3 + $0x730] sm:$0xff]
  %v5499 = vld [vmem:[%s3 + $0x738] sm:$0xff]
  %v5500 = vld [vmem:[%s3 + $0x740] sm:$0xff]
  %v5501 = vld [vmem:[%s3 + $0x748] sm:$0xff]
  %v5502 = vld [vmem:[%s3 + $0x750] sm:$0xff]
  %v5503 = vld [vmem:[%s3 + $0x758] sm:$0xff]
  %v5504 = vld [vmem:[%s3 + $0x760] sm:$0xff]
  %v5505 = vld [vmem:[%s3 + $0x768] sm:$0xff]
  %v5506 = vld [vmem:[%s3 + $0x770] sm:$0xff]
  %v5507 = vld [vmem:[%s3 + $0x778] sm:$0xff]
  %v5508 = vld [vmem:[%s3 + $0x780] sm:$0xff]
  %v5509 = vld [vmem:[%s3 + $0x788] sm:$0xff]
  %v5510 = vld [vmem:[%s3 + $0x790] sm:$0xff]
  %v5511 = vld [vmem:[%s3 + $0x798] sm:$0xff]
  %v5512 = vld [vmem:[%s3 + $0x7a0] sm:$0xff]
  %v5513 = vld [vmem:[%s3 + $0x7a8] sm:$0xff]
  %v5514 = vld [vmem:[%s3 + $0x7b0] sm:$0xff]
  %v5515 = vld [vmem:[%s3 + $0x7b8] sm:$0xff]
  %v5516 = vld [vmem:[%s3 + $0x7c0] sm:$0xff]
  %v5517 = vld [vmem:[%s3 + $0x7c8] sm:$0xff]
  %v5518 = vld [vmem:[%s3 + $0x7d0] sm:$0xff]
  %v5519 = vld [vmem:[%s3 + $0x7d8] sm:$0xff]
  %v5520 = vld [vmem:[%s3 + $0x7e0] sm:$0xff]
  %v5521 = vld [vmem:[%s3 + $0x7e8] sm:$0xff]
  %v5522 = vld [vmem:[%s3 + $0x7f0] sm:$0xff]
  %v5523 = vld [vmem:[%s3 + $0x7f8] sm:$0xff]
  %v5780 = vunpack.c.l.b16 %v5268
  %v5781 = vunpack.c.h.b16 %v5268
  %v5782 = vunpack.c.l.b16 %v5269
  %v5783 = vunpack.c.h.b16 %v5269
  %v5784 = vunpack.c.l.b16 %v5270
  %v5785 = vunpack.c.h.b16 %v5270
  %v5786 = vunpack.c.l.b16 %v5271
  %v5787 = vunpack.c.h.b16 %v5271
  %v5788 = vunpack.c.l.b16 %v5272
  %v5789 = vunpack.c.h.b16 %v5272
  %v5790 = vunpack.c.l.b16 %v5273
  %v5791 = vunpack.c.h.b16 %v5273
  %v5792 = vunpack.c.l.b16 %v5274
  %v5793 = vunpack.c.h.b16 %v5274
  %v5794 = vunpack.c.l.b16 %v5275
  %v5795 = vunpack.c.h.b16 %v5275
  %v5796 = vunpack.c.l.b16 %v5276
  %v5797 = vunpack.c.h.b16 %v5276
  %v5798 = vunpack.c.l.b16 %v5277
  %v5799 = vunpack.c.h.b16 %v5277
  %v5800 = vunpack.c.l.b16 %v5278
  %v5801 = vunpack.c.h.b16 %v5278
  %v5802 = vunpack.c.l.b16 %v5279
  %v5803 = vunpack.c.h.b16 %v5279
  %v5804 = vunpack.c.l.b16 %v5280
  %v5805 = vunpack.c.h.b16 %v5280
  %v5806 = vunpack.c.l.b16 %v5281
  %v5807 = vunpack.c.h.b16 %v5281
  %v5808 = vunpack.c.l.b16 %v5282
  %v5809 = vunpack.c.h.b16 %v5282
  %v5810 = vunpack.c.l.b16 %v5283
  %v5811 = vunpack.c.h.b16 %v5283
  %v5812 = vunpack.c.l.b16 %v5284
  %v5813 = vunpack.c.h.b16 %v5284
  %v5814 = vunpack.c.l.b16 %v5285
  %v5815 = vunpack.c.h.b16 %v5285
  %v5816 = vunpack.c.l.b16 %v5286
  %v5817 = vunpack.c.h.b16 %v5286
  %v5818 = vunpack.c.l.b16 %v5287
  %v5819 = vunpack.c.h.b16 %v5287
  %v5820 = vunpack.c.l.b16 %v5288
  %v5821 = vunpack.c.h.b16 %v5288
  %v5822 = vunpack.c.l.b16 %v5289
  %v5823 = vunpack.c.h.b16 %v5289
  %v5824 = vunpack.c.l.b16 %v5290
  %v5825 = vunpack.c.h.b16 %v5290
  %v5826 = vunpack.c.l.b16 %v5291
  %v5827 = vunpack.c.h.b16 %v5291
  %v5828 = vunpack.c.l.b16 %v5292
  %v5829 = vunpack.c.h.b16 %v5292
  %v5830 = vunpack.c.l.b16 %v5293
  %v5831 = vunpack.c.h.b16 %v5293
  %v5832 = vunpack.c.l.b16 %v5294
  %v5833 = vunpack.c.h.b16 %v5294
  %v5834 = vunpack.c.l.b16 %v5295
  %v5835 = vunpack.c.h.b16 %v5295
  %v5836 = vunpack.c.l.b16 %v5296
  %v5837 = vunpack.c.h.b16 %v5296
  %v5838 = vunpack.c.l.b16 %v5297
  %v5839 = vunpack.c.h.b16 %v5297
  %v5840 = vunpack.c.l.b16 %v5298
  %v5841 = vunpack.c.h.b16 %v5298
  %v5842 = vunpack.c.l.b16 %v5299
  %v5843 = vunpack.c.h.b16 %v5299
  %v5844 = vunpack.c.l.b16 %v5300
  %v5845 = vunpack.c.h.b16 %v5300
  %v5846 = vunpack.c.l.b16 %v5301
  %v5847 = vunpack.c.h.b16 %v5301
  %v5848 = vunpack.c.l.b16 %v5302
  %v5849 = vunpack.c.h.b16 %v5302
  %v5850 = vunpack.c.l.b16 %v5303
  %v5851 = vunpack.c.h.b16 %v5303
  %v5852 = vunpack.c.l.b16 %v5304
  %v5853 = vunpack.c.h.b16 %v5304
  %v5854 = vunpack.c.l.b16 %v5305
  %v5855 = vunpack.c.h.b16 %v5305
  %v5856 = vunpack.c.l.b16 %v5306
  %v5857 = vunpack.c.h.b16 %v5306
  %v5858 = vunpack.c.l.b16 %v5307
  %v5859 = vunpack.c.h.b16 %v5307
  %v5860 = vunpack.c.l.b16 %v5308
  %v5861 = vunpack.c.h.b16 %v5308
  %v5862 = vunpack.c.l.b16 %v5309
  %v5863 = vunpack.c.h.b16 %v5309
  %v5864 = vunpack.c.l.b16 %v5310
  %v5865 = vunpack.c.h.b16 %v5310
  %v5866 = vunpack.c.l.b16 %v5311
  %v5867 = vunpack.c.h.b16 %v5311
  %v5868 = vunpack.c.l.b16 %v5312
  %v5869 = vunpack.c.h.b16 %v5312
  %v5870 = vunpack.c.l.b16 %v5313
  %v5871 = vunpack.c.h.b16 %v5313
  %v5872 = vunpack.c.l.b16 %v5314
  %v5873 = vunpack.c.h.b16 %v5314
  %v5874 = vunpack.c.l.b16 %v5315
  %v5875 = vunpack.c.h.b16 %v5315
  %v5876 = vunpack.c.l.b16 %v5316
  %v5877 = vunpack.c.h.b16 %v5316
  %v5878 = vunpack.c.l.b16 %v5317
  %v5879 = vunpack.c.h.b16 %v5317
  %v5880 = vunpack.c.l.b16 %v5318
  %v5881 = vunpack.c.h.b16 %v5318
  %v5882 = vunpack.c.l.b16 %v5319
  %v5883 = vunpack.c.h.b16 %v5319
  %v5884 = vunpack.c.l.b16 %v5320
  %v5885 = vunpack.c.h.b16 %v5320
  %v5886 = vunpack.c.l.b16 %v5321
  %v5887 = vunpack.c.h.b16 %v5321
  %v5888 = vunpack.c.l.b16 %v5322
  %v5889 = vunpack.c.h.b16 %v5322
  %v5890 = vunpack.c.l.b16 %v5323
  %v5891 = vunpack.c.h.b16 %v5323
  %v5892 = vunpack.c.l.b16 %v5324
  %v5893 = vunpack.c.h.b16 %v5324
  %v5894 = vunpack.c.l.b16 %v5325
  %v5895 = vunpack.c.h.b16 %v5325
  %v5896 = vunpack.c.l.b16 %v5326
  %v5897 = vunpack.c.h.b16 %v5326
  %v5898 = vunpack.c.l.b16 %v5327
  %v5899 = vunpack.c.h.b16 %v5327
  %v5900 = vunpack.c.l.b16 %v5328
  %v5901 = vunpack.c.h.b16 %v5328
  %v5902 = vunpack.c.l.b16 %v5329
  %v5903 = vunpack.c.h.b16 %v5329
  %v5904 = vunpack.c.l.b16 %v5330
  %v5905 = vunpack.c.h.b16 %v5330
  %v5906 = vunpack.c.l.b16 %v5331
  %v5907 = vunpack.c.h.b16 %v5331
  %v5908 = vunpack.c.l.b16 %v5332
  %v5909 = vunpack.c.h.b16 %v5332
  %v5910 = vunpack.c.l.b16 %v5333
  %v5911 = vunpack.c.h.b16 %v5333
  %v5912 = vunpack.c.l.b16 %v5334
  %v5913 = vunpack.c.h.b16 %v5334
  %v5914 = vunpack.c.l.b16 %v5335
  %v5915 = vunpack.c.h.b16 %v5335
  %v5916 = vunpack.c.l.b16 %v5336
  %v5917 = vunpack.c.h.b16 %v5336
  %v5918 = vunpack.c.l.b16 %v5337
  %v5919 = vunpack.c.h.b16 %v5337
  %v5920 = vunpack.c.l.b16 %v5338
  %v5921 = vunpack.c.h.b16 %v5338
  %v5922 = vunpack.c.l.b16 %v5339
  %v5923 = vunpack.c.h.b16 %v5339
  %v5924 = vunpack.c.l.b16 %v5340
  %v5925 = vunpack.c.h.b16 %v5340
  %v5926 = vunpack.c.l.b16 %v5341
  %v5927 = vunpack.c.h.b16 %v5341
  %v5928 = vunpack.c.l.b16 %v5342
  %v5929 = vunpack.c.h.b16 %v5342
  %v5930 = vunpack.c.l.b16 %v5343
  %v5931 = vunpack.c.h.b16 %v5343
  %v5932 = vunpack.c.l.b16 %v5344
  %v5933 = vunpack.c.h.b16 %v5344
  %v5934 = vunpack.c.l.b16 %v5345
  %v5935 = vunpack.c.h.b16 %v5345
  %v5936 = vunpack.c.l.b16 %v5346
  %v5937 = vunpack.c.h.b16 %v5346
  %v5938 = vunpack.c.l.b16 %v5347
  %v5939 = vunpack.c.h.b16 %v5347
  %v5940 = vunpack.c.l.b16 %v5348
  %v5941 = vunpack.c.h.b16 %v5348
  %v5942 = vunpack.c.l.b16 %v5349
  %v5943 = vunpack.c.h.b16 %v5349
  %v5944 = vunpack.c.l.b16 %v5350
  %v5945 = vunpack.c.h.b16 %v5350
  %v5946 = vunpack.c.l.b16 %v5351
  %v5947 = vunpack.c.h.b16 %v5351
  %v5948 = vunpack.c.l.b16 %v5352
  %v5949 = vunpack.c.h.b16 %v5352
  %v5950 = vunpack.c.l.b16 %v5353
  %v5951 = vunpack.c.h.b16 %v5353
  %v5952 = vunpack.c.l.b16 %v5354
  %v5953 = vunpack.c.h.b16 %v5354
  %v5954 = vunpack.c.l.b16 %v5355
  %v5955 = vunpack.c.h.b16 %v5355
  %v5956 = vunpack.c.l.b16 %v5356
  %v5957 = vunpack.c.h.b16 %v5356
  %v5958 = vunpack.c.l.b16 %v5357
  %v5959 = vunpack.c.h.b16 %v5357
  %v5960 = vunpack.c.l.b16 %v5358
  %v5961 = vunpack.c.h.b16 %v5358
  %v5962 = vunpack.c.l.b16 %v5359
  %v5963 = vunpack.c.h.b16 %v5359
  %v5964 = vunpack.c.l.b16 %v5360
  %v5965 = vunpack.c.h.b16 %v5360
  %v5966 = vunpack.c.l.b16 %v5361
  %v5967 = vunpack.c.h.b16 %v5361
  %v5968 = vunpack.c.l.b16 %v5362
  %v5969 = vunpack.c.h.b16 %v5362
  %v5970 = vunpack.c.l.b16 %v5363
  %v5971 = vunpack.c.h.b16 %v5363
  %v5972 = vunpack.c.l.b16 %v5364
  %v5973 = vunpack.c.h.b16 %v5364
  %v5974 = vunpack.c.l.b16 %v5365
  %v5975 = vunpack.c.h.b16 %v5365
  %v5976 = vunpack.c.l.b16 %v5366
  %v5977 = vunpack.c.h.b16 %v5366
  %v5978 = vunpack.c.l.b16 %v5367
  %v5979 = vunpack.c.h.b16 %v5367
  %v5980 = vunpack.c.l.b16 %v5368
  %v5981 = vunpack.c.h.b16 %v5368
  %v5982 = vunpack.c.l.b16 %v5369
  %v5983 = vunpack.c.h.b16 %v5369
  %v5984 = vunpack.c.l.b16 %v5370
  %v5985 = vunpack.c.h.b16 %v5370
  %v5986 = vunpack.c.l.b16 %v5371
  %v5987 = vunpack.c.h.b16 %v5371
  %v5988 = vunpack.c.l.b16 %v5372
  %v5989 = vunpack.c.h.b16 %v5372
  %v5990 = vunpack.c.l.b16 %v5373
  %v5991 = vunpack.c.h.b16 %v5373
  %v5992 = vunpack.c.l.b16 %v5374
  %v5993 = vunpack.c.h.b16 %v5374
  %v5994 = vunpack.c.l.b16 %v5375
  %v5995 = vunpack.c.h.b16 %v5375
  %v5996 = vunpack.c.l.b16 %v5376
  %v5997 = vunpack.c.h.b16 %v5376
  %v5998 = vunpack.c.l.b16 %v5377
  %v5999 = vunpack.c.h.b16 %v5377
  %v6000 = vunpack.c.l.b16 %v5378
  %v6001 = vunpack.c.h.b16 %v5378
  %v6002 = vunpack.c.l.b16 %v5379
  %v6003 = vunpack.c.h.b16 %v5379
  %v6004 = vunpack.c.l.b16 %v5380
  %v6005 = vunpack.c.h.b16 %v5380
  %v6006 = vunpack.c.l.b16 %v5381
  %v6007 = vunpack.c.h.b16 %v5381
  %v6008 = vunpack.c.l.b16 %v5382
  %v6009 = vunpack.c.h.b16 %v5382
  %v6010 = vunpack.c.l.b16 %v5383
  %v6011 = vunpack.c.h.b16 %v5383
  %v6012 = vunpack.c.l.b16 %v5384
  %v6013 = vunpack.c.h.b16 %v5384
  %v6014 = vunpack.c.l.b16 %v5385
  %v6015 = vunpack.c.h.b16 %v5385
  %v6016 = vunpack.c.l.b16 %v5386
  %v6017 = vunpack.c.h.b16 %v5386
  %v6018 = vunpack.c.l.b16 %v5387
  %v6019 = vunpack.c.h.b16 %v5387
  %v6020 = vunpack.c.l.b16 %v5388
  %v6021 = vunpack.c.h.b16 %v5388
  %v6022 = vunpack.c.l.b16 %v5389
  %v6023 = vunpack.c.h.b16 %v5389
  %v6024 = vunpack.c.l.b16 %v5390
  %v6025 = vunpack.c.h.b16 %v5390
  %v6026 = vunpack.c.l.b16 %v5391
  %v6027 = vunpack.c.h.b16 %v5391
  %v6028 = vunpack.c.l.b16 %v5392
  %v6029 = vunpack.c.h.b16 %v5392
  %v6030 = vunpack.c.l.b16 %v5393
  %v6031 = vunpack.c.h.b16 %v5393
  %v6032 = vunpack.c.l.b16 %v5394
  %v6033 = vunpack.c.h.b16 %v5394
  %v6034 = vunpack.c.l.b16 %v5395
  %v6035 = vunpack.c.h.b16 %v5395
  %v6036 = vunpack.c.l.b16 %v5396
  %v6037 = vunpack.c.h.b16 %v5396
  %v6038 = vunpack.c.l.b16 %v5397
  %v6039 = vunpack.c.h.b16 %v5397
  %v6040 = vunpack.c.l.b16 %v5398
  %v6041 = vunpack.c.h.b16 %v5398
  %v6042 = vunpack.c.l.b16 %v5399
  %v6043 = vunpack.c.h.b16 %v5399
  %v6044 = vunpack.c.l.b16 %v5400
  %v6045 = vunpack.c.h.b16 %v5400
  %v6046 = vunpack.c.l.b16 %v5401
  %v6047 = vunpack.c.h.b16 %v5401
  %v6048 = vunpack.c.l.b16 %v5402
  %v6049 = vunpack.c.h.b16 %v5402
  %v6050 = vunpack.c.l.b16 %v5403
  %v6051 = vunpack.c.h.b16 %v5403
  %v6052 = vunpack.c.l.b16 %v5404
  %v6053 = vunpack.c.h.b16 %v5404
  %v6054 = vunpack.c.l.b16 %v5405
  %v6055 = vunpack.c.h.b16 %v5405
  %v6056 = vunpack.c.l.b16 %v5406
  %v6057 = vunpack.c.h.b16 %v5406
  %v6058 = vunpack.c.l.b16 %v5407
  %v6059 = vunpack.c.h.b16 %v5407
  %v6060 = vunpack.c.l.b16 %v5408
  %v6061 = vunpack.c.h.b16 %v5408
  %v6062 = vunpack.c.l.b16 %v5409
  %v6063 = vunpack.c.h.b16 %v5409
  %v6064 = vunpack.c.l.b16 %v5410
  %v6065 = vunpack.c.h.b16 %v5410
  %v6066 = vunpack.c.l.b16 %v5411
  %v6067 = vunpack.c.h.b16 %v5411
  %v6068 = vunpack.c.l.b16 %v5412
  %v6069 = vunpack.c.h.b16 %v5412
  %v6070 = vunpack.c.l.b16 %v5413
  %v6071 = vunpack.c.h.b16 %v5413
  %v6072 = vunpack.c.l.b16 %v5414
  %v6073 = vunpack.c.h.b16 %v5414
  %v6074 = vunpack.c.l.b16 %v5415
  %v6075 = vunpack.c.h.b16 %v5415
  %v6076 = vunpack.c.l.b16 %v5416
  %v6077 = vunpack.c.h.b16 %v5416
  %v6078 = vunpack.c.l.b16 %v5417
  %v6079 = vunpack.c.h.b16 %v5417
  %v6080 = vunpack.c.l.b16 %v5418
  %v6081 = vunpack.c.h.b16 %v5418
  %v6082 = vunpack.c.l.b16 %v5419
  %v6083 = vunpack.c.h.b16 %v5419
  %v6084 = vunpack.c.l.b16 %v5420
  %v6085 = vunpack.c.h.b16 %v5420
  %v6086 = vunpack.c.l.b16 %v5421
  %v6087 = vunpack.c.h.b16 %v5421
  %v6088 = vunpack.c.l.b16 %v5422
  %v6089 = vunpack.c.h.b16 %v5422
  %v6090 = vunpack.c.l.b16 %v5423
  %v6091 = vunpack.c.h.b16 %v5423
  %v6092 = vunpack.c.l.b16 %v5424
  %v6093 = vunpack.c.h.b16 %v5424
  %v6094 = vunpack.c.l.b16 %v5425
  %v6095 = vunpack.c.h.b16 %v5425
  %v6096 = vunpack.c.l.b16 %v5426
  %v6097 = vunpack.c.h.b16 %v5426
  %v6098 = vunpack.c.l.b16 %v5427
  %v6099 = vunpack.c.h.b16 %v5427
  %v6100 = vunpack.c.l.b16 %v5428
  %v6101 = vunpack.c.h.b16 %v5428
  %v6102 = vunpack.c.l.b16 %v5429
  %v6103 = vunpack.c.h.b16 %v5429
  %v6104 = vunpack.c.l.b16 %v5430
  %v6105 = vunpack.c.h.b16 %v5430
  %v6106 = vunpack.c.l.b16 %v5431
  %v6107 = vunpack.c.h.b16 %v5431
  %v6108 = vunpack.c.l.b16 %v5432
  %v6109 = vunpack.c.h.b16 %v5432
  %v6110 = vunpack.c.l.b16 %v5433
  %v6111 = vunpack.c.h.b16 %v5433
  %v6112 = vunpack.c.l.b16 %v5434
  %v6113 = vunpack.c.h.b16 %v5434
  %v6114 = vunpack.c.l.b16 %v5435
  %v6115 = vunpack.c.h.b16 %v5435
  %v6116 = vunpack.c.l.b16 %v5436
  %v6117 = vunpack.c.h.b16 %v5436
  %v6118 = vunpack.c.l.b16 %v5437
  %v6119 = vunpack.c.h.b16 %v5437
  %v6120 = vunpack.c.l.b16 %v5438
  %v6121 = vunpack.c.h.b16 %v5438
  %v6122 = vunpack.c.l.b16 %v5439
  %v6123 = vunpack.c.h.b16 %v5439
  %v6124 = vunpack.c.l.b16 %v5440
  %v6125 = vunpack.c.h.b16 %v5440
  %v6126 = vunpack.c.l.b16 %v5441
  %v6127 = vunpack.c.h.b16 %v5441
  %v6128 = vunpack.c.l.b16 %v5442
  %v6129 = vunpack.c.h.b16 %v5442
  %v6130 = vunpack.c.l.b16 %v5443
  %v6131 = vunpack.c.h.b16 %v5443
  %v6132 = vunpack.c.l.b16 %v5444
  %v6133 = vunpack.c.h.b16 %v5444
  %v6134 = vunpack.c.l.b16 %v5445
  %v6135 = vunpack.c.h.b16 %v5445
  %v6136 = vunpack.c.l.b16 %v5446
  %v6137 = vunpack.c.h.b16 %v5446
  %v6138 = vunpack.c.l.b16 %v5447
  %v6139 = vunpack.c.h.b16 %v5447
  %v6140 = vunpack.c.l.b16 %v5448
  %v6141 = vunpack.c.h.b16 %v5448
  %v6142 = vunpack.c.l.b16 %v5449
  %v6143 = vunpack.c.h.b16 %v5449
  %v6144 = vunpack.c.l.b16 %v5450
  %v6145 = vunpack.c.h.b16 %v5450
  %v6146 = vunpack.c.l.b16 %v5451
  %v6147 = vunpack.c.h.b16 %v5451
  %v6148 = vunpack.c.l.b16 %v5452
  %v6149 = vunpack.c.h.b16 %v5452
  %v6150 = vunpack.c.l.b16 %v5453
  %v6151 = vunpack.c.h.b16 %v5453
  %v6152 = vunpack.c.l.b16 %v5454
  %v6153 = vunpack.c.h.b16 %v5454
  %v6154 = vunpack.c.l.b16 %v5455
  %v6155 = vunpack.c.h.b16 %v5455
  %v6156 = vunpack.c.l.b16 %v5456
  %v6157 = vunpack.c.h.b16 %v5456
  %v6158 = vunpack.c.l.b16 %v5457
  %v6159 = vunpack.c.h.b16 %v5457
  %v6160 = vunpack.c.l.b16 %v5458
  %v6161 = vunpack.c.h.b16 %v5458
  %v6162 = vunpack.c.l.b16 %v5459
  %v6163 = vunpack.c.h.b16 %v5459
  %v6164 = vunpack.c.l.b16 %v5460
  %v6165 = vunpack.c.h.b16 %v5460
  %v6166 = vunpack.c.l.b16 %v5461
  %v6167 = vunpack.c.h.b16 %v5461
  %v6168 = vunpack.c.l.b16 %v5462
  %v6169 = vunpack.c.h.b16 %v5462
  %v6170 = vunpack.c.l.b16 %v5463
  %v6171 = vunpack.c.h.b16 %v5463
  %v6172 = vunpack.c.l.b16 %v5464
  %v6173 = vunpack.c.h.b16 %v5464
  %v6174 = vunpack.c.l.b16 %v5465
  %v6175 = vunpack.c.h.b16 %v5465
  %v6176 = vunpack.c.l.b16 %v5466
  %v6177 = vunpack.c.h.b16 %v5466
  %v6178 = vunpack.c.l.b16 %v5467
  %v6179 = vunpack.c.h.b16 %v5467
  %v6180 = vunpack.c.l.b16 %v5468
  %v6181 = vunpack.c.h.b16 %v5468
  %v6182 = vunpack.c.l.b16 %v5469
  %v6183 = vunpack.c.h.b16 %v5469
  %v6184 = vunpack.c.l.b16 %v5470
  %v6185 = vunpack.c.h.b16 %v5470
  %v6186 = vunpack.c.l.b16 %v5471
  %v6187 = vunpack.c.h.b16 %v5471
  %v6188 = vunpack.c.l.b16 %v5472
  %v6189 = vunpack.c.h.b16 %v5472
  %v6190 = vunpack.c.l.b16 %v5473
  %v6191 = vunpack.c.h.b16 %v5473
  %v6192 = vunpack.c.l.b16 %v5474
  %v6193 = vunpack.c.h.b16 %v5474
  %v6194 = vunpack.c.l.b16 %v5475
  %v6195 = vunpack.c.h.b16 %v5475
  %v6196 = vunpack.c.l.b16 %v5476
  %v6197 = vunpack.c.h.b16 %v5476
  %v6198 = vunpack.c.l.b16 %v5477
  %v6199 = vunpack.c.h.b16 %v5477
  %v6200 = vunpack.c.l.b16 %v5478
  %v6201 = vunpack.c.h.b16 %v5478
  %v6202 = vunpack.c.l.b16 %v5479
  %v6203 = vunpack.c.h.b16 %v5479
  %v6204 = vunpack.c.l.b16 %v5480
  %v6205 = vunpack.c.h.b16 %v5480
  %v6206 = vunpack.c.l.b16 %v5481
  %v6207 = vunpack.c.h.b16 %v5481
  %v6208 = vunpack.c.l.b16 %v5482
  %v6209 = vunpack.c.h.b16 %v5482
  %v6210 = vunpack.c.l.b16 %v5483
  %v6211 = vunpack.c.h.b16 %v5483
  %v6212 = vunpack.c.l.b16 %v5484
  %v6213 = vunpack.c.h.b16 %v5484
  %v6214 = vunpack.c.l.b16 %v5485
  %v6215 = vunpack.c.h.b16 %v5485
  %v6216 = vunpack.c.l.b16 %v5486
  %v6217 = vunpack.c.h.b16 %v5486
  %v6218 = vunpack.c.l.b16 %v5487
  %v6219 = vunpack.c.h.b16 %v5487
  %v6220 = vunpack.c.l.b16 %v5488
  %v6221 = vunpack.c.h.b16 %v5488
  %v6222 = vunpack.c.l.b16 %v5489
  %v6223 = vunpack.c.h.b16 %v5489
  %v6224 = vunpack.c.l.b16 %v5490
  %v6225 = vunpack.c.h.b16 %v5490
  %v6226 = vunpack.c.l.b16 %v5491
  %v6227 = vunpack.c.h.b16 %v5491
  %v6228 = vunpack.c.l.b16 %v5492
  %v6229 = vunpack.c.h.b16 %v5492
  %v6230 = vunpack.c.l.b16 %v5493
  %v6231 = vunpack.c.h.b16 %v5493
  %v6232 = vunpack.c.l.b16 %v5494
  %v6233 = vunpack.c.h.b16 %v5494
  %v6234 = vunpack.c.l.b16 %v5495
  %v6235 = vunpack.c.h.b16 %v5495
  %v6236 = vunpack.c.l.b16 %v5496
  %v6237 = vunpack.c.h.b16 %v5496
  %v6238 = vunpack.c.l.b16 %v5497
  %v6239 = vunpack.c.h.b16 %v5497
  %v6240 = vunpack.c.l.b16 %v5498
  %v6241 = vunpack.c.h.b16 %v5498
  %v6242 = vunpack.c.l.b16 %v5499
  %v6243 = vunpack.c.h.b16 %v5499
  %v6244 = vunpack.c.l.b16 %v5500
  %v6245 = vunpack.c.h.b16 %v5500
  %v6246 = vunpack.c.l.b16 %v5501
  %v6247 = vunpack.c.h.b16 %v5501
  %v6248 = vunpack.c.l.b16 %v5502
  %v6249 = vunpack.c.h.b16 %v5502
  %v6250 = vunpack.c.l.b16 %v5503
  %v6251 = vunpack.c.h.b16 %v5503
  %v6252 = vunpack.c.l.b16 %v5504
  %v6253 = vunpack.c.h.b16 %v5504
  %v6254 = vunpack.c.l.b16 %v5505
  %v6255 = vunpack.c.h.b16 %v5505
  %v6256 = vunpack.c.l.b16 %v5506
  %v6257 = vunpack.c.h.b16 %v5506
  %v6258 = vunpack.c.l.b16 %v5507
  %v6259 = vunpack.c.h.b16 %v5507
  %v6260 = vunpack.c.l.b16 %v5508
  %v6261 = vunpack.c.h.b16 %v5508
  %v6262 = vunpack.c.l.b16 %v5509
  %v6263 = vunpack.c.h.b16 %v5509
  %v6264 = vunpack.c.l.b16 %v5510
  %v6265 = vunpack.c.h.b16 %v5510
  %v6266 = vunpack.c.l.b16 %v5511
  %v6267 = vunpack.c.h.b16 %v5511
  %v6268 = vunpack.c.l.b16 %v5512
  %v6269 = vunpack.c.h.b16 %v5512
  %v6270 = vunpack.c.l.b16 %v5513
  %v6271 = vunpack.c.h.b16 %v5513
  %v6272 = vunpack.c.l.b16 %v5514
  %v6273 = vunpack.c.h.b16 %v5514
  %v6274 = vunpack.c.l.b16 %v5515
  %v6275 = vunpack.c.h.b16 %v5515
  %v6276 = vunpack.c.l.b16 %v5516
  %v6277 = vunpack.c.h.b16 %v5516
  %v6278 = vunpack.c.l.b16 %v5517
  %v6279 = vunpack.c.h.b16 %v5517
  %v6280 = vunpack.c.l.b16 %v5518
  %v6281 = vunpack.c.h.b16 %v5518
  %v6282 = vunpack.c.l.b16 %v5519
  %v6283 = vunpack.c.h.b16 %v5519
  %v6284 = vunpack.c.l.b16 %v5520
  %v6285 = vunpack.c.h.b16 %v5520
  %v6286 = vunpack.c.l.b16 %v5521
  %v6287 = vunpack.c.h.b16 %v5521
  %v6288 = vunpack.c.l.b16 %v5522
  %v6289 = vunpack.c.h.b16 %v5522
  %v6290 = vunpack.c.l.b16 %v5523
  %v6291 = vunpack.c.h.b16 %v5523
  %v6292 = vpack.c.b16 %v5784, %v5780
  %v6293 = vpack.c.b16 %v5785, %v5781
  %v6294 = vpack.c.b16 %v5786, %v5782
  %v6295 = vpack.c.b16 %v5787, %v5783
  %v6296 = vpack.c.b16 %v5792, %v5788
  %v6297 = vpack.c.b16 %v5793, %v5789
  %v6298 = vpack.c.b16 %v5794, %v5790
  %v6299 = vpack.c.b16 %v5795, %v5791
  %v6300 = vpack.c.b16 %v5800, %v5796
  %v6301 = vpack.c.b16 %v5801, %v5797
  %v6302 = vpack.c.b16 %v5802, %v5798
  %v6303 = vpack.c.b16 %v5803, %v5799
  %v6304 = vpack.c.b16 %v5808, %v5804
  %v6305 = vpack.c.b16 %v5809, %v5805
  %v6306 = vpack.c.b16 %v5810, %v5806
  %v6307 = vpack.c.b16 %v5811, %v5807
  %v6308 = vpack.c.b16 %v5816, %v5812
  %v6309 = vpack.c.b16 %v5817, %v5813
  %v6310 = vpack.c.b16 %v5818, %v5814
  %v6311 = vpack.c.b16 %v5819, %v5815
  %v6312 = vpack.c.b16 %v5824, %v5820
  %v6313 = vpack.c.b16 %v5825, %v5821
  %v6314 = vpack.c.b16 %v5826, %v5822
  %v6315 = vpack.c.b16 %v5827, %v5823
  %v6316 = vpack.c.b16 %v5832, %v5828
  %v6317 = vpack.c.b16 %v5833, %v5829
  %v6318 = vpack.c.b16 %v5834, %v5830
  %v6319 = vpack.c.b16 %v5835, %v5831
  %v6320 = vpack.c.b16 %v5840, %v5836
  %v6321 = vpack.c.b16 %v5841, %v5837
  %v6322 = vpack.c.b16 %v5842, %v5838
  %v6323 = vpack.c.b16 %v5843, %v5839
  %v6324 = vpack.c.b16 %v5848, %v5844
  %v6325 = vpack.c.b16 %v5849, %v5845
  %v6326 = vpack.c.b16 %v5850, %v5846
  %v6327 = vpack.c.b16 %v5851, %v5847
  %v6328 = vpack.c.b16 %v5856, %v5852
  %v6329 = vpack.c.b16 %v5857, %v5853
  %v6330 = vpack.c.b16 %v5858, %v5854
  %v6331 = vpack.c.b16 %v5859, %v5855
  %v6332 = vpack.c.b16 %v5864, %v5860
  %v6333 = vpack.c.b16 %v5865, %v5861
  %v6334 = vpack.c.b16 %v5866, %v5862
  %v6335 = vpack.c.b16 %v5867, %v5863
  %v6336 = vpack.c.b16 %v5872, %v5868
  %v6337 = vpack.c.b16 %v5873, %v5869
  %v6338 = vpack.c.b16 %v5874, %v5870
  %v6339 = vpack.c.b16 %v5875, %v5871
  %v6340 = vpack.c.b16 %v5880, %v5876
  %v6341 = vpack.c.b16 %v5881, %v5877
  %v6342 = vpack.c.b16 %v5882, %v5878
  %v6343 = vpack.c.b16 %v5883, %v5879
  %v6344 = vpack.c.b16 %v5888, %v5884
  %v6345 = vpack.c.b16 %v5889, %v5885
  %v6346 = vpack.c.b16 %v5890, %v5886
  %v6347 = vpack.c.b16 %v5891, %v5887
  %v6348 = vpack.c.b16 %v5896, %v5892
  %v6349 = vpack.c.b16 %v5897, %v5893
  %v6350 = vpack.c.b16 %v5898, %v5894
  %v6351 = vpack.c.b16 %v5899, %v5895
  %v6352 = vpack.c.b16 %v5904, %v5900
  %v6353 = vpack.c.b16 %v5905, %v5901
  %v6354 = vpack.c.b16 %v5906, %v5902
  %v6355 = vpack.c.b16 %v5907, %v5903
  %v6356 = vpack.c.b16 %v5912, %v5908
  %v6357 = vpack.c.b16 %v5913, %v5909
  %v6358 = vpack.c.b16 %v5914, %v5910
  %v6359 = vpack.c.b16 %v5915, %v5911
  %v6360 = vpack.c.b16 %v5920, %v5916
  %v6361 = vpack.c.b16 %v5921, %v5917
  %v6362 = vpack.c.b16 %v5922, %v5918
  %v6363 = vpack.c.b16 %v5923, %v5919
  %v6364 = vpack.c.b16 %v5928, %v5924
  %v6365 = vpack.c.b16 %v5929, %v5925
  %v6366 = vpack.c.b16 %v5930, %v5926
  %v6367 = vpack.c.b16 %v5931, %v5927
  %v6368 = vpack.c.b16 %v5936, %v5932
  %v6369 = vpack.c.b16 %v5937, %v5933
  %v6370 = vpack.c.b16 %v5938, %v5934
  %v6371 = vpack.c.b16 %v5939, %v5935
  %v6372 = vpack.c.b16 %v5944, %v5940
  %v6373 = vpack.c.b16 %v5945, %v5941
  %v6374 = vpack.c.b16 %v5946, %v5942
  %v6375 = vpack.c.b16 %v5947, %v5943
  %v6376 = vpack.c.b16 %v5952, %v5948
  %v6377 = vpack.c.b16 %v5953, %v5949
  %v6378 = vpack.c.b16 %v5954, %v5950
  %v6379 = vpack.c.b16 %v5955, %v5951
  %v6380 = vpack.c.b16 %v5960, %v5956
  %v6381 = vpack.c.b16 %v5961, %v5957
  %v6382 = vpack.c.b16 %v5962, %v5958
  %v6383 = vpack.c.b16 %v5963, %v5959
  %v6384 = vpack.c.b16 %v5968, %v5964
  %v6385 = vpack.c.b16 %v5969, %v5965
  %v6386 = vpack.c.b16 %v5970, %v5966
  %v6387 = vpack.c.b16 %v5971, %v5967
  %v6388 = vpack.c.b16 %v5976, %v5972
  %v6389 = vpack.c.b16 %v5977, %v5973
  %v6390 = vpack.c.b16 %v5978, %v5974
  %v6391 = vpack.c.b16 %v5979, %v5975
  %v6392 = vpack.c.b16 %v5984, %v5980
  %v6393 = vpack.c.b16 %v5985, %v5981
  %v6394 = vpack.c.b16 %v5986, %v5982
  %v6395 = vpack.c.b16 %v5987, %v5983
  %v6396 = vpack.c.b16 %v5992, %v5988
  %v6397 = vpack.c.b16 %v5993, %v5989
  %v6398 = vpack.c.b16 %v5994, %v5990
  %v6399 = vpack.c.b16 %v5995, %v5991
  %v6400 = vpack.c.b16 %v6000, %v5996
  %v6401 = vpack.c.b16 %v6001, %v5997
  %v6402 = vpack.c.b16 %v6002, %v5998
  %v6403 = vpack.c.b16 %v6003, %v5999
  %v6404 = vpack.c.b16 %v6008, %v6004
  %v6405 = vpack.c.b16 %v6009, %v6005
  %v6406 = vpack.c.b16 %v6010, %v6006
  %v6407 = vpack.c.b16 %v6011, %v6007
  %v6408 = vpack.c.b16 %v6016, %v6012
  %v6409 = vpack.c.b16 %v6017, %v6013
  %v6410 = vpack.c.b16 %v6018, %v6014
  %v6411 = vpack.c.b16 %v6019, %v6015
  %v6412 = vpack.c.b16 %v6024, %v6020
  %v6413 = vpack.c.b16 %v6025, %v6021
  %v6414 = vpack.c.b16 %v6026, %v6022
  %v6415 = vpack.c.b16 %v6027, %v6023
  %v6416 = vpack.c.b16 %v6032, %v6028
  %v6417 = vpack.c.b16 %v6033, %v6029
  %v6418 = vpack.c.b16 %v6034, %v6030
  %v6419 = vpack.c.b16 %v6035, %v6031
  %v6420 = vpack.c.b16 %v6040, %v6036
  %v6421 = vpack.c.b16 %v6041, %v6037
  %v6422 = vpack.c.b16 %v6042, %v6038
  %v6423 = vpack.c.b16 %v6043, %v6039
  %v6424 = vpack.c.b16 %v6048, %v6044
  %v6425 = vpack.c.b16 %v6049, %v6045
  %v6426 = vpack.c.b16 %v6050, %v6046
  %v6427 = vpack.c.b16 %v6051, %v6047
  %v6428 = vpack.c.b16 %v6056, %v6052
  %v6429 = vpack.c.b16 %v6057, %v6053
  %v6430 = vpack.c.b16 %v6058, %v6054
  %v6431 = vpack.c.b16 %v6059, %v6055
  %v6432 = vpack.c.b16 %v6064, %v6060
  %v6433 = vpack.c.b16 %v6065, %v6061
  %v6434 = vpack.c.b16 %v6066, %v6062
  %v6435 = vpack.c.b16 %v6067, %v6063
  %v6436 = vpack.c.b16 %v6072, %v6068
  %v6437 = vpack.c.b16 %v6073, %v6069
  %v6438 = vpack.c.b16 %v6074, %v6070
  %v6439 = vpack.c.b16 %v6075, %v6071
  %v6440 = vpack.c.b16 %v6080, %v6076
  %v6441 = vpack.c.b16 %v6081, %v6077
  %v6442 = vpack.c.b16 %v6082, %v6078
  %v6443 = vpack.c.b16 %v6083, %v6079
  %v6444 = vpack.c.b16 %v6088, %v6084
  %v6445 = vpack.c.b16 %v6089, %v6085
  %v6446 = vpack.c.b16 %v6090, %v6086
  %v6447 = vpack.c.b16 %v6091, %v6087
  %v6448 = vpack.c.b16 %v6096, %v6092
  %v6449 = vpack.c.b16 %v6097, %v6093
  %v6450 = vpack.c.b16 %v6098, %v6094
  %v6451 = vpack.c.b16 %v6099, %v6095
  %v6452 = vpack.c.b16 %v6104, %v6100
  %v6453 = vpack.c.b16 %v6105, %v6101
  %v6454 = vpack.c.b16 %v6106, %v6102
  %v6455 = vpack.c.b16 %v6107, %v6103
  %v6456 = vpack.c.b16 %v6112, %v6108
  %v6457 = vpack.c.b16 %v6113, %v6109
  %v6458 = vpack.c.b16 %v6114, %v6110
  %v6459 = vpack.c.b16 %v6115, %v6111
  %v6460 = vpack.c.b16 %v6120, %v6116
  %v6461 = vpack.c.b16 %v6121, %v6117
  %v6462 = vpack.c.b16 %v6122, %v6118
  %v6463 = vpack.c.b16 %v6123, %v6119
  %v6464 = vpack.c.b16 %v6128, %v6124
  %v6465 = vpack.c.b16 %v6129, %v6125
  %v6466 = vpack.c.b16 %v6130, %v6126
  %v6467 = vpack.c.b16 %v6131, %v6127
  %v6468 = vpack.c.b16 %v6136, %v6132
  %v6469 = vpack.c.b16 %v6137, %v6133
  %v6470 = vpack.c.b16 %v6138, %v6134
  %v6471 = vpack.c.b16 %v6139, %v6135
  %v6472 = vpack.c.b16 %v6144, %v6140
  %v6473 = vpack.c.b16 %v6145, %v6141
  %v6474 = vpack.c.b16 %v6146, %v6142
  %v6475 = vpack.c.b16 %v6147, %v6143
  %v6476 = vpack.c.b16 %v6152, %v6148
  %v6477 = vpack.c.b16 %v6153, %v6149
  %v6478 = vpack.c.b16 %v6154, %v6150
  %v6479 = vpack.c.b16 %v6155, %v6151
  %v6480 = vpack.c.b16 %v6160, %v6156
  %v6481 = vpack.c.b16 %v6161, %v6157
  %v6482 = vpack.c.b16 %v6162, %v6158
  %v6483 = vpack.c.b16 %v6163, %v6159
  %v6484 = vpack.c.b16 %v6168, %v6164
  %v6485 = vpack.c.b16 %v6169, %v6165
  %v6486 = vpack.c.b16 %v6170, %v6166
  %v6487 = vpack.c.b16 %v6171, %v6167
  %v6488 = vpack.c.b16 %v6176, %v6172
  %v6489 = vpack.c.b16 %v6177, %v6173
  %v6490 = vpack.c.b16 %v6178, %v6174
  %v6491 = vpack.c.b16 %v6179, %v6175
  %v6492 = vpack.c.b16 %v6184, %v6180
  %v6493 = vpack.c.b16 %v6185, %v6181
  %v6494 = vpack.c.b16 %v6186, %v6182
  %v6495 = vpack.c.b16 %v6187, %v6183
  %v6496 = vpack.c.b16 %v6192, %v6188
  %v6497 = vpack.c.b16 %v6193, %v6189
  %v6498 = vpack.c.b16 %v6194, %v6190
  %v6499 = vpack.c.b16 %v6195, %v6191
  %v6500 = vpack.c.b16 %v6200, %v6196
  %v6501 = vpack.c.b16 %v6201, %v6197
  %v6502 = vpack.c.b16 %v6202, %v6198
  %v6503 = vpack.c.b16 %v6203, %v6199
  %v6504 = vpack.c.b16 %v6208, %v6204
  %v6505 = vpack.c.b16 %v6209, %v6205
  %v6506 = vpack.c.b16 %v6210, %v6206
  %v6507 = vpack.c.b16 %v6211, %v6207
  %v6508 = vpack.c.b16 %v6216, %v6212
  %v6509 = vpack.c.b16 %v6217, %v6213
  %v6510 = vpack.c.b16 %v6218, %v6214
  %v6511 = vpack.c.b16 %v6219, %v6215
  %v6512 = vpack.c.b16 %v6224, %v6220
  %v6513 = vpack.c.b16 %v6225, %v6221
  %v6514 = vpack.c.b16 %v6226, %v6222
  %v6515 = vpack.c.b16 %v6227, %v6223
  %v6516 = vpack.c.b16 %v6232, %v6228
  %v6517 = vpack.c.b16 %v6233, %v6229
  %v6518 = vpack.c.b16 %v6234, %v6230
  %v6519 = vpack.c.b16 %v6235, %v6231
  %v6520 = vpack.c.b16 %v6240, %v6236
  %v6521 = vpack.c.b16 %v6241, %v6237
  %v6522 = vpack.c.b16 %v6242, %v6238
  %v6523 = vpack.c.b16 %v6243, %v6239
  %v6524 = vpack.c.b16 %v6248, %v6244
  %v6525 = vpack.c.b16 %v6249, %v6245
  %v6526 = vpack.c.b16 %v6250, %v6246
  %v6527 = vpack.c.b16 %v6251, %v6247
  %v6528 = vpack.c.b16 %v6256, %v6252
  %v6529 = vpack.c.b16 %v6257, %v6253
  %v6530 = vpack.c.b16 %v6258, %v6254
  %v6531 = vpack.c.b16 %v6259, %v6255
  %v6532 = vpack.c.b16 %v6264, %v6260
  %v6533 = vpack.c.b16 %v6265, %v6261
  %v6534 = vpack.c.b16 %v6266, %v6262
  %v6535 = vpack.c.b16 %v6267, %v6263
  %v6536 = vpack.c.b16 %v6272, %v6268
  %v6537 = vpack.c.b16 %v6273, %v6269
  %v6538 = vpack.c.b16 %v6274, %v6270
  %v6539 = vpack.c.b16 %v6275, %v6271
  %v6540 = vpack.c.b16 %v6280, %v6276
  %v6541 = vpack.c.b16 %v6281, %v6277
  %v6542 = vpack.c.b16 %v6282, %v6278
  %v6543 = vpack.c.b16 %v6283, %v6279
  %v6544 = vpack.c.b16 %v6288, %v6284
  %v6545 = vpack.c.b16 %v6289, %v6285
  %v6546 = vpack.c.b16 %v6290, %v6286
  %v6547 = vpack.c.b16 %v6291, %v6287
  %6804 = vmatprep.subr.bf16.mxu0 %v6293
  %6805 = vmatpush1.bf16.msra.mxu0 %v6292
  %6806 = vmatprep.subr.bf16.mxu0 %v6297
  %6807 = vmatpush1.bf16.msra.mxu0 %v6296
  %6808 = vmatprep.subr.bf16.mxu0 %v6301
  %6809 = vmatpush1.bf16.msra.mxu0 %v6300
  %6810 = vmatprep.subr.bf16.mxu0 %v6305
  %6811 = vmatpush1.bf16.msra.mxu0 %v6304
  %6812 = vmatprep.subr.bf16.mxu0 %v6309
  %6813 = vmatpush1.bf16.msra.mxu0 %v6308
  %6814 = vmatprep.subr.bf16.mxu0 %v6313
  %6815 = vmatpush1.bf16.msra.mxu0 %v6312
  %6816 = vmatprep.subr.bf16.mxu0 %v6317
  %6817 = vmatpush1.bf16.msra.mxu0 %v6316
  %6818 = vmatprep.subr.bf16.mxu0 %v6321
  %6819 = vmatpush1.bf16.msra.mxu0 %v6320
  %6820 = vmatprep.subr.bf16.mxu0 %v6325
  %6821 = vmatpush1.bf16.msra.mxu0 %v6324
  %6822 = vmatprep.subr.bf16.mxu0 %v6329
  %6823 = vmatpush1.bf16.msra.mxu0 %v6328
  %6824 = vmatprep.subr.bf16.mxu0 %v6333
  %6825 = vmatpush1.bf16.msra.mxu0 %v6332
  %6826 = vmatprep.subr.bf16.mxu0 %v6337
  %6827 = vmatpush1.bf16.msra.mxu0 %v6336
  %6828 = vmatprep.subr.bf16.mxu0 %v6341
  %6829 = vmatpush1.bf16.msra.mxu0 %v6340
  %6830 = vmatprep.subr.bf16.mxu0 %v6345
  %6831 = vmatpush1.bf16.msra.mxu0 %v6344
  %6832 = vmatprep.subr.bf16.mxu0 %v6349
  %6833 = vmatpush1.bf16.msra.mxu0 %v6348
  %6834 = vmatprep.subr.bf16.mxu0 %v6353
  %6835 = vmatpush1.bf16.msra.mxu0 %v6352
  %6836 = vmatprep.mubr.bf16.mxu0 %v5253
  %6837 = vmatmul.mubr.bf16.gmra.mrb[0].mxu0 %v5252
  %v6838 = vpop.f32.mrb[0].mxu0
  %v6839 = vadd.f32 0.0, %v6838
  %v6840 = vpop.f32.mrb[0].mxu0
  %v6841 = vadd.f32 0.0, %v6840
  %v6842 = vpop.f32.mrb[0].mxu0
  %v6843 = vadd.f32 0.0, %v6842
  %v6844 = vpop.f32.mrb[0].mxu0
  %v6845 = vadd.f32 0.0, %v6844
  %6846 = vmatprep.mubr.bf16.mxu0 %v5261
  %6847 = vmatmul.mubr.bf16.gmra.mrb[0].mxu0 %v5260
  %v6848 = vpop.f32.mrb[0].mxu0
  %v6849 = vadd.f32 0.0, %v6848
  %v6850 = vpop.f32.mrb[0].mxu0
  %v6851 = vadd.f32 0.0, %v6850
  %v6852 = vpop.f32.mrb[0].mxu0
  %v6853 = vpop.f32.mrb[0].mxu0
  %6854 = vdwg.mxu0
  %6855 = vmatprep.subr.bf16.mxu0 %v6357
  %6856 = vmatpush1.bf16.msra.mxu0 %v6356
  %6857 = vmatprep.subr.bf16.mxu0 %v6361
  %6858 = vmatpush1.bf16.msra.mxu0 %v6360
  %6859 = vmatprep.subr.bf16.mxu0 %v6365
  %6860 = vmatpush1.bf16.msra.mxu0 %v6364
  %6861 = vmatprep.subr.bf16.mxu0 %v6369
  %6862 = vmatpush1.bf16.msra.mxu0 %v6368
  %6863 = vmatprep.subr.bf16.mxu0 %v6373
  %6864 = vmatpush1.bf16.msra.mxu0 %v6372
  %6865 = vmatprep.subr.bf16.mxu0 %v6377
  %6866 = vmatpush1.bf16.msra.mxu0 %v6376
  %6867 = vmatprep.subr.bf16.mxu0 %v6381
  %6868 = vmatpush1.bf16.msra.mxu0 %v6380
  %6869 = vmatprep.subr.bf16.mxu0 %v6385
  %6870 = vmatpush1.bf16.msra.mxu0 %v6384
  %6871 = vmatprep.subr.bf16.mxu0 %v6389
  %6872 = vmatpush1.bf16.msra.mxu0 %v6388
  %6873 = vmatprep.subr.bf16.mxu0 %v6393
  %6874 = vmatpush1.bf16.msra.mxu0 %v6392
  %6875 = vmatprep.subr.bf16.mxu0 %v6397
  %6876 = vmatpush1.bf16.msra.mxu0 %v6396
  %6877 = vmatprep.subr.bf16.mxu0 %v6401
  %6878 = vmatpush1.bf16.msra.mxu0 %v6400
  %6879 = vmatprep.subr.bf16.mxu0 %v6405
  %6880 = vmatpush1.bf16.msra.mxu0 %v6404
  %6881 = vmatprep.subr.bf16.mxu0 %v6409
  %6882 = vmatpush1.bf16.msra.mxu0 %v6408
  %6883 = vmatprep.subr.bf16.mxu0 %v6413
  %6884 = vmatpush1.bf16.msra.mxu0 %v6412
  %6885 = vmatprep.subr.bf16.mxu0 %v6417
  %6886 = vmatpush1.bf16.msra.mxu0 %v6416
  %6887 = vmatprep.mubr.bf16.mxu0 %v5255
  %6888 = vmatmul.mubr.bf16.gmra.mrb[0].mxu0 %v5254
  %v6889 = vpop.f32.mrb[0].mxu0
  %v6890 = vadd.f32 %v6839, %v6889
  %v6891 = vpop.f32.mrb[0].mxu0
  %v6892 = vadd.f32 %v6841, %v6891
  %v6893 = vpop.f32.mrb[0].mxu0
  %v6894 = vadd.f32 %v6843, %v6893
  %v6895 = vpop.f32.mrb[0].mxu0
  %v6896 = vadd.f32 %v6845, %v6895
  %6897 = vmatprep.mubr.bf16.mxu0 %v5263
  %6898 = vmatmul.mubr.bf16.gmra.mrb[0].mxu0 %v5262
  %v6899 = vpop.f32.mrb[0].mxu0
  %v6900 = vadd.f32 %v6849, %v6899
  %v6901 = vpop.f32.mrb[0].mxu0
  %v6902 = vadd.f32 %v6851, %v6901
  %v6903 = vpop.f32.mrb[0].mxu0
  %v6904 = vpop.f32.mrb[0].mxu0
  %6905 = vdwg.mxu0
  %6906 = vmatprep.subr.bf16.mxu0 %v6421
  %6907 = vmatpush1.bf16.msra.mxu0 %v6420
  %6908 = vmatprep.subr.bf16.mxu0 %v6425
  %6909 = vmatpush1.bf16.msra.mxu0 %v6424
  %6910 = vmatprep.subr.bf16.mxu0 %v6429
  %6911 = vmatpush1.bf16.msra.mxu0 %v6428
  %6912 = vmatprep.subr.bf16.mxu0 %v6433
  %6913 = vmatpush1.bf16.msra.mxu0 %v6432
  %6914 = vmatprep.subr.bf16.mxu0 %v6437
  %6915 = vmatpush1.bf16.msra.mxu0 %v6436
  %6916 = vmatprep.subr.bf16.mxu0 %v6441
  %6917 = vmatpush1.bf16.msra.mxu0 %v6440
  %6918 = vmatprep.subr.bf16.mxu0 %v6445
  %6919 = vmatpush1.bf16.msra.mxu0 %v6444
  %6920 = vmatprep.subr.bf16.mxu0 %v6449
  %6921 = vmatpush1.bf16.msra.mxu0 %v6448
  %6922 = vmatprep.subr.bf16.mxu0 %v6453
  %6923 = vmatpush1.bf16.msra.mxu0 %v6452
  %6924 = vmatprep.subr.bf16.mxu0 %v6457
  %6925 = vmatpush1.bf16.msra.mxu0 %v6456
  %6926 = vmatprep.subr.bf16.mxu0 %v6461
  %6927 = vmatpush1.bf16.msra.mxu0 %v6460
  %6928 = vmatprep.subr.bf16.mxu0 %v6465
  %6929 = vmatpush1.bf16.msra.mxu0 %v6464
  %6930 = vmatprep.subr.bf16.mxu0 %v6469
  %6931 = vmatpush1.bf16.msra.mxu0 %v6468
  %6932 = vmatprep.subr.bf16.mxu0 %v6473
  %6933 = vmatpush1.bf16.msra.mxu0 %v6472
  %6934 = vmatprep.subr.bf16.mxu0 %v6477
  %6935 = vmatpush1.bf16.msra.mxu0 %v6476
  %6936 = vmatprep.subr.bf16.mxu0 %v6481
  %6937 = vmatpush1.bf16.msra.mxu0 %v6480
  %6938 = vmatprep.mubr.bf16.mxu0 %v5257
  %6939 = vmatmul.mubr.bf16.gmra.mrb[0].mxu0 %v5256
  %v6940 = vpop.f32.mrb[0].mxu0
  %v6941 = vadd.f32 %v6890, %v6940
  %v6942 = vpop.f32.mrb[0].mxu0
  %v6943 = vadd.f32 %v6892, %v6942
  %v6944 = vpop.f32.mrb[0].mxu0
  %v6945 = vadd.f32 %v6894, %v6944
  %v6946 = vpop.f32.mrb[0].mxu0
  %v6947 = vadd.f32 %v6896, %v6946
  %6948 = vmatprep.mubr.bf16.mxu0 %v5265
  %6949 = vmatmul.mubr.bf16.gmra.mrb[0].mxu0 %v5264
  %v6950 = vpop.f32.mrb[0].mxu0
  %v6951 = vadd.f32 %v6900, %v6950
  %v6952 = vpop.f32.mrb[0].mxu0
  %v6953 = vadd.f32 %v6902, %v6952
  %v6954 = vpop.f32.mrb[0].mxu0
  %v6955 = vpop.f32.mrb[0].mxu0
  %6956 = vdwg.mxu0
  %6957 = vmatprep.subr.bf16.mxu0 %v6485
  %6958 = vmatpush1.bf16.msra.mxu0 %v6484
  %6959 = vmatprep.subr.bf16.mxu0 %v6489
  %6960 = vmatpush1.bf16.msra.mxu0 %v6488
  %6961 = vmatprep.subr.bf16.mxu0 %v6493
  %6962 = vmatpush1.bf16.msra.mxu0 %v6492
  %6963 = vmatprep.subr.bf16.mxu0 %v6497
  %6964 = vmatpush1.bf16.msra.mxu0 %v6496
  %6965 = vmatprep.subr.bf16.mxu0 %v6501
  %6966 = vmatpush1.bf16.msra.mxu0 %v6500
  %6967 = vmatprep.subr.bf16.mxu0 %v6505
  %6968 = vmatpush1.bf16.msra.mxu0 %v6504
  %6969 = vmatprep.subr.bf16.mxu0 %v6509
  %6970 = vmatpush1.bf16.msra.mxu0 %v6508
  %6971 = vmatprep.subr.bf16.mxu0 %v6513
  %6972 = vmatpush1.bf16.msra.mxu0 %v6512
  %6973 = vmatprep.subr.bf16.mxu0 %v6517
  %6974 = vmatpush1.bf16.msra.mxu0 %v6516
  %6975 = vmatprep.subr.bf16.mxu0 %v6521
  %6976 = vmatpush1.bf16.msra.mxu0 %v6520
  %6977 = vmatprep.subr.bf16.mxu0 %v6525
  %6978 = vmatpush1.bf16.msra.mxu0 %v6524
  %6979 = vmatprep.subr.bf16.mxu0 %v6529
  %6980 = vmatpush1.bf16.msra.mxu0 %v6528
  %6981 = vmatprep.subr.bf16.mxu0 %v6533
  %6982 = vmatpush1.bf16.msra.mxu0 %v6532
  %6983 = vmatprep.subr.bf16.mxu0 %v6537
  %6984 = vmatpush1.bf16.msra.mxu0 %v6536
  %6985 = vmatprep.subr.bf16.mxu0 %v6541
  %6986 = vmatpush1.bf16.msra.mxu0 %v6540
  %6987 = vmatprep.subr.bf16.mxu0 %v6545
  %6988 = vmatpush1.bf16.msra.mxu0 %v6544
  %6989 = vmatprep.mubr.bf16.mxu0 %v5259
  %6990 = vmatmul.mubr.bf16.gmra.mrb[0].mxu0 %v5258
  %v6991 = vpop.f32.mrb[0].mxu0
  %v6992 = vadd.f32 %v6941, %v6991
  %v6993 = vpop.f32.mrb[0].mxu0
  %v6994 = vadd.f32 %v6943, %v6993
  %v6995 = vpop.f32.mrb[0].mxu0
  %v6996 = vadd.f32 %v6945, %v6995
  %v6997 = vpop.f32.mrb[0].mxu0
  %v6998 = vadd.f32 %v6947, %v6997
  %6999 = vmatprep.mubr.bf16.mxu0 %v5267
  %7000 = vmatmul.mubr.bf16.gmra.mrb[0].mxu0 %v5266
  %v7001 = vpop.f32.mrb[0].mxu0
  %v7002 = vadd.f32 %v6951, %v7001
  %v7003 = vpop.f32.mrb[0].mxu0
  %v7004 = vadd.f32 %v6953, %v7003
  %v7005 = vpop.f32.mrb[0].mxu0
  %v7006 = vpop.f32.mrb[0].mxu0
  %7007 = vdwg.mxu0
  %7008 = vmatprep.subr.bf16.mxu0 %v6295
  %7009 = vmatpush1.bf16.msra.mxu0 %v6294
  %7010 = vmatprep.subr.bf16.mxu0 %v6299
  %7011 = vmatpush1.bf16.msra.mxu0 %v6298
  %7012 = vmatprep.subr.bf16.mxu0 %v6303
  %7013 = vmatpush1.bf16.msra.mxu0 %v6302
  %7014 = vmatprep.subr.bf16.mxu0 %v6307
  %7015 = vmatpush1.bf16.msra.mxu0 %v6306
  %7016 = vmatprep.subr.bf16.mxu0 %v6311
  %7017 = vmatpush1.bf16.msra.mxu0 %v6310
  %7018 = vmatprep.subr.bf16.mxu0 %v6315
  %7019 = vmatpush1.bf16.msra.mxu0 %v6314
  %7020 = vmatprep.subr.bf16.mxu0 %v6319
  %7021 = vmatpush1.bf16.msra.mxu0 %v6318
  %7022 = vmatprep.subr.bf16.mxu0 %v6323
  %7023 = vmatpush1.bf16.msra.mxu0 %v6322
  %7024 = vmatprep.subr.bf16.mxu0 %v6327
  %7025 = vmatpush1.bf16.msra.mxu0 %v6326
  %7026 = vmatprep.subr.bf16.mxu0 %v6331
  %7027 = vmatpush1.bf16.msra.mxu0 %v6330
  %7028 = vmatprep.subr.bf16.mxu0 %v6335
  %7029 = vmatpush1.bf16.msra.mxu0 %v6334
  %7030 = vmatprep.subr.bf16.mxu0 %v6339
  %7031 = vmatpush1.bf16.msra.mxu0 %v6338
  %7032 = vmatprep.subr.bf16.mxu0 %v6343
  %7033 = vmatpush1.bf16.msra.mxu0 %v6342
  %7034 = vmatprep.subr.bf16.mxu0 %v6347
  %7035 = vmatpush1.bf16.msra.mxu0 %v6346
  %7036 = vmatprep.subr.bf16.mxu0 %v6351
  %7037 = vmatpush1.bf16.msra.mxu0 %v6350
  %7038 = vmatprep.subr.bf16.mxu0 %v6355
  %7039 = vmatpush1.bf16.msra.mxu0 %v6354
  %7040 = vmatprep.mubr.bf16.mxu0 %v5253
  %7041 = vmatmul.mubr.bf16.gmra.mrb[0].mxu0 %v5252
  %v7042 = vpop.f32.mrb[0].mxu0
  %v7043 = vadd.f32 0.0, %v7042
  %v7044 = vpop.f32.mrb[0].mxu0
  %v7045 = vadd.f32 0.0, %v7044
  %v7046 = vpop.f32.mrb[0].mxu0
  %v7047 = vadd.f32 0.0, %v7046
  %v7048 = vpop.f32.mrb[0].mxu0
  %v7049 = vadd.f32 0.0, %v7048
  %7050 = vmatprep.mubr.bf16.mxu0 %v5261
  %7051 = vmatmul.mubr.bf16.gmra.mrb[0].mxu0 %v5260
  %v7052 = vpop.f32.mrb[0].mxu0
  %v7053 = vadd.f32 0.0, %v7052
  %v7054 = vpop.f32.mrb[0].mxu0
  %v7055 = vadd.f32 0.0, %v7054
  %v7056 = vpop.f32.mrb[0].mxu0
  %v7057 = vpop.f32.mrb[0].mxu0
  %7058 = vdwg.mxu0
  %7059 = vmatprep.subr.bf16.mxu0 %v6359
  %7060 = vmatpush1.bf16.msra.mxu0 %v6358
  %7061 = vmatprep.subr.bf16.mxu0 %v6363
  %7062 = vmatpush1.bf16.msra.mxu0 %v6362
  %7063 = vmatprep.subr.bf16.mxu0 %v6367
  %7064 = vmatpush1.bf16.msra.mxu0 %v6366
  %7065 = vmatprep.subr.bf16.mxu0 %v6371
  %7066 = vmatpush1.bf16.msra.mxu0 %v6370
  %7067 = vmatprep.subr.bf16.mxu0 %v6375
  %7068 = vmatpush1.bf16.msra.mxu0 %v6374
  %7069 = vmatprep.subr.bf16.mxu0 %v6379
  %7070 = vmatpush1.bf16.msra.mxu0 %v6378
  %7071 = vmatprep.subr.bf16.mxu0 %v6383
  %7072 = vmatpush1.bf16.msra.mxu0 %v6382
  %7073 = vmatprep.subr.bf16.mxu0 %v6387
  %7074 = vmatpush1.bf16.msra.mxu0 %v6386
  %7075 = vmatprep.subr.bf16.mxu0 %v6391
  %7076 = vmatpush1.bf16.msra.mxu0 %v6390
  %7077 = vmatprep.subr.bf16.mxu0 %v6395
  %7078 = vmatpush1.bf16.msra.mxu0 %v6394
  %7079 = vmatprep.subr.bf16.mxu0 %v6399
  %7080 = vmatpush1.bf16.msra.mxu0 %v6398
  %7081 = vmatprep.subr.bf16.mxu0 %v6403
  %7082 = vmatpush1.bf16.msra.mxu0 %v6402
  %7083 = vmatprep.subr.bf16.mxu0 %v6407
  %7084 = vmatpush1.bf16.msra.mxu0 %v6406
  %7085 = vmatprep.subr.bf16.mxu0 %v6411
  %7086 = vmatpush1.bf16.msra.mxu0 %v6410
  %7087 = vmatprep.subr.bf16.mxu0 %v6415
  %7088 = vmatpush1.bf16.msra.mxu0 %v6414
  %7089 = vmatprep.subr.bf16.mxu0 %v6419
  %7090 = vmatpush1.bf16.msra.mxu0 %v6418
  %7091 = vmatprep.mubr.bf16.mxu0 %v5255
  %7092 = vmatmul.mubr.bf16.gmra.mrb[0].mxu0 %v5254
  %v7093 = vpop.f32.mrb[0].mxu0
  %v7094 = vadd.f32 %v7043, %v7093
  %v7095 = vpop.f32.mrb[0].mxu0
  %v7096 = vadd.f32 %v7045, %v7095
  %v7097 = vpop.f32.mrb[0].mxu0
  %v7098 = vadd.f32 %v7047, %v7097
  %v7099 = vpop.f32.mrb[0].mxu0
  %v7100 = vadd.f32 %v7049, %v7099
  %7101 = vmatprep.mubr.bf16.mxu0 %v5263
  %7102 = vmatmul.mubr.bf16.gmra.mrb[0].mxu0 %v5262
  %v7103 = vpop.f32.mrb[0].mxu0
  %v7104 = vadd.f32 %v7053, %v7103
  %v7105 = vpop.f32.mrb[0].mxu0
  %v7106 = vadd.f32 %v7055, %v7105
  %v7107 = vpop.f32.mrb[0].mxu0
  %v7108 = vpop.f32.mrb[0].mxu0
  %7109 = vdwg.mxu0
  %7110 = vmatprep.subr.bf16.mxu0 %v6423
  %7111 = vmatpush1.bf16.msra.mxu0 %v6422
  %7112 = vmatprep.subr.bf16.mxu0 %v6427
  %7113 = vmatpush1.bf16.msra.mxu0 %v6426
  %7114 = vmatprep.subr.bf16.mxu0 %v6431
  %7115 = vmatpush1.bf16.msra.mxu0 %v6430
  %7116 = vmatprep.subr.bf16.mxu0 %v6435
  %7117 = vmatpush1.bf16.msra.mxu0 %v6434
  %7118 = vmatprep.subr.bf16.mxu0 %v6439
  %7119 = vmatpush1.bf16.msra.mxu0 %v6438
  %7120 = vmatprep.subr.bf16.mxu0 %v6443
  %7121 = vmatpush1.bf16.msra.mxu0 %v6442
  %7122 = vmatprep.subr.bf16.mxu0 %v6447
  %7123 = vmatpush1.bf16.msra.mxu0 %v6446
  %7124 = vmatprep.subr.bf16.mxu0 %v6451
  %7125 = vmatpush1.bf16.msra.mxu0 %v6450
  %7126 = vmatprep.subr.bf16.mxu0 %v6455
  %7127 = vmatpush1.bf16.msra.mxu0 %v6454
  %7128 = vmatprep.subr.bf16.mxu0 %v6459
  %7129 = vmatpush1.bf16.msra.mxu0 %v6458
  %7130 = vmatprep.subr.bf16.mxu0 %v6463
  %7131 = vmatpush1.bf16.msra.mxu0 %v6462
  %7132 = vmatprep.subr.bf16.mxu0 %v6467
  %7133 = vmatpush1.bf16.msra.mxu0 %v6466
  %7134 = vmatprep.subr.bf16.mxu0 %v6471
  %7135 = vmatpush1.bf16.msra.mxu0 %v6470
  %7136 = vmatprep.subr.bf16.mxu0 %v6475
  %7137 = vmatpush1.bf16.msra.mxu0 %v6474
  %7138 = vmatprep.subr.bf16.mxu0 %v6479
  %7139 = vmatpush1.bf16.msra.mxu0 %v6478
  %7140 = vmatprep.subr.bf16.mxu0 %v6483
  %7141 = vmatpush1.bf16.msra.mxu0 %v6482
  %7142 = vmatprep.mubr.bf16.mxu0 %v5257
  %7143 = vmatmul.mubr.bf16.gmra.mrb[0].mxu0 %v5256
  %v7144 = vpop.f32.mrb[0].mxu0
  %v7145 = vadd.f32 %v7094, %v7144
  %v7146 = vpop.f32.mrb[0].mxu0
  %v7147 = vadd.f32 %v7096, %v7146
  %v7148 = vpop.f32.mrb[0].mxu0
  %v7149 = vadd.f32 %v7098, %v7148
  %v7150 = vpop.f32.mrb[0].mxu0
  %v7151 = vadd.f32 %v7100, %v7150
  %7152 = vmatprep.mubr.bf16.mxu0 %v5265
  %7153 = vmatmul.mubr.bf16.gmra.mrb[0].mxu0 %v5264
  %v7154 = vpop.f32.mrb[0].mxu0
  %v7155 = vadd.f32 %v7104, %v7154
  %v7156 = vpop.f32.mrb[0].mxu0
  %v7157 = vadd.f32 %v7106, %v7156
  %v7158 = vpop.f32.mrb[0].mxu0
  %v7159 = vpop.f32.mrb[0].mxu0
  %7160 = vdwg.mxu0
  %7161 = vmatprep.subr.bf16.mxu0 %v6487
  %7162 = vmatpush1.bf16.msra.mxu0 %v6486
  %7163 = vmatprep.subr.bf16.mxu0 %v6491
  %7164 = vmatpush1.bf16.msra.mxu0 %v6490
  %7165 = vmatprep.subr.bf16.mxu0 %v6495
  %7166 = vmatpush1.bf16.msra.mxu0 %v6494
  %7167 = vmatprep.subr.bf16.mxu0 %v6499
  %7168 = vmatpush1.bf16.msra.mxu0 %v6498
  %7169 = vmatprep.subr.bf16.mxu0 %v6503
  %7170 = vmatpush1.bf16.msra.mxu0 %v6502
  %7171 = vmatprep.subr.bf16.mxu0 %v6507
  %7172 = vmatpush1.bf16.msra.mxu0 %v6506
  %7173 = vmatprep.subr.bf16.mxu0 %v6511
  %7174 = vmatpush1.bf16.msra.mxu0 %v6510
  %7175 = vmatprep.subr.bf16.mxu0 %v6515
  %7176 = vmatpush1.bf16.msra.mxu0 %v6514
  %7177 = vmatprep.subr.bf16.mxu0 %v6519
  %7178 = vmatpush1.bf16.msra.mxu0 %v6518
  %7179 = vmatprep.subr.bf16.mxu0 %v6523
  %7180 = vmatpush1.bf16.msra.mxu0 %v6522
  %7181 = vmatprep.subr.bf16.mxu0 %v6527
  %7182 = vmatpush1.bf16.msra.mxu0 %v6526
  %7183 = vmatprep.subr.bf16.mxu0 %v6531
  %7184 = vmatpush1.bf16.msra.mxu0 %v6530
  %7185 = vmatprep.subr.bf16.mxu0 %v6535
  %7186 = vmatpush1.bf16.msra.mxu0 %v6534
  %7187 = vmatprep.subr.bf16.mxu0 %v6539
  %7188 = vmatpush1.bf16.msra.mxu0 %v6538
  %7189 = vmatprep.subr.bf16.mxu0 %v6543
  %7190 = vmatpush1.bf16.msra.mxu0 %v6542
  %7191 = vmatprep.subr.bf16.mxu0 %v6547
  %7192 = vmatpush1.bf16.msra.mxu0 %v6546
  %7193 = vmatprep.mubr.bf16.mxu0 %v5259
  %7194 = vmatmul.mubr.bf16.gmra.mrb[0].mxu0 %v5258
  %v7195 = vpop.f32.mrb[0].mxu0
  %v7196 = vadd.f32 %v7145, %v7195
  %v7197 = vpop.f32.mrb[0].mxu0
  %v7198 = vadd.f32 %v7147, %v7197
  %v7199 = vpop.f32.mrb[0].mxu0
  %v7200 = vadd.f32 %v7149, %v7199
  %v7201 = vpop.f32.mrb[0].mxu0
  %v7202 = vadd.f32 %v7151, %v7201
  %7203 = vmatprep.mubr.bf16.mxu0 %v5267
  %7204 = vmatmul.mubr.bf16.gmra.mrb[0].mxu0 %v5266
  %v7205 = vpop.f32.mrb[0].mxu0
  %v7206 = vadd.f32 %v7155, %v7205
  %v7207 = vpop.f32.mrb[0].mxu0
  %v7208 = vadd.f32 %v7157, %v7207
  %v7209 = vpop.f32.mrb[0].mxu0
  %v7210 = vpop.f32.mrb[0].mxu0
  %7211 = vdwg.mxu0
  %v7212 = vrot.slane %v6992, 4
  %v7213 = vadd.f32 %v6992, %v7212
  %v7214 = vrot.slane %v7213, 2
  %v7215 = vadd.f32 %v7213, %v7214
  %v7216 = vrot.slane %v7215, 1
  %v7217 = vadd.f32 %v7215, %v7216
  %v7218 = vrot.slane %v6994, 4
  %v7219 = vadd.f32 %v6994, %v7218
  %v7220 = vrot.slane %v7219, 2
  %v7221 = vadd.f32 %v7219, %v7220
  %v7222 = vrot.slane %v7221, 1
  %v7223 = vadd.f32 %v7221, %v7222
  %v7224 = vrot.slane %v7196, 4
  %v7225 = vadd.f32 %v7196, %v7224
  %v7226 = vrot.slane %v7225, 2
  %v7227 = vadd.f32 %v7225, %v7226
  %v7228 = vrot.slane %v7227, 1
  %v7229 = vadd.f32 %v7227, %v7228
  %v7230 = vrot.slane %v7198, 4
  %v7231 = vadd.f32 %v7198, %v7230
  %v7232 = vrot.slane %v7231, 2
  %v7233 = vadd.f32 %v7231, %v7232
  %v7234 = vrot.slane %v7233, 1
  %v7235 = vadd.f32 %v7233, %v7234
  %v7236 = vrot.slane %v6996, 4
  %v7237 = vadd.f32 %v6996, %v7236
  %v7238 = vrot.slane %v7237, 2
  %v7239 = vadd.f32 %v7237, %v7238
  %v7240 = vrot.slane %v7239, 1
  %v7241 = vadd.f32 %v7239, %v7240
  %v7242 = vrot.slane %v6998, 4
  %v7243 = vadd.f32 %v6998, %v7242
  %v7244 = vrot.slane %v7243, 2
  %v7245 = vadd.f32 %v7243, %v7244
  %v7246 = vrot.slane %v7245, 1
  %v7247 = vadd.f32 %v7245, %v7246
  %v7248 = vrot.slane %v7200, 4
  %v7249 = vadd.f32 %v7200, %v7248
  %v7250 = vrot.slane %v7249, 2
  %v7251 = vadd.f32 %v7249, %v7250
  %v7252 = vrot.slane %v7251, 1
  %v7253 = vadd.f32 %v7251, %v7252
  %v7254 = vrot.slane %v7202, 4
  %v7255 = vadd.f32 %v7202, %v7254
  %v7256 = vrot.slane %v7255, 2
  %v7257 = vadd.f32 %v7255, %v7256
  %v7258 = vrot.slane %v7257, 1
  %v7259 = vadd.f32 %v7257, %v7258
  %v7260 = vrot.slane %v7002, 4
  %v7261 = vadd.f32 %v7002, %v7260
  %v7262 = vrot.slane %v7261, 2
  %v7263 = vadd.f32 %v7261, %v7262
  %v7264 = vrot.slane %v7263, 1
  %v7265 = vadd.f32 %v7263, %v7264
  %v7266 = vrot.slane %v7004, 4
  %v7267 = vadd.f32 %v7004, %v7266
  %v7268 = vrot.slane %v7267, 2
  %v7269 = vadd.f32 %v7267, %v7268
  %v7270 = vrot.slane %v7269, 1
  %v7271 = vadd.f32 %v7269, %v7270
  %v7272 = vrot.slane %v7206, 4
  %v7273 = vadd.f32 %v7206, %v7272
  %v7274 = vrot.slane %v7273, 2
  %v7275 = vadd.f32 %v7273, %v7274
  %v7276 = vrot.slane %v7275, 1
  %v7277 = vadd.f32 %v7275, %v7276
  %v7278 = vrot.slane %v7208, 4
  %v7279 = vadd.f32 %v7208, %v7278
  %v7280 = vrot.slane %v7279, 2
  %v7281 = vadd.f32 %v7279, %v7280
  %v7282 = vrot.slane %v7281, 1
  %v7283 = vadd.f32 %v7281, %v7282
  %v7284 = vmul.f32 %v7217, %v4139
  %v7285 = vmul.f32 %v7223, %v4139
  %v7286 = vmul.f32 %v7229, %v4139
  %v7287 = vmul.f32 %v7235, %v4139
  %v7288 = vmul.f32 %v7241, %v4139
  %v7289 = vmul.f32 %v7247, %v4139
  %v7290 = vmul.f32 %v7253, %v4139
  %v7291 = vmul.f32 %v7259, %v4139
  %v7292 = vmul.f32 %v7265, %v4139
  %v7293 = vmul.f32 %v7271, %v4139
  %v7294 = vmul.f32 %v7277, %v4139
  %v7295 = vmul.f32 %v7283, %v4139
  %v7296 = vsub.f32 %v6992, %v7284
  %v7297 = vsub.f32 %v6994, %v7285
  %v7298 = vsub.f32 %v7196, %v7286
  %v7299 = vsub.f32 %v7198, %v7287
  %v7300 = vsub.f32 %v6996, %v7288
  %v7301 = vsub.f32 %v6998, %v7289
  %v7302 = vsub.f32 %v7200, %v7290
  %v7303 = vsub.f32 %v7202, %v7291
  %v7304 = vsub.f32 %v7002, %v7292
  %v7305 = vsub.f32 %v7004, %v7293
  %v7306 = vsub.f32 %v7206, %v7294
  %v7307 = vsub.f32 %v7208, %v7295
  %v7308 = vmul.f32 %v7296, %v7296
  %v7309 = vmul.f32 %v7297, %v7297
  %v7310 = vmul.f32 %v7298, %v7298
  %v7311 = vmul.f32 %v7299, %v7299
  %v7312 = vmul.f32 %v7300, %v7300
  %v7313 = vmul.f32 %v7301, %v7301
  %v7314 = vmul.f32 %v7302, %v7302
  %v7315 = vmul.f32 %v7303, %v7303
  %v7316 = vmul.f32 %v7304, %v7304
  %v7317 = vmul.f32 %v7305, %v7305
  %v7318 = vmul.f32 %v7306, %v7306
  %v7319 = vmul.f32 %v7307, %v7307
  %v7320 = vrot.slane %v7308, 4
  %v7321 = vadd.f32 %v7308, %v7320
  %v7322 = vrot.slane %v7321, 2
  %v7323 = vadd.f32 %v7321, %v7322
  %v7324 = vrot.slane %v7323, 1
  %v7325 = vadd.f32 %v7323, %v7324
  %v7326 = vrot.slane %v7309, 4
  %v7327 = vadd.f32 %v7309, %v7326
  %v7328 = vrot.slane %v7327, 2
  %v7329 = vadd.f32 %v7327, %v7328
  %v7330 = vrot.slane %v7329, 1
  %v7331 = vadd.f32 %v7329, %v7330
  %v7332 = vrot.slane %v7310, 4
  %v7333 = vadd.f32 %v7310, %v7332
  %v7334 = vrot.slane %v7333, 2
  %v7335 = vadd.f32 %v7333, %v7334
  %v7336 = vrot.slane %v7335, 1
  %v7337 = vadd.f32 %v7335, %v7336
  %v7338 = vrot.slane %v7311, 4
  %v7339 = vadd.f32 %v7311, %v7338
  %v7340 = vrot.slane %v7339, 2
  %v7341 = vadd.f32 %v7339, %v7340
  %v7342 = vrot.slane %v7341, 1
  %v7343 = vadd.f32 %v7341, %v7342
  %v7344 = vrot.slane %v7312, 4
  %v7345 = vadd.f32 %v7312, %v7344
  %v7346 = vrot.slane %v7345, 2
  %v7347 = vadd.f32 %v7345, %v7346
  %v7348 = vrot.slane %v7347, 1
  %v7349 = vadd.f32 %v7347, %v7348
  %v7350 = vrot.slane %v7313, 4
  %v7351 = vadd.f32 %v7313, %v7350
  %v7352 = vrot.slane %v7351, 2
  %v7353 = vadd.f32 %v7351, %v7352
  %v7354 = vrot.slane %v7353, 1
  %v7355 = vadd.f32 %v7353, %v7354
  %v7356 = vrot.slane %v7314, 4
  %v7357 = vadd.f32 %v7314, %v7356
  %v7358 = vrot.slane %v7357, 2
  %v7359 = vadd.f32 %v7357, %v7358
  %v7360 = vrot.slane %v7359, 1
  %v7361 = vadd.f32 %v7359, %v7360
  %v7362 = vrot.slane %v7315, 4
  %v7363 = vadd.f32 %v7315, %v7362
  %v7364 = vrot.slane %v7363, 2
  %v7365 = vadd.f32 %v7363, %v7364
  %v7366 = vrot.slane %v7365, 1
  %v7367 = vadd.f32 %v7365, %v7366
  %v7368 = vrot.slane %v7316, 4
  %v7369 = vadd.f32 %v7316, %v7368
  %v7370 = vrot.slane %v7369, 2
  %v7371 = vadd.f32 %v7369, %v7370
  %v7372 = vrot.slane %v7371, 1
  %v7373 = vadd.f32 %v7371, %v7372
  %v7374 = vrot.slane %v7317, 4
  %v7375 = vadd.f32 %v7317, %v7374
  %v7376 = vrot.slane %v7375, 2
  %v7377 = vadd.f32 %v7375, %v7376
  %v7378 = vrot.slane %v7377, 1
  %v7379 = vadd.f32 %v7377, %v7378
  %v7380 = vrot.slane %v7318, 4
  %v7381 = vadd.f32 %v7318, %v7380
  %v7382 = vrot.slane %v7381, 2
  %v7383 = vadd.f32 %v7381, %v7382
  %v7384 = vrot.slane %v7383, 1
  %v7385 = vadd.f32 %v7383, %v7384
  %v7386 = vrot.slane %v7319, 4
  %v7387 = vadd.f32 %v7319, %v7386
  %v7388 = vrot.slane %v7387, 2
  %v7389 = vadd.f32 %v7387, %v7388
  %v7390 = vrot.slane %v7389, 1
  %v7391 = vadd.f32 %v7389, %v7390
  %v7392 = vmul.f32 %v7325, %v4139
  %v7393 = vmul.f32 %v7331, %v4139
  %v7394 = vmul.f32 %v7337, %v4139
  %v7395 = vmul.f32 %v7343, %v4139
  %v7396 = vmul.f32 %v7349, %v4139
  %v7397 = vmul.f32 %v7355, %v4139
  %v7398 = vmul.f32 %v7361, %v4139
  %v7399 = vmul.f32 %v7367, %v4139
  %v7400 = vmul.f32 %v7373, %v4139
  %v7401 = vmul.f32 %v7379, %v4139
  %v7402 = vmul.f32 %v7385, %v4139
  %v7403 = vmul.f32 %v7391, %v4139
  %v7404 = vld [vmem:[%s4] sm:$0xff]
  %v7405 = vadd.f32 %v7392, 1e-05
  %v7406 = vadd.f32 %v7393, 1e-05
  %v7407 = vadd.f32 %v7394, 1e-05
  %v7408 = vadd.f32 %v7395, 1e-05
  %v7409 = vadd.f32 %v7396, 1e-05
  %v7410 = vadd.f32 %v7397, 1e-05
  %v7411 = vadd.f32 %v7398, 1e-05
  %v7412 = vadd.f32 %v7399, 1e-05
  %v7413 = vadd.f32 %v7400, 1e-05
  %v7414 = vadd.f32 %v7401, 1e-05
  %v7415 = vadd.f32 %v7402, 1e-05
  %v7416 = vadd.f32 %v7403, 1e-05
  %v7417 = vrsqrt.pop %v7405
  %v7418 = vrsqrt.pop %v7406
  %v7419 = vrsqrt.pop %v7407
  %v7420 = vrsqrt.pop %v7408
  %v7421 = vrsqrt.pop %v7409
  %v7422 = vrsqrt.pop %v7410
  %v7423 = vrsqrt.pop %v7411
  %v7424 = vrsqrt.pop %v7412
  %v7425 = vrsqrt.pop %v7413
  %v7426 = vrsqrt.pop %v7414
  %v7427 = vrsqrt.pop %v7415
  %v7428 = vrsqrt.pop %v7416
  %v7441 = vcombine.low %v7417, %v7418
  %v7442 = vcombine.low %v7419, %v7420
  %v7444 = vunpack.c.l.s4 1983009808
  %v7445 = vunpack.c.0.s8 %v7444
  %v7446 = vlaneseq
  %v7447 = vshrl.u32 %v7446, 7
  %v7448 = vsub.s32 %v7445, %v7447
  %v7449 = vrot.slane %v7441, %v7448
  %v7451 = vunpack.c.l.s4 1983009808
  %v7452 = vunpack.c.0.s8 %v7451
  %v7453 = vlaneseq
  %v7454 = vshrl.u32 %v7453, 7
  %v7455 = vsub.s32 %v7452, %v7454
  %v7456 = vrot.slane %v7442, %v7455
  %v7457 = vcombine.low %v7449, %v7456
  %v7458 = vcombine.low %v7421, %v7422
  %v7459 = vcombine.low %v7423, %v7424
  %v7461 = vunpack.c.l.s4 1983009808
  %v7462 = vunpack.c.0.s8 %v7461
  %v7463 = vlaneseq
  %v7464 = vshrl.u32 %v7463, 7
  %v7465 = vsub.s32 %v7462, %v7464
  %v7466 = vrot.slane %v7458, %v7465
  %v7468 = vunpack.c.l.s4 1983009808
  %v7469 = vunpack.c.0.s8 %v7468
  %v7470 = vlaneseq
  %v7471 = vshrl.u32 %v7470, 7
  %v7472 = vsub.s32 %v7469, %v7471
  %v7473 = vrot.slane %v7459, %v7472
  %v7474 = vcombine.low %v7466, %v7473
  %v7475 = vcombine.low %v7425, %v7426
  %v7476 = vcombine.low %v7427, %v7428
  %v7478 = vunpack.c.l.s4 1983009808
  %v7479 = vunpack.c.0.s8 %v7478
  %v7480 = vlaneseq
  %v7481 = vshrl.u32 %v7480, 7
  %v7482 = vsub.s32 %v7479, %v7481
  %v7483 = vrot.slane %v7475, %v7482
  %v7485 = vunpack.c.l.s4 1983009808
  %v7486 = vunpack.c.0.s8 %v7485
  %v7487 = vlaneseq
  %v7488 = vshrl.u32 %v7487, 7
  %v7489 = vsub.s32 %v7486, %v7488
  %v7490 = vrot.slane %v7476, %v7489
  %v7491 = vcombine.low %v7483, %v7490
  %v7495 = vmul.f32 %v7404, %v7457
  %v7496 = vmul.f32 %v7404, %v7474
  %v7497 = vmul.f32 %v7404, %v7491
  %v7501 = vlaneseq
  %v7502 = vshrl.u32 %v7501, 7
  %v7503 = vsub.s32 0, %v7502
  %v7504 = vrot.slane %v7495, %v7503
  %v7505 = vlaneseq
  %v7506 = vshrl.u32 %v7505, 7
  %v7507 = vsub.s32 2, %v7506
  %v7508 = vrot.slane %v7495, %v7507
  %v7509 = vlaneseq
  %v7510 = vshrl.u32 %v7509, 7
  %v7511 = vsub.s32 4, %v7510
  %v7512 = vrot.slane %v7495, %v7511
  %v7513 = vlaneseq
  %v7514 = vshrl.u32 %v7513, 7
  %v7515 = vsub.s32 6, %v7514
  %v7516 = vrot.slane %v7495, %v7515
  %v7517 = vlaneseq
  %v7518 = vshrl.u32 %v7517, 7
  %v7519 = vsub.s32 0, %v7518
  %v7520 = vrot.slane %v7496, %v7519
  %v7521 = vlaneseq
  %v7522 = vshrl.u32 %v7521, 7
  %v7523 = vsub.s32 2, %v7522
  %v7524 = vrot.slane %v7496, %v7523
  %v7525 = vlaneseq
  %v7526 = vshrl.u32 %v7525, 7
  %v7527 = vsub.s32 4, %v7526
  %v7528 = vrot.slane %v7496, %v7527
  %v7529 = vlaneseq
  %v7530 = vshrl.u32 %v7529, 7
  %v7531 = vsub.s32 6, %v7530
  %v7532 = vrot.slane %v7496, %v7531
  %v7533 = vlaneseq
  %v7534 = vshrl.u32 %v7533, 7
  %v7535 = vsub.s32 0, %v7534
  %v7536 = vrot.slane %v7497, %v7535
  %v7537 = vlaneseq
  %v7538 = vshrl.u32 %v7537, 7
  %v7539 = vsub.s32 2, %v7538
  %v7540 = vrot.slane %v7497, %v7539
  %v7541 = vlaneseq
  %v7542 = vshrl.u32 %v7541, 7
  %v7543 = vsub.s32 4, %v7542
  %v7544 = vrot.slane %v7497, %v7543
  %v7545 = vlaneseq
  %v7546 = vshrl.u32 %v7545, 7
  %v7547 = vsub.s32 6, %v7546
  %v7548 = vrot.slane %v7497, %v7547
  %v7561 = vmul.f32 %v7284, %v7504
  %v7562 = vmul.f32 %v7285, %v7508
  %v7563 = vmul.f32 %v7286, %v7512
  %v7564 = vmul.f32 %v7287, %v7516
  %v7565 = vmul.f32 %v7288, %v7520
  %v7566 = vmul.f32 %v7289, %v7524
  %v7567 = vmul.f32 %v7290, %v7528
  %v7568 = vmul.f32 %v7291, %v7532
  %v7569 = vmul.f32 %v7292, %v7536
  %v7570 = vmul.f32 %v7293, %v7540
  %v7571 = vmul.f32 %v7294, %v7544
  %v7572 = vmul.f32 %v7295, %v7548
  %v7585 = vcombine.low %v7561, %v7562
  %v7586 = vcombine.low %v7563, %v7564
  %v7588 = vunpack.c.l.s4 1983009808
  %v7589 = vunpack.c.0.s8 %v7588
  %v7590 = vlaneseq
  %v7591 = vshrl.u32 %v7590, 7
  %v7592 = vsub.s32 %v7589, %v7591
  %v7593 = vrot.slane %v7585, %v7592
  %v7595 = vunpack.c.l.s4 1983009808
  %v7596 = vunpack.c.0.s8 %v7595
  %v7597 = vlaneseq
  %v7598 = vshrl.u32 %v7597, 7
  %v7599 = vsub.s32 %v7596, %v7598
  %v7600 = vrot.slane %v7586, %v7599
  %v7601 = vcombine.low %v7593, %v7600
  %v7602 = vcombine.low %v7565, %v7566
  %v7603 = vcombine.low %v7567, %v7568
  %v7605 = vunpack.c.l.s4 1983009808
  %v7606 = vunpack.c.0.s8 %v7605
  %v7607 = vlaneseq
  %v7608 = vshrl.u32 %v7607, 7
  %v7609 = vsub.s32 %v7606, %v7608
  %v7610 = vrot.slane %v7602, %v7609
  %v7612 = vunpack.c.l.s4 1983009808
  %v7613 = vunpack.c.0.s8 %v7612
  %v7614 = vlaneseq
  %v7615 = vshrl.u32 %v7614, 7
  %v7616 = vsub.s32 %v7613, %v7615
  %v7617 = vrot.slane %v7603, %v7616
  %v7618 = vcombine.low %v7610, %v7617
  %v7619 = vcombine.low %v7569, %v7570
  %v7620 = vcombine.low %v7571, %v7572
  %v7622 = vunpack.c.l.s4 1983009808
  %v7623 = vunpack.c.0.s8 %v7622
  %v7624 = vlaneseq
  %v7625 = vshrl.u32 %v7624, 7
  %v7626 = vsub.s32 %v7623, %v7625
  %v7627 = vrot.slane %v7619, %v7626
  %v7629 = vunpack.c.l.s4 1983009808
  %v7630 = vunpack.c.0.s8 %v7629
  %v7631 = vlaneseq
  %v7632 = vshrl.u32 %v7631, 7
  %v7633 = vsub.s32 %v7630, %v7632
  %v7634 = vrot.slane %v7620, %v7633
  %v7635 = vcombine.low %v7627, %v7634
  %v7636 = vrot.slane %v7601, 7
  %v7637 = vrot.slane %v7618, 7
  %v7638 = vrot.slane %v7635, 7
  %v7642 = vsub.f32 %v7404, %v7636
  %v7643 = vsub.f32 %v7404, %v7637
  %v7644 = vsub.f32 %v7404, %v7638
  %v7645 = vlaneseq
  %v7646 = vshrl.u32 %v7645, 7
  %v7647 = vsub.s32 0, %v7646
  %v7648 = vrot.slane %v7504, %v7647
  %v7649 = vlaneseq
  %v7650 = vshrl.u32 %v7649, 7
  %v7651 = vsub.s32 0, %v7650
  %v7652 = vrot.slane %v7508, %v7651
  %v7653 = vlaneseq
  %v7654 = vshrl.u32 %v7653, 7
  %v7655 = vsub.s32 0, %v7654
  %v7656 = vrot.slane %v7512, %v7655
  %v7657 = vlaneseq
  %v7658 = vshrl.u32 %v7657, 7
  %v7659 = vsub.s32 0, %v7658
  %v7660 = vrot.slane %v7516, %v7659
  %v7661 = vlaneseq
  %v7662 = vshrl.u32 %v7661, 7
  %v7663 = vsub.s32 0, %v7662
  %v7664 = vrot.slane %v7520, %v7663
  %v7665 = vlaneseq
  %v7666 = vshrl.u32 %v7665, 7
  %v7667 = vsub.s32 0, %v7666
  %v7668 = vrot.slane %v7524, %v7667
  %v7669 = vlaneseq
  %v7670 = vshrl.u32 %v7669, 7
  %v7671 = vsub.s32 0, %v7670
  %v7672 = vrot.slane %v7528, %v7671
  %v7673 = vlaneseq
  %v7674 = vshrl.u32 %v7673, 7
  %v7675 = vsub.s32 0, %v7674
  %v7676 = vrot.slane %v7532, %v7675
  %v7677 = vlaneseq
  %v7678 = vshrl.u32 %v7677, 7
  %v7679 = vsub.s32 0, %v7678
  %v7680 = vrot.slane %v7536, %v7679
  %v7681 = vlaneseq
  %v7682 = vshrl.u32 %v7681, 7
  %v7683 = vsub.s32 0, %v7682
  %v7684 = vrot.slane %v7540, %v7683
  %v7685 = vlaneseq
  %v7686 = vshrl.u32 %v7685, 7
  %v7687 = vsub.s32 0, %v7686
  %v7688 = vrot.slane %v7544, %v7687
  %v7689 = vlaneseq
  %v7690 = vshrl.u32 %v7689, 7
  %v7691 = vsub.s32 0, %v7690
  %v7692 = vrot.slane %v7548, %v7691
  %v7693 = vmul.f32 %v6992, %v7648
  %v7694 = vmul.f32 %v6994, %v7652
  %v7695 = vmul.f32 %v7196, %v7656
  %v7696 = vmul.f32 %v7198, %v7660
  %v7697 = vmul.f32 %v6996, %v7664
  %v7698 = vmul.f32 %v6998, %v7668
  %v7699 = vmul.f32 %v7200, %v7672
  %v7700 = vmul.f32 %v7202, %v7676
  %v7701 = vmul.f32 %v7002, %v7680
  %v7702 = vmul.f32 %v7004, %v7684
  %v7703 = vmul.f32 %v7206, %v7688
  %v7704 = vmul.f32 %v7208, %v7692
  %v7708 = vlaneseq
  %v7709 = vshrl.u32 %v7708, 7
  %v7710 = vsub.s32 1, %v7709
  %v7711 = vrot.slane %v7642, %v7710
  %v7712 = vlaneseq
  %v7713 = vshrl.u32 %v7712, 7
  %v7714 = vsub.s32 3, %v7713
  %v7715 = vrot.slane %v7642, %v7714
  %v7716 = vlaneseq
  %v7717 = vshrl.u32 %v7716, 7
  %v7718 = vsub.s32 5, %v7717
  %v7719 = vrot.slane %v7642, %v7718
  %v7720 = vlaneseq
  %v7721 = vshrl.u32 %v7720, 7
  %v7722 = vsub.s32 7, %v7721
  %v7723 = vrot.slane %v7642, %v7722
  %v7724 = vlaneseq
  %v7725 = vshrl.u32 %v7724, 7
  %v7726 = vsub.s32 1, %v7725
  %v7727 = vrot.slane %v7643, %v7726
  %v7728 = vlaneseq
  %v7729 = vshrl.u32 %v7728, 7
  %v7730 = vsub.s32 3, %v7729
  %v7731 = vrot.slane %v7643, %v7730
  %v7732 = vlaneseq
  %v7733 = vshrl.u32 %v7732, 7
  %v7734 = vsub.s32 5, %v7733
  %v7735 = vrot.slane %v7643, %v7734
  %v7736 = vlaneseq
  %v7737 = vshrl.u32 %v7736, 7
  %v7738 = vsub.s32 7, %v7737
  %v7739 = vrot.slane %v7643, %v7738
  %v7740 = vlaneseq
  %v7741 = vshrl.u32 %v7740, 7
  %v7742 = vsub.s32 1, %v7741
  %v7743 = vrot.slane %v7644, %v7742
  %v7744 = vlaneseq
  %v7745 = vshrl.u32 %v7744, 7
  %v7746 = vsub.s32 3, %v7745
  %v7747 = vrot.slane %v7644, %v7746
  %v7748 = vlaneseq
  %v7749 = vshrl.u32 %v7748, 7
  %v7750 = vsub.s32 5, %v7749
  %v7751 = vrot.slane %v7644, %v7750
  %v7752 = vlaneseq
  %v7753 = vshrl.u32 %v7752, 7
  %v7754 = vsub.s32 7, %v7753
  %v7755 = vrot.slane %v7644, %v7754
  %v7768 = vlaneseq
  %v7769 = vshrl.u32 %v7768, 7
  %v7770 = vsub.s32 1, %v7769
  %v7771 = vrot.slane %v7711, %v7770
  %v7772 = vlaneseq
  %v7773 = vshrl.u32 %v7772, 7
  %v7774 = vsub.s32 1, %v7773
  %v7775 = vrot.slane %v7715, %v7774
  %v7776 = vlaneseq
  %v7777 = vshrl.u32 %v7776, 7
  %v7778 = vsub.s32 1, %v7777
  %v7779 = vrot.slane %v7719, %v7778
  %v7780 = vlaneseq
  %v7781 = vshrl.u32 %v7780, 7
  %v7782 = vsub.s32 1, %v7781
  %v7783 = vrot.slane %v7723, %v7782
  %v7784 = vlaneseq
  %v7785 = vshrl.u32 %v7784, 7
  %v7786 = vsub.s32 1, %v7785
  %v7787 = vrot.slane %v7727, %v7786
  %v7788 = vlaneseq
  %v7789 = vshrl.u32 %v7788, 7
  %v7790 = vsub.s32 1, %v7789
  %v7791 = vrot.slane %v7731, %v7790
  %v7792 = vlaneseq
  %v7793 = vshrl.u32 %v7792, 7
  %v7794 = vsub.s32 1, %v7793
  %v7795 = vrot.slane %v7735, %v7794
  %v7796 = vlaneseq
  %v7797 = vshrl.u32 %v7796, 7
  %v7798 = vsub.s32 1, %v7797
  %v7799 = vrot.slane %v7739, %v7798
  %v7800 = vlaneseq
  %v7801 = vshrl.u32 %v7800, 7
  %v7802 = vsub.s32 1, %v7801
  %v7803 = vrot.slane %v7743, %v7802
  %v7804 = vlaneseq
  %v7805 = vshrl.u32 %v7804, 7
  %v7806 = vsub.s32 1, %v7805
  %v7807 = vrot.slane %v7747, %v7806
  %v7808 = vlaneseq
  %v7809 = vshrl.u32 %v7808, 7
  %v7810 = vsub.s32 1, %v7809
  %v7811 = vrot.slane %v7751, %v7810
  %v7812 = vlaneseq
  %v7813 = vshrl.u32 %v7812, 7
  %v7814 = vsub.s32 1, %v7813
  %v7815 = vrot.slane %v7755, %v7814
  %v7816 = vadd.f32 %v7693, %v7771
  %v7817 = vadd.f32 %v7694, %v7775
  %v7818 = vadd.f32 %v7695, %v7779
  %v7819 = vadd.f32 %v7696, %v7783
  %v7820 = vadd.f32 %v7697, %v7787
  %v7821 = vadd.f32 %v7698, %v7791
  %v7822 = vadd.f32 %v7699, %v7795
  %v7823 = vadd.f32 %v7700, %v7799
  %v7824 = vadd.f32 %v7701, %v7803
  %v7825 = vadd.f32 %v7702, %v7807
  %v7826 = vadd.f32 %v7703, %v7811
  %v7827 = vadd.f32 %v7704, %v7815
  %v7828 = vmax.f32 %v7816, 0.0
  %v7829 = vmax.f32 %v7817, 0.0
  %v7830 = vmax.f32 %v7818, 0.0
  %v7831 = vmax.f32 %v7819, 0.0
  %v7832 = vmax.f32 %v7820, 0.0
  %v7833 = vmax.f32 %v7821, 0.0
  %v7834 = vmax.f32 %v7822, 0.0
  %v7835 = vmax.f32 %v7823, 0.0
  %v7836 = vmax.f32 %v7824, 0.0
  %v7837 = vmax.f32 %v7825, 0.0
  %v7838 = vmax.f32 %v7826, 0.0
  %v7839 = vmax.f32 %v7827, 0.0
  %v7840 = vpack.c.bf16 %v7832, %v7828
  %v7841 = vpack.c.bf16 %v7833, %v7829
  %v7842 = vpack.c.bf16 %v7834, %v7830
  %v7843 = vpack.c.bf16 %v7835, %v7831
  %v7844 = vpack.c.bf16 %v7836, %v7836
  %v7845 = vpack.c.bf16 %v7837, %v7837
  %v7846 = vpack.c.bf16 %v7838, %v7838
  %v7847 = vpack.c.bf16 %v7839, %v7839
  %v7848 = vld [vmem:[%s5] sm:$0xf]
  %v7849 = vld [vmem:[%s5 + $0x4] sm:$0xf]
  %v7850 = vld [vmem:[%s5 + $0x8] sm:$0xf]
  %v7851 = vld [vmem:[%s5 + $0xc] sm:$0xf]
  %v7852 = vld [vmem:[%s5 + $0x10] sm:$0xf]
  %v7853 = vld [vmem:[%s5 + $0x14] sm:$0xf]
  %v7854 = vld [vmem:[%s5 + $0x18] sm:$0xf]
  %v7855 = vld [vmem:[%s5 + $0x1c] sm:$0xf]
  %v7856 = vld [vmem:[%s5 + $0x20] sm:$0xf]
  %v7857 = vld [vmem:[%s5 + $0x24] sm:$0xf]
  %v7858 = vld [vmem:[%s5 + $0x28] sm:$0xf]
  %v7859 = vld [vmem:[%s5 + $0x2c] sm:$0xf]
  %v7860 = vld [vmem:[%s5 + $0x30] sm:$0xf]
  %v7861 = vld [vmem:[%s5 + $0x34] sm:$0xf]
  %v7862 = vld [vmem:[%s5 + $0x38] sm:$0xf]
  %v7863 = vld [vmem:[%s5 + $0x3c] sm:$0xf]
  %v7864 = vld [vmem:[%s5 + $0x40] sm:$0xf]
  %v7865 = vld [vmem:[%s5 + $0x44] sm:$0xf]
  %v7866 = vld [vmem:[%s5 + $0x48] sm:$0xf]
  %v7867 = vld [vmem:[%s5 + $0x4c] sm:$0xf]
  %v7868 = vld [vmem:[%s5 + $0x50] sm:$0xf]
  %v7869 = vld [vmem:[%s5 + $0x54] sm:$0xf]
  %v7870 = vld [vmem:[%s5 + $0x58] sm:$0xf]
  %v7871 = vld [vmem:[%s5 + $0x5c] sm:$0xf]
  %v7872 = vld [vmem:[%s5 + $0x60] sm:$0xf]
  %v7873 = vld [vmem:[%s5 + $0x64] sm:$0xf]
  %v7874 = vld [vmem:[%s5 + $0x68] sm:$0xf]
  %v7875 = vld [vmem:[%s5 + $0x6c] sm:$0xf]
  %v7876 = vld [vmem:[%s5 + $0x70] sm:$0xf]
  %v7877 = vld [vmem:[%s5 + $0x74] sm:$0xf]
  %v7878 = vld [vmem:[%s5 + $0x78] sm:$0xf]
  %v7879 = vld [vmem:[%s5 + $0x7c] sm:$0xf]
  %v7880 = vld [vmem:[%s5 + $0x80] sm:$0xf]
  %v7881 = vld [vmem:[%s5 + $0x84] sm:$0xf]
  %v7882 = vld [vmem:[%s5 + $0x88] sm:$0xf]
  %v7883 = vld [vmem:[%s5 + $0x8c] sm:$0xf]
  %v7884 = vld [vmem:[%s5 + $0x90] sm:$0xf]
  %v7885 = vld [vmem:[%s5 + $0x94] sm:$0xf]
  %v7886 = vld [vmem:[%s5 + $0x98] sm:$0xf]
  %v7887 = vld [vmem:[%s5 + $0x9c] sm:$0xf]
  %v7888 = vld [vmem:[%s5 + $0xa0] sm:$0xf]
  %v7889 = vld [vmem:[%s5 + $0xa4] sm:$0xf]
  %v7890 = vld [vmem:[%s5 + $0xa8] sm:$0xf]
  %v7891 = vld [vmem:[%s5 + $0xac] sm:$0xf]
  %v7892 = vld [vmem:[%s5 + $0xb0] sm:$0xf]
  %v7893 = vld [vmem:[%s5 + $0xb4] sm:$0xf]
  %v7894 = vld [vmem:[%s5 + $0xb8] sm:$0xf]
  %v7895 = vld [vmem:[%s5 + $0xbc] sm:$0xf]
  %v7896 = vld [vmem:[%s5 + $0xc0] sm:$0xf]
  %v7897 = vld [vmem:[%s5 + $0xc4] sm:$0xf]
  %v7898 = vld [vmem:[%s5 + $0xc8] sm:$0xf]
  %v7899 = vld [vmem:[%s5 + $0xcc] sm:$0xf]
  %v7900 = vld [vmem:[%s5 + $0xd0] sm:$0xf]
  %v7901 = vld [vmem:[%s5 + $0xd4] sm:$0xf]
  %v7902 = vld [vmem:[%s5 + $0xd8] sm:$0xf]
  %v7903 = vld [vmem:[%s5 + $0xdc] sm:$0xf]
  %v7904 = vld [vmem:[%s5 + $0xe0] sm:$0xf]
  %v7905 = vld [vmem:[%s5 + $0xe4] sm:$0xf]
  %v7906 = vld [vmem:[%s5 + $0xe8] sm:$0xf]
  %v7907 = vld [vmem:[%s5 + $0xec] sm:$0xf]
  %v7908 = vld [vmem:[%s5 + $0xf0] sm:$0xf]
  %v7909 = vld [vmem:[%s5 + $0xf4] sm:$0xf]
  %v7910 = vld [vmem:[%s5 + $0xf8] sm:$0xf]
  %v7911 = vld [vmem:[%s5 + $0xfc] sm:$0xf]
  %v7976 = vunpack.c.l.b16 %v7848
  %v7977 = vunpack.c.l.b16 %v7849
  %v7978 = vunpack.c.l.b16 %v7850
  %v7979 = vunpack.c.l.b16 %v7851
  %v7980 = vunpack.c.l.b16 %v7852
  %v7981 = vunpack.c.l.b16 %v7853
  %v7982 = vunpack.c.l.b16 %v7854
  %v7983 = vunpack.c.l.b16 %v7855
  %v7984 = vunpack.c.l.b16 %v7856
  %v7985 = vunpack.c.l.b16 %v7857
  %v7986 = vunpack.c.l.b16 %v7858
  %v7987 = vunpack.c.l.b16 %v7859
  %v7988 = vunpack.c.l.b16 %v7860
  %v7989 = vunpack.c.l.b16 %v7861
  %v7990 = vunpack.c.l.b16 %v7862
  %v7991 = vunpack.c.l.b16 %v7863
  %v7992 = vunpack.c.l.b16 %v7864
  %v7993 = vunpack.c.l.b16 %v7865
  %v7994 = vunpack.c.l.b16 %v7866
  %v7995 = vunpack.c.l.b16 %v7867
  %v7996 = vunpack.c.l.b16 %v7868
  %v7997 = vunpack.c.l.b16 %v7869
  %v7998 = vunpack.c.l.b16 %v7870
  %v7999 = vunpack.c.l.b16 %v7871
  %v8000 = vunpack.c.l.b16 %v7872
  %v8001 = vunpack.c.l.b16 %v7873
  %v8002 = vunpack.c.l.b16 %v7874
  %v8003 = vunpack.c.l.b16 %v7875
  %v8004 = vunpack.c.l.b16 %v7876
  %v8005 = vunpack.c.l.b16 %v7877
  %v8006 = vunpack.c.l.b16 %v7878
  %v8007 = vunpack.c.l.b16 %v7879
  %v8008 = vunpack.c.l.b16 %v7880
  %v8009 = vunpack.c.l.b16 %v7881
  %v8010 = vunpack.c.l.b16 %v7882
  %v8011 = vunpack.c.l.b16 %v7883
  %v8012 = vunpack.c.l.b16 %v7884
  %v8013 = vunpack.c.l.b16 %v7885
  %v8014 = vunpack.c.l.b16 %v7886
  %v8015 = vunpack.c.l.b16 %v7887
  %v8016 = vunpack.c.l.b16 %v7888
  %v8017 = vunpack.c.l.b16 %v7889
  %v8018 = vunpack.c.l.b16 %v7890
  %v8019 = vunpack.c.l.b16 %v7891
  %v8020 = vunpack.c.l.b16 %v7892
  %v8021 = vunpack.c.l.b16 %v7893
  %v8022 = vunpack.c.l.b16 %v7894
  %v8023 = vunpack.c.l.b16 %v7895
  %v8024 = vunpack.c.l.b16 %v7896
  %v8025 = vunpack.c.l.b16 %v7897
  %v8026 = vunpack.c.l.b16 %v7898
  %v8027 = vunpack.c.l.b16 %v7899
  %v8028 = vunpack.c.l.b16 %v7900
  %v8029 = vunpack.c.l.b16 %v7901
  %v8030 = vunpack.c.l.b16 %v7902
  %v8031 = vunpack.c.l.b16 %v7903
  %v8032 = vunpack.c.l.b16 %v7904
  %v8033 = vunpack.c.l.b16 %v7905
  %v8034 = vunpack.c.l.b16 %v7906
  %v8035 = vunpack.c.l.b16 %v7907
  %v8036 = vunpack.c.l.b16 %v7908
  %v8037 = vunpack.c.l.b16 %v7909
  %v8038 = vunpack.c.l.b16 %v7910
  %v8039 = vunpack.c.l.b16 %v7911
  %v8040 = vpack.c.b16 %v7977, %v7976
  %v8041 = vpack.c.b16 %v7979, %v7978
  %v8042 = vpack.c.b16 %v7981, %v7980
  %v8043 = vpack.c.b16 %v7983, %v7982
  %v8044 = vpack.c.b16 %v7985, %v7984
  %v8045 = vpack.c.b16 %v7987, %v7986
  %v8046 = vpack.c.b16 %v7989, %v7988
  %v8047 = vpack.c.b16 %v7991, %v7990
  %v8048 = vpack.c.b16 %v7993, %v7992
  %v8049 = vpack.c.b16 %v7995, %v7994
  %v8050 = vpack.c.b16 %v7997, %v7996
  %v8051 = vpack.c.b16 %v7999, %v7998
  %v8052 = vpack.c.b16 %v8001, %v8000
  %v8053 = vpack.c.b16 %v8003, %v8002
  %v8054 = vpack.c.b16 %v8005, %v8004
  %v8055 = vpack.c.b16 %v8007, %v8006
  %v8056 = vpack.c.b16 %v8009, %v8008
  %v8057 = vpack.c.b16 %v8011, %v8010
  %v8058 = vpack.c.b16 %v8013, %v8012
  %v8059 = vpack.c.b16 %v8015, %v8014
  %v8060 = vpack.c.b16 %v8017, %v8016
  %v8061 = vpack.c.b16 %v8019, %v8018
  %v8062 = vpack.c.b16 %v8021, %v8020
  %v8063 = vpack.c.b16 %v8023, %v8022
  %v8064 = vpack.c.b16 %v8025, %v8024
  %v8065 = vpack.c.b16 %v8027, %v8026
  %v8066 = vpack.c.b16 %v8029, %v8028
  %v8067 = vpack.c.b16 %v8031, %v8030
  %v8068 = vpack.c.b16 %v8033, %v8032
  %v8069 = vpack.c.b16 %v8035, %v8034
  %v8070 = vpack.c.b16 %v8037, %v8036
  %v8071 = vpack.c.b16 %v8039, %v8038
  %8104 = vmatprep.subr.bf16.mxu0 0
  %8105 = vmatpush1.bf16.msra.mxu0 %v8040
  %8106 = vmatprep.subr.bf16.mxu0 0
  %8107 = vmatpush1.bf16.msra.mxu0 %v8041
  %8108 = vmatprep.subr.bf16.mxu0 0
  %8109 = vmatpush1.bf16.msra.mxu0 %v8042
  %8110 = vmatprep.subr.bf16.mxu0 0
  %8111 = vmatpush1.bf16.msra.mxu0 %v8043
  %8112 = vmatprep.subr.bf16.mxu0 0
  %8113 = vmatpush1.bf16.msra.mxu0 %v8044
  %8114 = vmatprep.subr.bf16.mxu0 0
  %8115 = vmatpush1.bf16.msra.mxu0 %v8045
  %8116 = vmatprep.subr.bf16.mxu0 0
  %8117 = vmatpush1.bf16.msra.mxu0 %v8046
  %8118 = vmatprep.subr.bf16.mxu0 0
  %8119 = vmatpush1.bf16.msra.mxu0 %v8047
  %8120 = vmatprep.subr.bf16.mxu0 0
  %8121 = vmatpush1.bf16.msra.mxu0 %v8048
  %8122 = vmatprep.subr.bf16.mxu0 0
  %8123 = vmatpush1.bf16.msra.mxu0 %v8049
  %8124 = vmatprep.subr.bf16.mxu0 0
  %8125 = vmatpush1.bf16.msra.mxu0 %v8050
  %8126 = vmatprep.subr.bf16.mxu0 0
  %8127 = vmatpush1.bf16.msra.mxu0 %v8051
  %8128 = vmatprep.subr.bf16.mxu0 0
  %8129 = vmatpush1.bf16.msra.mxu0 %v8052
  %8130 = vmatprep.subr.bf16.mxu0 0
  %8131 = vmatpush1.bf16.msra.mxu0 %v8053
  %8132 = vmatprep.subr.bf16.mxu0 0
  %8133 = vmatpush1.bf16.msra.mxu0 %v8054
  %8134 = vmatprep.subr.bf16.mxu0 0
  %8135 = vmatpush1.bf16.msra.mxu0 %v8055
  %8136 = vmatprep.mubr.bf16.mxu0 %v7841
  %8137 = vmatmul.mubr.bf16.gmra.mrb[0].mxu0 %v7840
  %v8138 = vpop.f32.mrb[0].mxu0
  %v8139 = vadd.f32 0.0, %v8138
  %v8140 = vpop.f32.mrb[0].mxu0
  %v8141 = vpop.f32.mrb[0].mxu0
  %v8142 = vadd.f32 0.0, %v8141
  %v8143 = vpop.f32.mrb[0].mxu0
  %8144 = vmatprep.mubr.bf16.mxu0 %v7845
  %8145 = vmatmul.mubr.bf16.gmra.mrb[0].mxu0 %v7844
  %v8146 = vpop.f32.mrb[0].mxu0
  %v8147 = vadd.f32 0.0, %v8146
  %v8148 = vpop.f32.mrb[0].mxu0
  %v8149 = vpop.f32.mrb[0].mxu0
  %v8150 = vpop.f32.mrb[0].mxu0
  %8151 = vdwg.mxu0
  %8152 = vmatprep.subr.bf16.mxu0 0
  %8153 = vmatpush1.bf16.msra.mxu0 %v8056
  %8154 = vmatprep.subr.bf16.mxu0 0
  %8155 = vmatpush1.bf16.msra.mxu0 %v8057
  %8156 = vmatprep.subr.bf16.mxu0 0
  %8157 = vmatpush1.bf16.msra.mxu0 %v8058
  %8158 = vmatprep.subr.bf16.mxu0 0
  %8159 = vmatpush1.bf16.msra.mxu0 %v8059
  %8160 = vmatprep.subr.bf16.mxu0 0
  %8161 = vmatpush1.bf16.msra.mxu0 %v8060
  %8162 = vmatprep.subr.bf16.mxu0 0
  %8163 = vmatpush1.bf16.msra.mxu0 %v8061
  %8164 = vmatprep.subr.bf16.mxu0 0
  %8165 = vmatpush1.bf16.msra.mxu0 %v8062
  %8166 = vmatprep.subr.bf16.mxu0 0
  %8167 = vmatpush1.bf16.msra.mxu0 %v8063
  %8168 = vmatprep.subr.bf16.mxu0 0
  %8169 = vmatpush1.bf16.msra.mxu0 %v8064
  %8170 = vmatprep.subr.bf16.mxu0 0
  %8171 = vmatpush1.bf16.msra.mxu0 %v8065
  %8172 = vmatprep.subr.bf16.mxu0 0
  %8173 = vmatpush1.bf16.msra.mxu0 %v8066
  %8174 = vmatprep.subr.bf16.mxu0 0
  %8175 = vmatpush1.bf16.msra.mxu0 %v8067
  %8176 = vmatprep.subr.bf16.mxu0 0
  %8177 = vmatpush1.bf16.msra.mxu0 %v8068
  %8178 = vmatprep.subr.bf16.mxu0 0
  %8179 = vmatpush1.bf16.msra.mxu0 %v8069
  %8180 = vmatprep.subr.bf16.mxu0 0
  %8181 = vmatpush1.bf16.msra.mxu0 %v8070
  %8182 = vmatprep.subr.bf16.mxu0 0
  %8183 = vmatpush1.bf16.msra.mxu0 %v8071
  %8184 = vmatprep.mubr.bf16.mxu0 %v7843
  %8185 = vmatmul.mubr.bf16.gmra.mrb[0].mxu0 %v7842
  %v8186 = vpop.f32.mrb[0].mxu0
  %v8187 = vadd.f32 %v8139, %v8186
  %v8188 = vpop.f32.mrb[0].mxu0
  %v8189 = vpop.f32.mrb[0].mxu0
  %v8190 = vadd.f32 %v8142, %v8189
  %v8191 = vpop.f32.mrb[0].mxu0
  %8192 = vmatprep.mubr.bf16.mxu0 %v7847
  %8193 = vmatmul.mubr.bf16.gmra.mrb[0].mxu0 %v7846
  %v8194 = vpop.f32.mrb[0].mxu0
  %v8195 = vadd.f32 %v8147, %v8194
  %v8196 = vpop.f32.mrb[0].mxu0
  %v8197 = vpop.f32.mrb[0].mxu0
  %v8198 = vpop.f32.mrb[0].mxu0
  %8199 = vdwg.mxu0
  %vm8200 = vcmask 261120
  %v8201 = vsel %vm8200, %v8187, 0.0
  %v8202 = vrot.slane %v8201, 4
  %v8203 = vadd.f32 %v8201, %v8202
  %v8204 = vrot.slane %v8203, 2
  %v8205 = vadd.f32 %v8203, %v8204
  %v8206 = vrot.slane %v8205, 1
  %v8207 = vadd.f32 %v8205, %v8206
  %v8208 = vsel %vm8200, %v8190, 0.0
  %v8209 = vrot.slane %v8208, 4
  %v8210 = vadd.f32 %v8208, %v8209
  %v8211 = vrot.slane %v8210, 2
  %v8212 = vadd.f32 %v8210, %v8211
  %v8213 = vrot.slane %v8212, 1
  %v8214 = vadd.f32 %v8212, %v8213
  %v8215 = vsel %vm8200, %v8195, 0.0
  %v8216 = vrot.slane %v8215, 4
  %v8217 = vadd.f32 %v8215, %v8216
  %v8218 = vrot.slane %v8217, 2
  %v8219 = vadd.f32 %v8217, %v8218
  %v8220 = vrot.slane %v8219, 1
  %v8221 = vadd.f32 %v8219, %v8220
  %v8222 = vmul.f32 %v8207, %v4139
  %v8223 = vmul.f32 %v8214, %v4139
  %v8224 = vmul.f32 %v8221, %v4139
  %v8225 = vsub.f32 %v8187, %v8222
  %v8226 = vsub.f32 %v8190, %v8223
  %v8227 = vsub.f32 %v8195, %v8224
  %v8228 = vmul.f32 %v8225, %v8225
  %v8229 = vmul.f32 %v8226, %v8226
  %v8230 = vmul.f32 %v8227, %v8227
  %v8231 = vsel %vm8200, %v8228, 0.0
  %v8232 = vrot.slane %v8231, 4
  %v8233 = vadd.f32 %v8231, %v8232
  %v8234 = vrot.slane %v8233, 2
  %v8235 = vadd.f32 %v8233, %v8234
  %v8236 = vrot.slane %v8235, 1
  %v8237 = vadd.f32 %v8235, %v8236
  %v8238 = vsel %vm8200, %v8229, 0.0
  %v8239 = vrot.slane %v8238, 4
  %v8240 = vadd.f32 %v8238, %v8239
  %v8241 = vrot.slane %v8240, 2
  %v8242 = vadd.f32 %v8240, %v8241
  %v8243 = vrot.slane %v8242, 1
  %v8244 = vadd.f32 %v8242, %v8243
  %v8245 = vsel %vm8200, %v8230, 0.0
  %v8246 = vrot.slane %v8245, 4
  %v8247 = vadd.f32 %v8245, %v8246
  %v8248 = vrot.slane %v8247, 2
  %v8249 = vadd.f32 %v8247, %v8248
  %v8250 = vrot.slane %v8249, 1
  %v8251 = vadd.f32 %v8249, %v8250
  %v8252 = vmul.f32 %v8237, %v4139
  %v8253 = vmul.f32 %v8244, %v4139
  %v8254 = vmul.f32 %v8251, %v4139
  %v8255 = vld [vmem:[%s6] sm:$0x3]
  %v8256 = vadd.f32 %v8252, 1e-05
  %v8257 = vadd.f32 %v8253, 1e-05
  %v8258 = vadd.f32 %v8254, 1e-05
  %v8259 = vrsqrt.pop %v8256
  %v8260 = vrsqrt.pop %v8257
  %v8261 = vrsqrt.pop %v8258
  %v8262 = vmul.f32 %v8255, %v8259
  %v8263 = vmul.f32 %v8255, %v8260
  %v8264 = vmul.f32 %v8255, %v8261
  %v8265 = vmul.f32 %v8222, %v8262
  %v8266 = vmul.f32 %v8223, %v8263
  %v8267 = vmul.f32 %v8224, %v8264
  %v8271 = vrot.slane %v8265, 7
  %v8272 = vrot.slane %v8266, 7
  %v8273 = vrot.slane %v8267, 7
  %v8277 = vsub.f32 %v8255, %v8271
  %v8278 = vsub.f32 %v8255, %v8272
  %v8279 = vsub.f32 %v8255, %v8273
  %v8280 = vlaneseq
  %v8281 = vshrl.u32 %v8280, 7
  %v8282 = vsub.s32 0, %v8281
  %v8283 = vrot.slane %v8262, %v8282
  %v8284 = vlaneseq
  %v8285 = vshrl.u32 %v8284, 7
  %v8286 = vsub.s32 0, %v8285
  %v8287 = vrot.slane %v8263, %v8286
  %v8288 = vlaneseq
  %v8289 = vshrl.u32 %v8288, 7
  %v8290 = vsub.s32 0, %v8289
  %v8291 = vrot.slane %v8264, %v8290
  %v8292 = vmul.f32 %v8187, %v8283
  %v8293 = vmul.f32 %v8190, %v8287
  %v8294 = vmul.f32 %v8195, %v8291
  %v8295 = vlaneseq
  %v8296 = vshrl.u32 %v8295, 7
  %v8297 = vsub.s32 1, %v8296
  %v8298 = vrot.slane %v8277, %v8297
  %v8299 = vlaneseq
  %v8300 = vshrl.u32 %v8299, 7
  %v8301 = vsub.s32 1, %v8300
  %v8302 = vrot.slane %v8278, %v8301
  %v8303 = vlaneseq
  %v8304 = vshrl.u32 %v8303, 7
  %v8305 = vsub.s32 1, %v8304
  %v8306 = vrot.slane %v8279, %v8305
  %v8307 = vadd.f32 %v8292, %v8298
  %v8308 = vadd.f32 %v8293, %v8302
  %v8309 = vadd.f32 %v8294, %v8306
  %v8310 = vmax.f32 %v8307, 0.0
  %v8311 = vmax.f32 %v8308, 0.0
  %v8312 = vmax.f32 %v8309, 0.0
  %8313 = vst.msk [vmem:[%s7] sm:$0xff] %vm8200, %v8310
  %8314 = vst.msk [vmem:[%s7 + $0x8] sm:$0xff] %vm8200, %v8311
  %8315 = vst.msk [vmem:[%s7 + $0x10] sm:$0xff] %vm8200, %v8312
  // Predicated region
  $region30: #{_lambda_.1} parent=0 // pred_check
    _
  $region31: #{_lambda_.1} parent=0 // pred_check_branch
    %8317 = sbr.rel (0) target = $region33
  $region32: #{_lambda_.1} parent=0 // pred_region
    _
  $region33: #{_lambda_.1} parent=0 // pred_fallthru
    _
  // Predicated region
  $region34: #{_lambda_.1} parent=0 // pred_check
    _
  $region35: #{_lambda_.1} parent=0 // pred_check_branch
    %8319 = sbr.rel (0) target = $region37
  $region36: #{_lambda_.1} parent=0 // pred_region
    _
  $region37: #{_lambda_.1} parent=0 // pred_fallthru
    _

</llo_original>
